<compile_context>
chip_gen: v6e
topology: v6e:2x2x1
jax: 0.10.0
libtpu: 0.0.40
codegen_flags: <defaults>
</compile_context>

<pallas_src>
import functools

import jax
import jax.numpy as jnp
from jax.experimental import pallas as pl
from jax.experimental.pallas import tpu as pltpu


def _softplus_b100(x):
    # torch.nn.Softplus(beta=100, threshold=20): x if 100*x > 20 else log1p(exp(100*x))/100
    bx = 100.0 * x
    safe = jnp.minimum(bx, 20.0)
    return jnp.where(bx > 20.0, x, 0.01 * jnp.log1p(jnp.exp(safe)))


def _tnet_kernel(pd_ref, ff_ref, tgt_ref,
                 wx_pd, wx_ff, b0, w1, b1, w2a, b2, w3, b3, w4, b4,
                 loss_ref):
    H = b0.shape[0]                          # hidden width (256)
    bf16 = jnp.bfloat16

    x_pd = pd_ref[...].astype(bf16)          # (C_pd, T)
    x_ff = ff_ref[...].astype(bf16)          # (C_ff, T)

    # Fused layer-0 + layer-2-residual matmul over the wide input: one MXU pass
    # over the expensive K=701 path.  Rows [0:H] -> layer-0 preact, [H:2H] -> residual term.
    xb = (jnp.dot(wx_pd[...], x_pd, preferred_element_type=jnp.float32)
          + jnp.dot(wx_ff[...], x_ff, preferred_element_type=jnp.float32))   # (2H, T) f32

    h = _softplus_b100(xb[:H, :] + b0[...])                                   # (H, T) f32
    h = _softplus_b100(
        jnp.dot(w1[...], h.astype(bf16), preferred_element_type=jnp.float32) + b1[...])
    h = _softplus_b100(
        jnp.dot(w2a[...], h.astype(bf16), preferred_element_type=jnp.float32)
        + xb[H:, :] + b2[...])
    h = _softplus_b100(
        jnp.dot(w3[...], h.astype(bf16), preferred_element_type=jnp.float32) + b3[...])
    pred = (jnp.dot(w4[...], h.astype(bf16), preferred_element_type=jnp.float32)
            + b4[...])                                                        # (3, T) f32

    # Per-tile L1 partial sum; mean is finished in the wrapper.  Distinct output
    # block per grid cell -> no cross-core race, both grid axes can be "parallel".
    loss_ref[...] = jnp.sum(jnp.abs(pred - tgt_ref[...]), keepdims=True)      # (1, 1)


def _pick_tile(n, pref):
    """Largest lane tile <= pref that divides n (multiple of 128), else full n."""
    pref = max(128, (pref // 128) * 128)
    if n <= pref:
        return n
    t = pref
    while t >= 128:
        if n % t == 0:
            return t
        t -= 128
    return n


@functools.partial(jax.jit, static_argnames=("tile_n",))
def tnet_forward(points_discription, last_layer_feature, target_color, params, tile_n=512):
    B, C_pd, N = points_discription.shape
    C_ff = last_layer_feature.shape[1]
    wx_pd, wx_ff, b0, w1, b1, w2a, b2, w3, b3, w4, b4 = params
    H = b0.shape[0]

    tn = _pick_tile(N, tile_n)
    assert N % tn == 0
    nj = N // tn

    bf16 = jnp.bfloat16
    # bf16 weights for the MXU; biases stay f32; activations are cast in-kernel.
    wx_pd_b, wx_ff_b = wx_pd.astype(bf16), wx_ff.astype(bf16)
    w1_b, w2a_b, w3_b, w4_b = (w.astype(bf16) for w in (w1, w2a, w3, w4))
    consts = (wx_pd_b, wx_ff_b, b0, w1_b, b1, w2a_b, b2, w3_b, b3, w4_b, b4)

    def data_spec(c):
        return pl.BlockSpec((None, c, tn), lambda b, j: (b, 0, j))

    def const_spec(a):
        return pl.BlockSpec(a.shape, lambda b, j: (0, 0))

    flops = 2 * B * N * ((C_pd + C_ff) * 2 * H + 3 * H * H + 3 * H)
    transcendentals = B * N * 4 * H * 2          # exp + log1p per hidden unit, 4 layers
    bytes_accessed = (B * N * (C_pd + C_ff + 3) * 4
                      + sum(int(a.size) * a.dtype.itemsize for a in consts)
                      + B * nj * 4)

    loss_parts = pl.pallas_call(
        _tnet_kernel,
        out_shape=jax.ShapeDtypeStruct((B, nj, 1, 1), jnp.float32),
        grid_spec=pltpu.PrefetchScalarGridSpec(
            num_scalar_prefetch=0,
            grid=(B, nj),
            in_specs=[data_spec(C_pd), data_spec(C_ff), data_spec(3)]
                     + [const_spec(a) for a in consts],
            out_specs=pl.BlockSpec((None, None, 1, 1), lambda b, j: (b, j, 0, 0)),
        ),
        compiler_params=pltpu.CompilerParams(
            dimension_semantics=("parallel", "parallel")),
        cost_estimate=pl.CostEstimate(flops=int(flops),
                                      transcendentals=int(transcendentals),
                                      bytes_accessed=int(bytes_accessed)),
    )(points_discription, last_layer_feature, target_color, *consts)

    error_color = jnp.sum(loss_parts) / (B * 3 * N)     # nn.L1Loss (mean reduction)
    return error_color


def make_params(key):
    # TNet.__init__ channel bookkeeping:
    #   embed(d_size=5, in=3) -> 33, + g_dim 64, + pose_dim*23 = 92, + feature_dim 512 = 701
    # MLP filters: [701->256, 256->256, (256+701)->256 (res layer 2), 256->256, 256->3]
    C_pd, C_ff, H = 189, 512, 256
    C_in = C_pd + C_ff
    keys = jax.random.split(key, 16)
    ki = iter(keys)

    def conv_v(out_c, in_c):
        return 0.02 * jax.random.normal(next(ki), (out_c, in_c), jnp.float32)

    def wnorm(v, g):
        # nn.utils.weight_norm: w = g * v / ||v||, norm per output channel (dim 0)
        n = jnp.sqrt(jnp.sum(v * v, axis=1, keepdims=True))
        return g[:, None] * v / n

    def gain(out_c):
        return 0.5 + jax.random.uniform(next(ki), (out_c,), jnp.float32)

    def bias(out_c):
        return 0.01 * jax.random.normal(next(ki), (out_c,), jnp.float32).reshape(-1, 1)

    W0 = wnorm(conv_v(H, C_in), gain(H)); b0 = bias(H)
    W1 = wnorm(conv_v(H, H), gain(H)); b1 = bias(H)
    W2 = wnorm(conv_v(H, H + C_in), gain(H)); b2 = bias(H)   # norm over full row, then split
    W3 = wnorm(conv_v(H, H), gain(H)); b3 = bias(H)
    W4 = conv_v(3, H); b4 = bias(3)                          # last conv: no weight norm

    W2a, W2b = W2[:, :H], W2[:, H:]          # W2a acts on h, W2b on the residual (original) input
    Wx = jnp.concatenate([W0, W2b], axis=0)  # fused K=701 weight: rows [0:H]=layer0, [H:2H]=residual
    wx_pd, wx_ff = Wx[:, :C_pd], Wx[:, C_pd:]
    return (wx_pd, wx_ff, b0, W1, b1, W2a, b2, W3, b3, W4, b4)


def ref_forward(pd, ff, tgt, params):
    # pure-JAX f32 reference (MLP with res_layers=[2], Softplus(beta=100), L1 mean loss)
    wx_pd, wx_ff, b0, w1, b1, w2a, b2, w3, b3, w4, b4 = params
    H = b0.shape[0]
    sp = _softplus_b100
    mm = lambda w, x: jnp.einsum('oc,bcn->bon', w, x)
    xb = mm(wx_pd, pd) + mm(wx_ff, ff)
    h = sp(xb[:, :H] + b0[None])
    h = sp(mm(w1, h) + b1[None])
    h = sp(mm(w2a, h) + xb[:, H:] + b2[None])
    h = sp(mm(w3, h) + b3[None])
    pred = mm(w4, h) + b4[None]
    return jnp.mean(jnp.abs(pred - tgt))


if __name__ == "__main__":
    key = jax.random.PRNGKey(0)
    kp, k1, k2, k3 = jax.random.split(key, 4)
    B, N = 2, 512
    points_discription = jax.random.normal(k1, (B, 189, N), jnp.float32)   # 33 + 64 + 4*23
    last_layer_feature = jax.random.normal(k2, (B, 512, N), jnp.float32)   # feature_dim = 512
    target_color = jax.random.uniform(k3, (B, 3, N), jnp.float32)

    params = make_params(kp)

    # tile_n=256 -> 2x2 grid on this small example (default 512 for real sizes).
    error_color = tnet_forward(points_discription, last_layer_feature, target_color,
                               params, tile_n=256)
    error_color = jax.block_until_ready(error_color)

    err_ref = jax.block_until_ready(
        ref_forward(points_discription, last_layer_feature, target_color, params))
    assert jnp.allclose(error_color, err_ref, rtol=5e-2, atol=5e-2), (error_color, err_ref)

    err_dict = {'CLR': float(error_color)}   # error_color.item() equivalent (host-side)
    print("KERNEL_OK")
</pallas_src>

<mosaic_0001>
module attributes {stable_mosaic.version = 11 : i64} {
  func.func @_tnet_kernel(%arg0: i32, %arg1: i32, %arg2: memref<1x189x256xf32, #tpu.memory_space<vmem>>, %arg3: memref<1x512x256xf32, #tpu.memory_space<vmem>>, %arg4: memref<1x3x256xf32, #tpu.memory_space<vmem>>, %arg5: memref<512x189xbf16, #tpu.memory_space<vmem>>, %arg6: memref<512x512xbf16, #tpu.memory_space<vmem>>, %arg7: memref<256x1xf32, #tpu.memory_space<vmem>>, %arg8: memref<256x256xbf16, #tpu.memory_space<vmem>>, %arg9: memref<256x1xf32, #tpu.memory_space<vmem>>, %arg10: memref<256x256xbf16, #tpu.memory_space<vmem>>, %arg11: memref<256x1xf32, #tpu.memory_space<vmem>>, %arg12: memref<256x256xbf16, #tpu.memory_space<vmem>>, %arg13: memref<256x1xf32, #tpu.memory_space<vmem>>, %arg14: memref<3x256xbf16, #tpu.memory_space<vmem>>, %arg15: memref<3x1xf32, #tpu.memory_space<vmem>>, %arg16: memref<1x1x1x1xf32, #tpu.memory_space<vmem>>) attributes {dimension_semantics = [#tpu.dimension_semantics<parallel>, #tpu.dimension_semantics<parallel>], iteration_bounds = array<i64: 2, 2>, scalar_prefetch = 0 : i64, scratch_operands = 0 : i64, tpu.core_type = #tpu.core_type<tc>, window_params = [{transform_indices = @transform_0, window_bounds = array<i64: 1, 189, 256>}, {transform_indices = @transform_1, window_bounds = array<i64: 1, 512, 256>}, {transform_indices = @transform_2, window_bounds = array<i64: 1, 3, 256>}, {pipeline_mode = #tpu.pipeline_mode<synchronous>, transform_indices = @transform_3, window_bounds = array<i64: 512, 189>}, {pipeline_mode = #tpu.pipeline_mode<synchronous>, transform_indices = @transform_4, window_bounds = array<i64: 512, 512>}, {pipeline_mode = #tpu.pipeline_mode<synchronous>, transform_indices = @transform_5, window_bounds = array<i64: 256, 1>}, {pipeline_mode = #tpu.pipeline_mode<synchronous>, transform_indices = @transform_6, window_bounds = array<i64: 256, 256>}, {pipeline_mode = #tpu.pipeline_mode<synchronous>, transform_indices = @transform_7, window_bounds = array<i64: 256, 1>}, {pipeline_mode = #tpu.pipeline_mode<synchronous>, transform_indices = @transform_8, window_bounds = array<i64: 256, 256>}, {pipeline_mode = #tpu.pipeline_mode<synchronous>, transform_indices = @transform_9, window_bounds = array<i64: 256, 1>}, {pipeline_mode = #tpu.pipeline_mode<synchronous>, transform_indices = @transform_10, window_bounds = array<i64: 256, 256>}, {pipeline_mode = #tpu.pipeline_mode<synchronous>, transform_indices = @transform_11, window_bounds = array<i64: 256, 1>}, {pipeline_mode = #tpu.pipeline_mode<synchronous>, transform_indices = @transform_12, window_bounds = array<i64: 3, 256>}, {pipeline_mode = #tpu.pipeline_mode<synchronous>, transform_indices = @transform_13, window_bounds = array<i64: 3, 1>}, {transform_indices = @transform_14, window_bounds = array<i64: 1, 1, 1, 1>}]} {
    %c0 = arith.constant 0 : index
    %c0_0 = arith.constant 0 : index
    %c0_1 = arith.constant 0 : index
    %0 = vector.load %arg2[%c0, %c0_0, %c0_1] : memref<1x189x256xf32, #tpu.memory_space<vmem>>, vector<1x189x256xf32>
    %1 = vector.shape_cast %0 : vector<1x189x256xf32> to vector<189x256xf32>
    %2 = arith.truncf %1 : vector<189x256xf32> to vector<189x256xbf16>
    %c0_2 = arith.constant 0 : index
    %c0_3 = arith.constant 0 : index
    %c0_4 = arith.constant 0 : index
    %3 = vector.load %arg3[%c0_2, %c0_3, %c0_4] : memref<1x512x256xf32, #tpu.memory_space<vmem>>, vector<1x512x256xf32>
    %4 = vector.shape_cast %3 : vector<1x512x256xf32> to vector<512x256xf32>
    %5 = arith.truncf %4 : vector<512x256xf32> to vector<512x256xbf16>
    %c0_5 = arith.constant 0 : index
    %c0_6 = arith.constant 0 : index
    %6 = vector.load %arg5[%c0_5, %c0_6] : memref<512x189xbf16, #tpu.memory_space<vmem>>, vector<512x189xbf16>
    %cst = arith.constant dense<0.000000e+00> : vector<512x256xf32>
    %7 = tpu.matmul %6, %2, %cst {dimension_numbers = #tpu.dot_dimension_numbers<[1], [0], [0], [1], [0, 0, 1, 1], [], []>} : vector<512x189xbf16>, vector<189x256xbf16>, vector<512x256xf32> -> vector<512x256xf32>
    %c0_7 = arith.constant 0 : index
    %c0_8 = arith.constant 0 : index
    %8 = vector.load %arg6[%c0_7, %c0_8] : memref<512x512xbf16, #tpu.memory_space<vmem>>, vector<512x512xbf16>
    %cst_9 = arith.constant dense<0.000000e+00> : vector<512x256xf32>
    %9 = tpu.matmul %8, %5, %cst_9 {dimension_numbers = #tpu.dot_dimension_numbers<[1], [0], [0], [1], [0, 0, 1, 1], [], []>} : vector<512x512xbf16>, vector<512x256xbf16>, vector<512x256xf32> -> vector<512x256xf32>
    %10 = arith.addf %7, %9 : vector<512x256xf32>
    %11 = vector.extract_strided_slice %10 {offsets = [0, 0], sizes = [256, 256], strides = [1, 1]} : vector<512x256xf32> to vector<256x256xf32>
    %c0_10 = arith.constant 0 : index
    %c0_11 = arith.constant 0 : index
    %12 = vector.load %arg7[%c0_10, %c0_11] : memref<256x1xf32, #tpu.memory_space<vmem>>, vector<256x1xf32>
    %13 = vector.broadcast %12 : vector<256x1xf32> to vector<256x256xf32>
    %14 = arith.addf %11, %13 : vector<256x256xf32>
    %cst_12 = arith.constant 1.000000e+02 : f32
    %15 = vector.broadcast %cst_12 : f32 to vector<256x256xf32>
    %16 = arith.mulf %15, %14 : vector<256x256xf32>
    %cst_13 = arith.constant 2.000000e+01 : f32
    %17 = vector.broadcast %cst_13 : f32 to vector<256x256xf32>
    %18 = arith.minimumf %16, %17 : vector<256x256xf32>
    %cst_14 = arith.constant 2.000000e+01 : f32
    %19 = vector.broadcast %cst_14 : f32 to vector<256x256xf32>
    %20 = arith.cmpf ogt, %16, %19 : vector<256x256xf32>
    %21 = math.exp %18 : vector<256x256xf32>
    %22 = math.log1p %21 : vector<256x256xf32>
    %cst_15 = arith.constant 0.00999999977 : f32
    %23 = vector.broadcast %cst_15 : f32 to vector<256x256xf32>
    %24 = arith.mulf %23, %22 : vector<256x256xf32>
    %25 = arith.select %20, %14, %24 : vector<256x256xi1>, vector<256x256xf32>
    %c0_16 = arith.constant 0 : index
    %c0_17 = arith.constant 0 : index
    %26 = vector.load %arg8[%c0_16, %c0_17] : memref<256x256xbf16, #tpu.memory_space<vmem>>, vector<256x256xbf16>
    %27 = arith.truncf %25 : vector<256x256xf32> to vector<256x256xbf16>
    %cst_18 = arith.constant dense<0.000000e+00> : vector<256x256xf32>
    %28 = tpu.matmul %26, %27, %cst_18 {dimension_numbers = #tpu.dot_dimension_numbers<[1], [0], [0], [1], [0, 0, 1, 1], [], []>} : vector<256x256xbf16>, vector<256x256xbf16>, vector<256x256xf32> -> vector<256x256xf32>
    %c0_19 = arith.constant 0 : index
    %c0_20 = arith.constant 0 : index
    %29 = vector.load %arg9[%c0_19, %c0_20] : memref<256x1xf32, #tpu.memory_space<vmem>>, vector<256x1xf32>
    %30 = vector.broadcast %29 : vector<256x1xf32> to vector<256x256xf32>
    %31 = arith.addf %28, %30 : vector<256x256xf32>
    %cst_21 = arith.constant 1.000000e+02 : f32
    %32 = vector.broadcast %cst_21 : f32 to vector<256x256xf32>
    %33 = arith.mulf %32, %31 : vector<256x256xf32>
    %cst_22 = arith.constant 2.000000e+01 : f32
    %34 = vector.broadcast %cst_22 : f32 to vector<256x256xf32>
    %35 = arith.minimumf %33, %34 : vector<256x256xf32>
    %cst_23 = arith.constant 2.000000e+01 : f32
    %36 = vector.broadcast %cst_23 : f32 to vector<256x256xf32>
    %37 = arith.cmpf ogt, %33, %36 : vector<256x256xf32>
    %38 = math.exp %35 : vector<256x256xf32>
    %39 = math.log1p %38 : vector<256x256xf32>
    %cst_24 = arith.constant 0.00999999977 : f32
    %40 = vector.broadcast %cst_24 : f32 to vector<256x256xf32>
    %41 = arith.mulf %40, %39 : vector<256x256xf32>
    %42 = arith.select %37, %31, %41 : vector<256x256xi1>, vector<256x256xf32>
    %c0_25 = arith.constant 0 : index
    %c0_26 = arith.constant 0 : index
    %43 = vector.load %arg10[%c0_25, %c0_26] : memref<256x256xbf16, #tpu.memory_space<vmem>>, vector<256x256xbf16>
    %44 = arith.truncf %42 : vector<256x256xf32> to vector<256x256xbf16>
    %cst_27 = arith.constant dense<0.000000e+00> : vector<256x256xf32>
    %45 = tpu.matmul %43, %44, %cst_27 {dimension_numbers = #tpu.dot_dimension_numbers<[1], [0], [0], [1], [0, 0, 1, 1], [], []>} : vector<256x256xbf16>, vector<256x256xbf16>, vector<256x256xf32> -> vector<256x256xf32>
    %46 = vector.extract_strided_slice %10 {offsets = [256, 0], sizes = [256, 256], strides = [1, 1]} : vector<512x256xf32> to vector<256x256xf32>
    %47 = arith.addf %45, %46 : vector<256x256xf32>
    %c0_28 = arith.constant 0 : index
    %c0_29 = arith.constant 0 : index
    %48 = vector.load %arg11[%c0_28, %c0_29] : memref<256x1xf32, #tpu.memory_space<vmem>>, vector<256x1xf32>
    %49 = vector.broadcast %48 : vector<256x1xf32> to vector<256x256xf32>
    %50 = arith.addf %47, %49 : vector<256x256xf32>
    %cst_30 = arith.constant 1.000000e+02 : f32
    %51 = vector.broadcast %cst_30 : f32 to vector<256x256xf32>
    %52 = arith.mulf %51, %50 : vector<256x256xf32>
    %cst_31 = arith.constant 2.000000e+01 : f32
    %53 = vector.broadcast %cst_31 : f32 to vector<256x256xf32>
    %54 = arith.minimumf %52, %53 : vector<256x256xf32>
    %cst_32 = arith.constant 2.000000e+01 : f32
    %55 = vector.broadcast %cst_32 : f32 to vector<256x256xf32>
    %56 = arith.cmpf ogt, %52, %55 : vector<256x256xf32>
    %57 = math.exp %54 : vector<256x256xf32>
    %58 = math.log1p %57 : vector<256x256xf32>
    %cst_33 = arith.constant 0.00999999977 : f32
    %59 = vector.broadcast %cst_33 : f32 to vector<256x256xf32>
    %60 = arith.mulf %59, %58 : vector<256x256xf32>
    %61 = arith.select %56, %50, %60 : vector<256x256xi1>, vector<256x256xf32>
    %c0_34 = arith.constant 0 : index
    %c0_35 = arith.constant 0 : index
    %62 = vector.load %arg12[%c0_34, %c0_35] : memref<256x256xbf16, #tpu.memory_space<vmem>>, vector<256x256xbf16>
    %63 = arith.truncf %61 : vector<256x256xf32> to vector<256x256xbf16>
    %cst_36 = arith.constant dense<0.000000e+00> : vector<256x256xf32>
    %64 = tpu.matmul %62, %63, %cst_36 {dimension_numbers = #tpu.dot_dimension_numbers<[1], [0], [0], [1], [0, 0, 1, 1], [], []>} : vector<256x256xbf16>, vector<256x256xbf16>, vector<256x256xf32> -> vector<256x256xf32>
    %c0_37 = arith.constant 0 : index
    %c0_38 = arith.constant 0 : index
    %65 = vector.load %arg13[%c0_37, %c0_38] : memref<256x1xf32, #tpu.memory_space<vmem>>, vector<256x1xf32>
    %66 = vector.broadcast %65 : vector<256x1xf32> to vector<256x256xf32>
    %67 = arith.addf %64, %66 : vector<256x256xf32>
    %cst_39 = arith.constant 1.000000e+02 : f32
    %68 = vector.broadcast %cst_39 : f32 to vector<256x256xf32>
    %69 = arith.mulf %68, %67 : vector<256x256xf32>
    %cst_40 = arith.constant 2.000000e+01 : f32
    %70 = vector.broadcast %cst_40 : f32 to vector<256x256xf32>
    %71 = arith.minimumf %69, %70 : vector<256x256xf32>
    %cst_41 = arith.constant 2.000000e+01 : f32
    %72 = vector.broadcast %cst_41 : f32 to vector<256x256xf32>
    %73 = arith.cmpf ogt, %69, %72 : vector<256x256xf32>
    %74 = math.exp %71 : vector<256x256xf32>
    %75 = math.log1p %74 : vector<256x256xf32>
    %cst_42 = arith.constant 0.00999999977 : f32
    %76 = vector.broadcast %cst_42 : f32 to vector<256x256xf32>
    %77 = arith.mulf %76, %75 : vector<256x256xf32>
    %78 = arith.select %73, %67, %77 : vector<256x256xi1>, vector<256x256xf32>
    %c0_43 = arith.constant 0 : index
    %c0_44 = arith.constant 0 : index
    %79 = vector.load %arg14[%c0_43, %c0_44] : memref<3x256xbf16, #tpu.memory_space<vmem>>, vector<3x256xbf16>
    %80 = arith.truncf %78 : vector<256x256xf32> to vector<256x256xbf16>
    %cst_45 = arith.constant dense<0.000000e+00> : vector<3x256xf32>
    %81 = tpu.matmul %79, %80, %cst_45 {dimension_numbers = #tpu.dot_dimension_numbers<[1], [0], [0], [1], [0, 0, 1, 1], [], []>} : vector<3x256xbf16>, vector<256x256xbf16>, vector<3x256xf32> -> vector<3x256xf32>
    %c0_46 = arith.constant 0 : index
    %c0_47 = arith.constant 0 : index
    %82 = vector.load %arg15[%c0_46, %c0_47] : memref<3x1xf32, #tpu.memory_space<vmem>>, vector<3x1xf32>
    %83 = vector.broadcast %82 : vector<3x1xf32> to vector<3x256xf32>
    %84 = arith.addf %81, %83 : vector<3x256xf32>
    %c0_48 = arith.constant 0 : index
    %c0_49 = arith.constant 0 : index
    %c0_50 = arith.constant 0 : index
    %85 = vector.load %arg4[%c0_48, %c0_49, %c0_50] : memref<1x3x256xf32, #tpu.memory_space<vmem>>, vector<1x3x256xf32>
    %86 = vector.shape_cast %85 : vector<1x3x256xf32> to vector<3x256xf32>
    %87 = arith.subf %84, %86 : vector<3x256xf32>
    %88 = math.absf %87 : vector<3x256xf32>
    %89 = vector.shape_cast %88 : vector<3x256xf32> to vector<1x3x256xf32>
    %cst_51 = arith.constant dense<0.000000e+00> : vector<1xf32>
    %90 = vector.multi_reduction <add>, %89, %cst_51 [1, 2] : vector<1x3x256xf32> to vector<1xf32>
    %91 = vector.shape_cast %90 : vector<1xf32> to vector<1x1x1xf32>
    %92 = vector.extract %91[0, 0, 0] : f32 from vector<1x1x1xf32>
    %93 = vector.broadcast %92 : f32 to vector<1x1xf32>
    %c0_52 = arith.constant 0 : index
    %c0_53 = arith.constant 0 : index
    %c0_54 = arith.constant 0 : index
    %c0_55 = arith.constant 0 : index
    %94 = vector.load %arg16[%c0_52, %c0_53, %c0_54, %c0_55] : memref<1x1x1x1xf32, #tpu.memory_space<vmem>>, vector<1x1x1x1xf32>
    %95 = vector.shape_cast %94 : vector<1x1x1x1xf32> to vector<1x1xf32>
    %96 = vector.shape_cast %93 : vector<1x1xf32> to vector<1x1x1x1xf32>
    tpu.vector_store %arg16[%c0_52, %c0_53, %c0_54, %c0_55], %96 {strides = array<i32>} : memref<1x1x1x1xf32, #tpu.memory_space<vmem>>, vector<1x1x1x1xf32>,
    return
  }
  func.func @transform_0(%arg0: i32, %arg1: i32) -> (i32, i32, i32) {
    %c0_i32 = arith.constant 0 : i32
    %c0_i32_0 = arith.constant 0 : i32
    return %arg0, %c0_i32, %arg1 : i32, i32, i32
  }
  func.func @transform_1(%arg0: i32, %arg1: i32) -> (i32, i32, i32) {
    %c0_i32 = arith.constant 0 : i32
    %c0_i32_0 = arith.constant 0 : i32
    return %arg0, %c0_i32, %arg1 : i32, i32, i32
  }
  func.func @transform_2(%arg0: i32, %arg1: i32) -> (i32, i32, i32) {
    %c0_i32 = arith.constant 0 : i32
    %c0_i32_0 = arith.constant 0 : i32
    return %arg0, %c0_i32, %arg1 : i32, i32, i32
  }
  func.func @transform_3(%arg0: i32, %arg1: i32) -> (i32, i32) {
    %c0_i32 = arith.constant 0 : i32
    %c0_i32_0 = arith.constant 0 : i32
    %c0_i32_1 = arith.constant 0 : i32
    return %c0_i32, %c0_i32_0 : i32, i32
  }
  func.func @transform_4(%arg0: i32, %arg1: i32) -> (i32, i32) {
    %c0_i32 = arith.constant 0 : i32
    %c0_i32_0 = arith.constant 0 : i32
    %c0_i32_1 = arith.constant 0 : i32
    return %c0_i32, %c0_i32_0 : i32, i32
  }
  func.func @transform_5(%arg0: i32, %arg1: i32) -> (i32, i32) {
    %c0_i32 = arith.constant 0 : i32
    %c0_i32_0 = arith.constant 0 : i32
    %c0_i32_1 = arith.constant 0 : i32
    return %c0_i32, %c0_i32_0 : i32, i32
  }
  func.func @transform_6(%arg0: i32, %arg1: i32) -> (i32, i32) {
    %c0_i32 = arith.constant 0 : i32
    %c0_i32_0 = arith.constant 0 : i32
    %c0_i32_1 = arith.constant 0 : i32
    return %c0_i32, %c0_i32_0 : i32, i32
  }
  func.func @transform_7(%arg0: i32, %arg1: i32) -> (i32, i32) {
    %c0_i32 = arith.constant 0 : i32
    %c0_i32_0 = arith.constant 0 : i32
    %c0_i32_1 = arith.constant 0 : i32
    return %c0_i32, %c0_i32_0 : i32, i32
  }
  func.func @transform_8(%arg0: i32, %arg1: i32) -> (i32, i32) {
    %c0_i32 = arith.constant 0 : i32
    %c0_i32_0 = arith.constant 0 : i32
    %c0_i32_1 = arith.constant 0 : i32
    return %c0_i32, %c0_i32_0 : i32, i32
  }
  func.func @transform_9(%arg0: i32, %arg1: i32) -> (i32, i32) {
    %c0_i32 = arith.constant 0 : i32
    %c0_i32_0 = arith.constant 0 : i32
    %c0_i32_1 = arith.constant 0 : i32
    return %c0_i32, %c0_i32_0 : i32, i32
  }
  func.func @transform_10(%arg0: i32, %arg1: i32) -> (i32, i32) {
    %c0_i32 = arith.constant 0 : i32
    %c0_i32_0 = arith.constant 0 : i32
    %c0_i32_1 = arith.constant 0 : i32
    return %c0_i32, %c0_i32_0 : i32, i32
  }
  func.func @transform_11(%arg0: i32, %arg1: i32) -> (i32, i32) {
    %c0_i32 = arith.constant 0 : i32
    %c0_i32_0 = arith.constant 0 : i32
    %c0_i32_1 = arith.constant 0 : i32
    return %c0_i32, %c0_i32_0 : i32, i32
  }
  func.func @transform_12(%arg0: i32, %arg1: i32) -> (i32, i32) {
    %c0_i32 = arith.constant 0 : i32
    %c0_i32_0 = arith.constant 0 : i32
    %c0_i32_1 = arith.constant 0 : i32
    return %c0_i32, %c0_i32_0 : i32, i32
  }
  func.func @transform_13(%arg0: i32, %arg1: i32) -> (i32, i32) {
    %c0_i32 = arith.constant 0 : i32
    %c0_i32_0 = arith.constant 0 : i32
    %c0_i32_1 = arith.constant 0 : i32
    return %c0_i32, %c0_i32_0 : i32, i32
  }
  func.func @transform_14(%arg0: i32, %arg1: i32) -> (i32, i32, i32, i32) {
    %c0_i32 = arith.constant 0 : i32
    %c0_i32_0 = arith.constant 0 : i32
    %c0_i32_1 = arith.constant 0 : i32
    return %arg0, %arg1, %c0_i32, %c0_i32_0 : i32, i32, i32, i32
  }
}

</mosaic_0001>

<llo_original>
// kernel: tnet_forward.1
$region0: #{tnet_forward.1}
  #allocation0 [shape = 'u32[]', space=smem, size = 0x4, offset = 0x4, fixed_abs, tag = 'smem constant byte address 0x4 - core index']
  #allocation1 [shape = 'u32[144,128]{1,0:T(1,128)}', space=vmem, size = 0x12000, scoped, tag = 'internal scratch']
  %s0 = inlined_call_operand.vmem [shape: f32[2,189,512], index: 0, kind: input, shape index: {}]
  %s1 = inlined_call_operand.vmem [shape: f32[2,512,512], index: 1, kind: input, shape index: {}]
  %s2 = inlined_call_operand.vmem [shape: f32[2,3,512], index: 2, kind: input, shape index: {}]
  %s3 = inlined_call_operand.vmem [shape: bf16[512,189], index: 3, kind: input, shape index: {}]
  %s4 = inlined_call_operand.vmem [shape: bf16[512,512], index: 4, kind: input, shape index: {}]
  %s5 = inlined_call_operand.vmem [shape: f32[256,1], index: 5, kind: input, shape index: {}]
  %s6 = inlined_call_operand.vmem [shape: bf16[256,256], index: 6, kind: input, shape index: {}]
  %s7 = inlined_call_operand.vmem [shape: f32[256,1], index: 7, kind: input, shape index: {}]
  %s8 = inlined_call_operand.vmem [shape: bf16[256,256], index: 8, kind: input, shape index: {}]
  %s9 = inlined_call_operand.vmem [shape: f32[256,1], index: 9, kind: input, shape index: {}]
  %s10 = inlined_call_operand.vmem [shape: bf16[256,256], index: 10, kind: input, shape index: {}]
  %s11 = inlined_call_operand.vmem [shape: f32[256,1], index: 11, kind: input, shape index: {}]
  %s12 = inlined_call_operand.vmem [shape: bf16[3,256], index: 12, kind: input, shape index: {}]
  %s13 = inlined_call_operand.vmem [shape: f32[3,1], index: 13, kind: input, shape index: {}]
  %s14 = inlined_call_operand.vmem [shape: f32[2,2,1,1], index: 14, kind: output, shape index: {}]
  %s15 = sld [smem:[#allocation0]]
  $region135: #{tnet_forward.1} parent=0
    _
  %s17 = ssub.s32 1, %s15
  %s18 = scalar_select 0, %s17, %s15
  $region1: #{tnet_forward.1} parent=0
    #allocation2 [shape = 'u8[393216]{0}', space=vmem, size = 0x60000, scoped, tag = 'input window, operand 0']
    #allocation3 [shape = 'u8[1048576]{0}', space=vmem, size = 0x100000, scoped, tag = 'input window, operand 1']
    loop: start=0, step=1, limit=6
    $region2: #{tnet_forward.1} parent=1 // loop_pre_header
      _
    $region3: #{tnet_forward.1} parent=1 // loop_header
      %s20 = sphi 0, %s24
      %p21 = scmp.ge.s32.totalorder %s20, 6
      %s27 = sphi 0, %s39
      %s28 = sphi 0, %s35
      %s29 = sphi 0, %s27
      %s30 = sphi 0, %s28
      %s31 = sphi 0, %s29
      %s32 = sphi 0, %s30
      %s44 = sphi 0, %s46
      %s47 = sphi 0, %s44
      %s48 = sphi 0, %s47
      %s64 = sphi 0, %s48
      %s72 = sphi 0, %s74
      %s75 = sphi 0, %s72
      %s76 = sphi 0, %s75
      %s92 = sphi 0, %s76
      %s100 = sphi 0, %s102
      %s103 = sphi 0, %s100
      %s104 = sphi 0, %s103
      %s120 = sphi 0, %s104
      %s124 = sphi 0, %s124
      %s126 = sphi 0, %s124
      %s127 = sphi 0, %s126
      %s141 = sphi 0, %s127
      %s145 = sphi 0, %s145
      %s147 = sphi 0, %s145
      %s148 = sphi 0, %s147
      %s162 = sphi 0, %s148
      %s166 = sphi 0, %s166
      %s168 = sphi 0, %s166
      %s169 = sphi 0, %s168
      %s183 = sphi 0, %s169
      %s187 = sphi 0, %s187
      %s189 = sphi 0, %s187
      %s190 = sphi 0, %s189
      %s204 = sphi 0, %s190
      %s208 = sphi 0, %s208
      %s210 = sphi 0, %s208
      %s211 = sphi 0, %s210
      %s225 = sphi 0, %s211
      %s229 = sphi 0, %s229
      %s231 = sphi 0, %s229
      %s232 = sphi 0, %s231
      %s246 = sphi 0, %s232
      %s250 = sphi 0, %s250
      %s252 = sphi 0, %s250
      %s253 = sphi 0, %s252
      %s267 = sphi 0, %s253
      %s271 = sphi 0, %s271
      %s273 = sphi 0, %s271
      %s274 = sphi 0, %s273
      %s288 = sphi 0, %s274
      %s292 = sphi 0, %s292
      %s294 = sphi 0, %s292
      %s295 = sphi 0, %s294
      %s309 = sphi 0, %s295
      %s313 = sphi 0, %s313
      %s315 = sphi 0, %s313
      %s316 = sphi 0, %s315
      %s330 = sphi 0, %s316
      %s334 = sphi 0, %s334
      %s336 = sphi 0, %s334
      %s337 = sphi 0, %s336
      %s351 = sphi 0, %s337
      %s359 = sphi 0, %s361
      %s362 = sphi 0, %s359
      %s363 = sphi 0, %s362
      %s379 = sphi 0, %s363
    $region4: #{tnet_forward.1} parent=1 // loop_header_branch
      %23 = sbr.rel (%p21) target = $region8
    $region5: #{tnet_forward.1} parent=1 // loop_body
      %s25 = ssub.s32 %s20, 1
      %s26 = ssub.s32 %s20, 2
      %s33 = sadd.s32 1, %s28
      %p34 = scmp.ge.s32.totalorder %s33, 2
      %s35 = scalar_select %p34, 0, %s33
      %s36 = sadd.s32 1, %s27
      %s37 = scalar_select %p34, %s36, %s27
      %p38 = scmp.ge.s32.totalorder %s37, 2
      %s39 = scalar_select %p38, 0, %s37
      %s40 = ssub.s32 %s27, %s39
      %s41 = ssub.s32 %s28, %s35
      %s42 = sor.u32 %s40, %s41
      %p43 = scmp.eq.s32.totalorder %s42, 0
      %s45 = sadd.s32 %s44, 1
      %s46 = scalar_select %p43, %s44, %s45
      %p49 = pneg %p43
      %p50 = scmp.eq.s32.totalorder %s20, 3
      %p51 = por %p49, %p50
      %p52 = scmp.ne.s32.totalorder %s44, %s47
      %p53 = scmp.eq.s32.totalorder %s20, 0
      %p54 = por %p52, %p53
      %p55 = scmp.ne.s32.totalorder %s44, %s47
      %p56 = scmp.eq.s32.totalorder %s25, 3
      %p57 = por %p55, %p56
      %p58 = scmp.ne.s32.totalorder %s47, %s48
      %p59 = scmp.eq.s32.totalorder %s25, 0
      %p60 = por %p58, %p59
      %p61 = scmp.ne.s32.totalorder %s47, %s48
      %p62 = scmp.eq.s32.totalorder %s26, 3
      %p63 = por %p61, %p62
      %p65 = scmp.ne.s32.totalorder %s48, %s64
      %p66 = scmp.eq.s32.totalorder %s26, 0
      %p67 = por %p65, %p66
      %s68 = ssub.s32 %s27, %s39
      %s69 = ssub.s32 %s28, %s35
      %s70 = sor.u32 %s68, %s69
      %p71 = scmp.eq.s32.totalorder %s70, 0
      %s73 = sadd.s32 %s72, 1
      %s74 = scalar_select %p71, %s72, %s73
      %p77 = pneg %p71
      %p78 = scmp.eq.s32.totalorder %s20, 3
      %p79 = por %p77, %p78
      %p80 = scmp.ne.s32.totalorder %s72, %s75
      %p81 = scmp.eq.s32.totalorder %s20, 0
      %p82 = por %p80, %p81
      %p83 = scmp.ne.s32.totalorder %s72, %s75
      %p84 = scmp.eq.s32.totalorder %s25, 3
      %p85 = por %p83, %p84
      %p86 = scmp.ne.s32.totalorder %s75, %s76
      %p87 = scmp.eq.s32.totalorder %s25, 0
      %p88 = por %p86, %p87
      %p89 = scmp.ne.s32.totalorder %s75, %s76
      %p90 = scmp.eq.s32.totalorder %s26, 3
      %p91 = por %p89, %p90
      %p93 = scmp.ne.s32.totalorder %s76, %s92
      %p94 = scmp.eq.s32.totalorder %s26, 0
      %p95 = por %p93, %p94
      %s96 = ssub.s32 %s27, %s39
      %s97 = ssub.s32 %s28, %s35
      %s98 = sor.u32 %s96, %s97
      %p99 = scmp.eq.s32.totalorder %s98, 0
      %s101 = sadd.s32 %s100, 1
      %s102 = scalar_select %p99, %s100, %s101
      %p105 = pneg %p99
      %p106 = scmp.eq.s32.totalorder %s20, 3
      %p107 = por %p105, %p106
      %p108 = scmp.ne.s32.totalorder %s100, %s103
      %p109 = scmp.eq.s32.totalorder %s20, 0
      %p110 = por %p108, %p109
      %p111 = scmp.ne.s32.totalorder %s100, %s103
      %p112 = scmp.eq.s32.totalorder %s25, 3
      %p113 = por %p111, %p112
      %p114 = scmp.ne.s32.totalorder %s103, %s104
      %p115 = scmp.eq.s32.totalorder %s25, 0
      %p116 = por %p114, %p115
      %p117 = scmp.ne.s32.totalorder %s103, %s104
      %p118 = scmp.eq.s32.totalorder %s26, 3
      %p119 = por %p117, %p118
      %p121 = scmp.ne.s32.totalorder %s104, %s120
      %p122 = scmp.eq.s32.totalorder %s26, 0
      %p123 = por %p121, %p122
      %s125 = sadd.s32 %s124, 1
      %p128 = scmp.eq.s32.totalorder %s20, 3
      %p129 = scmp.ne.s32.totalorder %s124, %s126
      %p130 = scmp.eq.s32.totalorder %s20, 0
      %p131 = por %p129, %p130
      %p132 = scmp.ne.s32.totalorder %s124, %s126
      %p133 = scmp.eq.s32.totalorder %s25, 3
      %p134 = por %p132, %p133
      %p135 = scmp.ne.s32.totalorder %s126, %s127
      %p136 = scmp.eq.s32.totalorder %s25, 0
      %p137 = por %p135, %p136
      %p138 = scmp.ne.s32.totalorder %s126, %s127
      %p139 = scmp.eq.s32.totalorder %s26, 3
      %p140 = por %p138, %p139
      %p142 = scmp.ne.s32.totalorder %s127, %s141
      %p143 = scmp.eq.s32.totalorder %s26, 0
      %p144 = por %p142, %p143
      %s146 = sadd.s32 %s145, 1
      %p149 = scmp.eq.s32.totalorder %s20, 3
      %p150 = scmp.ne.s32.totalorder %s145, %s147
      %p151 = scmp.eq.s32.totalorder %s20, 0
      %p152 = por %p150, %p151
      %p153 = scmp.ne.s32.totalorder %s145, %s147
      %p154 = scmp.eq.s32.totalorder %s25, 3
      %p155 = por %p153, %p154
      %p156 = scmp.ne.s32.totalorder %s147, %s148
      %p157 = scmp.eq.s32.totalorder %s25, 0
      %p158 = por %p156, %p157
      %p159 = scmp.ne.s32.totalorder %s147, %s148
      %p160 = scmp.eq.s32.totalorder %s26, 3
      %p161 = por %p159, %p160
      %p163 = scmp.ne.s32.totalorder %s148, %s162
      %p164 = scmp.eq.s32.totalorder %s26, 0
      %p165 = por %p163, %p164
      %s167 = sadd.s32 %s166, 1
      %p170 = scmp.eq.s32.totalorder %s20, 3
      %p171 = scmp.ne.s32.totalorder %s166, %s168
      %p172 = scmp.eq.s32.totalorder %s20, 0
      %p173 = por %p171, %p172
      %p174 = scmp.ne.s32.totalorder %s166, %s168
      %p175 = scmp.eq.s32.totalorder %s25, 3
      %p176 = por %p174, %p175
      %p177 = scmp.ne.s32.totalorder %s168, %s169
      %p178 = scmp.eq.s32.totalorder %s25, 0
      %p179 = por %p177, %p178
      %p180 = scmp.ne.s32.totalorder %s168, %s169
      %p181 = scmp.eq.s32.totalorder %s26, 3
      %p182 = por %p180, %p181
      %p184 = scmp.ne.s32.totalorder %s169, %s183
      %p185 = scmp.eq.s32.totalorder %s26, 0
      %p186 = por %p184, %p185
      %s188 = sadd.s32 %s187, 1
      %p191 = scmp.eq.s32.totalorder %s20, 3
      %p192 = scmp.ne.s32.totalorder %s187, %s189
      %p193 = scmp.eq.s32.totalorder %s20, 0
      %p194 = por %p192, %p193
      %p195 = scmp.ne.s32.totalorder %s187, %s189
      %p196 = scmp.eq.s32.totalorder %s25, 3
      %p197 = por %p195, %p196
      %p198 = scmp.ne.s32.totalorder %s189, %s190
      %p199 = scmp.eq.s32.totalorder %s25, 0
      %p200 = por %p198, %p199
      %p201 = scmp.ne.s32.totalorder %s189, %s190
      %p202 = scmp.eq.s32.totalorder %s26, 3
      %p203 = por %p201, %p202
      %p205 = scmp.ne.s32.totalorder %s190, %s204
      %p206 = scmp.eq.s32.totalorder %s26, 0
      %p207 = por %p205, %p206
      %s209 = sadd.s32 %s208, 1
      %p212 = scmp.eq.s32.totalorder %s20, 3
      %p213 = scmp.ne.s32.totalorder %s208, %s210
      %p214 = scmp.eq.s32.totalorder %s20, 0
      %p215 = por %p213, %p214
      %p216 = scmp.ne.s32.totalorder %s208, %s210
      %p217 = scmp.eq.s32.totalorder %s25, 3
      %p218 = por %p216, %p217
      %p219 = scmp.ne.s32.totalorder %s210, %s211
      %p220 = scmp.eq.s32.totalorder %s25, 0
      %p221 = por %p219, %p220
      %p222 = scmp.ne.s32.totalorder %s210, %s211
      %p223 = scmp.eq.s32.totalorder %s26, 3
      %p224 = por %p222, %p223
      %p226 = scmp.ne.s32.totalorder %s211, %s225
      %p227 = scmp.eq.s32.totalorder %s26, 0
      %p228 = por %p226, %p227
      %s230 = sadd.s32 %s229, 1
      %p233 = scmp.eq.s32.totalorder %s20, 3
      %p234 = scmp.ne.s32.totalorder %s229, %s231
      %p235 = scmp.eq.s32.totalorder %s20, 0
      %p236 = por %p234, %p235
      %p237 = scmp.ne.s32.totalorder %s229, %s231
      %p238 = scmp.eq.s32.totalorder %s25, 3
      %p239 = por %p237, %p238
      %p240 = scmp.ne.s32.totalorder %s231, %s232
      %p241 = scmp.eq.s32.totalorder %s25, 0
      %p242 = por %p240, %p241
      %p243 = scmp.ne.s32.totalorder %s231, %s232
      %p244 = scmp.eq.s32.totalorder %s26, 3
      %p245 = por %p243, %p244
      %p247 = scmp.ne.s32.totalorder %s232, %s246
      %p248 = scmp.eq.s32.totalorder %s26, 0
      %p249 = por %p247, %p248
      %s251 = sadd.s32 %s250, 1
      %p254 = scmp.eq.s32.totalorder %s20, 3
      %p255 = scmp.ne.s32.totalorder %s250, %s252
      %p256 = scmp.eq.s32.totalorder %s20, 0
      %p257 = por %p255, %p256
      %p258 = scmp.ne.s32.totalorder %s250, %s252
      %p259 = scmp.eq.s32.totalorder %s25, 3
      %p260 = por %p258, %p259
      %p261 = scmp.ne.s32.totalorder %s252, %s253
      %p262 = scmp.eq.s32.totalorder %s25, 0
      %p263 = por %p261, %p262
      %p264 = scmp.ne.s32.totalorder %s252, %s253
      %p265 = scmp.eq.s32.totalorder %s26, 3
      %p266 = por %p264, %p265
      %p268 = scmp.ne.s32.totalorder %s253, %s267
      %p269 = scmp.eq.s32.totalorder %s26, 0
      %p270 = por %p268, %p269
      %s272 = sadd.s32 %s271, 1
      %p275 = scmp.eq.s32.totalorder %s20, 3
      %p276 = scmp.ne.s32.totalorder %s271, %s273
      %p277 = scmp.eq.s32.totalorder %s20, 0
      %p278 = por %p276, %p277
      %p279 = scmp.ne.s32.totalorder %s271, %s273
      %p280 = scmp.eq.s32.totalorder %s25, 3
      %p281 = por %p279, %p280
      %p282 = scmp.ne.s32.totalorder %s273, %s274
      %p283 = scmp.eq.s32.totalorder %s25, 0
      %p284 = por %p282, %p283
      %p285 = scmp.ne.s32.totalorder %s273, %s274
      %p286 = scmp.eq.s32.totalorder %s26, 3
      %p287 = por %p285, %p286
      %p289 = scmp.ne.s32.totalorder %s274, %s288
      %p290 = scmp.eq.s32.totalorder %s26, 0
      %p291 = por %p289, %p290
      %s293 = sadd.s32 %s292, 1
      %p296 = scmp.eq.s32.totalorder %s20, 3
      %p297 = scmp.ne.s32.totalorder %s292, %s294
      %p298 = scmp.eq.s32.totalorder %s20, 0
      %p299 = por %p297, %p298
      %p300 = scmp.ne.s32.totalorder %s292, %s294
      %p301 = scmp.eq.s32.totalorder %s25, 3
      %p302 = por %p300, %p301
      %p303 = scmp.ne.s32.totalorder %s294, %s295
      %p304 = scmp.eq.s32.totalorder %s25, 0
      %p305 = por %p303, %p304
      %p306 = scmp.ne.s32.totalorder %s294, %s295
      %p307 = scmp.eq.s32.totalorder %s26, 3
      %p308 = por %p306, %p307
      %p310 = scmp.ne.s32.totalorder %s295, %s309
      %p311 = scmp.eq.s32.totalorder %s26, 0
      %p312 = por %p310, %p311
      %s314 = sadd.s32 %s313, 1
      %p317 = scmp.eq.s32.totalorder %s20, 3
      %p318 = scmp.ne.s32.totalorder %s313, %s315
      %p319 = scmp.eq.s32.totalorder %s20, 0
      %p320 = por %p318, %p319
      %p321 = scmp.ne.s32.totalorder %s313, %s315
      %p322 = scmp.eq.s32.totalorder %s25, 3
      %p323 = por %p321, %p322
      %p324 = scmp.ne.s32.totalorder %s315, %s316
      %p325 = scmp.eq.s32.totalorder %s25, 0
      %p326 = por %p324, %p325
      %p327 = scmp.ne.s32.totalorder %s315, %s316
      %p328 = scmp.eq.s32.totalorder %s26, 3
      %p329 = por %p327, %p328
      %p331 = scmp.ne.s32.totalorder %s316, %s330
      %p332 = scmp.eq.s32.totalorder %s26, 0
      %p333 = por %p331, %p332
      %s335 = sadd.s32 %s334, 1
      %p338 = scmp.eq.s32.totalorder %s20, 3
      %p339 = scmp.ne.s32.totalorder %s334, %s336
      %p340 = scmp.eq.s32.totalorder %s20, 0
      %p341 = por %p339, %p340
      %p342 = scmp.ne.s32.totalorder %s334, %s336
      %p343 = scmp.eq.s32.totalorder %s25, 3
      %p344 = por %p342, %p343
      %p345 = scmp.ne.s32.totalorder %s336, %s337
      %p346 = scmp.eq.s32.totalorder %s25, 0
      %p347 = por %p345, %p346
      %p348 = scmp.ne.s32.totalorder %s336, %s337
      %p349 = scmp.eq.s32.totalorder %s26, 3
      %p350 = por %p348, %p349
      %p352 = scmp.ne.s32.totalorder %s337, %s351
      %p353 = scmp.eq.s32.totalorder %s26, 0
      %p354 = por %p352, %p353
      %s355 = ssub.s32 %s27, %s39
      %s356 = ssub.s32 %s28, %s35
      %s357 = sor.u32 %s355, %s356
      %p358 = scmp.eq.s32.totalorder %s357, 0
      %s360 = sadd.s32 %s359, 1
      %s361 = scalar_select %p358, %s359, %s360
      %p364 = pneg %p358
      %p365 = scmp.eq.s32.totalorder %s20, 3
      %p366 = por %p364, %p365
      %p367 = scmp.ne.s32.totalorder %s359, %s362
      %p368 = scmp.eq.s32.totalorder %s20, 0
      %p369 = por %p367, %p368
      %p370 = scmp.ne.s32.totalorder %s359, %s362
      %p371 = scmp.eq.s32.totalorder %s25, 3
      %p372 = por %p370, %p371
      %p373 = scmp.ne.s32.totalorder %s362, %s363
      %p374 = scmp.eq.s32.totalorder %s25, 0
      %p375 = por %p373, %p374
      %p376 = scmp.ne.s32.totalorder %s362, %s363
      %p377 = scmp.eq.s32.totalorder %s26, 3
      %p378 = por %p376, %p377
      %p380 = scmp.ne.s32.totalorder %s363, %s379
      %p381 = scmp.eq.s32.totalorder %s26, 0
      %p382 = por %p380, %p381
      %p383 = scmp.le.s32.totalorder 1, %s20
      %p384 = scmp.lt.s32.totalorder %s20, 5
      %p385 = pnand %p383, %p384
      %p386 = pneg %p385
      // Predicated region
      $region9: #{tnet_forward.1} parent=5 // pred_check
        _
      $region10: #{tnet_forward.1} parent=5 // pred_check_branch
        %388 = sbr.rel (%p385) target = $region12
      $region11: #{tnet_forward.1} parent=5 // pred_region
        %s389 = ssub.s32 %s20, 1
        // Predicated region
        $region13: #{tnet_forward.1} parent=11 // pred_check
          %p390 = pneg %p137
        $region14: #{tnet_forward.1} parent=11 // pred_check_branch
          %392 = sbr.rel (%p390) target = $region16
        $region15: #{tnet_forward.1} parent=11 // pred_region
          _
        $region16: #{tnet_forward.1} parent=11 // pred_fallthru
          _
        // Predicated region
        $region17: #{tnet_forward.1} parent=11 // pred_check
          %p393 = pneg %p158
        $region18: #{tnet_forward.1} parent=11 // pred_check_branch
          %395 = sbr.rel (%p393) target = $region20
        $region19: #{tnet_forward.1} parent=11 // pred_region
          _
        $region20: #{tnet_forward.1} parent=11 // pred_fallthru
          _
        // Predicated region
        $region21: #{tnet_forward.1} parent=11 // pred_check
          %p396 = pneg %p179
        $region22: #{tnet_forward.1} parent=11 // pred_check_branch
          %398 = sbr.rel (%p396) target = $region24
        $region23: #{tnet_forward.1} parent=11 // pred_region
          _
        $region24: #{tnet_forward.1} parent=11 // pred_fallthru
          _
        // Predicated region
        $region25: #{tnet_forward.1} parent=11 // pred_check
          %p399 = pneg %p200
        $region26: #{tnet_forward.1} parent=11 // pred_check_branch
          %401 = sbr.rel (%p399) target = $region28
        $region27: #{tnet_forward.1} parent=11 // pred_region
          _
        $region28: #{tnet_forward.1} parent=11 // pred_fallthru
          _
        // Predicated region
        $region29: #{tnet_forward.1} parent=11 // pred_check
          %p402 = pneg %p221
        $region30: #{tnet_forward.1} parent=11 // pred_check_branch
          %404 = sbr.rel (%p402) target = $region32
        $region31: #{tnet_forward.1} parent=11 // pred_region
          _
        $region32: #{tnet_forward.1} parent=11 // pred_fallthru
          _
        // Predicated region
        $region33: #{tnet_forward.1} parent=11 // pred_check
          %p405 = pneg %p242
        $region34: #{tnet_forward.1} parent=11 // pred_check_branch
          %407 = sbr.rel (%p405) target = $region36
        $region35: #{tnet_forward.1} parent=11 // pred_region
          _
        $region36: #{tnet_forward.1} parent=11 // pred_fallthru
          _
        // Predicated region
        $region37: #{tnet_forward.1} parent=11 // pred_check
          %p408 = pneg %p263
        $region38: #{tnet_forward.1} parent=11 // pred_check_branch
          %410 = sbr.rel (%p408) target = $region40
        $region39: #{tnet_forward.1} parent=11 // pred_region
          _
        $region40: #{tnet_forward.1} parent=11 // pred_fallthru
          _
        // Predicated region
        $region41: #{tnet_forward.1} parent=11 // pred_check
          %p411 = pneg %p284
        $region42: #{tnet_forward.1} parent=11 // pred_check_branch
          %413 = sbr.rel (%p411) target = $region44
        $region43: #{tnet_forward.1} parent=11 // pred_region
          _
        $region44: #{tnet_forward.1} parent=11 // pred_fallthru
          _
        // Predicated region
        $region45: #{tnet_forward.1} parent=11 // pred_check
          %p414 = pneg %p305
        $region46: #{tnet_forward.1} parent=11 // pred_check_branch
          %416 = sbr.rel (%p414) target = $region48
        $region47: #{tnet_forward.1} parent=11 // pred_region
          _
        $region48: #{tnet_forward.1} parent=11 // pred_fallthru
          _
        // Predicated region
        $region49: #{tnet_forward.1} parent=11 // pred_check
          %p417 = pneg %p326
        $region50: #{tnet_forward.1} parent=11 // pred_check_branch
          %419 = sbr.rel (%p417) target = $region52
        $region51: #{tnet_forward.1} parent=11 // pred_region
          _
        $region52: #{tnet_forward.1} parent=11 // pred_fallthru
          _
        // Predicated region
        $region53: #{tnet_forward.1} parent=11 // pred_check
          %p420 = pneg %p347
        $region54: #{tnet_forward.1} parent=11 // pred_check_branch
          %422 = sbr.rel (%p420) target = $region56
        $region55: #{tnet_forward.1} parent=11 // pred_region
          _
        $region56: #{tnet_forward.1} parent=11 // pred_fallthru
          _
      $region12: #{tnet_forward.1} parent=5 // pred_fallthru
        _
      %p423 = scmp.lt.s32.totalorder %s20, 4
      // Predicated region
      $region57: #{tnet_forward.1} parent=5 // pred_check
        %p424 = pneg %p423
      $region58: #{tnet_forward.1} parent=5 // pred_check_branch
        %426 = sbr.rel (%p424) target = $region60
      $region59: #{tnet_forward.1} parent=5 // pred_region
        // Predicated region
        $region61: #{tnet_forward.1} parent=59 // pred_check
          %p427 = pneg %p54
        $region62: #{tnet_forward.1} parent=59 // pred_check_branch
          %429 = sbr.rel (%p427) target = $region64
        $region63: #{tnet_forward.1} parent=59 // pred_region
          %s430 = sand.u32 %s44, 1
          %s431 = sand.u32 %s44, 1
          %s432 = smul.addr %s431, 384
          %s433 = scalar_lea.vmem [#allocation2], %s432
          %s434 = smul.u32 2, %s28
          %s435 = smul.addr %s27, 96
          %s436 = sadd.s32 %s434, %s435
          %s437 = smul.addr %s436, 8
          %s438 = scalar_lea.vmem %s0, %s437
          // Predicated region
          $region65: #{tnet_forward.1} parent=63 // pred_check
            _
          $region66: #{tnet_forward.1} parent=63 // pred_check_branch
            %440 = sbr.rel (0) target = $region68
          $region67: #{tnet_forward.1} parent=63 // pred_region
            // Predicated region
            $region69: #{tnet_forward.1} parent=67 // pred_check
              _
            $region70: #{tnet_forward.1} parent=67 // pred_check_branch
              %442 = sbr.rel (0) target = $region72
            $region71: #{tnet_forward.1} parent=67 // pred_region
              loop: start=0, step=1, limit=1
              $region73: #{tnet_forward.1} parent=71 // loop_pre_header
                _
              $region74: #{tnet_forward.1} parent=71 // loop_header
                %s444 = sphi 0, %s448
                %p445 = scmp.ge.s32.totalorder %s444, 1
                %s449 = sphi %s438, %s438
                %s450 = sphi %s433, %s433
              $region75: #{tnet_forward.1} parent=71 // loop_header_branch
                %447 = sbr.rel (%p445) target = $region79
              $region76: #{tnet_forward.1} parent=71 // loop_body
                %v451 = vld [vmem:[%s449] sm:$0xff]
                %452 = vst [vmem:[%s450] sm:$0xff] %v451
                %v453 = vld [vmem:[%s449 + $0x8] sm:$0xff]
                %454 = vst [vmem:[%s450 + $0x8] sm:$0xff] %v453
                %v455 = vld [vmem:[%s449 + $0x20] sm:$0xff]
                %456 = vst [vmem:[%s450 + $0x10] sm:$0xff] %v455
                %v457 = vld [vmem:[%s449 + $0x28] sm:$0xff]
                %458 = vst [vmem:[%s450 + $0x18] sm:$0xff] %v457
                %v459 = vld [vmem:[%s449 + $0x40] sm:$0xff]
                %460 = vst [vmem:[%s450 + $0x20] sm:$0xff] %v459
                %v461 = vld [vmem:[%s449 + $0x48] sm:$0xff]
                %462 = vst [vmem:[%s450 + $0x28] sm:$0xff] %v461
                %v463 = vld [vmem:[%s449 + $0x60] sm:$0xff]
                %464 = vst [vmem:[%s450 + $0x30] sm:$0xff] %v463
                %v465 = vld [vmem:[%s449 + $0x68] sm:$0xff]
                %466 = vst [vmem:[%s450 + $0x38] sm:$0xff] %v465
                %v467 = vld [vmem:[%s449 + $0x80] sm:$0xff]
                %468 = vst [vmem:[%s450 + $0x40] sm:$0xff] %v467
                %v469 = vld [vmem:[%s449 + $0x88] sm:$0xff]
                %470 = vst [vmem:[%s450 + $0x48] sm:$0xff] %v469
                %v471 = vld [vmem:[%s449 + $0xa0] sm:$0xff]
                %472 = vst [vmem:[%s450 + $0x50] sm:$0xff] %v471
                %v473 = vld [vmem:[%s449 + $0xa8] sm:$0xff]
                %474 = vst [vmem:[%s450 + $0x58] sm:$0xff] %v473
                %v475 = vld [vmem:[%s449 + $0xc0] sm:$0xff]
                %476 = vst [vmem:[%s450 + $0x60] sm:$0xff] %v475
                %v477 = vld [vmem:[%s449 + $0xc8] sm:$0xff]
                %478 = vst [vmem:[%s450 + $0x68] sm:$0xff] %v477
                %v479 = vld [vmem:[%s449 + $0xe0] sm:$0xff]
                %480 = vst [vmem:[%s450 + $0x70] sm:$0xff] %v479
                %v481 = vld [vmem:[%s449 + $0xe8] sm:$0xff]
                %482 = vst [vmem:[%s450 + $0x78] sm:$0xff] %v481
                %v483 = vld [vmem:[%s449 + $0x100] sm:$0xff]
                %484 = vst [vmem:[%s450 + $0x80] sm:$0xff] %v483
                %v485 = vld [vmem:[%s449 + $0x108] sm:$0xff]
                %486 = vst [vmem:[%s450 + $0x88] sm:$0xff] %v485
                %v487 = vld [vmem:[%s449 + $0x120] sm:$0xff]
                %488 = vst [vmem:[%s450 + $0x90] sm:$0xff] %v487
                %v489 = vld [vmem:[%s449 + $0x128] sm:$0xff]
                %490 = vst [vmem:[%s450 + $0x98] sm:$0xff] %v489
                %v491 = vld [vmem:[%s449 + $0x140] sm:$0xff]
                %492 = vst [vmem:[%s450 + $0xa0] sm:$0xff] %v491
                %v493 = vld [vmem:[%s449 + $0x148] sm:$0xff]
                %494 = vst [vmem:[%s450 + $0xa8] sm:$0xff] %v493
                %v495 = vld [vmem:[%s449 + $0x160] sm:$0xff]
                %496 = vst [vmem:[%s450 + $0xb0] sm:$0xff] %v495
                %v497 = vld [vmem:[%s449 + $0x168] sm:$0xff]
                %498 = vst [vmem:[%s450 + $0xb8] sm:$0xff] %v497
                %v499 = vld [vmem:[%s449 + $0x180] sm:$0xff]
                %500 = vst [vmem:[%s450 + $0xc0] sm:$0xff] %v499
                %v501 = vld [vmem:[%s449 + $0x188] sm:$0xff]
                %502 = vst [vmem:[%s450 + $0xc8] sm:$0xff] %v501
                %v503 = vld [vmem:[%s449 + $0x1a0] sm:$0xff]
                %504 = vst [vmem:[%s450 + $0xd0] sm:$0xff] %v503
                %v505 = vld [vmem:[%s449 + $0x1a8] sm:$0xff]
                %506 = vst [vmem:[%s450 + $0xd8] sm:$0xff] %v505
                %v507 = vld [vmem:[%s449 + $0x1c0] sm:$0xff]
                %508 = vst [vmem:[%s450 + $0xe0] sm:$0xff] %v507
                %v509 = vld [vmem:[%s449 + $0x1c8] sm:$0xff]
                %510 = vst [vmem:[%s450 + $0xe8] sm:$0xff] %v509
                %v511 = vld [vmem:[%s449 + $0x1e0] sm:$0xff]
                %512 = vst [vmem:[%s450 + $0xf0] sm:$0xff] %v511
                %v513 = vld [vmem:[%s449 + $0x1e8] sm:$0xff]
                %514 = vst [vmem:[%s450 + $0xf8] sm:$0xff] %v513
                %v515 = vld [vmem:[%s449 + $0x200] sm:$0xff]
                %516 = vst [vmem:[%s450 + $0x100] sm:$0xff] %v515
                %v517 = vld [vmem:[%s449 + $0x208] sm:$0xff]
                %518 = vst [vmem:[%s450 + $0x108] sm:$0xff] %v517
                %v519 = vld [vmem:[%s449 + $0x220] sm:$0xff]
                %520 = vst [vmem:[%s450 + $0x110] sm:$0xff] %v519
                %v521 = vld [vmem:[%s449 + $0x228] sm:$0xff]
                %522 = vst [vmem:[%s450 + $0x118] sm:$0xff] %v521
                %v523 = vld [vmem:[%s449 + $0x240] sm:$0xff]
                %524 = vst [vmem:[%s450 + $0x120] sm:$0xff] %v523
                %v525 = vld [vmem:[%s449 + $0x248] sm:$0xff]
                %526 = vst [vmem:[%s450 + $0x128] sm:$0xff] %v525
                %v527 = vld [vmem:[%s449 + $0x260] sm:$0xff]
                %528 = vst [vmem:[%s450 + $0x130] sm:$0xff] %v527
                %v529 = vld [vmem:[%s449 + $0x268] sm:$0xff]
                %530 = vst [vmem:[%s450 + $0x138] sm:$0xff] %v529
                %v531 = vld [vmem:[%s449 + $0x280] sm:$0xff]
                %532 = vst [vmem:[%s450 + $0x140] sm:$0xff] %v531
                %v533 = vld [vmem:[%s449 + $0x288] sm:$0xff]
                %534 = vst [vmem:[%s450 + $0x148] sm:$0xff] %v533
                %v535 = vld [vmem:[%s449 + $0x2a0] sm:$0xff]
                %536 = vst [vmem:[%s450 + $0x150] sm:$0xff] %v535
                %v537 = vld [vmem:[%s449 + $0x2a8] sm:$0xff]
                %538 = vst [vmem:[%s450 + $0x158] sm:$0xff] %v537
                %v539 = vld [vmem:[%s449 + $0x2c0] sm:$0xff]
                %540 = vst [vmem:[%s450 + $0x160] sm:$0xff] %v539
                %v541 = vld [vmem:[%s449 + $0x2c8] sm:$0xff]
                %542 = vst [vmem:[%s450 + $0x168] sm:$0xff] %v541
                %v543 = vld [vmem:[%s449 + $0x2e0] sm:$0xff]
                %544 = vst [vmem:[%s450 + $0x170] sm:$0xff] %v543
                %v545 = vld [vmem:[%s449 + $0x2e8] sm:$0xff]
                %546 = vst [vmem:[%s450 + $0x178] sm:$0xff] %v545
              $region77: #{tnet_forward.1} parent=71 // loop_footer
                %s448 = sadd.s32 1, %s444
              $region78: #{tnet_forward.1} parent=71 // loop_footer_branch
                %443 = sbr.rel target = $region74
              $region79: #{tnet_forward.1} parent=71 // loop_exit
                _
            $region72: #{tnet_forward.1} parent=67 // pred_fallthru
              _
            // Predicated region
            $region80: #{tnet_forward.1} parent=67 // pred_check
              _
            $region81: #{tnet_forward.1} parent=67 // pred_check_branch
              %548 = sbr.rel target = $region83
            $region82: #{tnet_forward.1} parent=67 // pred_region
              _
            $region83: #{tnet_forward.1} parent=67 // pred_fallthru
              _
          $region68: #{tnet_forward.1} parent=63 // pred_fallthru
            _
          %549 = vnop
        $region64: #{tnet_forward.1} parent=59 // pred_fallthru
          _
        // Predicated region
        $region84: #{tnet_forward.1} parent=59 // pred_check
          %p550 = pneg %p82
        $region85: #{tnet_forward.1} parent=59 // pred_check_branch
          %552 = sbr.rel (%p550) target = $region87
        $region86: #{tnet_forward.1} parent=59 // pred_region
          %s553 = sand.u32 %s72, 1
          %s554 = sand.u32 %s72, 1
          %s555 = smul.addr %s554, 1024
          %s556 = scalar_lea.vmem [#allocation3], %s555
          %s557 = smul.u32 2, %s28
          %s558 = smul.addr %s27, 256
          %s559 = sadd.s32 %s557, %s558
          %s560 = smul.addr %s559, 8
          %s561 = scalar_lea.vmem %s1, %s560
          // Predicated region
          $region88: #{tnet_forward.1} parent=86 // pred_check
            _
          $region89: #{tnet_forward.1} parent=86 // pred_check_branch
            %563 = sbr.rel (0) target = $region91
          $region90: #{tnet_forward.1} parent=86 // pred_region
            // Predicated region
            $region92: #{tnet_forward.1} parent=90 // pred_check
              _
            $region93: #{tnet_forward.1} parent=90 // pred_check_branch
              %565 = sbr.rel (0) target = $region95
            $region94: #{tnet_forward.1} parent=90 // pred_region
              loop: start=0, step=1, limit=1
              $region96: #{tnet_forward.1} parent=94 // loop_pre_header
                _
              $region97: #{tnet_forward.1} parent=94 // loop_header
                %s567 = sphi 0, %s571
                %p568 = scmp.ge.s32.totalorder %s567, 1
                %s572 = sphi %s561, %s561
                %s573 = sphi %s556, %s556
              $region98: #{tnet_forward.1} parent=94 // loop_header_branch
                %570 = sbr.rel (%p568) target = $region102
              $region99: #{tnet_forward.1} parent=94 // loop_body
                %v574 = vld [vmem:[%s572] sm:$0xff]
                %575 = vst [vmem:[%s573] sm:$0xff] %v574
                %v576 = vld [vmem:[%s572 + $0x8] sm:$0xff]
                %577 = vst [vmem:[%s573 + $0x8] sm:$0xff] %v576
                %v578 = vld [vmem:[%s572 + $0x20] sm:$0xff]
                %579 = vst [vmem:[%s573 + $0x10] sm:$0xff] %v578
                %v580 = vld [vmem:[%s572 + $0x28] sm:$0xff]
                %581 = vst [vmem:[%s573 + $0x18] sm:$0xff] %v580
                %v582 = vld [vmem:[%s572 + $0x40] sm:$0xff]
                %583 = vst [vmem:[%s573 + $0x20] sm:$0xff] %v582
                %v584 = vld [vmem:[%s572 + $0x48] sm:$0xff]
                %585 = vst [vmem:[%s573 + $0x28] sm:$0xff] %v584
                %v586 = vld [vmem:[%s572 + $0x60] sm:$0xff]
                %587 = vst [vmem:[%s573 + $0x30] sm:$0xff] %v586
                %v588 = vld [vmem:[%s572 + $0x68] sm:$0xff]
                %589 = vst [vmem:[%s573 + $0x38] sm:$0xff] %v588
                %v590 = vld [vmem:[%s572 + $0x80] sm:$0xff]
                %591 = vst [vmem:[%s573 + $0x40] sm:$0xff] %v590
                %v592 = vld [vmem:[%s572 + $0x88] sm:$0xff]
                %593 = vst [vmem:[%s573 + $0x48] sm:$0xff] %v592
                %v594 = vld [vmem:[%s572 + $0xa0] sm:$0xff]
                %595 = vst [vmem:[%s573 + $0x50] sm:$0xff] %v594
                %v596 = vld [vmem:[%s572 + $0xa8] sm:$0xff]
                %597 = vst [vmem:[%s573 + $0x58] sm:$0xff] %v596
                %v598 = vld [vmem:[%s572 + $0xc0] sm:$0xff]
                %599 = vst [vmem:[%s573 + $0x60] sm:$0xff] %v598
                %v600 = vld [vmem:[%s572 + $0xc8] sm:$0xff]
                %601 = vst [vmem:[%s573 + $0x68] sm:$0xff] %v600
                %v602 = vld [vmem:[%s572 + $0xe0] sm:$0xff]
                %603 = vst [vmem:[%s573 + $0x70] sm:$0xff] %v602
                %v604 = vld [vmem:[%s572 + $0xe8] sm:$0xff]
                %605 = vst [vmem:[%s573 + $0x78] sm:$0xff] %v604
                %v606 = vld [vmem:[%s572 + $0x100] sm:$0xff]
                %607 = vst [vmem:[%s573 + $0x80] sm:$0xff] %v606
                %v608 = vld [vmem:[%s572 + $0x108] sm:$0xff]
                %609 = vst [vmem:[%s573 + $0x88] sm:$0xff] %v608
                %v610 = vld [vmem:[%s572 + $0x120] sm:$0xff]
                %611 = vst [vmem:[%s573 + $0x90] sm:$0xff] %v610
                %v612 = vld [vmem:[%s572 + $0x128] sm:$0xff]
                %613 = vst [vmem:[%s573 + $0x98] sm:$0xff] %v612
                %v614 = vld [vmem:[%s572 + $0x140] sm:$0xff]
                %615 = vst [vmem:[%s573 + $0xa0] sm:$0xff] %v614
                %v616 = vld [vmem:[%s572 + $0x148] sm:$0xff]
                %617 = vst [vmem:[%s573 + $0xa8] sm:$0xff] %v616
                %v618 = vld [vmem:[%s572 + $0x160] sm:$0xff]
                %619 = vst [vmem:[%s573 + $0xb0] sm:$0xff] %v618
                %v620 = vld [vmem:[%s572 + $0x168] sm:$0xff]
                %621 = vst [vmem:[%s573 + $0xb8] sm:$0xff] %v620
                %v622 = vld [vmem:[%s572 + $0x180] sm:$0xff]
                %623 = vst [vmem:[%s573 + $0xc0] sm:$0xff] %v622
                %v624 = vld [vmem:[%s572 + $0x188] sm:$0xff]
                %625 = vst [vmem:[%s573 + $0xc8] sm:$0xff] %v624
                %v626 = vld [vmem:[%s572 + $0x1a0] sm:$0xff]
                %627 = vst [vmem:[%s573 + $0xd0] sm:$0xff] %v626
                %v628 = vld [vmem:[%s572 + $0x1a8] sm:$0xff]
                %629 = vst [vmem:[%s573 + $0xd8] sm:$0xff] %v628
                %v630 = vld [vmem:[%s572 + $0x1c0] sm:$0xff]
                %631 = vst [vmem:[%s573 + $0xe0] sm:$0xff] %v630
                %v632 = vld [vmem:[%s572 + $0x1c8] sm:$0xff]
                %633 = vst [vmem:[%s573 + $0xe8] sm:$0xff] %v632
                %v634 = vld [vmem:[%s572 + $0x1e0] sm:$0xff]
                %635 = vst [vmem:[%s573 + $0xf0] sm:$0xff] %v634
                %v636 = vld [vmem:[%s572 + $0x1e8] sm:$0xff]
                %637 = vst [vmem:[%s573 + $0xf8] sm:$0xff] %v636
                %v638 = vld [vmem:[%s572 + $0x200] sm:$0xff]
                %639 = vst [vmem:[%s573 + $0x100] sm:$0xff] %v638
                %v640 = vld [vmem:[%s572 + $0x208] sm:$0xff]
                %641 = vst [vmem:[%s573 + $0x108] sm:$0xff] %v640
                %v642 = vld [vmem:[%s572 + $0x220] sm:$0xff]
                %643 = vst [vmem:[%s573 + $0x110] sm:$0xff] %v642
                %v644 = vld [vmem:[%s572 + $0x228] sm:$0xff]
                %645 = vst [vmem:[%s573 + $0x118] sm:$0xff] %v644
                %v646 = vld [vmem:[%s572 + $0x240] sm:$0xff]
                %647 = vst [vmem:[%s573 + $0x120] sm:$0xff] %v646
                %v648 = vld [vmem:[%s572 + $0x248] sm:$0xff]
                %649 = vst [vmem:[%s573 + $0x128] sm:$0xff] %v648
                %v650 = vld [vmem:[%s572 + $0x260] sm:$0xff]
                %651 = vst [vmem:[%s573 + $0x130] sm:$0xff] %v650
                %v652 = vld [vmem:[%s572 + $0x268] sm:$0xff]
                %653 = vst [vmem:[%s573 + $0x138] sm:$0xff] %v652
                %v654 = vld [vmem:[%s572 + $0x280] sm:$0xff]
                %655 = vst [vmem:[%s573 + $0x140] sm:$0xff] %v654
                %v656 = vld [vmem:[%s572 + $0x288] sm:$0xff]
                %657 = vst [vmem:[%s573 + $0x148] sm:$0xff] %v656
                %v658 = vld [vmem:[%s572 + $0x2a0] sm:$0xff]
                %659 = vst [vmem:[%s573 + $0x150] sm:$0xff] %v658
                %v660 = vld [vmem:[%s572 + $0x2a8] sm:$0xff]
                %661 = vst [vmem:[%s573 + $0x158] sm:$0xff] %v660
                %v662 = vld [vmem:[%s572 + $0x2c0] sm:$0xff]
                %663 = vst [vmem:[%s573 + $0x160] sm:$0xff] %v662
                %v664 = vld [vmem:[%s572 + $0x2c8] sm:$0xff]
                %665 = vst [vmem:[%s573 + $0x168] sm:$0xff] %v664
                %v666 = vld [vmem:[%s572 + $0x2e0] sm:$0xff]
                %667 = vst [vmem:[%s573 + $0x170] sm:$0xff] %v666
                %v668 = vld [vmem:[%s572 + $0x2e8] sm:$0xff]
                %669 = vst [vmem:[%s573 + $0x178] sm:$0xff] %v668
                %v670 = vld [vmem:[%s572 + $0x300] sm:$0xff]
                %671 = vst [vmem:[%s573 + $0x180] sm:$0xff] %v670
                %v672 = vld [vmem:[%s572 + $0x308] sm:$0xff]
                %673 = vst [vmem:[%s573 + $0x188] sm:$0xff] %v672
                %v674 = vld [vmem:[%s572 + $0x320] sm:$0xff]
                %675 = vst [vmem:[%s573 + $0x190] sm:$0xff] %v674
                %v676 = vld [vmem:[%s572 + $0x328] sm:$0xff]
                %677 = vst [vmem:[%s573 + $0x198] sm:$0xff] %v676
                %v678 = vld [vmem:[%s572 + $0x340] sm:$0xff]
                %679 = vst [vmem:[%s573 + $0x1a0] sm:$0xff] %v678
                %v680 = vld [vmem:[%s572 + $0x348] sm:$0xff]
                %681 = vst [vmem:[%s573 + $0x1a8] sm:$0xff] %v680
                %v682 = vld [vmem:[%s572 + $0x360] sm:$0xff]
                %683 = vst [vmem:[%s573 + $0x1b0] sm:$0xff] %v682
                %v684 = vld [vmem:[%s572 + $0x368] sm:$0xff]
                %685 = vst [vmem:[%s573 + $0x1b8] sm:$0xff] %v684
                %v686 = vld [vmem:[%s572 + $0x380] sm:$0xff]
                %687 = vst [vmem:[%s573 + $0x1c0] sm:$0xff] %v686
                %v688 = vld [vmem:[%s572 + $0x388] sm:$0xff]
                %689 = vst [vmem:[%s573 + $0x1c8] sm:$0xff] %v688
                %v690 = vld [vmem:[%s572 + $0x3a0] sm:$0xff]
                %691 = vst [vmem:[%s573 + $0x1d0] sm:$0xff] %v690
                %v692 = vld [vmem:[%s572 + $0x3a8] sm:$0xff]
                %693 = vst [vmem:[%s573 + $0x1d8] sm:$0xff] %v692
                %v694 = vld [vmem:[%s572 + $0x3c0] sm:$0xff]
                %695 = vst [vmem:[%s573 + $0x1e0] sm:$0xff] %v694
                %v696 = vld [vmem:[%s572 + $0x3c8] sm:$0xff]
                %697 = vst [vmem:[%s573 + $0x1e8] sm:$0xff] %v696
                %v698 = vld [vmem:[%s572 + $0x3e0] sm:$0xff]
                %699 = vst [vmem:[%s573 + $0x1f0] sm:$0xff] %v698
                %v700 = vld [vmem:[%s572 + $0x3e8] sm:$0xff]
                %701 = vst [vmem:[%s573 + $0x1f8] sm:$0xff] %v700
                %v702 = vld [vmem:[%s572 + $0x400] sm:$0xff]
                %703 = vst [vmem:[%s573 + $0x200] sm:$0xff] %v702
                %v704 = vld [vmem:[%s572 + $0x408] sm:$0xff]
                %705 = vst [vmem:[%s573 + $0x208] sm:$0xff] %v704
                %v706 = vld [vmem:[%s572 + $0x420] sm:$0xff]
                %707 = vst [vmem:[%s573 + $0x210] sm:$0xff] %v706
                %v708 = vld [vmem:[%s572 + $0x428] sm:$0xff]
                %709 = vst [vmem:[%s573 + $0x218] sm:$0xff] %v708
                %v710 = vld [vmem:[%s572 + $0x440] sm:$0xff]
                %711 = vst [vmem:[%s573 + $0x220] sm:$0xff] %v710
                %v712 = vld [vmem:[%s572 + $0x448] sm:$0xff]
                %713 = vst [vmem:[%s573 + $0x228] sm:$0xff] %v712
                %v714 = vld [vmem:[%s572 + $0x460] sm:$0xff]
                %715 = vst [vmem:[%s573 + $0x230] sm:$0xff] %v714
                %v716 = vld [vmem:[%s572 + $0x468] sm:$0xff]
                %717 = vst [vmem:[%s573 + $0x238] sm:$0xff] %v716
                %v718 = vld [vmem:[%s572 + $0x480] sm:$0xff]
                %719 = vst [vmem:[%s573 + $0x240] sm:$0xff] %v718
                %v720 = vld [vmem:[%s572 + $0x488] sm:$0xff]
                %721 = vst [vmem:[%s573 + $0x248] sm:$0xff] %v720
                %v722 = vld [vmem:[%s572 + $0x4a0] sm:$0xff]
                %723 = vst [vmem:[%s573 + $0x250] sm:$0xff] %v722
                %v724 = vld [vmem:[%s572 + $0x4a8] sm:$0xff]
                %725 = vst [vmem:[%s573 + $0x258] sm:$0xff] %v724
                %v726 = vld [vmem:[%s572 + $0x4c0] sm:$0xff]
                %727 = vst [vmem:[%s573 + $0x260] sm:$0xff] %v726
                %v728 = vld [vmem:[%s572 + $0x4c8] sm:$0xff]
                %729 = vst [vmem:[%s573 + $0x268] sm:$0xff] %v728
                %v730 = vld [vmem:[%s572 + $0x4e0] sm:$0xff]
                %731 = vst [vmem:[%s573 + $0x270] sm:$0xff] %v730
                %v732 = vld [vmem:[%s572 + $0x4e8] sm:$0xff]
                %733 = vst [vmem:[%s573 + $0x278] sm:$0xff] %v732
                %v734 = vld [vmem:[%s572 + $0x500] sm:$0xff]
                %735 = vst [vmem:[%s573 + $0x280] sm:$0xff] %v734
                %v736 = vld [vmem:[%s572 + $0x508] sm:$0xff]
                %737 = vst [vmem:[%s573 + $0x288] sm:$0xff] %v736
                %v738 = vld [vmem:[%s572 + $0x520] sm:$0xff]
                %739 = vst [vmem:[%s573 + $0x290] sm:$0xff] %v738
                %v740 = vld [vmem:[%s572 + $0x528] sm:$0xff]
                %741 = vst [vmem:[%s573 + $0x298] sm:$0xff] %v740
                %v742 = vld [vmem:[%s572 + $0x540] sm:$0xff]
                %743 = vst [vmem:[%s573 + $0x2a0] sm:$0xff] %v742
                %v744 = vld [vmem:[%s572 + $0x548] sm:$0xff]
                %745 = vst [vmem:[%s573 + $0x2a8] sm:$0xff] %v744
                %v746 = vld [vmem:[%s572 + $0x560] sm:$0xff]
                %747 = vst [vmem:[%s573 + $0x2b0] sm:$0xff] %v746
                %v748 = vld [vmem:[%s572 + $0x568] sm:$0xff]
                %749 = vst [vmem:[%s573 + $0x2b8] sm:$0xff] %v748
                %v750 = vld [vmem:[%s572 + $0x580] sm:$0xff]
                %751 = vst [vmem:[%s573 + $0x2c0] sm:$0xff] %v750
                %v752 = vld [vmem:[%s572 + $0x588] sm:$0xff]
                %753 = vst [vmem:[%s573 + $0x2c8] sm:$0xff] %v752
                %v754 = vld [vmem:[%s572 + $0x5a0] sm:$0xff]
                %755 = vst [vmem:[%s573 + $0x2d0] sm:$0xff] %v754
                %v756 = vld [vmem:[%s572 + $0x5a8] sm:$0xff]
                %757 = vst [vmem:[%s573 + $0x2d8] sm:$0xff] %v756
                %v758 = vld [vmem:[%s572 + $0x5c0] sm:$0xff]
                %759 = vst [vmem:[%s573 + $0x2e0] sm:$0xff] %v758
                %v760 = vld [vmem:[%s572 + $0x5c8] sm:$0xff]
                %761 = vst [vmem:[%s573 + $0x2e8] sm:$0xff] %v760
                %v762 = vld [vmem:[%s572 + $0x5e0] sm:$0xff]
                %763 = vst [vmem:[%s573 + $0x2f0] sm:$0xff] %v762
                %v764 = vld [vmem:[%s572 + $0x5e8] sm:$0xff]
                %765 = vst [vmem:[%s573 + $0x2f8] sm:$0xff] %v764
                %v766 = vld [vmem:[%s572 + $0x600] sm:$0xff]
                %767 = vst [vmem:[%s573 + $0x300] sm:$0xff] %v766
                %v768 = vld [vmem:[%s572 + $0x608] sm:$0xff]
                %769 = vst [vmem:[%s573 + $0x308] sm:$0xff] %v768
                %v770 = vld [vmem:[%s572 + $0x620] sm:$0xff]
                %771 = vst [vmem:[%s573 + $0x310] sm:$0xff] %v770
                %v772 = vld [vmem:[%s572 + $0x628] sm:$0xff]
                %773 = vst [vmem:[%s573 + $0x318] sm:$0xff] %v772
                %v774 = vld [vmem:[%s572 + $0x640] sm:$0xff]
                %775 = vst [vmem:[%s573 + $0x320] sm:$0xff] %v774
                %v776 = vld [vmem:[%s572 + $0x648] sm:$0xff]
                %777 = vst [vmem:[%s573 + $0x328] sm:$0xff] %v776
                %v778 = vld [vmem:[%s572 + $0x660] sm:$0xff]
                %779 = vst [vmem:[%s573 + $0x330] sm:$0xff] %v778
                %v780 = vld [vmem:[%s572 + $0x668] sm:$0xff]
                %781 = vst [vmem:[%s573 + $0x338] sm:$0xff] %v780
                %v782 = vld [vmem:[%s572 + $0x680] sm:$0xff]
                %783 = vst [vmem:[%s573 + $0x340] sm:$0xff] %v782
                %v784 = vld [vmem:[%s572 + $0x688] sm:$0xff]
                %785 = vst [vmem:[%s573 + $0x348] sm:$0xff] %v784
                %v786 = vld [vmem:[%s572 + $0x6a0] sm:$0xff]
                %787 = vst [vmem:[%s573 + $0x350] sm:$0xff] %v786
                %v788 = vld [vmem:[%s572 + $0x6a8] sm:$0xff]
                %789 = vst [vmem:[%s573 + $0x358] sm:$0xff] %v788
                %v790 = vld [vmem:[%s572 + $0x6c0] sm:$0xff]
                %791 = vst [vmem:[%s573 + $0x360] sm:$0xff] %v790
                %v792 = vld [vmem:[%s572 + $0x6c8] sm:$0xff]
                %793 = vst [vmem:[%s573 + $0x368] sm:$0xff] %v792
                %v794 = vld [vmem:[%s572 + $0x6e0] sm:$0xff]
                %795 = vst [vmem:[%s573 + $0x370] sm:$0xff] %v794
                %v796 = vld [vmem:[%s572 + $0x6e8] sm:$0xff]
                %797 = vst [vmem:[%s573 + $0x378] sm:$0xff] %v796
                %v798 = vld [vmem:[%s572 + $0x700] sm:$0xff]
                %799 = vst [vmem:[%s573 + $0x380] sm:$0xff] %v798
                %v800 = vld [vmem:[%s572 + $0x708] sm:$0xff]
                %801 = vst [vmem:[%s573 + $0x388] sm:$0xff] %v800
                %v802 = vld [vmem:[%s572 + $0x720] sm:$0xff]
                %803 = vst [vmem:[%s573 + $0x390] sm:$0xff] %v802
                %v804 = vld [vmem:[%s572 + $0x728] sm:$0xff]
                %805 = vst [vmem:[%s573 + $0x398] sm:$0xff] %v804
                %v806 = vld [vmem:[%s572 + $0x740] sm:$0xff]
                %807 = vst [vmem:[%s573 + $0x3a0] sm:$0xff] %v806
                %v808 = vld [vmem:[%s572 + $0x748] sm:$0xff]
                %809 = vst [vmem:[%s573 + $0x3a8] sm:$0xff] %v808
                %v810 = vld [vmem:[%s572 + $0x760] sm:$0xff]
                %811 = vst [vmem:[%s573 + $0x3b0] sm:$0xff] %v810
                %v812 = vld [vmem:[%s572 + $0x768] sm:$0xff]
                %813 = vst [vmem:[%s573 + $0x3b8] sm:$0xff] %v812
                %v814 = vld [vmem:[%s572 + $0x780] sm:$0xff]
                %815 = vst [vmem:[%s573 + $0x3c0] sm:$0xff] %v814
                %v816 = vld [vmem:[%s572 + $0x788] sm:$0xff]
                %817 = vst [vmem:[%s573 + $0x3c8] sm:$0xff] %v816
                %v818 = vld [vmem:[%s572 + $0x7a0] sm:$0xff]
                %819 = vst [vmem:[%s573 + $0x3d0] sm:$0xff] %v818
                %v820 = vld [vmem:[%s572 + $0x7a8] sm:$0xff]
                %821 = vst [vmem:[%s573 + $0x3d8] sm:$0xff] %v820
                %v822 = vld [vmem:[%s572 + $0x7c0] sm:$0xff]
                %823 = vst [vmem:[%s573 + $0x3e0] sm:$0xff] %v822
                %v824 = vld [vmem:[%s572 + $0x7c8] sm:$0xff]
                %825 = vst [vmem:[%s573 + $0x3e8] sm:$0xff] %v824
                %v826 = vld [vmem:[%s572 + $0x7e0] sm:$0xff]
                %827 = vst [vmem:[%s573 + $0x3f0] sm:$0xff] %v826
                %v828 = vld [vmem:[%s572 + $0x7e8] sm:$0xff]
                %829 = vst [vmem:[%s573 + $0x3f8] sm:$0xff] %v828
              $region100: #{tnet_forward.1} parent=94 // loop_footer
                %s571 = sadd.s32 1, %s567
              $region101: #{tnet_forward.1} parent=94 // loop_footer_branch
                %566 = sbr.rel target = $region97
              $region102: #{tnet_forward.1} parent=94 // loop_exit
                _
            $region95: #{tnet_forward.1} parent=90 // pred_fallthru
              _
            // Predicated region
            $region103: #{tnet_forward.1} parent=90 // pred_check
              _
            $region104: #{tnet_forward.1} parent=90 // pred_check_branch
              %831 = sbr.rel target = $region106
            $region105: #{tnet_forward.1} parent=90 // pred_region
              _
            $region106: #{tnet_forward.1} parent=90 // pred_fallthru
              _
          $region91: #{tnet_forward.1} parent=86 // pred_fallthru
            _
          %832 = vnop
        $region87: #{tnet_forward.1} parent=59 // pred_fallthru
          _
        // Predicated region
        $region107: #{tnet_forward.1} parent=59 // pred_check
          %p833 = pneg %p110
        $region108: #{tnet_forward.1} parent=59 // pred_check_branch
          %835 = sbr.rel (%p833) target = $region110
        $region109: #{tnet_forward.1} parent=59 // pred_region
          %s836 = smul.u32 2, %s28
          %p837 = scmp.lt.s32.totalorder %s27, 1
          %s838 = scalar_select %p837, %s27, 1
          %p839 = scmp.lt.s32.totalorder %s836, 3
          %s840 = scalar_select %p839, %s836, 3
          %s841 = smul.addr %s838, 4
          %s842 = sadd.s32 %s840, %s841
          %s843 = smul.addr %s842, 4
          %s844 = scalar_lea.vmem %s2, %s843
          %s845 = smul.u32 2, %s28
        $region110: #{tnet_forward.1} parent=59 // pred_fallthru
          _
      $region60: #{tnet_forward.1} parent=5 // pred_fallthru
        _
      %p846 = scmp.le.s32.totalorder 1, %s20
      %p847 = scmp.lt.s32.totalorder %s20, 5
      %p848 = pnand %p846, %p847
      %p849 = pneg %p848
      // Predicated region
      $region111: #{tnet_forward.1} parent=5 // pred_check
        _
      $region112: #{tnet_forward.1} parent=5 // pred_check_branch
        %851 = sbr.rel (%p848) target = $region114
      $region113: #{tnet_forward.1} parent=5 // pred_region
        %s852 = ssub.s32 %s20, 1
        %s853 = sand.u32 %s47, 1
        %s854 = sand.u32 %s47, 1
        %s855 = smul.addr %s854, 384
        %s856 = scalar_lea.vmem [#allocation2], %s855
        // Predicated region
        $region115: #{tnet_forward.1} parent=113 // pred_check
          %p857 = pneg %p60
        $region116: #{tnet_forward.1} parent=113 // pred_check_branch
          %859 = sbr.rel (%p857) target = $region118
        $region117: #{tnet_forward.1} parent=113 // pred_region
          _
        $region118: #{tnet_forward.1} parent=113 // pred_fallthru
          _
        %s860 = sand.u32 %s75, 1
        %s861 = sand.u32 %s75, 1
        %s862 = smul.addr %s861, 1024
        %s863 = scalar_lea.vmem [#allocation3], %s862
        // Predicated region
        $region119: #{tnet_forward.1} parent=113 // pred_check
          %p864 = pneg %p88
        $region120: #{tnet_forward.1} parent=113 // pred_check_branch
          %866 = sbr.rel (%p864) target = $region122
        $region121: #{tnet_forward.1} parent=113 // pred_region
          _
        $region122: #{tnet_forward.1} parent=113 // pred_fallthru
          _
        %s867 = sand.u32 %s47, 1
        %s868 = sand.u32 %s47, 1
        %s869 = smul.addr %s868, 384
        %s870 = scalar_lea.vmem [#allocation2], %s869
        %p871 = pneg %p60
        %p872 = pneg %p57
        %s873 = sand.u32 %s75, 1
        %s874 = sand.u32 %s75, 1
        %s875 = smul.addr %s874, 1024
        %s876 = scalar_lea.vmem [#allocation3], %s875
        %p877 = pneg %p88
        %p878 = pneg %p85
        %s879 = smul.u32 2, %s30
        %p880 = scmp.lt.s32.totalorder %s29, 1
        %s881 = scalar_select %p880, %s29, 1
        %p882 = scmp.lt.s32.totalorder %s879, 3
        %s883 = scalar_select %p882, %s879, 3
        %s884 = smul.addr %s881, 4
        %s885 = sadd.s32 %s883, %s884
        %s886 = smul.addr %s885, 4
        %s887 = scalar_lea.vmem %s2, %s886
        %p888 = pneg %p116
        %p889 = pneg %p113
        %p890 = pneg %p137
        %p891 = pneg %p134
        %p892 = pneg %p158
        %p893 = pneg %p155
        %p894 = pneg %p179
        %p895 = pneg %p176
        %p896 = pneg %p200
        %p897 = pneg %p197
        %p898 = pneg %p221
        %p899 = pneg %p218
        %p900 = pneg %p242
        %p901 = pneg %p239
        %p902 = pneg %p263
        %p903 = pneg %p260
        %p904 = pneg %p284
        %p905 = pneg %p281
        %p906 = pneg %p305
        %p907 = pneg %p302
        %p908 = pneg %p326
        %p909 = pneg %p323
        %p910 = pneg %p347
        %p911 = pneg %p344
        %p912 = pneg %p375
        %p913 = pneg %p372
        %p914 = scmp.lt.s32.totalorder %s29, 1
        %s915 = scalar_select %p914, %s29, 1
        %p916 = scmp.lt.s32.totalorder %s30, 1
        %s917 = scalar_select %p916, %s30, 1
        %s918 = smul.addr %s915, 2
        %s919 = sadd.s32 %s917, %s918
        %s920 = scalar_lea.vmem %s14, %s919
        %s921 = smul.u32 2, %s30
        %s922 = smul.u32 2, %s30
        %s923 = smul.u32 2, %s30
        %p924 = scmp.lt.s32.totalorder %s29, 1
        %s925 = scalar_select %p924, %s29, 1
        %p926 = scmp.lt.s32.totalorder %s923, 3
        %s927 = scalar_select %p926, %s923, 3
        %s928 = smul.addr %s925, 4
        %s929 = sadd.s32 %s927, %s928
        %s930 = smul.addr %s929, 4
        %s931 = scalar_lea.vmem %s2, %s930
        %s932 = smul.u32 2, %s30
        %p933 = scmp.lt.s32.totalorder %s29, 1
        %s934 = scalar_select %p933, %s29, 1
        %p935 = scmp.lt.s32.totalorder %s30, 1
        %s936 = scalar_select %p935, %s30, 1
        %s937 = smul.addr %s934, 2
        %s938 = sadd.s32 %s936, %s937
        %s939 = scalar_lea.vmem %s14, %s938
        %v941 = vld [vmem:[%s856] sm:$0xff]
        %v942 = vld [vmem:[%s856 + $0x8] sm:$0xff]
        %v943 = vld [vmem:[%s856 + $0x10] sm:$0xff]
        %v944 = vld [vmem:[%s856 + $0x18] sm:$0xff]
        %v945 = vld [vmem:[%s856 + $0x20] sm:$0xff]
        %v946 = vld [vmem:[%s856 + $0x28] sm:$0xff]
        %v947 = vld [vmem:[%s856 + $0x30] sm:$0xff]
        %v948 = vld [vmem:[%s856 + $0x38] sm:$0xff]
        %v949 = vld [vmem:[%s856 + $0x40] sm:$0xff]
        %v950 = vld [vmem:[%s856 + $0x48] sm:$0xff]
        %v951 = vld [vmem:[%s856 + $0x50] sm:$0xff]
        %v952 = vld [vmem:[%s856 + $0x58] sm:$0xff]
        %v953 = vld [vmem:[%s856 + $0x60] sm:$0xff]
        %v954 = vld [vmem:[%s856 + $0x68] sm:$0xff]
        %v955 = vld [vmem:[%s856 + $0x70] sm:$0xff]
        %v956 = vld [vmem:[%s856 + $0x78] sm:$0xff]
        %v957 = vld [vmem:[%s856 + $0x80] sm:$0xff]
        %v958 = vld [vmem:[%s856 + $0x88] sm:$0xff]
        %v959 = vld [vmem:[%s856 + $0x90] sm:$0xff]
        %v960 = vld [vmem:[%s856 + $0x98] sm:$0xff]
        %v961 = vld [vmem:[%s856 + $0xa0] sm:$0xff]
        %v962 = vld [vmem:[%s856 + $0xa8] sm:$0xff]
        %v963 = vld [vmem:[%s856 + $0xb0] sm:$0xff]
        %v964 = vld [vmem:[%s856 + $0xb8] sm:$0xff]
        %v965 = vld [vmem:[%s856 + $0xc0] sm:$0xff]
        %v966 = vld [vmem:[%s856 + $0xc8] sm:$0xff]
        %v967 = vld [vmem:[%s856 + $0xd0] sm:$0xff]
        %v968 = vld [vmem:[%s856 + $0xd8] sm:$0xff]
        %v969 = vld [vmem:[%s856 + $0xe0] sm:$0xff]
        %v970 = vld [vmem:[%s856 + $0xe8] sm:$0xff]
        %v971 = vld [vmem:[%s856 + $0xf0] sm:$0xff]
        %v972 = vld [vmem:[%s856 + $0xf8] sm:$0xff]
        %v973 = vld [vmem:[%s856 + $0x100] sm:$0xff]
        %v974 = vld [vmem:[%s856 + $0x108] sm:$0xff]
        %v975 = vld [vmem:[%s856 + $0x110] sm:$0xff]
        %v976 = vld [vmem:[%s856 + $0x118] sm:$0xff]
        %v977 = vld [vmem:[%s856 + $0x120] sm:$0xff]
        %v978 = vld [vmem:[%s856 + $0x128] sm:$0xff]
        %v979 = vld [vmem:[%s856 + $0x130] sm:$0xff]
        %v980 = vld [vmem:[%s856 + $0x138] sm:$0xff]
        %v981 = vld [vmem:[%s856 + $0x140] sm:$0xff]
        %v982 = vld [vmem:[%s856 + $0x148] sm:$0xff]
        %v983 = vld [vmem:[%s856 + $0x150] sm:$0xff]
        %v984 = vld [vmem:[%s856 + $0x158] sm:$0xff]
        %v985 = vld [vmem:[%s856 + $0x160] sm:$0xff]
        %v986 = vld [vmem:[%s856 + $0x168] sm:$0xff]
        %v987 = vld [vmem:[%s856 + $0x170] sm:$0x1f]
        %v988 = vld [vmem:[%s856 + $0x178] sm:$0x1f]
        %v989 = vpack.c.bf16 %v943, %v941
        %v990 = vpack.c.bf16 %v944, %v942
        %v991 = vpack.c.bf16 %v947, %v945
        %v992 = vpack.c.bf16 %v948, %v946
        %v993 = vpack.c.bf16 %v951, %v949
        %v994 = vpack.c.bf16 %v952, %v950
        %v995 = vpack.c.bf16 %v955, %v953
        %v996 = vpack.c.bf16 %v956, %v954
        %v997 = vpack.c.bf16 %v959, %v957
        %v998 = vpack.c.bf16 %v960, %v958
        %v999 = vpack.c.bf16 %v963, %v961
        %v1000 = vpack.c.bf16 %v964, %v962
        %v1001 = vpack.c.bf16 %v967, %v965
        %v1002 = vpack.c.bf16 %v968, %v966
        %v1003 = vpack.c.bf16 %v971, %v969
        %v1004 = vpack.c.bf16 %v972, %v970
        %v1005 = vpack.c.bf16 %v975, %v973
        %v1006 = vpack.c.bf16 %v976, %v974
        %v1007 = vpack.c.bf16 %v979, %v977
        %v1008 = vpack.c.bf16 %v980, %v978
        %v1009 = vpack.c.bf16 %v983, %v981
        %v1010 = vpack.c.bf16 %v984, %v982
        %v1011 = vpack.c.bf16 %v987, %v985
        %v1012 = vpack.c.bf16 %v988, %v986
        %v1013 = vld [vmem:[%s863] sm:$0xff]
        %v1014 = vld [vmem:[%s863 + $0x8] sm:$0xff]
        %v1015 = vld [vmem:[%s863 + $0x10] sm:$0xff]
        %v1016 = vld [vmem:[%s863 + $0x18] sm:$0xff]
        %v1017 = vld [vmem:[%s863 + $0x20] sm:$0xff]
        %v1018 = vld [vmem:[%s863 + $0x28] sm:$0xff]
        %v1019 = vld [vmem:[%s863 + $0x30] sm:$0xff]
        %v1020 = vld [vmem:[%s863 + $0x38] sm:$0xff]
        %v1021 = vld [vmem:[%s863 + $0x40] sm:$0xff]
        %v1022 = vld [vmem:[%s863 + $0x48] sm:$0xff]
        %v1023 = vld [vmem:[%s863 + $0x50] sm:$0xff]
        %v1024 = vld [vmem:[%s863 + $0x58] sm:$0xff]
        %v1025 = vld [vmem:[%s863 + $0x60] sm:$0xff]
        %v1026 = vld [vmem:[%s863 + $0x68] sm:$0xff]
        %v1027 = vld [vmem:[%s863 + $0x70] sm:$0xff]
        %v1028 = vld [vmem:[%s863 + $0x78] sm:$0xff]
        %v1029 = vld [vmem:[%s863 + $0x80] sm:$0xff]
        %v1030 = vld [vmem:[%s863 + $0x88] sm:$0xff]
        %v1031 = vld [vmem:[%s863 + $0x90] sm:$0xff]
        %v1032 = vld [vmem:[%s863 + $0x98] sm:$0xff]
        %v1033 = vld [vmem:[%s863 + $0xa0] sm:$0xff]
        %v1034 = vld [vmem:[%s863 + $0xa8] sm:$0xff]
        %v1035 = vld [vmem:[%s863 + $0xb0] sm:$0xff]
        %v1036 = vld [vmem:[%s863 + $0xb8] sm:$0xff]
        %v1037 = vld [vmem:[%s863 + $0xc0] sm:$0xff]
        %v1038 = vld [vmem:[%s863 + $0xc8] sm:$0xff]
        %v1039 = vld [vmem:[%s863 + $0xd0] sm:$0xff]
        %v1040 = vld [vmem:[%s863 + $0xd8] sm:$0xff]
        %v1041 = vld [vmem:[%s863 + $0xe0] sm:$0xff]
        %v1042 = vld [vmem:[%s863 + $0xe8] sm:$0xff]
        %v1043 = vld [vmem:[%s863 + $0xf0] sm:$0xff]
        %v1044 = vld [vmem:[%s863 + $0xf8] sm:$0xff]
        %v1045 = vld [vmem:[%s863 + $0x100] sm:$0xff]
        %v1046 = vld [vmem:[%s863 + $0x108] sm:$0xff]
        %v1047 = vld [vmem:[%s863 + $0x110] sm:$0xff]
        %v1048 = vld [vmem:[%s863 + $0x118] sm:$0xff]
        %v1049 = vld [vmem:[%s863 + $0x120] sm:$0xff]
        %v1050 = vld [vmem:[%s863 + $0x128] sm:$0xff]
        %v1051 = vld [vmem:[%s863 + $0x130] sm:$0xff]
        %v1052 = vld [vmem:[%s863 + $0x138] sm:$0xff]
        %v1053 = vld [vmem:[%s863 + $0x140] sm:$0xff]
        %v1054 = vld [vmem:[%s863 + $0x148] sm:$0xff]
        %v1055 = vld [vmem:[%s863 + $0x150] sm:$0xff]
        %v1056 = vld [vmem:[%s863 + $0x158] sm:$0xff]
        %v1057 = vld [vmem:[%s863 + $0x160] sm:$0xff]
        %v1058 = vld [vmem:[%s863 + $0x168] sm:$0xff]
        %v1059 = vld [vmem:[%s863 + $0x170] sm:$0xff]
        %v1060 = vld [vmem:[%s863 + $0x178] sm:$0xff]
        %v1061 = vld [vmem:[%s863 + $0x180] sm:$0xff]
        %v1062 = vld [vmem:[%s863 + $0x188] sm:$0xff]
        %v1063 = vld [vmem:[%s863 + $0x190] sm:$0xff]
        %v1064 = vld [vmem:[%s863 + $0x198] sm:$0xff]
        %v1065 = vld [vmem:[%s863 + $0x1a0] sm:$0xff]
        %v1066 = vld [vmem:[%s863 + $0x1a8] sm:$0xff]
        %v1067 = vld [vmem:[%s863 + $0x1b0] sm:$0xff]
        %v1068 = vld [vmem:[%s863 + $0x1b8] sm:$0xff]
        %v1069 = vld [vmem:[%s863 + $0x1c0] sm:$0xff]
        %v1070 = vld [vmem:[%s863 + $0x1c8] sm:$0xff]
        %v1071 = vld [vmem:[%s863 + $0x1d0] sm:$0xff]
        %v1072 = vld [vmem:[%s863 + $0x1d8] sm:$0xff]
        %v1073 = vld [vmem:[%s863 + $0x1e0] sm:$0xff]
        %v1074 = vld [vmem:[%s863 + $0x1e8] sm:$0xff]
        %v1075 = vld [vmem:[%s863 + $0x1f0] sm:$0xff]
        %v1076 = vld [vmem:[%s863 + $0x1f8] sm:$0xff]
        %v1077 = vld [vmem:[%s863 + $0x200] sm:$0xff]
        %v1078 = vld [vmem:[%s863 + $0x208] sm:$0xff]
        %v1079 = vld [vmem:[%s863 + $0x210] sm:$0xff]
        %v1080 = vld [vmem:[%s863 + $0x218] sm:$0xff]
        %v1081 = vld [vmem:[%s863 + $0x220] sm:$0xff]
        %v1082 = vld [vmem:[%s863 + $0x228] sm:$0xff]
        %v1083 = vld [vmem:[%s863 + $0x230] sm:$0xff]
        %v1084 = vld [vmem:[%s863 + $0x238] sm:$0xff]
        %v1085 = vld [vmem:[%s863 + $0x240] sm:$0xff]
        %v1086 = vld [vmem:[%s863 + $0x248] sm:$0xff]
        %v1087 = vld [vmem:[%s863 + $0x250] sm:$0xff]
        %v1088 = vld [vmem:[%s863 + $0x258] sm:$0xff]
        %v1089 = vld [vmem:[%s863 + $0x260] sm:$0xff]
        %v1090 = vld [vmem:[%s863 + $0x268] sm:$0xff]
        %v1091 = vld [vmem:[%s863 + $0x270] sm:$0xff]
        %v1092 = vld [vmem:[%s863 + $0x278] sm:$0xff]
        %v1093 = vld [vmem:[%s863 + $0x280] sm:$0xff]
        %v1094 = vld [vmem:[%s863 + $0x288] sm:$0xff]
        %v1095 = vld [vmem:[%s863 + $0x290] sm:$0xff]
        %v1096 = vld [vmem:[%s863 + $0x298] sm:$0xff]
        %v1097 = vld [vmem:[%s863 + $0x2a0] sm:$0xff]
        %v1098 = vld [vmem:[%s863 + $0x2a8] sm:$0xff]
        %v1099 = vld [vmem:[%s863 + $0x2b0] sm:$0xff]
        %v1100 = vld [vmem:[%s863 + $0x2b8] sm:$0xff]
        %v1101 = vld [vmem:[%s863 + $0x2c0] sm:$0xff]
        %v1102 = vld [vmem:[%s863 + $0x2c8] sm:$0xff]
        %v1103 = vld [vmem:[%s863 + $0x2d0] sm:$0xff]
        %v1104 = vld [vmem:[%s863 + $0x2d8] sm:$0xff]
        %v1105 = vld [vmem:[%s863 + $0x2e0] sm:$0xff]
        %v1106 = vld [vmem:[%s863 + $0x2e8] sm:$0xff]
        %v1107 = vld [vmem:[%s863 + $0x2f0] sm:$0xff]
        %v1108 = vld [vmem:[%s863 + $0x2f8] sm:$0xff]
        %v1109 = vld [vmem:[%s863 + $0x300] sm:$0xff]
        %v1110 = vld [vmem:[%s863 + $0x308] sm:$0xff]
        %v1111 = vld [vmem:[%s863 + $0x310] sm:$0xff]
        %v1112 = vld [vmem:[%s863 + $0x318] sm:$0xff]
        %v1113 = vld [vmem:[%s863 + $0x320] sm:$0xff]
        %v1114 = vld [vmem:[%s863 + $0x328] sm:$0xff]
        %v1115 = vld [vmem:[%s863 + $0x330] sm:$0xff]
        %v1116 = vld [vmem:[%s863 + $0x338] sm:$0xff]
        %v1117 = vld [vmem:[%s863 + $0x340] sm:$0xff]
        %v1118 = vld [vmem:[%s863 + $0x348] sm:$0xff]
        %v1119 = vld [vmem:[%s863 + $0x350] sm:$0xff]
        %v1120 = vld [vmem:[%s863 + $0x358] sm:$0xff]
        %v1121 = vld [vmem:[%s863 + $0x360] sm:$0xff]
        %v1122 = vld [vmem:[%s863 + $0x368] sm:$0xff]
        %v1123 = vld [vmem:[%s863 + $0x370] sm:$0xff]
        %v1124 = vld [vmem:[%s863 + $0x378] sm:$0xff]
        %v1125 = vld [vmem:[%s863 + $0x380] sm:$0xff]
        %v1126 = vld [vmem:[%s863 + $0x388] sm:$0xff]
        %v1127 = vld [vmem:[%s863 + $0x390] sm:$0xff]
        %v1128 = vld [vmem:[%s863 + $0x398] sm:$0xff]
        %v1129 = vld [vmem:[%s863 + $0x3a0] sm:$0xff]
        %v1130 = vld [vmem:[%s863 + $0x3a8] sm:$0xff]
        %v1131 = vld [vmem:[%s863 + $0x3b0] sm:$0xff]
        %v1132 = vld [vmem:[%s863 + $0x3b8] sm:$0xff]
        %v1133 = vld [vmem:[%s863 + $0x3c0] sm:$0xff]
        %v1134 = vld [vmem:[%s863 + $0x3c8] sm:$0xff]
        %v1135 = vld [vmem:[%s863 + $0x3d0] sm:$0xff]
        %v1136 = vld [vmem:[%s863 + $0x3d8] sm:$0xff]
        %v1137 = vld [vmem:[%s863 + $0x3e0] sm:$0xff]
        %v1138 = vld [vmem:[%s863 + $0x3e8] sm:$0xff]
        %v1139 = vld [vmem:[%s863 + $0x3f0] sm:$0xff]
        %v1140 = vld [vmem:[%s863 + $0x3f8] sm:$0xff]
        %v1141 = vpack.c.bf16 %v1015, %v1013
        %v1142 = vpack.c.bf16 %v1016, %v1014
        %v1143 = vpack.c.bf16 %v1019, %v1017
        %v1144 = vpack.c.bf16 %v1020, %v1018
        %v1145 = vpack.c.bf16 %v1023, %v1021
        %v1146 = vpack.c.bf16 %v1024, %v1022
        %v1147 = vpack.c.bf16 %v1027, %v1025
        %v1148 = vpack.c.bf16 %v1028, %v1026
        %v1149 = vpack.c.bf16 %v1031, %v1029
        %v1150 = vpack.c.bf16 %v1032, %v1030
        %v1151 = vpack.c.bf16 %v1035, %v1033
        %v1152 = vpack.c.bf16 %v1036, %v1034
        %v1153 = vpack.c.bf16 %v1039, %v1037
        %v1154 = vpack.c.bf16 %v1040, %v1038
        %v1155 = vpack.c.bf16 %v1043, %v1041
        %v1156 = vpack.c.bf16 %v1044, %v1042
        %v1157 = vpack.c.bf16 %v1047, %v1045
        %v1158 = vpack.c.bf16 %v1048, %v1046
        %v1159 = vpack.c.bf16 %v1051, %v1049
        %v1160 = vpack.c.bf16 %v1052, %v1050
        %v1161 = vpack.c.bf16 %v1055, %v1053
        %v1162 = vpack.c.bf16 %v1056, %v1054
        %v1163 = vpack.c.bf16 %v1059, %v1057
        %v1164 = vpack.c.bf16 %v1060, %v1058
        %v1165 = vpack.c.bf16 %v1063, %v1061
        %v1166 = vpack.c.bf16 %v1064, %v1062
        %v1167 = vpack.c.bf16 %v1067, %v1065
        %v1168 = vpack.c.bf16 %v1068, %v1066
        %v1169 = vpack.c.bf16 %v1071, %v1069
        %v1170 = vpack.c.bf16 %v1072, %v1070
        %v1171 = vpack.c.bf16 %v1075, %v1073
        %v1172 = vpack.c.bf16 %v1076, %v1074
        %v1173 = vpack.c.bf16 %v1079, %v1077
        %v1174 = vpack.c.bf16 %v1080, %v1078
        %v1175 = vpack.c.bf16 %v1083, %v1081
        %v1176 = vpack.c.bf16 %v1084, %v1082
        %v1177 = vpack.c.bf16 %v1087, %v1085
        %v1178 = vpack.c.bf16 %v1088, %v1086
        %v1179 = vpack.c.bf16 %v1091, %v1089
        %v1180 = vpack.c.bf16 %v1092, %v1090
        %v1181 = vpack.c.bf16 %v1095, %v1093
        %v1182 = vpack.c.bf16 %v1096, %v1094
        %v1183 = vpack.c.bf16 %v1099, %v1097
        %v1184 = vpack.c.bf16 %v1100, %v1098
        %v1185 = vpack.c.bf16 %v1103, %v1101
        %v1186 = vpack.c.bf16 %v1104, %v1102
        %v1187 = vpack.c.bf16 %v1107, %v1105
        %v1188 = vpack.c.bf16 %v1108, %v1106
        %v1189 = vpack.c.bf16 %v1111, %v1109
        %v1190 = vpack.c.bf16 %v1112, %v1110
        %v1191 = vpack.c.bf16 %v1115, %v1113
        %v1192 = vpack.c.bf16 %v1116, %v1114
        %v1193 = vpack.c.bf16 %v1119, %v1117
        %v1194 = vpack.c.bf16 %v1120, %v1118
        %v1195 = vpack.c.bf16 %v1123, %v1121
        %v1196 = vpack.c.bf16 %v1124, %v1122
        %v1197 = vpack.c.bf16 %v1127, %v1125
        %v1198 = vpack.c.bf16 %v1128, %v1126
        %v1199 = vpack.c.bf16 %v1131, %v1129
        %v1200 = vpack.c.bf16 %v1132, %v1130
        %v1201 = vpack.c.bf16 %v1135, %v1133
        %v1202 = vpack.c.bf16 %v1136, %v1134
        %v1203 = vpack.c.bf16 %v1139, %v1137
        %v1204 = vpack.c.bf16 %v1140, %v1138
        %v1205 = vld [vmem:[%s3] sm:$0xff]
        %v1206 = vld [vmem:[%s3 + $0x8] sm:$0xff]
        %v1207 = vld [vmem:[%s3 + $0x10] sm:$0xff]
        %v1208 = vld [vmem:[%s3 + $0x18] sm:$0xff]
        %v1209 = vld [vmem:[%s3 + $0x20] sm:$0xff]
        %v1210 = vld [vmem:[%s3 + $0x28] sm:$0xff]
        %v1211 = vld [vmem:[%s3 + $0x30] sm:$0xff]
        %v1212 = vld [vmem:[%s3 + $0x38] sm:$0xff]
        %v1213 = vld [vmem:[%s3 + $0x40] sm:$0xff]
        %v1214 = vld [vmem:[%s3 + $0x48] sm:$0xff]
        %v1215 = vld [vmem:[%s3 + $0x50] sm:$0xff]
        %v1216 = vld [vmem:[%s3 + $0x58] sm:$0xff]
        %v1217 = vld [vmem:[%s3 + $0x60] sm:$0xff]
        %v1218 = vld [vmem:[%s3 + $0x68] sm:$0xff]
        %v1219 = vld [vmem:[%s3 + $0x70] sm:$0xff]
        %v1220 = vld [vmem:[%s3 + $0x78] sm:$0xff]
        %v1221 = vld [vmem:[%s3 + $0x80] sm:$0xff]
        %v1222 = vld [vmem:[%s3 + $0x88] sm:$0xff]
        %v1223 = vld [vmem:[%s3 + $0x90] sm:$0xff]
        %v1224 = vld [vmem:[%s3 + $0x98] sm:$0xff]
        %v1225 = vld [vmem:[%s3 + $0xa0] sm:$0xff]
        %v1226 = vld [vmem:[%s3 + $0xa8] sm:$0xff]
        %v1227 = vld [vmem:[%s3 + $0xb0] sm:$0xff]
        %v1228 = vld [vmem:[%s3 + $0xb8] sm:$0xff]
        %v1229 = vld [vmem:[%s3 + $0xc0] sm:$0xff]
        %v1230 = vld [vmem:[%s3 + $0xc8] sm:$0xff]
        %v1231 = vld [vmem:[%s3 + $0xd0] sm:$0xff]
        %v1232 = vld [vmem:[%s3 + $0xd8] sm:$0xff]
        %v1233 = vld [vmem:[%s3 + $0xe0] sm:$0xff]
        %v1234 = vld [vmem:[%s3 + $0xe8] sm:$0xff]
        %v1235 = vld [vmem:[%s3 + $0xf0] sm:$0xff]
        %v1236 = vld [vmem:[%s3 + $0xf8] sm:$0xff]
        %v1237 = vld [vmem:[%s3 + $0x100] sm:$0xff]
        %v1238 = vld [vmem:[%s3 + $0x108] sm:$0xff]
        %v1239 = vld [vmem:[%s3 + $0x110] sm:$0xff]
        %v1240 = vld [vmem:[%s3 + $0x118] sm:$0xff]
        %v1241 = vld [vmem:[%s3 + $0x120] sm:$0xff]
        %v1242 = vld [vmem:[%s3 + $0x128] sm:$0xff]
        %v1243 = vld [vmem:[%s3 + $0x130] sm:$0xff]
        %v1244 = vld [vmem:[%s3 + $0x138] sm:$0xff]
        %v1245 = vld [vmem:[%s3 + $0x140] sm:$0xff]
        %v1246 = vld [vmem:[%s3 + $0x148] sm:$0xff]
        %v1247 = vld [vmem:[%s3 + $0x150] sm:$0xff]
        %v1248 = vld [vmem:[%s3 + $0x158] sm:$0xff]
        %v1249 = vld [vmem:[%s3 + $0x160] sm:$0xff]
        %v1250 = vld [vmem:[%s3 + $0x168] sm:$0xff]
        %v1251 = vld [vmem:[%s3 + $0x170] sm:$0xff]
        %v1252 = vld [vmem:[%s3 + $0x178] sm:$0xff]
        %v1253 = vld [vmem:[%s3 + $0x180] sm:$0xff]
        %v1254 = vld [vmem:[%s3 + $0x188] sm:$0xff]
        %v1255 = vld [vmem:[%s3 + $0x190] sm:$0xff]
        %v1256 = vld [vmem:[%s3 + $0x198] sm:$0xff]
        %v1257 = vld [vmem:[%s3 + $0x1a0] sm:$0xff]
        %v1258 = vld [vmem:[%s3 + $0x1a8] sm:$0xff]
        %v1259 = vld [vmem:[%s3 + $0x1b0] sm:$0xff]
        %v1260 = vld [vmem:[%s3 + $0x1b8] sm:$0xff]
        %v1261 = vld [vmem:[%s3 + $0x1c0] sm:$0xff]
        %v1262 = vld [vmem:[%s3 + $0x1c8] sm:$0xff]
        %v1263 = vld [vmem:[%s3 + $0x1d0] sm:$0xff]
        %v1264 = vld [vmem:[%s3 + $0x1d8] sm:$0xff]
        %v1265 = vld [vmem:[%s3 + $0x1e0] sm:$0xff]
        %v1266 = vld [vmem:[%s3 + $0x1e8] sm:$0xff]
        %v1267 = vld [vmem:[%s3 + $0x1f0] sm:$0xff]
        %v1268 = vld [vmem:[%s3 + $0x1f8] sm:$0xff]
        %v1269 = vld [vmem:[%s4] sm:$0xff]
        %v1270 = vld [vmem:[%s4 + $0x8] sm:$0xff]
        %v1271 = vld [vmem:[%s4 + $0x10] sm:$0xff]
        %v1272 = vld [vmem:[%s4 + $0x18] sm:$0xff]
        %v1273 = vld [vmem:[%s4 + $0x20] sm:$0xff]
        %v1274 = vld [vmem:[%s4 + $0x28] sm:$0xff]
        %v1275 = vld [vmem:[%s4 + $0x30] sm:$0xff]
        %v1276 = vld [vmem:[%s4 + $0x38] sm:$0xff]
        %v1277 = vld [vmem:[%s4 + $0x40] sm:$0xff]
        %v1278 = vld [vmem:[%s4 + $0x48] sm:$0xff]
        %v1279 = vld [vmem:[%s4 + $0x50] sm:$0xff]
        %v1280 = vld [vmem:[%s4 + $0x58] sm:$0xff]
        %v1281 = vld [vmem:[%s4 + $0x60] sm:$0xff]
        %v1282 = vld [vmem:[%s4 + $0x68] sm:$0xff]
        %v1283 = vld [vmem:[%s4 + $0x70] sm:$0xff]
        %v1284 = vld [vmem:[%s4 + $0x78] sm:$0xff]
        %v1285 = vld [vmem:[%s4 + $0x80] sm:$0xff]
        %v1286 = vld [vmem:[%s4 + $0x88] sm:$0xff]
        %v1287 = vld [vmem:[%s4 + $0x90] sm:$0xff]
        %v1288 = vld [vmem:[%s4 + $0x98] sm:$0xff]
        %v1289 = vld [vmem:[%s4 + $0xa0] sm:$0xff]
        %v1290 = vld [vmem:[%s4 + $0xa8] sm:$0xff]
        %v1291 = vld [vmem:[%s4 + $0xb0] sm:$0xff]
        %v1292 = vld [vmem:[%s4 + $0xb8] sm:$0xff]
        %v1293 = vld [vmem:[%s4 + $0xc0] sm:$0xff]
        %v1294 = vld [vmem:[%s4 + $0xc8] sm:$0xff]
        %v1295 = vld [vmem:[%s4 + $0xd0] sm:$0xff]
        %v1296 = vld [vmem:[%s4 + $0xd8] sm:$0xff]
        %v1297 = vld [vmem:[%s4 + $0xe0] sm:$0xff]
        %v1298 = vld [vmem:[%s4 + $0xe8] sm:$0xff]
        %v1299 = vld [vmem:[%s4 + $0xf0] sm:$0xff]
        %v1300 = vld [vmem:[%s4 + $0xf8] sm:$0xff]
        %v1301 = vld [vmem:[%s4 + $0x100] sm:$0xff]
        %v1302 = vld [vmem:[%s4 + $0x108] sm:$0xff]
        %v1303 = vld [vmem:[%s4 + $0x110] sm:$0xff]
        %v1304 = vld [vmem:[%s4 + $0x118] sm:$0xff]
        %v1305 = vld [vmem:[%s4 + $0x120] sm:$0xff]
        %v1306 = vld [vmem:[%s4 + $0x128] sm:$0xff]
        %v1307 = vld [vmem:[%s4 + $0x130] sm:$0xff]
        %v1308 = vld [vmem:[%s4 + $0x138] sm:$0xff]
        %v1309 = vld [vmem:[%s4 + $0x140] sm:$0xff]
        %v1310 = vld [vmem:[%s4 + $0x148] sm:$0xff]
        %v1311 = vld [vmem:[%s4 + $0x150] sm:$0xff]
        %v1312 = vld [vmem:[%s4 + $0x158] sm:$0xff]
        %v1313 = vld [vmem:[%s4 + $0x160] sm:$0xff]
        %v1314 = vld [vmem:[%s4 + $0x168] sm:$0xff]
        %v1315 = vld [vmem:[%s4 + $0x170] sm:$0xff]
        %v1316 = vld [vmem:[%s4 + $0x178] sm:$0xff]
        %v1317 = vld [vmem:[%s4 + $0x180] sm:$0xff]
        %v1318 = vld [vmem:[%s4 + $0x188] sm:$0xff]
        %v1319 = vld [vmem:[%s4 + $0x190] sm:$0xff]
        %v1320 = vld [vmem:[%s4 + $0x198] sm:$0xff]
        %v1321 = vld [vmem:[%s4 + $0x1a0] sm:$0xff]
        %v1322 = vld [vmem:[%s4 + $0x1a8] sm:$0xff]
        %v1323 = vld [vmem:[%s4 + $0x1b0] sm:$0xff]
        %v1324 = vld [vmem:[%s4 + $0x1b8] sm:$0xff]
        %v1325 = vld [vmem:[%s4 + $0x1c0] sm:$0xff]
        %v1326 = vld [vmem:[%s4 + $0x1c8] sm:$0xff]
        %v1327 = vld [vmem:[%s4 + $0x1d0] sm:$0xff]
        %v1328 = vld [vmem:[%s4 + $0x1d8] sm:$0xff]
        %v1329 = vld [vmem:[%s4 + $0x1e0] sm:$0xff]
        %v1330 = vld [vmem:[%s4 + $0x1e8] sm:$0xff]
        %v1331 = vld [vmem:[%s4 + $0x1f0] sm:$0xff]
        %v1332 = vld [vmem:[%s4 + $0x1f8] sm:$0xff]
        %v1333 = vld [vmem:[%s4 + $0x200] sm:$0xff]
        %v1334 = vld [vmem:[%s4 + $0x208] sm:$0xff]
        %v1335 = vld [vmem:[%s4 + $0x210] sm:$0xff]
        %v1336 = vld [vmem:[%s4 + $0x218] sm:$0xff]
        %v1337 = vld [vmem:[%s4 + $0x220] sm:$0xff]
        %v1338 = vld [vmem:[%s4 + $0x228] sm:$0xff]
        %v1339 = vld [vmem:[%s4 + $0x230] sm:$0xff]
        %v1340 = vld [vmem:[%s4 + $0x238] sm:$0xff]
        %v1341 = vld [vmem:[%s4 + $0x240] sm:$0xff]
        %v1342 = vld [vmem:[%s4 + $0x248] sm:$0xff]
        %v1343 = vld [vmem:[%s4 + $0x250] sm:$0xff]
        %v1344 = vld [vmem:[%s4 + $0x258] sm:$0xff]
        %v1345 = vld [vmem:[%s4 + $0x260] sm:$0xff]
        %v1346 = vld [vmem:[%s4 + $0x268] sm:$0xff]
        %v1347 = vld [vmem:[%s4 + $0x270] sm:$0xff]
        %v1348 = vld [vmem:[%s4 + $0x278] sm:$0xff]
        %v1349 = vld [vmem:[%s4 + $0x280] sm:$0xff]
        %v1350 = vld [vmem:[%s4 + $0x288] sm:$0xff]
        %v1351 = vld [vmem:[%s4 + $0x290] sm:$0xff]
        %v1352 = vld [vmem:[%s4 + $0x298] sm:$0xff]
        %v1353 = vld [vmem:[%s4 + $0x2a0] sm:$0xff]
        %v1354 = vld [vmem:[%s4 + $0x2a8] sm:$0xff]
        %v1355 = vld [vmem:[%s4 + $0x2b0] sm:$0xff]
        %v1356 = vld [vmem:[%s4 + $0x2b8] sm:$0xff]
        %v1357 = vld [vmem:[%s4 + $0x2c0] sm:$0xff]
        %v1358 = vld [vmem:[%s4 + $0x2c8] sm:$0xff]
        %v1359 = vld [vmem:[%s4 + $0x2d0] sm:$0xff]
        %v1360 = vld [vmem:[%s4 + $0x2d8] sm:$0xff]
        %v1361 = vld [vmem:[%s4 + $0x2e0] sm:$0xff]
        %v1362 = vld [vmem:[%s4 + $0x2e8] sm:$0xff]
        %v1363 = vld [vmem:[%s4 + $0x2f0] sm:$0xff]
        %v1364 = vld [vmem:[%s4 + $0x2f8] sm:$0xff]
        %v1365 = vld [vmem:[%s4 + $0x300] sm:$0xff]
        %v1366 = vld [vmem:[%s4 + $0x308] sm:$0xff]
        %v1367 = vld [vmem:[%s4 + $0x310] sm:$0xff]
        %v1368 = vld [vmem:[%s4 + $0x318] sm:$0xff]
        %v1369 = vld [vmem:[%s4 + $0x320] sm:$0xff]
        %v1370 = vld [vmem:[%s4 + $0x328] sm:$0xff]
        %v1371 = vld [vmem:[%s4 + $0x330] sm:$0xff]
        %v1372 = vld [vmem:[%s4 + $0x338] sm:$0xff]
        %v1373 = vld [vmem:[%s4 + $0x340] sm:$0xff]
        %v1374 = vld [vmem:[%s4 + $0x348] sm:$0xff]
        %v1375 = vld [vmem:[%s4 + $0x350] sm:$0xff]
        %v1376 = vld [vmem:[%s4 + $0x358] sm:$0xff]
        %v1377 = vld [vmem:[%s4 + $0x360] sm:$0xff]
        %v1378 = vld [vmem:[%s4 + $0x368] sm:$0xff]
        %v1379 = vld [vmem:[%s4 + $0x370] sm:$0xff]
        %v1380 = vld [vmem:[%s4 + $0x378] sm:$0xff]
        %v1381 = vld [vmem:[%s4 + $0x380] sm:$0xff]
        %v1382 = vld [vmem:[%s4 + $0x388] sm:$0xff]
        %v1383 = vld [vmem:[%s4 + $0x390] sm:$0xff]
        %v1384 = vld [vmem:[%s4 + $0x398] sm:$0xff]
        %v1385 = vld [vmem:[%s4 + $0x3a0] sm:$0xff]
        %v1386 = vld [vmem:[%s4 + $0x3a8] sm:$0xff]
        %v1387 = vld [vmem:[%s4 + $0x3b0] sm:$0xff]
        %v1388 = vld [vmem:[%s4 + $0x3b8] sm:$0xff]
        %v1389 = vld [vmem:[%s4 + $0x3c0] sm:$0xff]
        %v1390 = vld [vmem:[%s4 + $0x3c8] sm:$0xff]
        %v1391 = vld [vmem:[%s4 + $0x3d0] sm:$0xff]
        %v1392 = vld [vmem:[%s4 + $0x3d8] sm:$0xff]
        %v1393 = vld [vmem:[%s4 + $0x3e0] sm:$0xff]
        %v1394 = vld [vmem:[%s4 + $0x3e8] sm:$0xff]
        %v1395 = vld [vmem:[%s4 + $0x3f0] sm:$0xff]
        %v1396 = vld [vmem:[%s4 + $0x3f8] sm:$0xff]
        %v1525 = vunpack.c.l.b16 %v1269
        %v1526 = vunpack.c.h.b16 %v1269
        %v1527 = vunpack.c.l.b16 %v1270
        %v1528 = vunpack.c.h.b16 %v1270
        %v1529 = vunpack.c.l.b16 %v1271
        %v1530 = vunpack.c.h.b16 %v1271
        %v1531 = vunpack.c.l.b16 %v1272
        %v1532 = vunpack.c.h.b16 %v1272
        %v1533 = vunpack.c.l.b16 %v1273
        %v1534 = vunpack.c.h.b16 %v1273
        %v1535 = vunpack.c.l.b16 %v1274
        %v1536 = vunpack.c.h.b16 %v1274
        %v1537 = vunpack.c.l.b16 %v1275
        %v1538 = vunpack.c.h.b16 %v1275
        %v1539 = vunpack.c.l.b16 %v1276
        %v1540 = vunpack.c.h.b16 %v1276
        %v1541 = vunpack.c.l.b16 %v1277
        %v1542 = vunpack.c.h.b16 %v1277
        %v1543 = vunpack.c.l.b16 %v1278
        %v1544 = vunpack.c.h.b16 %v1278
        %v1545 = vunpack.c.l.b16 %v1279
        %v1546 = vunpack.c.h.b16 %v1279
        %v1547 = vunpack.c.l.b16 %v1280
        %v1548 = vunpack.c.h.b16 %v1280
        %v1549 = vunpack.c.l.b16 %v1281
        %v1550 = vunpack.c.h.b16 %v1281
        %v1551 = vunpack.c.l.b16 %v1282
        %v1552 = vunpack.c.h.b16 %v1282
        %v1553 = vunpack.c.l.b16 %v1283
        %v1554 = vunpack.c.h.b16 %v1283
        %v1555 = vunpack.c.l.b16 %v1284
        %v1556 = vunpack.c.h.b16 %v1284
        %v1557 = vunpack.c.l.b16 %v1285
        %v1558 = vunpack.c.h.b16 %v1285
        %v1559 = vunpack.c.l.b16 %v1286
        %v1560 = vunpack.c.h.b16 %v1286
        %v1561 = vunpack.c.l.b16 %v1287
        %v1562 = vunpack.c.h.b16 %v1287
        %v1563 = vunpack.c.l.b16 %v1288
        %v1564 = vunpack.c.h.b16 %v1288
        %v1565 = vunpack.c.l.b16 %v1289
        %v1566 = vunpack.c.h.b16 %v1289
        %v1567 = vunpack.c.l.b16 %v1290
        %v1568 = vunpack.c.h.b16 %v1290
        %v1569 = vunpack.c.l.b16 %v1291
        %v1570 = vunpack.c.h.b16 %v1291
        %v1571 = vunpack.c.l.b16 %v1292
        %v1572 = vunpack.c.h.b16 %v1292
        %v1573 = vunpack.c.l.b16 %v1293
        %v1574 = vunpack.c.h.b16 %v1293
        %v1575 = vunpack.c.l.b16 %v1294
        %v1576 = vunpack.c.h.b16 %v1294
        %v1577 = vunpack.c.l.b16 %v1295
        %v1578 = vunpack.c.h.b16 %v1295
        %v1579 = vunpack.c.l.b16 %v1296
        %v1580 = vunpack.c.h.b16 %v1296
        %v1581 = vunpack.c.l.b16 %v1297
        %v1582 = vunpack.c.h.b16 %v1297
        %v1583 = vunpack.c.l.b16 %v1298
        %v1584 = vunpack.c.h.b16 %v1298
        %v1585 = vunpack.c.l.b16 %v1299
        %v1586 = vunpack.c.h.b16 %v1299
        %v1587 = vunpack.c.l.b16 %v1300
        %v1588 = vunpack.c.h.b16 %v1300
        %v1589 = vunpack.c.l.b16 %v1301
        %v1590 = vunpack.c.h.b16 %v1301
        %v1591 = vunpack.c.l.b16 %v1302
        %v1592 = vunpack.c.h.b16 %v1302
        %v1593 = vunpack.c.l.b16 %v1303
        %v1594 = vunpack.c.h.b16 %v1303
        %v1595 = vunpack.c.l.b16 %v1304
        %v1596 = vunpack.c.h.b16 %v1304
        %v1597 = vunpack.c.l.b16 %v1305
        %v1598 = vunpack.c.h.b16 %v1305
        %v1599 = vunpack.c.l.b16 %v1306
        %v1600 = vunpack.c.h.b16 %v1306
        %v1601 = vunpack.c.l.b16 %v1307
        %v1602 = vunpack.c.h.b16 %v1307
        %v1603 = vunpack.c.l.b16 %v1308
        %v1604 = vunpack.c.h.b16 %v1308
        %v1605 = vunpack.c.l.b16 %v1309
        %v1606 = vunpack.c.h.b16 %v1309
        %v1607 = vunpack.c.l.b16 %v1310
        %v1608 = vunpack.c.h.b16 %v1310
        %v1609 = vunpack.c.l.b16 %v1311
        %v1610 = vunpack.c.h.b16 %v1311
        %v1611 = vunpack.c.l.b16 %v1312
        %v1612 = vunpack.c.h.b16 %v1312
        %v1613 = vunpack.c.l.b16 %v1313
        %v1614 = vunpack.c.h.b16 %v1313
        %v1615 = vunpack.c.l.b16 %v1314
        %v1616 = vunpack.c.h.b16 %v1314
        %v1617 = vunpack.c.l.b16 %v1315
        %v1618 = vunpack.c.h.b16 %v1315
        %v1619 = vunpack.c.l.b16 %v1316
        %v1620 = vunpack.c.h.b16 %v1316
        %v1621 = vunpack.c.l.b16 %v1317
        %v1622 = vunpack.c.h.b16 %v1317
        %v1623 = vunpack.c.l.b16 %v1318
        %v1624 = vunpack.c.h.b16 %v1318
        %v1625 = vunpack.c.l.b16 %v1319
        %v1626 = vunpack.c.h.b16 %v1319
        %v1627 = vunpack.c.l.b16 %v1320
        %v1628 = vunpack.c.h.b16 %v1320
        %v1629 = vunpack.c.l.b16 %v1321
        %v1630 = vunpack.c.h.b16 %v1321
        %v1631 = vunpack.c.l.b16 %v1322
        %v1632 = vunpack.c.h.b16 %v1322
        %v1633 = vunpack.c.l.b16 %v1323
        %v1634 = vunpack.c.h.b16 %v1323
        %v1635 = vunpack.c.l.b16 %v1324
        %v1636 = vunpack.c.h.b16 %v1324
        %v1637 = vunpack.c.l.b16 %v1325
        %v1638 = vunpack.c.h.b16 %v1325
        %v1639 = vunpack.c.l.b16 %v1326
        %v1640 = vunpack.c.h.b16 %v1326
        %v1641 = vunpack.c.l.b16 %v1327
        %v1642 = vunpack.c.h.b16 %v1327
        %v1643 = vunpack.c.l.b16 %v1328
        %v1644 = vunpack.c.h.b16 %v1328
        %v1645 = vunpack.c.l.b16 %v1329
        %v1646 = vunpack.c.h.b16 %v1329
        %v1647 = vunpack.c.l.b16 %v1330
        %v1648 = vunpack.c.h.b16 %v1330
        %v1649 = vunpack.c.l.b16 %v1331
        %v1650 = vunpack.c.h.b16 %v1331
        %v1651 = vunpack.c.l.b16 %v1332
        %v1652 = vunpack.c.h.b16 %v1332
        %v1653 = vunpack.c.l.b16 %v1333
        %v1654 = vunpack.c.h.b16 %v1333
        %v1655 = vunpack.c.l.b16 %v1334
        %v1656 = vunpack.c.h.b16 %v1334
        %v1657 = vunpack.c.l.b16 %v1335
        %v1658 = vunpack.c.h.b16 %v1335
        %v1659 = vunpack.c.l.b16 %v1336
        %v1660 = vunpack.c.h.b16 %v1336
        %v1661 = vunpack.c.l.b16 %v1337
        %v1662 = vunpack.c.h.b16 %v1337
        %v1663 = vunpack.c.l.b16 %v1338
        %v1664 = vunpack.c.h.b16 %v1338
        %v1665 = vunpack.c.l.b16 %v1339
        %v1666 = vunpack.c.h.b16 %v1339
        %v1667 = vunpack.c.l.b16 %v1340
        %v1668 = vunpack.c.h.b16 %v1340
        %v1669 = vunpack.c.l.b16 %v1341
        %v1670 = vunpack.c.h.b16 %v1341
        %v1671 = vunpack.c.l.b16 %v1342
        %v1672 = vunpack.c.h.b16 %v1342
        %v1673 = vunpack.c.l.b16 %v1343
        %v1674 = vunpack.c.h.b16 %v1343
        %v1675 = vunpack.c.l.b16 %v1344
        %v1676 = vunpack.c.h.b16 %v1344
        %v1677 = vunpack.c.l.b16 %v1345
        %v1678 = vunpack.c.h.b16 %v1345
        %v1679 = vunpack.c.l.b16 %v1346
        %v1680 = vunpack.c.h.b16 %v1346
        %v1681 = vunpack.c.l.b16 %v1347
        %v1682 = vunpack.c.h.b16 %v1347
        %v1683 = vunpack.c.l.b16 %v1348
        %v1684 = vunpack.c.h.b16 %v1348
        %v1685 = vunpack.c.l.b16 %v1349
        %v1686 = vunpack.c.h.b16 %v1349
        %v1687 = vunpack.c.l.b16 %v1350
        %v1688 = vunpack.c.h.b16 %v1350
        %v1689 = vunpack.c.l.b16 %v1351
        %v1690 = vunpack.c.h.b16 %v1351
        %v1691 = vunpack.c.l.b16 %v1352
        %v1692 = vunpack.c.h.b16 %v1352
        %v1693 = vunpack.c.l.b16 %v1353
        %v1694 = vunpack.c.h.b16 %v1353
        %v1695 = vunpack.c.l.b16 %v1354
        %v1696 = vunpack.c.h.b16 %v1354
        %v1697 = vunpack.c.l.b16 %v1355
        %v1698 = vunpack.c.h.b16 %v1355
        %v1699 = vunpack.c.l.b16 %v1356
        %v1700 = vunpack.c.h.b16 %v1356
        %v1701 = vunpack.c.l.b16 %v1357
        %v1702 = vunpack.c.h.b16 %v1357
        %v1703 = vunpack.c.l.b16 %v1358
        %v1704 = vunpack.c.h.b16 %v1358
        %v1705 = vunpack.c.l.b16 %v1359
        %v1706 = vunpack.c.h.b16 %v1359
        %v1707 = vunpack.c.l.b16 %v1360
        %v1708 = vunpack.c.h.b16 %v1360
        %v1709 = vunpack.c.l.b16 %v1361
        %v1710 = vunpack.c.h.b16 %v1361
        %v1711 = vunpack.c.l.b16 %v1362
        %v1712 = vunpack.c.h.b16 %v1362
        %v1713 = vunpack.c.l.b16 %v1363
        %v1714 = vunpack.c.h.b16 %v1363
        %v1715 = vunpack.c.l.b16 %v1364
        %v1716 = vunpack.c.h.b16 %v1364
        %v1717 = vunpack.c.l.b16 %v1365
        %v1718 = vunpack.c.h.b16 %v1365
        %v1719 = vunpack.c.l.b16 %v1366
        %v1720 = vunpack.c.h.b16 %v1366
        %v1721 = vunpack.c.l.b16 %v1367
        %v1722 = vunpack.c.h.b16 %v1367
        %v1723 = vunpack.c.l.b16 %v1368
        %v1724 = vunpack.c.h.b16 %v1368
        %v1725 = vunpack.c.l.b16 %v1369
        %v1726 = vunpack.c.h.b16 %v1369
        %v1727 = vunpack.c.l.b16 %v1370
        %v1728 = vunpack.c.h.b16 %v1370
        %v1729 = vunpack.c.l.b16 %v1371
        %v1730 = vunpack.c.h.b16 %v1371
        %v1731 = vunpack.c.l.b16 %v1372
        %v1732 = vunpack.c.h.b16 %v1372
        %v1733 = vunpack.c.l.b16 %v1373
        %v1734 = vunpack.c.h.b16 %v1373
        %v1735 = vunpack.c.l.b16 %v1374
        %v1736 = vunpack.c.h.b16 %v1374
        %v1737 = vunpack.c.l.b16 %v1375
        %v1738 = vunpack.c.h.b16 %v1375
        %v1739 = vunpack.c.l.b16 %v1376
        %v1740 = vunpack.c.h.b16 %v1376
        %v1741 = vunpack.c.l.b16 %v1377
        %v1742 = vunpack.c.h.b16 %v1377
        %v1743 = vunpack.c.l.b16 %v1378
        %v1744 = vunpack.c.h.b16 %v1378
        %v1745 = vunpack.c.l.b16 %v1379
        %v1746 = vunpack.c.h.b16 %v1379
        %v1747 = vunpack.c.l.b16 %v1380
        %v1748 = vunpack.c.h.b16 %v1380
        %v1749 = vunpack.c.l.b16 %v1381
        %v1750 = vunpack.c.h.b16 %v1381
        %v1751 = vunpack.c.l.b16 %v1382
        %v1752 = vunpack.c.h.b16 %v1382
        %v1753 = vunpack.c.l.b16 %v1383
        %v1754 = vunpack.c.h.b16 %v1383
        %v1755 = vunpack.c.l.b16 %v1384
        %v1756 = vunpack.c.h.b16 %v1384
        %v1757 = vunpack.c.l.b16 %v1385
        %v1758 = vunpack.c.h.b16 %v1385
        %v1759 = vunpack.c.l.b16 %v1386
        %v1760 = vunpack.c.h.b16 %v1386
        %v1761 = vunpack.c.l.b16 %v1387
        %v1762 = vunpack.c.h.b16 %v1387
        %v1763 = vunpack.c.l.b16 %v1388
        %v1764 = vunpack.c.h.b16 %v1388
        %v1765 = vunpack.c.l.b16 %v1389
        %v1766 = vunpack.c.h.b16 %v1389
        %v1767 = vunpack.c.l.b16 %v1390
        %v1768 = vunpack.c.h.b16 %v1390
        %v1769 = vunpack.c.l.b16 %v1391
        %v1770 = vunpack.c.h.b16 %v1391
        %v1771 = vunpack.c.l.b16 %v1392
        %v1772 = vunpack.c.h.b16 %v1392
        %v1773 = vunpack.c.l.b16 %v1393
        %v1774 = vunpack.c.h.b16 %v1393
        %v1775 = vunpack.c.l.b16 %v1394
        %v1776 = vunpack.c.h.b16 %v1394
        %v1777 = vunpack.c.l.b16 %v1395
        %v1778 = vunpack.c.h.b16 %v1395
        %v1779 = vunpack.c.l.b16 %v1396
        %v1780 = vunpack.c.h.b16 %v1396
        %v1781 = vpack.c.b16 %v1529, %v1525
        %v1782 = vpack.c.b16 %v1530, %v1526
        %v1783 = vpack.c.b16 %v1531, %v1527
        %v1784 = vpack.c.b16 %v1532, %v1528
        %v1785 = vpack.c.b16 %v1537, %v1533
        %v1786 = vpack.c.b16 %v1538, %v1534
        %v1787 = vpack.c.b16 %v1539, %v1535
        %v1788 = vpack.c.b16 %v1540, %v1536
        %v1789 = vpack.c.b16 %v1545, %v1541
        %v1790 = vpack.c.b16 %v1546, %v1542
        %v1791 = vpack.c.b16 %v1547, %v1543
        %v1792 = vpack.c.b16 %v1548, %v1544
        %v1793 = vpack.c.b16 %v1553, %v1549
        %v1794 = vpack.c.b16 %v1554, %v1550
        %v1795 = vpack.c.b16 %v1555, %v1551
        %v1796 = vpack.c.b16 %v1556, %v1552
        %v1797 = vpack.c.b16 %v1561, %v1557
        %v1798 = vpack.c.b16 %v1562, %v1558
        %v1799 = vpack.c.b16 %v1563, %v1559
        %v1800 = vpack.c.b16 %v1564, %v1560
        %v1801 = vpack.c.b16 %v1569, %v1565
        %v1802 = vpack.c.b16 %v1570, %v1566
        %v1803 = vpack.c.b16 %v1571, %v1567
        %v1804 = vpack.c.b16 %v1572, %v1568
        %v1805 = vpack.c.b16 %v1577, %v1573
        %v1806 = vpack.c.b16 %v1578, %v1574
        %v1807 = vpack.c.b16 %v1579, %v1575
        %v1808 = vpack.c.b16 %v1580, %v1576
        %v1809 = vpack.c.b16 %v1585, %v1581
        %v1810 = vpack.c.b16 %v1586, %v1582
        %v1811 = vpack.c.b16 %v1587, %v1583
        %v1812 = vpack.c.b16 %v1588, %v1584
        %v1813 = vpack.c.b16 %v1593, %v1589
        %v1814 = vpack.c.b16 %v1594, %v1590
        %v1815 = vpack.c.b16 %v1595, %v1591
        %v1816 = vpack.c.b16 %v1596, %v1592
        %v1817 = vpack.c.b16 %v1601, %v1597
        %v1818 = vpack.c.b16 %v1602, %v1598
        %v1819 = vpack.c.b16 %v1603, %v1599
        %v1820 = vpack.c.b16 %v1604, %v1600
        %v1821 = vpack.c.b16 %v1609, %v1605
        %v1822 = vpack.c.b16 %v1610, %v1606
        %v1823 = vpack.c.b16 %v1611, %v1607
        %v1824 = vpack.c.b16 %v1612, %v1608
        %v1825 = vpack.c.b16 %v1617, %v1613
        %v1826 = vpack.c.b16 %v1618, %v1614
        %v1827 = vpack.c.b16 %v1619, %v1615
        %v1828 = vpack.c.b16 %v1620, %v1616
        %v1829 = vpack.c.b16 %v1625, %v1621
        %v1830 = vpack.c.b16 %v1626, %v1622
        %v1831 = vpack.c.b16 %v1627, %v1623
        %v1832 = vpack.c.b16 %v1628, %v1624
        %v1833 = vpack.c.b16 %v1633, %v1629
        %v1834 = vpack.c.b16 %v1634, %v1630
        %v1835 = vpack.c.b16 %v1635, %v1631
        %v1836 = vpack.c.b16 %v1636, %v1632
        %v1837 = vpack.c.b16 %v1641, %v1637
        %v1838 = vpack.c.b16 %v1642, %v1638
        %v1839 = vpack.c.b16 %v1643, %v1639
        %v1840 = vpack.c.b16 %v1644, %v1640
        %v1841 = vpack.c.b16 %v1649, %v1645
        %v1842 = vpack.c.b16 %v1650, %v1646
        %v1843 = vpack.c.b16 %v1651, %v1647
        %v1844 = vpack.c.b16 %v1652, %v1648
        %v1845 = vpack.c.b16 %v1657, %v1653
        %v1846 = vpack.c.b16 %v1658, %v1654
        %v1847 = vpack.c.b16 %v1659, %v1655
        %v1848 = vpack.c.b16 %v1660, %v1656
        %v1849 = vpack.c.b16 %v1665, %v1661
        %v1850 = vpack.c.b16 %v1666, %v1662
        %v1851 = vpack.c.b16 %v1667, %v1663
        %v1852 = vpack.c.b16 %v1668, %v1664
        %v1853 = vpack.c.b16 %v1673, %v1669
        %v1854 = vpack.c.b16 %v1674, %v1670
        %v1855 = vpack.c.b16 %v1675, %v1671
        %v1856 = vpack.c.b16 %v1676, %v1672
        %v1857 = vpack.c.b16 %v1681, %v1677
        %v1858 = vpack.c.b16 %v1682, %v1678
        %v1859 = vpack.c.b16 %v1683, %v1679
        %v1860 = vpack.c.b16 %v1684, %v1680
        %v1861 = vpack.c.b16 %v1689, %v1685
        %v1862 = vpack.c.b16 %v1690, %v1686
        %v1863 = vpack.c.b16 %v1691, %v1687
        %v1864 = vpack.c.b16 %v1692, %v1688
        %v1865 = vpack.c.b16 %v1697, %v1693
        %v1866 = vpack.c.b16 %v1698, %v1694
        %v1867 = vpack.c.b16 %v1699, %v1695
        %v1868 = vpack.c.b16 %v1700, %v1696
        %v1869 = vpack.c.b16 %v1705, %v1701
        %v1870 = vpack.c.b16 %v1706, %v1702
        %v1871 = vpack.c.b16 %v1707, %v1703
        %v1872 = vpack.c.b16 %v1708, %v1704
        %v1873 = vpack.c.b16 %v1713, %v1709
        %v1874 = vpack.c.b16 %v1714, %v1710
        %v1875 = vpack.c.b16 %v1715, %v1711
        %v1876 = vpack.c.b16 %v1716, %v1712
        %v1877 = vpack.c.b16 %v1721, %v1717
        %v1878 = vpack.c.b16 %v1722, %v1718
        %v1879 = vpack.c.b16 %v1723, %v1719
        %v1880 = vpack.c.b16 %v1724, %v1720
        %v1881 = vpack.c.b16 %v1729, %v1725
        %v1882 = vpack.c.b16 %v1730, %v1726
        %v1883 = vpack.c.b16 %v1731, %v1727
        %v1884 = vpack.c.b16 %v1732, %v1728
        %v1885 = vpack.c.b16 %v1737, %v1733
        %v1886 = vpack.c.b16 %v1738, %v1734
        %v1887 = vpack.c.b16 %v1739, %v1735
        %v1888 = vpack.c.b16 %v1740, %v1736
        %v1889 = vpack.c.b16 %v1745, %v1741
        %v1890 = vpack.c.b16 %v1746, %v1742
        %v1891 = vpack.c.b16 %v1747, %v1743
        %v1892 = vpack.c.b16 %v1748, %v1744
        %v1893 = vpack.c.b16 %v1753, %v1749
        %v1894 = vpack.c.b16 %v1754, %v1750
        %v1895 = vpack.c.b16 %v1755, %v1751
        %v1896 = vpack.c.b16 %v1756, %v1752
        %v1897 = vpack.c.b16 %v1761, %v1757
        %v1898 = vpack.c.b16 %v1762, %v1758
        %v1899 = vpack.c.b16 %v1763, %v1759
        %v1900 = vpack.c.b16 %v1764, %v1760
        %v1901 = vpack.c.b16 %v1769, %v1765
        %v1902 = vpack.c.b16 %v1770, %v1766
        %v1903 = vpack.c.b16 %v1771, %v1767
        %v1904 = vpack.c.b16 %v1772, %v1768
        %v1905 = vpack.c.b16 %v1777, %v1773
        %v1906 = vpack.c.b16 %v1778, %v1774
        %v1907 = vpack.c.b16 %v1779, %v1775
        %v1908 = vpack.c.b16 %v1780, %v1776
        %2037 = vmatprep.subr.bf16.mxu0 %v1156
        %2038 = vmatpush1.bf16.msra.mxu0 %v1155
        %2039 = vmatprep.subr.bf16.mxu0 %v1154
        %2040 = vmatpush1.bf16.msra.mxu0 %v1153
        %2041 = vmatprep.subr.bf16.mxu0 %v1152
        %2042 = vmatpush1.bf16.msra.mxu0 %v1151
        %2043 = vmatprep.subr.bf16.mxu0 %v1150
        %2044 = vmatpush1.bf16.msra.mxu0 %v1149
        %2045 = vmatprep.subr.bf16.mxu0 %v1148
        %2046 = vmatpush1.bf16.msra.mxu0 %v1147
        %2047 = vmatprep.subr.bf16.mxu0 %v1146
        %2048 = vmatpush1.bf16.msra.mxu0 %v1145
        %2049 = vmatprep.subr.bf16.mxu0 %v1144
        %2050 = vmatpush1.bf16.msra.mxu0 %v1143
        %2051 = vmatprep.subr.bf16.mxu0 %v1142
        %2052 = vmatpush1.bf16.msra.mxu0 %v1141
        %2053 = vmatprep.subr.bf16.mxu0 %v1172
        %2054 = vmatpush2.bf16.msra.mxu0 %v1171
        %2055 = vmatprep.subr.bf16.mxu0 %v1170
        %2056 = vmatpush2.bf16.msra.mxu0 %v1169
        %2057 = vmatprep.subr.bf16.mxu0 %v1168
        %2058 = vmatpush2.bf16.msra.mxu0 %v1167
        %2059 = vmatprep.subr.bf16.mxu0 %v1166
        %2060 = vmatpush2.bf16.msra.mxu0 %v1165
        %2061 = vmatprep.subr.bf16.mxu0 %v1164
        %2062 = vmatpush2.bf16.msra.mxu0 %v1163
        %2063 = vmatprep.subr.bf16.mxu0 %v1162
        %2064 = vmatpush2.bf16.msra.mxu0 %v1161
        %2065 = vmatprep.subr.bf16.mxu0 %v1160
        %2066 = vmatpush2.bf16.msra.mxu0 %v1159
        %2067 = vmatprep.subr.bf16.mxu0 %v1158
        %2068 = vmatpush2.bf16.msra.mxu0 %v1157
        %2069 = vmatprep.mubr.bf16.mxu0 %v1782
        %2070 = vmatmul.mubr.bf16.gmra.mxu0 %v1781
        %v2071 = vpop.f32.mrf.mxu0
        %v2072 = vadd.f32 0.0, %v2071
        %v2073 = vpop.f32.mrf.mxu0
        %v2074 = vadd.f32 0.0, %v2073
        %v2075 = vpop.f32.mrf.mxu0
        %v2076 = vadd.f32 0.0, %v2075
        %v2077 = vpop.f32.mrf.mxu0
        %v2078 = vadd.f32 0.0, %v2077
        %2079 = vmatprep.mubr.bf16.mxu0 %v1786
        %2080 = vmatmul.mubr.bf16.gmra.mxu0 %v1785
        %v2081 = vpop.f32.mrf.mxu0
        %v2082 = vadd.f32 0.0, %v2081
        %v2083 = vpop.f32.mrf.mxu0
        %v2084 = vadd.f32 0.0, %v2083
        %v2085 = vpop.f32.mrf.mxu0
        %v2086 = vadd.f32 0.0, %v2085
        %v2087 = vpop.f32.mrf.mxu0
        %v2088 = vadd.f32 0.0, %v2087
        %2089 = vmatprep.mubr.bf16.mxu0 %v1790
        %2090 = vmatmul.mubr.bf16.gmra.mxu0 %v1789
        %v2091 = vpop.f32.mrf.mxu0
        %v2092 = vadd.f32 0.0, %v2091
        %v2093 = vpop.f32.mrf.mxu0
        %v2094 = vadd.f32 0.0, %v2093
        %v2095 = vpop.f32.mrf.mxu0
        %v2096 = vadd.f32 0.0, %v2095
        %v2097 = vpop.f32.mrf.mxu0
        %v2098 = vadd.f32 0.0, %v2097
        %2099 = vmatprep.mubr.bf16.mxu0 %v1794
        %2100 = vmatmul.mubr.bf16.gmra.mxu0 %v1793
        %v2101 = vpop.f32.mrf.mxu0
        %v2102 = vadd.f32 0.0, %v2101
        %v2103 = vpop.f32.mrf.mxu0
        %v2104 = vadd.f32 0.0, %v2103
        %v2105 = vpop.f32.mrf.mxu0
        %v2106 = vadd.f32 0.0, %v2105
        %v2107 = vpop.f32.mrf.mxu0
        %v2108 = vadd.f32 0.0, %v2107
        %2109 = vmatprep.mubr.bf16.mxu0 %v1798
        %2110 = vmatmul.mubr.bf16.gmra.mxu0 %v1797
        %v2111 = vpop.f32.mrf.mxu0
        %v2112 = vadd.f32 0.0, %v2111
        %v2113 = vpop.f32.mrf.mxu0
        %v2114 = vadd.f32 0.0, %v2113
        %v2115 = vpop.f32.mrf.mxu0
        %v2116 = vadd.f32 0.0, %v2115
        %v2117 = vpop.f32.mrf.mxu0
        %v2118 = vadd.f32 0.0, %v2117
        %2119 = vmatprep.mubr.bf16.mxu0 %v1802
        %2120 = vmatmul.mubr.bf16.gmra.mxu0 %v1801
        %v2121 = vpop.f32.mrf.mxu0
        %v2122 = vadd.f32 0.0, %v2121
        %v2123 = vpop.f32.mrf.mxu0
        %v2124 = vadd.f32 0.0, %v2123
        %v2125 = vpop.f32.mrf.mxu0
        %v2126 = vadd.f32 0.0, %v2125
        %v2127 = vpop.f32.mrf.mxu0
        %v2128 = vadd.f32 0.0, %v2127
        %2129 = vmatprep.mubr.bf16.mxu0 %v1806
        %2130 = vmatmul.mubr.bf16.gmra.mxu0 %v1805
        %v2131 = vpop.f32.mrf.mxu0
        %v2132 = vadd.f32 0.0, %v2131
        %v2133 = vpop.f32.mrf.mxu0
        %v2134 = vadd.f32 0.0, %v2133
        %v2135 = vpop.f32.mrf.mxu0
        %v2136 = vadd.f32 0.0, %v2135
        %v2137 = vpop.f32.mrf.mxu0
        %v2138 = vadd.f32 0.0, %v2137
        %2139 = vmatprep.mubr.bf16.mxu0 %v1810
        %2140 = vmatmul.mubr.bf16.gmra.mxu0 %v1809
        %v2141 = vpop.f32.mrf.mxu0
        %v2142 = vadd.f32 0.0, %v2141
        %v2143 = vpop.f32.mrf.mxu0
        %v2144 = vadd.f32 0.0, %v2143
        %v2145 = vpop.f32.mrf.mxu0
        %v2146 = vadd.f32 0.0, %v2145
        %v2147 = vpop.f32.mrf.mxu0
        %v2148 = vadd.f32 0.0, %v2147
        %2149 = vmatprep.mubr.bf16.mxu0 %v1814
        %2150 = vmatmul.mubr.bf16.gmra.mxu0 %v1813
        %v2151 = vpop.f32.mrf.mxu0
        %v2152 = vadd.f32 0.0, %v2151
        %v2153 = vpop.f32.mrf.mxu0
        %v2154 = vadd.f32 0.0, %v2153
        %v2155 = vpop.f32.mrf.mxu0
        %v2156 = vadd.f32 0.0, %v2155
        %v2157 = vpop.f32.mrf.mxu0
        %v2158 = vadd.f32 0.0, %v2157
        %2159 = vmatprep.mubr.bf16.mxu0 %v1818
        %2160 = vmatmul.mubr.bf16.gmra.mxu0 %v1817
        %v2161 = vpop.f32.mrf.mxu0
        %v2162 = vadd.f32 0.0, %v2161
        %v2163 = vpop.f32.mrf.mxu0
        %v2164 = vadd.f32 0.0, %v2163
        %v2165 = vpop.f32.mrf.mxu0
        %v2166 = vadd.f32 0.0, %v2165
        %v2167 = vpop.f32.mrf.mxu0
        %v2168 = vadd.f32 0.0, %v2167
        %2169 = vmatprep.mubr.bf16.mxu0 %v1822
        %2170 = vmatmul.mubr.bf16.gmra.mxu0 %v1821
        %v2171 = vpop.f32.mrf.mxu0
        %v2172 = vadd.f32 0.0, %v2171
        %v2173 = vpop.f32.mrf.mxu0
        %v2174 = vadd.f32 0.0, %v2173
        %v2175 = vpop.f32.mrf.mxu0
        %v2176 = vadd.f32 0.0, %v2175
        %v2177 = vpop.f32.mrf.mxu0
        %v2178 = vadd.f32 0.0, %v2177
        %2179 = vmatprep.mubr.bf16.mxu0 %v1826
        %2180 = vmatmul.mubr.bf16.gmra.mxu0 %v1825
        %v2181 = vpop.f32.mrf.mxu0
        %v2182 = vadd.f32 0.0, %v2181
        %v2183 = vpop.f32.mrf.mxu0
        %v2184 = vadd.f32 0.0, %v2183
        %v2185 = vpop.f32.mrf.mxu0
        %v2186 = vadd.f32 0.0, %v2185
        %v2187 = vpop.f32.mrf.mxu0
        %v2188 = vadd.f32 0.0, %v2187
        %2189 = vmatprep.mubr.bf16.mxu0 %v1830
        %2190 = vmatmul.mubr.bf16.gmra.mxu0 %v1829
        %v2191 = vpop.f32.mrf.mxu0
        %v2192 = vadd.f32 0.0, %v2191
        %v2193 = vpop.f32.mrf.mxu0
        %v2194 = vadd.f32 0.0, %v2193
        %v2195 = vpop.f32.mrf.mxu0
        %v2196 = vadd.f32 0.0, %v2195
        %v2197 = vpop.f32.mrf.mxu0
        %v2198 = vadd.f32 0.0, %v2197
        %2199 = vmatprep.mubr.bf16.mxu0 %v1834
        %2200 = vmatmul.mubr.bf16.gmra.mxu0 %v1833
        %v2201 = vpop.f32.mrf.mxu0
        %v2202 = vadd.f32 0.0, %v2201
        %v2203 = vpop.f32.mrf.mxu0
        %v2204 = vadd.f32 0.0, %v2203
        %v2205 = vpop.f32.mrf.mxu0
        %v2206 = vadd.f32 0.0, %v2205
        %v2207 = vpop.f32.mrf.mxu0
        %v2208 = vadd.f32 0.0, %v2207
        %2209 = vmatprep.mubr.bf16.mxu0 %v1838
        %2210 = vmatmul.mubr.bf16.gmra.mxu0 %v1837
        %v2211 = vpop.f32.mrf.mxu0
        %v2212 = vadd.f32 0.0, %v2211
        %v2213 = vpop.f32.mrf.mxu0
        %v2214 = vadd.f32 0.0, %v2213
        %v2215 = vpop.f32.mrf.mxu0
        %v2216 = vadd.f32 0.0, %v2215
        %v2217 = vpop.f32.mrf.mxu0
        %v2218 = vadd.f32 0.0, %v2217
        %2219 = vmatprep.mubr.bf16.mxu0 %v1842
        %2220 = vmatmul.mubr.bf16.gmra.mxu0 %v1841
        %v2221 = vpop.f32.mrf.mxu0
        %v2222 = vadd.f32 0.0, %v2221
        %v2223 = vpop.f32.mrf.mxu0
        %v2224 = vadd.f32 0.0, %v2223
        %v2225 = vpop.f32.mrf.mxu0
        %v2226 = vadd.f32 0.0, %v2225
        %v2227 = vpop.f32.mrf.mxu0
        %v2228 = vadd.f32 0.0, %v2227
        %2229 = vmatprep.mubr.bf16.mxu0 %v1846
        %2230 = vmatmul.mubr.bf16.gmra.mxu0 %v1845
        %v2231 = vpop.f32.mrf.mxu0
        %v2232 = vadd.f32 0.0, %v2231
        %v2233 = vpop.f32.mrf.mxu0
        %v2234 = vadd.f32 0.0, %v2233
        %v2235 = vpop.f32.mrf.mxu0
        %v2236 = vadd.f32 0.0, %v2235
        %v2237 = vpop.f32.mrf.mxu0
        %v2238 = vadd.f32 0.0, %v2237
        %2239 = vmatprep.mubr.bf16.mxu0 %v1850
        %2240 = vmatmul.mubr.bf16.gmra.mxu0 %v1849
        %v2241 = vpop.f32.mrf.mxu0
        %v2242 = vadd.f32 0.0, %v2241
        %v2243 = vpop.f32.mrf.mxu0
        %v2244 = vadd.f32 0.0, %v2243
        %v2245 = vpop.f32.mrf.mxu0
        %v2246 = vadd.f32 0.0, %v2245
        %v2247 = vpop.f32.mrf.mxu0
        %v2248 = vadd.f32 0.0, %v2247
        %2249 = vmatprep.mubr.bf16.mxu0 %v1854
        %2250 = vmatmul.mubr.bf16.gmra.mxu0 %v1853
        %v2251 = vpop.f32.mrf.mxu0
        %v2252 = vadd.f32 0.0, %v2251
        %v2253 = vpop.f32.mrf.mxu0
        %v2254 = vadd.f32 0.0, %v2253
        %v2255 = vpop.f32.mrf.mxu0
        %v2256 = vadd.f32 0.0, %v2255
        %v2257 = vpop.f32.mrf.mxu0
        %v2258 = vadd.f32 0.0, %v2257
        %2259 = vmatprep.mubr.bf16.mxu0 %v1858
        %2260 = vmatmul.mubr.bf16.gmra.mxu0 %v1857
        %v2261 = vpop.f32.mrf.mxu0
        %v2262 = vadd.f32 0.0, %v2261
        %v2263 = vpop.f32.mrf.mxu0
        %v2264 = vadd.f32 0.0, %v2263
        %v2265 = vpop.f32.mrf.mxu0
        %v2266 = vadd.f32 0.0, %v2265
        %v2267 = vpop.f32.mrf.mxu0
        %v2268 = vadd.f32 0.0, %v2267
        %2269 = vmatprep.mubr.bf16.mxu0 %v1862
        %2270 = vmatmul.mubr.bf16.gmra.mxu0 %v1861
        %v2271 = vpop.f32.mrf.mxu0
        %v2272 = vadd.f32 0.0, %v2271
        %v2273 = vpop.f32.mrf.mxu0
        %v2274 = vadd.f32 0.0, %v2273
        %v2275 = vpop.f32.mrf.mxu0
        %v2276 = vadd.f32 0.0, %v2275
        %v2277 = vpop.f32.mrf.mxu0
        %v2278 = vadd.f32 0.0, %v2277
        %2279 = vmatprep.mubr.bf16.mxu0 %v1866
        %2280 = vmatmul.mubr.bf16.gmra.mxu0 %v1865
        %v2281 = vpop.f32.mrf.mxu0
        %v2282 = vadd.f32 0.0, %v2281
        %v2283 = vpop.f32.mrf.mxu0
        %v2284 = vadd.f32 0.0, %v2283
        %v2285 = vpop.f32.mrf.mxu0
        %v2286 = vadd.f32 0.0, %v2285
        %v2287 = vpop.f32.mrf.mxu0
        %v2288 = vadd.f32 0.0, %v2287
        %2289 = vmatprep.mubr.bf16.mxu0 %v1870
        %2290 = vmatmul.mubr.bf16.gmra.mxu0 %v1869
        %v2291 = vpop.f32.mrf.mxu0
        %v2292 = vadd.f32 0.0, %v2291
        %v2293 = vpop.f32.mrf.mxu0
        %v2294 = vadd.f32 0.0, %v2293
        %v2295 = vpop.f32.mrf.mxu0
        %v2296 = vadd.f32 0.0, %v2295
        %v2297 = vpop.f32.mrf.mxu0
        %v2298 = vadd.f32 0.0, %v2297
        %2299 = vmatprep.mubr.bf16.mxu0 %v1874
        %2300 = vmatmul.mubr.bf16.gmra.mxu0 %v1873
        %v2301 = vpop.f32.mrf.mxu0
        %v2302 = vadd.f32 0.0, %v2301
        %v2303 = vpop.f32.mrf.mxu0
        %v2304 = vadd.f32 0.0, %v2303
        %v2305 = vpop.f32.mrf.mxu0
        %v2306 = vadd.f32 0.0, %v2305
        %v2307 = vpop.f32.mrf.mxu0
        %v2308 = vadd.f32 0.0, %v2307
        %2309 = vmatprep.mubr.bf16.mxu0 %v1878
        %2310 = vmatmul.mubr.bf16.gmra.mxu0 %v1877
        %v2311 = vpop.f32.mrf.mxu0
        %v2312 = vadd.f32 0.0, %v2311
        %v2313 = vpop.f32.mrf.mxu0
        %v2314 = vadd.f32 0.0, %v2313
        %v2315 = vpop.f32.mrf.mxu0
        %v2316 = vadd.f32 0.0, %v2315
        %v2317 = vpop.f32.mrf.mxu0
        %v2318 = vadd.f32 0.0, %v2317
        %2319 = vmatprep.mubr.bf16.mxu0 %v1882
        %2320 = vmatmul.mubr.bf16.gmra.mxu0 %v1881
        %v2321 = vpop.f32.mrf.mxu0
        %v2322 = vadd.f32 0.0, %v2321
        %v2323 = vpop.f32.mrf.mxu0
        %v2324 = vadd.f32 0.0, %v2323
        %v2325 = vpop.f32.mrf.mxu0
        %v2326 = vadd.f32 0.0, %v2325
        %v2327 = vpop.f32.mrf.mxu0
        %v2328 = vadd.f32 0.0, %v2327
        %2329 = vmatprep.mubr.bf16.mxu0 %v1886
        %2330 = vmatmul.mubr.bf16.gmra.mxu0 %v1885
        %v2331 = vpop.f32.mrf.mxu0
        %v2332 = vadd.f32 0.0, %v2331
        %v2333 = vpop.f32.mrf.mxu0
        %v2334 = vadd.f32 0.0, %v2333
        %v2335 = vpop.f32.mrf.mxu0
        %v2336 = vadd.f32 0.0, %v2335
        %v2337 = vpop.f32.mrf.mxu0
        %v2338 = vadd.f32 0.0, %v2337
        %2339 = vmatprep.mubr.bf16.mxu0 %v1890
        %2340 = vmatmul.mubr.bf16.gmra.mxu0 %v1889
        %v2341 = vpop.f32.mrf.mxu0
        %v2342 = vadd.f32 0.0, %v2341
        %v2343 = vpop.f32.mrf.mxu0
        %v2344 = vadd.f32 0.0, %v2343
        %v2345 = vpop.f32.mrf.mxu0
        %v2346 = vadd.f32 0.0, %v2345
        %v2347 = vpop.f32.mrf.mxu0
        %v2348 = vadd.f32 0.0, %v2347
        %2349 = vmatprep.mubr.bf16.mxu0 %v1894
        %2350 = vmatmul.mubr.bf16.gmra.mxu0 %v1893
        %v2351 = vpop.f32.mrf.mxu0
        %v2352 = vadd.f32 0.0, %v2351
        %v2353 = vpop.f32.mrf.mxu0
        %v2354 = vadd.f32 0.0, %v2353
        %v2355 = vpop.f32.mrf.mxu0
        %v2356 = vadd.f32 0.0, %v2355
        %v2357 = vpop.f32.mrf.mxu0
        %v2358 = vadd.f32 0.0, %v2357
        %2359 = vmatprep.mubr.bf16.mxu0 %v1898
        %2360 = vmatmul.mubr.bf16.gmra.mxu0 %v1897
        %v2361 = vpop.f32.mrf.mxu0
        %v2362 = vadd.f32 0.0, %v2361
        %v2363 = vpop.f32.mrf.mxu0
        %v2364 = vadd.f32 0.0, %v2363
        %v2365 = vpop.f32.mrf.mxu0
        %v2366 = vadd.f32 0.0, %v2365
        %v2367 = vpop.f32.mrf.mxu0
        %v2368 = vadd.f32 0.0, %v2367
        %2369 = vmatprep.mubr.bf16.mxu0 %v1902
        %2370 = vmatmul.mubr.bf16.gmra.mxu0 %v1901
        %v2371 = vpop.f32.mrf.mxu0
        %v2372 = vadd.f32 0.0, %v2371
        %v2373 = vpop.f32.mrf.mxu0
        %v2374 = vadd.f32 0.0, %v2373
        %v2375 = vpop.f32.mrf.mxu0
        %v2376 = vadd.f32 0.0, %v2375
        %v2377 = vpop.f32.mrf.mxu0
        %v2378 = vadd.f32 0.0, %v2377
        %2379 = vmatprep.mubr.bf16.mxu0 %v1906
        %2380 = vmatmul.mubr.bf16.gmra.mxu0 %v1905
        %v2381 = vpop.f32.mrf.mxu0
        %v2382 = vadd.f32 0.0, %v2381
        %v2383 = vpop.f32.mrf.mxu0
        %v2384 = vadd.f32 0.0, %v2383
        %v2385 = vpop.f32.mrf.mxu0
        %v2386 = vadd.f32 0.0, %v2385
        %v2387 = vpop.f32.mrf.mxu0
        %v2388 = vadd.f32 0.0, %v2387
        %2389 = vdwg.mxu0
        %2390 = vmatprep.subr.bf16.mxu0 %v1188
        %2391 = vmatpush1.bf16.msra.mxu0 %v1187
        %2392 = vmatprep.subr.bf16.mxu0 %v1186
        %2393 = vmatpush1.bf16.msra.mxu0 %v1185
        %2394 = vmatprep.subr.bf16.mxu0 %v1184
        %2395 = vmatpush1.bf16.msra.mxu0 %v1183
        %2396 = vmatprep.subr.bf16.mxu0 %v1182
        %2397 = vmatpush1.bf16.msra.mxu0 %v1181
        %2398 = vmatprep.subr.bf16.mxu0 %v1180
        %2399 = vmatpush1.bf16.msra.mxu0 %v1179
        %2400 = vmatprep.subr.bf16.mxu0 %v1178
        %2401 = vmatpush1.bf16.msra.mxu0 %v1177
        %2402 = vmatprep.subr.bf16.mxu0 %v1176
        %2403 = vmatpush1.bf16.msra.mxu0 %v1175
        %2404 = vmatprep.subr.bf16.mxu0 %v1174
        %2405 = vmatpush1.bf16.msra.mxu0 %v1173
        %2406 = vmatprep.subr.bf16.mxu0 %v1204
        %2407 = vmatpush2.bf16.msra.mxu0 %v1203
        %2408 = vmatprep.subr.bf16.mxu0 %v1202
        %2409 = vmatpush2.bf16.msra.mxu0 %v1201
        %2410 = vmatprep.subr.bf16.mxu0 %v1200
        %2411 = vmatpush2.bf16.msra.mxu0 %v1199
        %2412 = vmatprep.subr.bf16.mxu0 %v1198
        %2413 = vmatpush2.bf16.msra.mxu0 %v1197
        %2414 = vmatprep.subr.bf16.mxu0 %v1196
        %2415 = vmatpush2.bf16.msra.mxu0 %v1195
        %2416 = vmatprep.subr.bf16.mxu0 %v1194
        %2417 = vmatpush2.bf16.msra.mxu0 %v1193
        %2418 = vmatprep.subr.bf16.mxu0 %v1192
        %2419 = vmatpush2.bf16.msra.mxu0 %v1191
        %2420 = vmatprep.subr.bf16.mxu0 %v1190
        %2421 = vmatpush2.bf16.msra.mxu0 %v1189
        %2422 = vmatprep.mubr.bf16.mxu0 %v1784
        %2423 = vmatmul.mubr.bf16.gmra.mxu0 %v1783
        %v2424 = vpop.f32.mrf.mxu0
        %v2425 = vadd.f32 %v2072, %v2424
        %v2426 = vpop.f32.mrf.mxu0
        %v2427 = vadd.f32 %v2074, %v2426
        %v2428 = vpop.f32.mrf.mxu0
        %v2429 = vadd.f32 %v2076, %v2428
        %v2430 = vpop.f32.mrf.mxu0
        %v2431 = vadd.f32 %v2078, %v2430
        %2432 = vmatprep.mubr.bf16.mxu0 %v1788
        %2433 = vmatmul.mubr.bf16.gmra.mxu0 %v1787
        %v2434 = vpop.f32.mrf.mxu0
        %v2435 = vadd.f32 %v2082, %v2434
        %v2436 = vpop.f32.mrf.mxu0
        %v2437 = vadd.f32 %v2084, %v2436
        %v2438 = vpop.f32.mrf.mxu0
        %v2439 = vadd.f32 %v2086, %v2438
        %v2440 = vpop.f32.mrf.mxu0
        %v2441 = vadd.f32 %v2088, %v2440
        %2442 = vmatprep.mubr.bf16.mxu0 %v1792
        %2443 = vmatmul.mubr.bf16.gmra.mxu0 %v1791
        %v2444 = vpop.f32.mrf.mxu0
        %v2445 = vadd.f32 %v2092, %v2444
        %v2446 = vpop.f32.mrf.mxu0
        %v2447 = vadd.f32 %v2094, %v2446
        %v2448 = vpop.f32.mrf.mxu0
        %v2449 = vadd.f32 %v2096, %v2448
        %v2450 = vpop.f32.mrf.mxu0
        %v2451 = vadd.f32 %v2098, %v2450
        %2452 = vmatprep.mubr.bf16.mxu0 %v1796
        %2453 = vmatmul.mubr.bf16.gmra.mxu0 %v1795
        %v2454 = vpop.f32.mrf.mxu0
        %v2455 = vadd.f32 %v2102, %v2454
        %v2456 = vpop.f32.mrf.mxu0
        %v2457 = vadd.f32 %v2104, %v2456
        %v2458 = vpop.f32.mrf.mxu0
        %v2459 = vadd.f32 %v2106, %v2458
        %v2460 = vpop.f32.mrf.mxu0
        %v2461 = vadd.f32 %v2108, %v2460
        %2462 = vmatprep.mubr.bf16.mxu0 %v1800
        %2463 = vmatmul.mubr.bf16.gmra.mxu0 %v1799
        %v2464 = vpop.f32.mrf.mxu0
        %v2465 = vadd.f32 %v2112, %v2464
        %v2466 = vpop.f32.mrf.mxu0
        %v2467 = vadd.f32 %v2114, %v2466
        %v2468 = vpop.f32.mrf.mxu0
        %v2469 = vadd.f32 %v2116, %v2468
        %v2470 = vpop.f32.mrf.mxu0
        %v2471 = vadd.f32 %v2118, %v2470
        %2472 = vmatprep.mubr.bf16.mxu0 %v1804
        %2473 = vmatmul.mubr.bf16.gmra.mxu0 %v1803
        %v2474 = vpop.f32.mrf.mxu0
        %v2475 = vadd.f32 %v2122, %v2474
        %v2476 = vpop.f32.mrf.mxu0
        %v2477 = vadd.f32 %v2124, %v2476
        %v2478 = vpop.f32.mrf.mxu0
        %v2479 = vadd.f32 %v2126, %v2478
        %v2480 = vpop.f32.mrf.mxu0
        %v2481 = vadd.f32 %v2128, %v2480
        %2482 = vmatprep.mubr.bf16.mxu0 %v1808
        %2483 = vmatmul.mubr.bf16.gmra.mxu0 %v1807
        %v2484 = vpop.f32.mrf.mxu0
        %v2485 = vadd.f32 %v2132, %v2484
        %v2486 = vpop.f32.mrf.mxu0
        %v2487 = vadd.f32 %v2134, %v2486
        %v2488 = vpop.f32.mrf.mxu0
        %v2489 = vadd.f32 %v2136, %v2488
        %v2490 = vpop.f32.mrf.mxu0
        %v2491 = vadd.f32 %v2138, %v2490
        %2492 = vmatprep.mubr.bf16.mxu0 %v1812
        %2493 = vmatmul.mubr.bf16.gmra.mxu0 %v1811
        %v2494 = vpop.f32.mrf.mxu0
        %v2495 = vadd.f32 %v2142, %v2494
        %v2496 = vpop.f32.mrf.mxu0
        %v2497 = vadd.f32 %v2144, %v2496
        %v2498 = vpop.f32.mrf.mxu0
        %v2499 = vadd.f32 %v2146, %v2498
        %v2500 = vpop.f32.mrf.mxu0
        %v2501 = vadd.f32 %v2148, %v2500
        %2502 = vmatprep.mubr.bf16.mxu0 %v1816
        %2503 = vmatmul.mubr.bf16.gmra.mxu0 %v1815
        %v2504 = vpop.f32.mrf.mxu0
        %v2505 = vadd.f32 %v2152, %v2504
        %v2506 = vpop.f32.mrf.mxu0
        %v2507 = vadd.f32 %v2154, %v2506
        %v2508 = vpop.f32.mrf.mxu0
        %v2509 = vadd.f32 %v2156, %v2508
        %v2510 = vpop.f32.mrf.mxu0
        %v2511 = vadd.f32 %v2158, %v2510
        %2512 = vmatprep.mubr.bf16.mxu0 %v1820
        %2513 = vmatmul.mubr.bf16.gmra.mxu0 %v1819
        %v2514 = vpop.f32.mrf.mxu0
        %v2515 = vadd.f32 %v2162, %v2514
        %v2516 = vpop.f32.mrf.mxu0
        %v2517 = vadd.f32 %v2164, %v2516
        %v2518 = vpop.f32.mrf.mxu0
        %v2519 = vadd.f32 %v2166, %v2518
        %v2520 = vpop.f32.mrf.mxu0
        %v2521 = vadd.f32 %v2168, %v2520
        %2522 = vmatprep.mubr.bf16.mxu0 %v1824
        %2523 = vmatmul.mubr.bf16.gmra.mxu0 %v1823
        %v2524 = vpop.f32.mrf.mxu0
        %v2525 = vadd.f32 %v2172, %v2524
        %v2526 = vpop.f32.mrf.mxu0
        %v2527 = vadd.f32 %v2174, %v2526
        %v2528 = vpop.f32.mrf.mxu0
        %v2529 = vadd.f32 %v2176, %v2528
        %v2530 = vpop.f32.mrf.mxu0
        %v2531 = vadd.f32 %v2178, %v2530
        %2532 = vmatprep.mubr.bf16.mxu0 %v1828
        %2533 = vmatmul.mubr.bf16.gmra.mxu0 %v1827
        %v2534 = vpop.f32.mrf.mxu0
        %v2535 = vadd.f32 %v2182, %v2534
        %v2536 = vpop.f32.mrf.mxu0
        %v2537 = vadd.f32 %v2184, %v2536
        %v2538 = vpop.f32.mrf.mxu0
        %v2539 = vadd.f32 %v2186, %v2538
        %v2540 = vpop.f32.mrf.mxu0
        %v2541 = vadd.f32 %v2188, %v2540
        %2542 = vmatprep.mubr.bf16.mxu0 %v1832
        %2543 = vmatmul.mubr.bf16.gmra.mxu0 %v1831
        %v2544 = vpop.f32.mrf.mxu0
        %v2545 = vadd.f32 %v2192, %v2544
        %v2546 = vpop.f32.mrf.mxu0
        %v2547 = vadd.f32 %v2194, %v2546
        %v2548 = vpop.f32.mrf.mxu0
        %v2549 = vadd.f32 %v2196, %v2548
        %v2550 = vpop.f32.mrf.mxu0
        %v2551 = vadd.f32 %v2198, %v2550
        %2552 = vmatprep.mubr.bf16.mxu0 %v1836
        %2553 = vmatmul.mubr.bf16.gmra.mxu0 %v1835
        %v2554 = vpop.f32.mrf.mxu0
        %v2555 = vadd.f32 %v2202, %v2554
        %v2556 = vpop.f32.mrf.mxu0
        %v2557 = vadd.f32 %v2204, %v2556
        %v2558 = vpop.f32.mrf.mxu0
        %v2559 = vadd.f32 %v2206, %v2558
        %v2560 = vpop.f32.mrf.mxu0
        %v2561 = vadd.f32 %v2208, %v2560
        %2562 = vmatprep.mubr.bf16.mxu0 %v1840
        %2563 = vmatmul.mubr.bf16.gmra.mxu0 %v1839
        %v2564 = vpop.f32.mrf.mxu0
        %v2565 = vadd.f32 %v2212, %v2564
        %v2566 = vpop.f32.mrf.mxu0
        %v2567 = vadd.f32 %v2214, %v2566
        %v2568 = vpop.f32.mrf.mxu0
        %v2569 = vadd.f32 %v2216, %v2568
        %v2570 = vpop.f32.mrf.mxu0
        %v2571 = vadd.f32 %v2218, %v2570
        %2572 = vmatprep.mubr.bf16.mxu0 %v1844
        %2573 = vmatmul.mubr.bf16.gmra.mxu0 %v1843
        %v2574 = vpop.f32.mrf.mxu0
        %v2575 = vadd.f32 %v2222, %v2574
        %v2576 = vpop.f32.mrf.mxu0
        %v2577 = vadd.f32 %v2224, %v2576
        %v2578 = vpop.f32.mrf.mxu0
        %v2579 = vadd.f32 %v2226, %v2578
        %v2580 = vpop.f32.mrf.mxu0
        %v2581 = vadd.f32 %v2228, %v2580
        %2582 = vmatprep.mubr.bf16.mxu0 %v1848
        %2583 = vmatmul.mubr.bf16.gmra.mxu0 %v1847
        %v2584 = vpop.f32.mrf.mxu0
        %v2585 = vadd.f32 %v2232, %v2584
        %v2586 = vpop.f32.mrf.mxu0
        %v2587 = vadd.f32 %v2234, %v2586
        %v2588 = vpop.f32.mrf.mxu0
        %v2589 = vadd.f32 %v2236, %v2588
        %v2590 = vpop.f32.mrf.mxu0
        %v2591 = vadd.f32 %v2238, %v2590
        %2592 = vmatprep.mubr.bf16.mxu0 %v1852
        %2593 = vmatmul.mubr.bf16.gmra.mxu0 %v1851
        %v2594 = vpop.f32.mrf.mxu0
        %v2595 = vadd.f32 %v2242, %v2594
        %v2596 = vpop.f32.mrf.mxu0
        %v2597 = vadd.f32 %v2244, %v2596
        %v2598 = vpop.f32.mrf.mxu0
        %v2599 = vadd.f32 %v2246, %v2598
        %v2600 = vpop.f32.mrf.mxu0
        %v2601 = vadd.f32 %v2248, %v2600
        %2602 = vmatprep.mubr.bf16.mxu0 %v1856
        %2603 = vmatmul.mubr.bf16.gmra.mxu0 %v1855
        %v2604 = vpop.f32.mrf.mxu0
        %v2605 = vadd.f32 %v2252, %v2604
        %v2606 = vpop.f32.mrf.mxu0
        %v2607 = vadd.f32 %v2254, %v2606
        %v2608 = vpop.f32.mrf.mxu0
        %v2609 = vadd.f32 %v2256, %v2608
        %v2610 = vpop.f32.mrf.mxu0
        %v2611 = vadd.f32 %v2258, %v2610
        %2612 = vmatprep.mubr.bf16.mxu0 %v1860
        %2613 = vmatmul.mubr.bf16.gmra.mxu0 %v1859
        %v2614 = vpop.f32.mrf.mxu0
        %v2615 = vadd.f32 %v2262, %v2614
        %v2616 = vpop.f32.mrf.mxu0
        %v2617 = vadd.f32 %v2264, %v2616
        %v2618 = vpop.f32.mrf.mxu0
        %v2619 = vadd.f32 %v2266, %v2618
        %v2620 = vpop.f32.mrf.mxu0
        %v2621 = vadd.f32 %v2268, %v2620
        %2622 = vmatprep.mubr.bf16.mxu0 %v1864
        %2623 = vmatmul.mubr.bf16.gmra.mxu0 %v1863
        %v2624 = vpop.f32.mrf.mxu0
        %v2625 = vadd.f32 %v2272, %v2624
        %v2626 = vpop.f32.mrf.mxu0
        %v2627 = vadd.f32 %v2274, %v2626
        %v2628 = vpop.f32.mrf.mxu0
        %v2629 = vadd.f32 %v2276, %v2628
        %v2630 = vpop.f32.mrf.mxu0
        %v2631 = vadd.f32 %v2278, %v2630
        %2632 = vmatprep.mubr.bf16.mxu0 %v1868
        %2633 = vmatmul.mubr.bf16.gmra.mxu0 %v1867
        %v2634 = vpop.f32.mrf.mxu0
        %v2635 = vadd.f32 %v2282, %v2634
        %v2636 = vpop.f32.mrf.mxu0
        %v2637 = vadd.f32 %v2284, %v2636
        %v2638 = vpop.f32.mrf.mxu0
        %v2639 = vadd.f32 %v2286, %v2638
        %v2640 = vpop.f32.mrf.mxu0
        %v2641 = vadd.f32 %v2288, %v2640
        %2642 = vmatprep.mubr.bf16.mxu0 %v1872
        %2643 = vmatmul.mubr.bf16.gmra.mxu0 %v1871
        %v2644 = vpop.f32.mrf.mxu0
        %v2645 = vadd.f32 %v2292, %v2644
        %v2646 = vpop.f32.mrf.mxu0
        %v2647 = vadd.f32 %v2294, %v2646
        %v2648 = vpop.f32.mrf.mxu0
        %v2649 = vadd.f32 %v2296, %v2648
        %v2650 = vpop.f32.mrf.mxu0
        %v2651 = vadd.f32 %v2298, %v2650
        %2652 = vmatprep.mubr.bf16.mxu0 %v1876
        %2653 = vmatmul.mubr.bf16.gmra.mxu0 %v1875
        %v2654 = vpop.f32.mrf.mxu0
        %v2655 = vadd.f32 %v2302, %v2654
        %v2656 = vpop.f32.mrf.mxu0
        %v2657 = vadd.f32 %v2304, %v2656
        %v2658 = vpop.f32.mrf.mxu0
        %v2659 = vadd.f32 %v2306, %v2658
        %v2660 = vpop.f32.mrf.mxu0
        %v2661 = vadd.f32 %v2308, %v2660
        %2662 = vmatprep.mubr.bf16.mxu0 %v1880
        %2663 = vmatmul.mubr.bf16.gmra.mxu0 %v1879
        %v2664 = vpop.f32.mrf.mxu0
        %v2665 = vadd.f32 %v2312, %v2664
        %v2666 = vpop.f32.mrf.mxu0
        %v2667 = vadd.f32 %v2314, %v2666
        %v2668 = vpop.f32.mrf.mxu0
        %v2669 = vadd.f32 %v2316, %v2668
        %v2670 = vpop.f32.mrf.mxu0
        %v2671 = vadd.f32 %v2318, %v2670
        %2672 = vmatprep.mubr.bf16.mxu0 %v1884
        %2673 = vmatmul.mubr.bf16.gmra.mxu0 %v1883
        %v2674 = vpop.f32.mrf.mxu0
        %v2675 = vadd.f32 %v2322, %v2674
        %v2676 = vpop.f32.mrf.mxu0
        %v2677 = vadd.f32 %v2324, %v2676
        %v2678 = vpop.f32.mrf.mxu0
        %v2679 = vadd.f32 %v2326, %v2678
        %v2680 = vpop.f32.mrf.mxu0
        %v2681 = vadd.f32 %v2328, %v2680
        %2682 = vmatprep.mubr.bf16.mxu0 %v1888
        %2683 = vmatmul.mubr.bf16.gmra.mxu0 %v1887
        %v2684 = vpop.f32.mrf.mxu0
        %v2685 = vadd.f32 %v2332, %v2684
        %v2686 = vpop.f32.mrf.mxu0
        %v2687 = vadd.f32 %v2334, %v2686
        %v2688 = vpop.f32.mrf.mxu0
        %v2689 = vadd.f32 %v2336, %v2688
        %v2690 = vpop.f32.mrf.mxu0
        %v2691 = vadd.f32 %v2338, %v2690
        %2692 = vmatprep.mubr.bf16.mxu0 %v1892
        %2693 = vmatmul.mubr.bf16.gmra.mxu0 %v1891
        %v2694 = vpop.f32.mrf.mxu0
        %v2695 = vadd.f32 %v2342, %v2694
        %v2696 = vpop.f32.mrf.mxu0
        %v2697 = vadd.f32 %v2344, %v2696
        %v2698 = vpop.f32.mrf.mxu0
        %v2699 = vadd.f32 %v2346, %v2698
        %v2700 = vpop.f32.mrf.mxu0
        %v2701 = vadd.f32 %v2348, %v2700
        %2702 = vmatprep.mubr.bf16.mxu0 %v1896
        %2703 = vmatmul.mubr.bf16.gmra.mxu0 %v1895
        %v2704 = vpop.f32.mrf.mxu0
        %v2705 = vadd.f32 %v2352, %v2704
        %v2706 = vpop.f32.mrf.mxu0
        %v2707 = vadd.f32 %v2354, %v2706
        %v2708 = vpop.f32.mrf.mxu0
        %v2709 = vadd.f32 %v2356, %v2708
        %v2710 = vpop.f32.mrf.mxu0
        %v2711 = vadd.f32 %v2358, %v2710
        %2712 = vmatprep.mubr.bf16.mxu0 %v1900
        %2713 = vmatmul.mubr.bf16.gmra.mxu0 %v1899
        %v2714 = vpop.f32.mrf.mxu0
        %v2715 = vadd.f32 %v2362, %v2714
        %v2716 = vpop.f32.mrf.mxu0
        %v2717 = vadd.f32 %v2364, %v2716
        %v2718 = vpop.f32.mrf.mxu0
        %v2719 = vadd.f32 %v2366, %v2718
        %v2720 = vpop.f32.mrf.mxu0
        %v2721 = vadd.f32 %v2368, %v2720
        %2722 = vmatprep.mubr.bf16.mxu0 %v1904
        %2723 = vmatmul.mubr.bf16.gmra.mxu0 %v1903
        %v2724 = vpop.f32.mrf.mxu0
        %v2725 = vadd.f32 %v2372, %v2724
        %v2726 = vpop.f32.mrf.mxu0
        %v2727 = vadd.f32 %v2374, %v2726
        %v2728 = vpop.f32.mrf.mxu0
        %v2729 = vadd.f32 %v2376, %v2728
        %v2730 = vpop.f32.mrf.mxu0
        %v2731 = vadd.f32 %v2378, %v2730
        %2732 = vmatprep.mubr.bf16.mxu0 %v1908
        %2733 = vmatmul.mubr.bf16.gmra.mxu0 %v1907
        %v2734 = vpop.f32.mrf.mxu0
        %v2735 = vadd.f32 %v2382, %v2734
        %v2736 = vpop.f32.mrf.mxu0
        %v2737 = vadd.f32 %v2384, %v2736
        %v2738 = vpop.f32.mrf.mxu0
        %v2739 = vadd.f32 %v2386, %v2738
        %v2740 = vpop.f32.mrf.mxu0
        %v2741 = vadd.f32 %v2388, %v2740
        %2742 = vdwg.mxu0
        %v2807 = vunpack.c.l.b16 %v1205
        %v2808 = vunpack.c.h.b16 %v1205
        %v2809 = vunpack.c.l.b16 %v1206
        %v2810 = vunpack.c.h.b16 %v1206
        %v2811 = vunpack.c.l.b16 %v1207
        %v2812 = vunpack.c.h.b16 %v1207
        %v2813 = vunpack.c.l.b16 %v1208
        %v2814 = vunpack.c.h.b16 %v1208
        %v2815 = vunpack.c.l.b16 %v1209
        %v2816 = vunpack.c.h.b16 %v1209
        %v2817 = vunpack.c.l.b16 %v1210
        %v2818 = vunpack.c.h.b16 %v1210
        %v2819 = vunpack.c.l.b16 %v1211
        %v2820 = vunpack.c.h.b16 %v1211
        %v2821 = vunpack.c.l.b16 %v1212
        %v2822 = vunpack.c.h.b16 %v1212
        %v2823 = vunpack.c.l.b16 %v1213
        %v2824 = vunpack.c.h.b16 %v1213
        %v2825 = vunpack.c.l.b16 %v1214
        %v2826 = vunpack.c.h.b16 %v1214
        %v2827 = vunpack.c.l.b16 %v1215
        %v2828 = vunpack.c.h.b16 %v1215
        %v2829 = vunpack.c.l.b16 %v1216
        %v2830 = vunpack.c.h.b16 %v1216
        %v2831 = vunpack.c.l.b16 %v1217
        %v2832 = vunpack.c.h.b16 %v1217
        %v2833 = vunpack.c.l.b16 %v1218
        %v2834 = vunpack.c.h.b16 %v1218
        %v2835 = vunpack.c.l.b16 %v1219
        %v2836 = vunpack.c.h.b16 %v1219
        %v2837 = vunpack.c.l.b16 %v1220
        %v2838 = vunpack.c.h.b16 %v1220
        %v2839 = vunpack.c.l.b16 %v1221
        %v2840 = vunpack.c.h.b16 %v1221
        %v2841 = vunpack.c.l.b16 %v1222
        %v2842 = vunpack.c.h.b16 %v1222
        %v2843 = vunpack.c.l.b16 %v1223
        %v2844 = vunpack.c.h.b16 %v1223
        %v2845 = vunpack.c.l.b16 %v1224
        %v2846 = vunpack.c.h.b16 %v1224
        %v2847 = vunpack.c.l.b16 %v1225
        %v2848 = vunpack.c.h.b16 %v1225
        %v2849 = vunpack.c.l.b16 %v1226
        %v2850 = vunpack.c.h.b16 %v1226
        %v2851 = vunpack.c.l.b16 %v1227
        %v2852 = vunpack.c.h.b16 %v1227
        %v2853 = vunpack.c.l.b16 %v1228
        %v2854 = vunpack.c.h.b16 %v1228
        %v2855 = vunpack.c.l.b16 %v1229
        %v2856 = vunpack.c.h.b16 %v1229
        %v2857 = vunpack.c.l.b16 %v1230
        %v2858 = vunpack.c.h.b16 %v1230
        %v2859 = vunpack.c.l.b16 %v1231
        %v2860 = vunpack.c.h.b16 %v1231
        %v2861 = vunpack.c.l.b16 %v1232
        %v2862 = vunpack.c.h.b16 %v1232
        %v2863 = vunpack.c.l.b16 %v1233
        %v2864 = vunpack.c.h.b16 %v1233
        %v2865 = vunpack.c.l.b16 %v1234
        %v2866 = vunpack.c.h.b16 %v1234
        %v2867 = vunpack.c.l.b16 %v1235
        %v2868 = vunpack.c.h.b16 %v1235
        %v2869 = vunpack.c.l.b16 %v1236
        %v2870 = vunpack.c.h.b16 %v1236
        %v2871 = vunpack.c.l.b16 %v1237
        %v2872 = vunpack.c.h.b16 %v1237
        %v2873 = vunpack.c.l.b16 %v1238
        %v2874 = vunpack.c.h.b16 %v1238
        %v2875 = vunpack.c.l.b16 %v1239
        %v2876 = vunpack.c.h.b16 %v1239
        %v2877 = vunpack.c.l.b16 %v1240
        %v2878 = vunpack.c.h.b16 %v1240
        %v2879 = vunpack.c.l.b16 %v1241
        %v2880 = vunpack.c.h.b16 %v1241
        %v2881 = vunpack.c.l.b16 %v1242
        %v2882 = vunpack.c.h.b16 %v1242
        %v2883 = vunpack.c.l.b16 %v1243
        %v2884 = vunpack.c.h.b16 %v1243
        %v2885 = vunpack.c.l.b16 %v1244
        %v2886 = vunpack.c.h.b16 %v1244
        %v2887 = vunpack.c.l.b16 %v1245
        %v2888 = vunpack.c.h.b16 %v1245
        %v2889 = vunpack.c.l.b16 %v1246
        %v2890 = vunpack.c.h.b16 %v1246
        %v2891 = vunpack.c.l.b16 %v1247
        %v2892 = vunpack.c.h.b16 %v1247
        %v2893 = vunpack.c.l.b16 %v1248
        %v2894 = vunpack.c.h.b16 %v1248
        %v2895 = vunpack.c.l.b16 %v1249
        %v2896 = vunpack.c.h.b16 %v1249
        %v2897 = vunpack.c.l.b16 %v1250
        %v2898 = vunpack.c.h.b16 %v1250
        %v2899 = vunpack.c.l.b16 %v1251
        %v2900 = vunpack.c.h.b16 %v1251
        %v2901 = vunpack.c.l.b16 %v1252
        %v2902 = vunpack.c.h.b16 %v1252
        %v2903 = vunpack.c.l.b16 %v1253
        %v2904 = vunpack.c.h.b16 %v1253
        %v2905 = vunpack.c.l.b16 %v1254
        %v2906 = vunpack.c.h.b16 %v1254
        %v2907 = vunpack.c.l.b16 %v1255
        %v2908 = vunpack.c.h.b16 %v1255
        %v2909 = vunpack.c.l.b16 %v1256
        %v2910 = vunpack.c.h.b16 %v1256
        %v2911 = vunpack.c.l.b16 %v1257
        %v2912 = vunpack.c.h.b16 %v1257
        %v2913 = vunpack.c.l.b16 %v1258
        %v2914 = vunpack.c.h.b16 %v1258
        %v2915 = vunpack.c.l.b16 %v1259
        %v2916 = vunpack.c.h.b16 %v1259
        %v2917 = vunpack.c.l.b16 %v1260
        %v2918 = vunpack.c.h.b16 %v1260
        %v2919 = vunpack.c.l.b16 %v1261
        %v2920 = vunpack.c.h.b16 %v1261
        %v2921 = vunpack.c.l.b16 %v1262
        %v2922 = vunpack.c.h.b16 %v1262
        %v2923 = vunpack.c.l.b16 %v1263
        %v2924 = vunpack.c.h.b16 %v1263
        %v2925 = vunpack.c.l.b16 %v1264
        %v2926 = vunpack.c.h.b16 %v1264
        %v2927 = vunpack.c.l.b16 %v1265
        %v2928 = vunpack.c.h.b16 %v1265
        %v2929 = vunpack.c.l.b16 %v1266
        %v2930 = vunpack.c.h.b16 %v1266
        %v2931 = vunpack.c.l.b16 %v1267
        %v2932 = vunpack.c.h.b16 %v1267
        %v2933 = vunpack.c.l.b16 %v1268
        %v2934 = vunpack.c.h.b16 %v1268
        %v2935 = vpack.c.b16 %v2809, %v2807
        %v2936 = vpack.c.b16 %v2810, %v2808
        %v2937 = vpack.c.b16 %v2813, %v2811
        %v2938 = vpack.c.b16 %v2814, %v2812
        %v2939 = vpack.c.b16 %v2817, %v2815
        %v2940 = vpack.c.b16 %v2818, %v2816
        %v2941 = vpack.c.b16 %v2821, %v2819
        %v2942 = vpack.c.b16 %v2822, %v2820
        %v2943 = vpack.c.b16 %v2825, %v2823
        %v2944 = vpack.c.b16 %v2826, %v2824
        %v2945 = vpack.c.b16 %v2829, %v2827
        %v2946 = vpack.c.b16 %v2830, %v2828
        %v2947 = vpack.c.b16 %v2833, %v2831
        %v2948 = vpack.c.b16 %v2834, %v2832
        %v2949 = vpack.c.b16 %v2837, %v2835
        %v2950 = vpack.c.b16 %v2838, %v2836
        %v2951 = vpack.c.b16 %v2841, %v2839
        %v2952 = vpack.c.b16 %v2842, %v2840
        %v2953 = vpack.c.b16 %v2845, %v2843
        %v2954 = vpack.c.b16 %v2846, %v2844
        %v2955 = vpack.c.b16 %v2849, %v2847
        %v2956 = vpack.c.b16 %v2850, %v2848
        %v2957 = vpack.c.b16 %v2853, %v2851
        %v2958 = vpack.c.b16 %v2854, %v2852
        %v2959 = vpack.c.b16 %v2857, %v2855
        %v2960 = vpack.c.b16 %v2858, %v2856
        %v2961 = vpack.c.b16 %v2861, %v2859
        %v2962 = vpack.c.b16 %v2862, %v2860
        %v2963 = vpack.c.b16 %v2865, %v2863
        %v2964 = vpack.c.b16 %v2866, %v2864
        %v2965 = vpack.c.b16 %v2869, %v2867
        %v2966 = vpack.c.b16 %v2870, %v2868
        %v2967 = vpack.c.b16 %v2873, %v2871
        %v2968 = vpack.c.b16 %v2874, %v2872
        %v2969 = vpack.c.b16 %v2877, %v2875
        %v2970 = vpack.c.b16 %v2878, %v2876
        %v2971 = vpack.c.b16 %v2881, %v2879
        %v2972 = vpack.c.b16 %v2882, %v2880
        %v2973 = vpack.c.b16 %v2885, %v2883
        %v2974 = vpack.c.b16 %v2886, %v2884
        %v2975 = vpack.c.b16 %v2889, %v2887
        %v2976 = vpack.c.b16 %v2890, %v2888
        %v2977 = vpack.c.b16 %v2893, %v2891
        %v2978 = vpack.c.b16 %v2894, %v2892
        %v2979 = vpack.c.b16 %v2897, %v2895
        %v2980 = vpack.c.b16 %v2898, %v2896
        %v2981 = vpack.c.b16 %v2901, %v2899
        %v2982 = vpack.c.b16 %v2902, %v2900
        %v2983 = vpack.c.b16 %v2905, %v2903
        %v2984 = vpack.c.b16 %v2906, %v2904
        %v2985 = vpack.c.b16 %v2909, %v2907
        %v2986 = vpack.c.b16 %v2910, %v2908
        %v2987 = vpack.c.b16 %v2913, %v2911
        %v2988 = vpack.c.b16 %v2914, %v2912
        %v2989 = vpack.c.b16 %v2917, %v2915
        %v2990 = vpack.c.b16 %v2918, %v2916
        %v2991 = vpack.c.b16 %v2921, %v2919
        %v2992 = vpack.c.b16 %v2922, %v2920
        %v2993 = vpack.c.b16 %v2925, %v2923
        %v2994 = vpack.c.b16 %v2926, %v2924
        %v2995 = vpack.c.b16 %v2929, %v2927
        %v2996 = vpack.c.b16 %v2930, %v2928
        %v2997 = vpack.c.b16 %v2933, %v2931
        %v2998 = vpack.c.b16 %v2934, %v2932
        %vm3031 = vcmask 498688
        %v3033 = vsel %vm3031, %v2936, 0
        %v3036 = vsel %vm3031, %v2938, 0
        %v3039 = vsel %vm3031, %v2940, 0
        %v3042 = vsel %vm3031, %v2942, 0
        %v3045 = vsel %vm3031, %v2944, 0
        %v3048 = vsel %vm3031, %v2946, 0
        %v3051 = vsel %vm3031, %v2948, 0
        %v3054 = vsel %vm3031, %v2950, 0
        %v3057 = vsel %vm3031, %v2952, 0
        %v3060 = vsel %vm3031, %v2954, 0
        %v3063 = vsel %vm3031, %v2956, 0
        %v3066 = vsel %vm3031, %v2958, 0
        %v3069 = vsel %vm3031, %v2960, 0
        %v3072 = vsel %vm3031, %v2962, 0
        %v3075 = vsel %vm3031, %v2964, 0
        %v3078 = vsel %vm3031, %v2966, 0
        %v3081 = vsel %vm3031, %v2968, 0
        %v3084 = vsel %vm3031, %v2970, 0
        %v3087 = vsel %vm3031, %v2972, 0
        %v3090 = vsel %vm3031, %v2974, 0
        %v3093 = vsel %vm3031, %v2976, 0
        %v3096 = vsel %vm3031, %v2978, 0
        %v3099 = vsel %vm3031, %v2980, 0
        %v3102 = vsel %vm3031, %v2982, 0
        %v3105 = vsel %vm3031, %v2984, 0
        %v3108 = vsel %vm3031, %v2986, 0
        %v3111 = vsel %vm3031, %v2988, 0
        %v3114 = vsel %vm3031, %v2990, 0
        %v3117 = vsel %vm3031, %v2992, 0
        %v3120 = vsel %vm3031, %v2994, 0
        %v3123 = vsel %vm3031, %v2996, 0
        %v3126 = vsel %vm3031, %v2998, 0
        %vm3128 = vcmask 1045504
        %vm3129 = vcmask 1046528
        %v3130 = vsel %vm3128, 4294967295, 65535
        %v3131 = vsel %vm3129, %v3130, 0
        %v3133 = vand.u32 %v1011, %v3131
        %v3136 = vand.u32 %v1012, %v3131
        %3138 = vmatprep.subr.bf16.mxu0 %v1004
        %3139 = vmatpush1.bf16.msra.mxu0 %v1003
        %3140 = vmatprep.subr.bf16.mxu0 %v1002
        %3141 = vmatpush1.bf16.msra.mxu0 %v1001
        %3142 = vmatprep.subr.bf16.mxu0 %v1000
        %3143 = vmatpush1.bf16.msra.mxu0 %v999
        %3144 = vmatprep.subr.bf16.mxu0 %v998
        %3145 = vmatpush1.bf16.msra.mxu0 %v997
        %3146 = vmatprep.subr.bf16.mxu0 %v996
        %3147 = vmatpush1.bf16.msra.mxu0 %v995
        %3148 = vmatprep.subr.bf16.mxu0 %v994
        %3149 = vmatpush1.bf16.msra.mxu0 %v993
        %3150 = vmatprep.subr.bf16.mxu0 %v992
        %3151 = vmatpush1.bf16.msra.mxu0 %v991
        %3152 = vmatprep.subr.bf16.mxu0 %v990
        %3153 = vmatpush1.bf16.msra.mxu0 %v989
        %3154 = vmatprep.subr.bf16.mxu0 0
        %3155 = vmatpush2.bf16.msra.mxu0 0
        %3156 = vmatprep.subr.bf16.mxu0 0
        %3157 = vmatpush2.bf16.msra.mxu0 0
        %3158 = vmatprep.subr.bf16.mxu0 0
        %3159 = vmatpush2.bf16.msra.mxu0 0
        %3160 = vmatprep.subr.bf16.mxu0 0
        %3161 = vmatpush2.bf16.msra.mxu0 0
        %3162 = vmatprep.subr.bf16.mxu0 %v3136
        %3163 = vmatpush2.bf16.msra.mxu0 %v3133
        %3164 = vmatprep.subr.bf16.mxu0 %v1010
        %3165 = vmatpush2.bf16.msra.mxu0 %v1009
        %3166 = vmatprep.subr.bf16.mxu0 %v1008
        %3167 = vmatpush2.bf16.msra.mxu0 %v1007
        %3168 = vmatprep.subr.bf16.mxu0 %v1006
        %3169 = vmatpush2.bf16.msra.mxu0 %v1005
        %3170 = vmatprep.mubr.bf16.mxu0 %v3033
        %3171 = vmatmul.mubr.bf16.gmra.mxu0 %v2935
        %v3172 = vpop.f32.mrf.mxu0
        %v3173 = vadd.f32 %v2425, %v3172
        %v3174 = vpop.f32.mrf.mxu0
        %v3175 = vadd.f32 %v2427, %v3174
        %v3176 = vpop.f32.mrf.mxu0
        %v3177 = vadd.f32 %v2429, %v3176
        %v3178 = vpop.f32.mrf.mxu0
        %v3179 = vadd.f32 %v2431, %v3178
        %3180 = vmatprep.mubr.bf16.mxu0 %v3036
        %3181 = vmatmul.mubr.bf16.gmra.mxu0 %v2937
        %v3182 = vpop.f32.mrf.mxu0
        %v3183 = vadd.f32 %v2435, %v3182
        %v3184 = vpop.f32.mrf.mxu0
        %v3185 = vadd.f32 %v2437, %v3184
        %v3186 = vpop.f32.mrf.mxu0
        %v3187 = vadd.f32 %v2439, %v3186
        %v3188 = vpop.f32.mrf.mxu0
        %v3189 = vadd.f32 %v2441, %v3188
        %3190 = vmatprep.mubr.bf16.mxu0 %v3039
        %3191 = vmatmul.mubr.bf16.gmra.mxu0 %v2939
        %v3192 = vpop.f32.mrf.mxu0
        %v3193 = vadd.f32 %v2445, %v3192
        %v3194 = vpop.f32.mrf.mxu0
        %v3195 = vadd.f32 %v2447, %v3194
        %v3196 = vpop.f32.mrf.mxu0
        %v3197 = vadd.f32 %v2449, %v3196
        %v3198 = vpop.f32.mrf.mxu0
        %v3199 = vadd.f32 %v2451, %v3198
        %3200 = vmatprep.mubr.bf16.mxu0 %v3042
        %3201 = vmatmul.mubr.bf16.gmra.mxu0 %v2941
        %v3202 = vpop.f32.mrf.mxu0
        %v3203 = vadd.f32 %v2455, %v3202
        %v3204 = vpop.f32.mrf.mxu0
        %v3205 = vadd.f32 %v2457, %v3204
        %v3206 = vpop.f32.mrf.mxu0
        %v3207 = vadd.f32 %v2459, %v3206
        %v3208 = vpop.f32.mrf.mxu0
        %v3209 = vadd.f32 %v2461, %v3208
        %3210 = vmatprep.mubr.bf16.mxu0 %v3045
        %3211 = vmatmul.mubr.bf16.gmra.mxu0 %v2943
        %v3212 = vpop.f32.mrf.mxu0
        %v3213 = vadd.f32 %v2465, %v3212
        %v3214 = vpop.f32.mrf.mxu0
        %v3215 = vadd.f32 %v2467, %v3214
        %v3216 = vpop.f32.mrf.mxu0
        %v3217 = vadd.f32 %v2469, %v3216
        %v3218 = vpop.f32.mrf.mxu0
        %v3219 = vadd.f32 %v2471, %v3218
        %3220 = vmatprep.mubr.bf16.mxu0 %v3048
        %3221 = vmatmul.mubr.bf16.gmra.mxu0 %v2945
        %v3222 = vpop.f32.mrf.mxu0
        %v3223 = vadd.f32 %v2475, %v3222
        %v3224 = vpop.f32.mrf.mxu0
        %v3225 = vadd.f32 %v2477, %v3224
        %v3226 = vpop.f32.mrf.mxu0
        %v3227 = vadd.f32 %v2479, %v3226
        %v3228 = vpop.f32.mrf.mxu0
        %v3229 = vadd.f32 %v2481, %v3228
        %3230 = vmatprep.mubr.bf16.mxu0 %v3051
        %3231 = vmatmul.mubr.bf16.gmra.mxu0 %v2947
        %v3232 = vpop.f32.mrf.mxu0
        %v3233 = vadd.f32 %v2485, %v3232
        %v3234 = vpop.f32.mrf.mxu0
        %v3235 = vadd.f32 %v2487, %v3234
        %v3236 = vpop.f32.mrf.mxu0
        %v3237 = vadd.f32 %v2489, %v3236
        %v3238 = vpop.f32.mrf.mxu0
        %v3239 = vadd.f32 %v2491, %v3238
        %3240 = vmatprep.mubr.bf16.mxu0 %v3054
        %3241 = vmatmul.mubr.bf16.gmra.mxu0 %v2949
        %v3242 = vpop.f32.mrf.mxu0
        %v3243 = vadd.f32 %v2495, %v3242
        %v3244 = vpop.f32.mrf.mxu0
        %v3245 = vadd.f32 %v2497, %v3244
        %v3246 = vpop.f32.mrf.mxu0
        %v3247 = vadd.f32 %v2499, %v3246
        %v3248 = vpop.f32.mrf.mxu0
        %v3249 = vadd.f32 %v2501, %v3248
        %3250 = vmatprep.mubr.bf16.mxu0 %v3057
        %3251 = vmatmul.mubr.bf16.gmra.mxu0 %v2951
        %v3252 = vpop.f32.mrf.mxu0
        %v3253 = vadd.f32 %v2505, %v3252
        %v3254 = vpop.f32.mrf.mxu0
        %v3255 = vadd.f32 %v2507, %v3254
        %v3256 = vpop.f32.mrf.mxu0
        %v3257 = vadd.f32 %v2509, %v3256
        %v3258 = vpop.f32.mrf.mxu0
        %v3259 = vadd.f32 %v2511, %v3258
        %3260 = vmatprep.mubr.bf16.mxu0 %v3060
        %3261 = vmatmul.mubr.bf16.gmra.mxu0 %v2953
        %v3262 = vpop.f32.mrf.mxu0
        %v3263 = vadd.f32 %v2515, %v3262
        %v3264 = vpop.f32.mrf.mxu0
        %v3265 = vadd.f32 %v2517, %v3264
        %v3266 = vpop.f32.mrf.mxu0
        %v3267 = vadd.f32 %v2519, %v3266
        %v3268 = vpop.f32.mrf.mxu0
        %v3269 = vadd.f32 %v2521, %v3268
        %3270 = vmatprep.mubr.bf16.mxu0 %v3063
        %3271 = vmatmul.mubr.bf16.gmra.mxu0 %v2955
        %v3272 = vpop.f32.mrf.mxu0
        %v3273 = vadd.f32 %v2525, %v3272
        %v3274 = vpop.f32.mrf.mxu0
        %v3275 = vadd.f32 %v2527, %v3274
        %v3276 = vpop.f32.mrf.mxu0
        %v3277 = vadd.f32 %v2529, %v3276
        %v3278 = vpop.f32.mrf.mxu0
        %v3279 = vadd.f32 %v2531, %v3278
        %3280 = vmatprep.mubr.bf16.mxu0 %v3066
        %3281 = vmatmul.mubr.bf16.gmra.mxu0 %v2957
        %v3282 = vpop.f32.mrf.mxu0
        %v3283 = vadd.f32 %v2535, %v3282
        %v3284 = vpop.f32.mrf.mxu0
        %v3285 = vadd.f32 %v2537, %v3284
        %v3286 = vpop.f32.mrf.mxu0
        %v3287 = vadd.f32 %v2539, %v3286
        %v3288 = vpop.f32.mrf.mxu0
        %v3289 = vadd.f32 %v2541, %v3288
        %3290 = vmatprep.mubr.bf16.mxu0 %v3069
        %3291 = vmatmul.mubr.bf16.gmra.mxu0 %v2959
        %v3292 = vpop.f32.mrf.mxu0
        %v3293 = vadd.f32 %v2545, %v3292
        %v3294 = vpop.f32.mrf.mxu0
        %v3295 = vadd.f32 %v2547, %v3294
        %v3296 = vpop.f32.mrf.mxu0
        %v3297 = vadd.f32 %v2549, %v3296
        %v3298 = vpop.f32.mrf.mxu0
        %v3299 = vadd.f32 %v2551, %v3298
        %3300 = vmatprep.mubr.bf16.mxu0 %v3072
        %3301 = vmatmul.mubr.bf16.gmra.mxu0 %v2961
        %v3302 = vpop.f32.mrf.mxu0
        %v3303 = vadd.f32 %v2555, %v3302
        %v3304 = vpop.f32.mrf.mxu0
        %v3305 = vadd.f32 %v2557, %v3304
        %v3306 = vpop.f32.mrf.mxu0
        %v3307 = vadd.f32 %v2559, %v3306
        %v3308 = vpop.f32.mrf.mxu0
        %v3309 = vadd.f32 %v2561, %v3308
        %3310 = vmatprep.mubr.bf16.mxu0 %v3075
        %3311 = vmatmul.mubr.bf16.gmra.mxu0 %v2963
        %v3312 = vpop.f32.mrf.mxu0
        %v3313 = vadd.f32 %v2565, %v3312
        %v3314 = vpop.f32.mrf.mxu0
        %v3315 = vadd.f32 %v2567, %v3314
        %v3316 = vpop.f32.mrf.mxu0
        %v3317 = vadd.f32 %v2569, %v3316
        %v3318 = vpop.f32.mrf.mxu0
        %v3319 = vadd.f32 %v2571, %v3318
        %3320 = vmatprep.mubr.bf16.mxu0 %v3078
        %3321 = vmatmul.mubr.bf16.gmra.mxu0 %v2965
        %v3322 = vpop.f32.mrf.mxu0
        %v3323 = vadd.f32 %v2575, %v3322
        %v3324 = vpop.f32.mrf.mxu0
        %v3325 = vadd.f32 %v2577, %v3324
        %v3326 = vpop.f32.mrf.mxu0
        %v3327 = vadd.f32 %v2579, %v3326
        %v3328 = vpop.f32.mrf.mxu0
        %v3329 = vadd.f32 %v2581, %v3328
        %3330 = vmatprep.mubr.bf16.mxu0 %v3081
        %3331 = vmatmul.mubr.bf16.gmra.mxu0 %v2967
        %v3332 = vpop.f32.mrf.mxu0
        %v3333 = vadd.f32 %v2585, %v3332
        %v3334 = vpop.f32.mrf.mxu0
        %v3335 = vadd.f32 %v2587, %v3334
        %v3336 = vpop.f32.mrf.mxu0
        %v3337 = vadd.f32 %v2589, %v3336
        %v3338 = vpop.f32.mrf.mxu0
        %v3339 = vadd.f32 %v2591, %v3338
        %3340 = vmatprep.mubr.bf16.mxu0 %v3084
        %3341 = vmatmul.mubr.bf16.gmra.mxu0 %v2969
        %v3342 = vpop.f32.mrf.mxu0
        %v3343 = vadd.f32 %v2595, %v3342
        %v3344 = vpop.f32.mrf.mxu0
        %v3345 = vadd.f32 %v2597, %v3344
        %v3346 = vpop.f32.mrf.mxu0
        %v3347 = vadd.f32 %v2599, %v3346
        %v3348 = vpop.f32.mrf.mxu0
        %v3349 = vadd.f32 %v2601, %v3348
        %3350 = vmatprep.mubr.bf16.mxu0 %v3087
        %3351 = vmatmul.mubr.bf16.gmra.mxu0 %v2971
        %v3352 = vpop.f32.mrf.mxu0
        %v3353 = vadd.f32 %v2605, %v3352
        %v3354 = vpop.f32.mrf.mxu0
        %v3355 = vadd.f32 %v2607, %v3354
        %v3356 = vpop.f32.mrf.mxu0
        %v3357 = vadd.f32 %v2609, %v3356
        %v3358 = vpop.f32.mrf.mxu0
        %v3359 = vadd.f32 %v2611, %v3358
        %3360 = vmatprep.mubr.bf16.mxu0 %v3090
        %3361 = vmatmul.mubr.bf16.gmra.mxu0 %v2973
        %v3362 = vpop.f32.mrf.mxu0
        %v3363 = vadd.f32 %v2615, %v3362
        %v3364 = vpop.f32.mrf.mxu0
        %v3365 = vadd.f32 %v2617, %v3364
        %v3366 = vpop.f32.mrf.mxu0
        %v3367 = vadd.f32 %v2619, %v3366
        %v3368 = vpop.f32.mrf.mxu0
        %v3369 = vadd.f32 %v2621, %v3368
        %3370 = vmatprep.mubr.bf16.mxu0 %v3093
        %3371 = vmatmul.mubr.bf16.gmra.mxu0 %v2975
        %v3372 = vpop.f32.mrf.mxu0
        %v3373 = vadd.f32 %v2625, %v3372
        %v3374 = vpop.f32.mrf.mxu0
        %v3375 = vadd.f32 %v2627, %v3374
        %v3376 = vpop.f32.mrf.mxu0
        %v3377 = vadd.f32 %v2629, %v3376
        %v3378 = vpop.f32.mrf.mxu0
        %v3379 = vadd.f32 %v2631, %v3378
        %3380 = vmatprep.mubr.bf16.mxu0 %v3096
        %3381 = vmatmul.mubr.bf16.gmra.mxu0 %v2977
        %v3382 = vpop.f32.mrf.mxu0
        %v3383 = vadd.f32 %v2635, %v3382
        %v3384 = vpop.f32.mrf.mxu0
        %v3385 = vadd.f32 %v2637, %v3384
        %v3386 = vpop.f32.mrf.mxu0
        %v3387 = vadd.f32 %v2639, %v3386
        %v3388 = vpop.f32.mrf.mxu0
        %v3389 = vadd.f32 %v2641, %v3388
        %3390 = vmatprep.mubr.bf16.mxu0 %v3099
        %3391 = vmatmul.mubr.bf16.gmra.mxu0 %v2979
        %v3392 = vpop.f32.mrf.mxu0
        %v3393 = vadd.f32 %v2645, %v3392
        %v3394 = vpop.f32.mrf.mxu0
        %v3395 = vadd.f32 %v2647, %v3394
        %v3396 = vpop.f32.mrf.mxu0
        %v3397 = vadd.f32 %v2649, %v3396
        %v3398 = vpop.f32.mrf.mxu0
        %v3399 = vadd.f32 %v2651, %v3398
        %3400 = vmatprep.mubr.bf16.mxu0 %v3102
        %3401 = vmatmul.mubr.bf16.gmra.mxu0 %v2981
        %v3402 = vpop.f32.mrf.mxu0
        %v3403 = vadd.f32 %v2655, %v3402
        %v3404 = vpop.f32.mrf.mxu0
        %v3405 = vadd.f32 %v2657, %v3404
        %v3406 = vpop.f32.mrf.mxu0
        %v3407 = vadd.f32 %v2659, %v3406
        %v3408 = vpop.f32.mrf.mxu0
        %v3409 = vadd.f32 %v2661, %v3408
        %3410 = vmatprep.mubr.bf16.mxu0 %v3105
        %3411 = vmatmul.mubr.bf16.gmra.mxu0 %v2983
        %v3412 = vpop.f32.mrf.mxu0
        %v3413 = vadd.f32 %v2665, %v3412
        %v3414 = vpop.f32.mrf.mxu0
        %v3415 = vadd.f32 %v2667, %v3414
        %v3416 = vpop.f32.mrf.mxu0
        %v3417 = vadd.f32 %v2669, %v3416
        %v3418 = vpop.f32.mrf.mxu0
        %v3419 = vadd.f32 %v2671, %v3418
        %3420 = vmatprep.mubr.bf16.mxu0 %v3108
        %3421 = vmatmul.mubr.bf16.gmra.mxu0 %v2985
        %v3422 = vpop.f32.mrf.mxu0
        %v3423 = vadd.f32 %v2675, %v3422
        %v3424 = vpop.f32.mrf.mxu0
        %v3425 = vadd.f32 %v2677, %v3424
        %v3426 = vpop.f32.mrf.mxu0
        %v3427 = vadd.f32 %v2679, %v3426
        %v3428 = vpop.f32.mrf.mxu0
        %v3429 = vadd.f32 %v2681, %v3428
        %3430 = vmatprep.mubr.bf16.mxu0 %v3111
        %3431 = vmatmul.mubr.bf16.gmra.mxu0 %v2987
        %v3432 = vpop.f32.mrf.mxu0
        %v3433 = vadd.f32 %v2685, %v3432
        %v3434 = vpop.f32.mrf.mxu0
        %v3435 = vadd.f32 %v2687, %v3434
        %v3436 = vpop.f32.mrf.mxu0
        %v3437 = vadd.f32 %v2689, %v3436
        %v3438 = vpop.f32.mrf.mxu0
        %v3439 = vadd.f32 %v2691, %v3438
        %3440 = vmatprep.mubr.bf16.mxu0 %v3114
        %3441 = vmatmul.mubr.bf16.gmra.mxu0 %v2989
        %v3442 = vpop.f32.mrf.mxu0
        %v3443 = vadd.f32 %v2695, %v3442
        %v3444 = vpop.f32.mrf.mxu0
        %v3445 = vadd.f32 %v2697, %v3444
        %v3446 = vpop.f32.mrf.mxu0
        %v3447 = vadd.f32 %v2699, %v3446
        %v3448 = vpop.f32.mrf.mxu0
        %v3449 = vadd.f32 %v2701, %v3448
        %3450 = vmatprep.mubr.bf16.mxu0 %v3117
        %3451 = vmatmul.mubr.bf16.gmra.mxu0 %v2991
        %v3452 = vpop.f32.mrf.mxu0
        %v3453 = vadd.f32 %v2705, %v3452
        %v3454 = vpop.f32.mrf.mxu0
        %v3455 = vadd.f32 %v2707, %v3454
        %v3456 = vpop.f32.mrf.mxu0
        %v3457 = vadd.f32 %v2709, %v3456
        %v3458 = vpop.f32.mrf.mxu0
        %v3459 = vadd.f32 %v2711, %v3458
        %3460 = vmatprep.mubr.bf16.mxu0 %v3120
        %3461 = vmatmul.mubr.bf16.gmra.mxu0 %v2993
        %v3462 = vpop.f32.mrf.mxu0
        %v3463 = vadd.f32 %v2715, %v3462
        %v3464 = vpop.f32.mrf.mxu0
        %v3465 = vadd.f32 %v2717, %v3464
        %v3466 = vpop.f32.mrf.mxu0
        %v3467 = vadd.f32 %v2719, %v3466
        %v3468 = vpop.f32.mrf.mxu0
        %v3469 = vadd.f32 %v2721, %v3468
        %3470 = vmatprep.mubr.bf16.mxu0 %v3123
        %3471 = vmatmul.mubr.bf16.gmra.mxu0 %v2995
        %v3472 = vpop.f32.mrf.mxu0
        %v3473 = vadd.f32 %v2725, %v3472
        %v3474 = vpop.f32.mrf.mxu0
        %v3475 = vadd.f32 %v2727, %v3474
        %v3476 = vpop.f32.mrf.mxu0
        %v3477 = vadd.f32 %v2729, %v3476
        %v3478 = vpop.f32.mrf.mxu0
        %v3479 = vadd.f32 %v2731, %v3478
        %3480 = vmatprep.mubr.bf16.mxu0 %v3126
        %3481 = vmatmul.mubr.bf16.gmra.mxu0 %v2997
        %v3482 = vpop.f32.mrf.mxu0
        %v3483 = vadd.f32 %v2735, %v3482
        %v3484 = vpop.f32.mrf.mxu0
        %v3485 = vadd.f32 %v2737, %v3484
        %v3486 = vpop.f32.mrf.mxu0
        %v3487 = vadd.f32 %v2739, %v3486
        %v3488 = vpop.f32.mrf.mxu0
        %v3489 = vadd.f32 %v2741, %v3488
        %3490 = vdwg.mxu0
        %v3491 = vld [vmem:[%s5] sm:$0xff]
        %v3492 = vld [vmem:[%s5 + $0x8] sm:$0xff]
        %v3493 = vld [vmem:[%s5 + $0x10] sm:$0xff]
        %v3494 = vld [vmem:[%s5 + $0x18] sm:$0xff]
        %v3495 = vld [vmem:[%s5 + $0x20] sm:$0xff]
        %v3496 = vld [vmem:[%s5 + $0x28] sm:$0xff]
        %v3497 = vld [vmem:[%s5 + $0x30] sm:$0xff]
        %v3498 = vld [vmem:[%s5 + $0x38] sm:$0xff]
        %v3499 = vld [vmem:[%s5 + $0x40] sm:$0xff]
        %v3500 = vld [vmem:[%s5 + $0x48] sm:$0xff]
        %v3501 = vld [vmem:[%s5 + $0x50] sm:$0xff]
        %v3502 = vld [vmem:[%s5 + $0x58] sm:$0xff]
        %v3503 = vld [vmem:[%s5 + $0x60] sm:$0xff]
        %v3504 = vld [vmem:[%s5 + $0x68] sm:$0xff]
        %v3505 = vld [vmem:[%s5 + $0x70] sm:$0xff]
        %v3506 = vld [vmem:[%s5 + $0x78] sm:$0xff]
        %v3507 = vld [vmem:[%s5 + $0x80] sm:$0xff]
        %v3508 = vld [vmem:[%s5 + $0x88] sm:$0xff]
        %v3509 = vld [vmem:[%s5 + $0x90] sm:$0xff]
        %v3510 = vld [vmem:[%s5 + $0x98] sm:$0xff]
        %v3511 = vld [vmem:[%s5 + $0xa0] sm:$0xff]
        %v3512 = vld [vmem:[%s5 + $0xa8] sm:$0xff]
        %v3513 = vld [vmem:[%s5 + $0xb0] sm:$0xff]
        %v3514 = vld [vmem:[%s5 + $0xb8] sm:$0xff]
        %v3515 = vld [vmem:[%s5 + $0xc0] sm:$0xff]
        %v3516 = vld [vmem:[%s5 + $0xc8] sm:$0xff]
        %v3517 = vld [vmem:[%s5 + $0xd0] sm:$0xff]
        %v3518 = vld [vmem:[%s5 + $0xd8] sm:$0xff]
        %v3519 = vld [vmem:[%s5 + $0xe0] sm:$0xff]
        %v3520 = vld [vmem:[%s5 + $0xe8] sm:$0xff]
        %v3521 = vld [vmem:[%s5 + $0xf0] sm:$0xff]
        %v3522 = vld [vmem:[%s5 + $0xf8] sm:$0xff]
        %3524 = vset.pattern.permute.xlu0 0
        %3525 = vperm.xlu0 %3524, %v3491
        %v3526 = vpop.permute.xlu0 %3525
        %3529 = vset.pattern.permute.xlu0 0
        %3530 = vperm.xlu0 %3529, %v3492
        %v3531 = vpop.permute.xlu0 %3530
        %3534 = vset.pattern.permute.xlu0 0
        %3535 = vperm.xlu0 %3534, %v3493
        %v3536 = vpop.permute.xlu0 %3535
        %3539 = vset.pattern.permute.xlu0 0
        %3540 = vperm.xlu0 %3539, %v3494
        %v3541 = vpop.permute.xlu0 %3540
        %3544 = vset.pattern.permute.xlu0 0
        %3545 = vperm.xlu0 %3544, %v3495
        %v3546 = vpop.permute.xlu0 %3545
        %3549 = vset.pattern.permute.xlu0 0
        %3550 = vperm.xlu0 %3549, %v3496
        %v3551 = vpop.permute.xlu0 %3550
        %3554 = vset.pattern.permute.xlu0 0
        %3555 = vperm.xlu0 %3554, %v3497
        %v3556 = vpop.permute.xlu0 %3555
        %3559 = vset.pattern.permute.xlu0 0
        %3560 = vperm.xlu0 %3559, %v3498
        %v3561 = vpop.permute.xlu0 %3560
        %3564 = vset.pattern.permute.xlu0 0
        %3565 = vperm.xlu0 %3564, %v3499
        %v3566 = vpop.permute.xlu0 %3565
        %3569 = vset.pattern.permute.xlu0 0
        %3570 = vperm.xlu0 %3569, %v3500
        %v3571 = vpop.permute.xlu0 %3570
        %3574 = vset.pattern.permute.xlu0 0
        %3575 = vperm.xlu0 %3574, %v3501
        %v3576 = vpop.permute.xlu0 %3575
        %3579 = vset.pattern.permute.xlu0 0
        %3580 = vperm.xlu0 %3579, %v3502
        %v3581 = vpop.permute.xlu0 %3580
        %3584 = vset.pattern.permute.xlu0 0
        %3585 = vperm.xlu0 %3584, %v3503
        %v3586 = vpop.permute.xlu0 %3585
        %3589 = vset.pattern.permute.xlu0 0
        %3590 = vperm.xlu0 %3589, %v3504
        %v3591 = vpop.permute.xlu0 %3590
        %3594 = vset.pattern.permute.xlu0 0
        %3595 = vperm.xlu0 %3594, %v3505
        %v3596 = vpop.permute.xlu0 %3595
        %3599 = vset.pattern.permute.xlu0 0
        %3600 = vperm.xlu0 %3599, %v3506
        %v3601 = vpop.permute.xlu0 %3600
        %3604 = vset.pattern.permute.xlu0 0
        %3605 = vperm.xlu0 %3604, %v3507
        %v3606 = vpop.permute.xlu0 %3605
        %3609 = vset.pattern.permute.xlu0 0
        %3610 = vperm.xlu0 %3609, %v3508
        %v3611 = vpop.permute.xlu0 %3610
        %3614 = vset.pattern.permute.xlu0 0
        %3615 = vperm.xlu0 %3614, %v3509
        %v3616 = vpop.permute.xlu0 %3615
        %3619 = vset.pattern.permute.xlu0 0
        %3620 = vperm.xlu0 %3619, %v3510
        %v3621 = vpop.permute.xlu0 %3620
        %3624 = vset.pattern.permute.xlu0 0
        %3625 = vperm.xlu0 %3624, %v3511
        %v3626 = vpop.permute.xlu0 %3625
        %3629 = vset.pattern.permute.xlu0 0
        %3630 = vperm.xlu0 %3629, %v3512
        %v3631 = vpop.permute.xlu0 %3630
        %3634 = vset.pattern.permute.xlu0 0
        %3635 = vperm.xlu0 %3634, %v3513
        %v3636 = vpop.permute.xlu0 %3635
        %3639 = vset.pattern.permute.xlu0 0
        %3640 = vperm.xlu0 %3639, %v3514
        %v3641 = vpop.permute.xlu0 %3640
        %3644 = vset.pattern.permute.xlu0 0
        %3645 = vperm.xlu0 %3644, %v3515
        %v3646 = vpop.permute.xlu0 %3645
        %3649 = vset.pattern.permute.xlu0 0
        %3650 = vperm.xlu0 %3649, %v3516
        %v3651 = vpop.permute.xlu0 %3650
        %3654 = vset.pattern.permute.xlu0 0
        %3655 = vperm.xlu0 %3654, %v3517
        %v3656 = vpop.permute.xlu0 %3655
        %3659 = vset.pattern.permute.xlu0 0
        %3660 = vperm.xlu0 %3659, %v3518
        %v3661 = vpop.permute.xlu0 %3660
        %3664 = vset.pattern.permute.xlu0 0
        %3665 = vperm.xlu0 %3664, %v3519
        %v3666 = vpop.permute.xlu0 %3665
        %3669 = vset.pattern.permute.xlu0 0
        %3670 = vperm.xlu0 %3669, %v3520
        %v3671 = vpop.permute.xlu0 %3670
        %3674 = vset.pattern.permute.xlu0 0
        %3675 = vperm.xlu0 %3674, %v3521
        %v3676 = vpop.permute.xlu0 %3675
        %3679 = vset.pattern.permute.xlu0 0
        %3680 = vperm.xlu0 %3679, %v3522
        %v3681 = vpop.permute.xlu0 %3680
        %v3683 = vadd.f32 %v3173, %v3526
        %v3684 = vadd.f32 %v3175, %v3526
        %v3685 = vadd.f32 %v3177, %v3531
        %v3686 = vadd.f32 %v3179, %v3531
        %v3687 = vadd.f32 %v3183, %v3536
        %v3688 = vadd.f32 %v3185, %v3536
        %v3689 = vadd.f32 %v3187, %v3541
        %v3690 = vadd.f32 %v3189, %v3541
        %v3691 = vadd.f32 %v3193, %v3546
        %v3692 = vadd.f32 %v3195, %v3546
        %v3693 = vadd.f32 %v3197, %v3551
        %v3694 = vadd.f32 %v3199, %v3551
        %v3695 = vadd.f32 %v3203, %v3556
        %v3696 = vadd.f32 %v3205, %v3556
        %v3697 = vadd.f32 %v3207, %v3561
        %v3698 = vadd.f32 %v3209, %v3561
        %v3699 = vadd.f32 %v3213, %v3566
        %v3700 = vadd.f32 %v3215, %v3566
        %v3701 = vadd.f32 %v3217, %v3571
        %v3702 = vadd.f32 %v3219, %v3571
        %v3703 = vadd.f32 %v3223, %v3576
        %v3704 = vadd.f32 %v3225, %v3576
        %v3705 = vadd.f32 %v3227, %v3581
        %v3706 = vadd.f32 %v3229, %v3581
        %v3707 = vadd.f32 %v3233, %v3586
        %v3708 = vadd.f32 %v3235, %v3586
        %v3709 = vadd.f32 %v3237, %v3591
        %v3710 = vadd.f32 %v3239, %v3591
        %v3711 = vadd.f32 %v3243, %v3596
        %v3712 = vadd.f32 %v3245, %v3596
        %v3713 = vadd.f32 %v3247, %v3601
        %v3714 = vadd.f32 %v3249, %v3601
        %v3715 = vadd.f32 %v3253, %v3606
        %v3716 = vadd.f32 %v3255, %v3606
        %v3717 = vadd.f32 %v3257, %v3611
        %v3718 = vadd.f32 %v3259, %v3611
        %v3719 = vadd.f32 %v3263, %v3616
        %v3720 = vadd.f32 %v3265, %v3616
        %v3721 = vadd.f32 %v3267, %v3621
        %v3722 = vadd.f32 %v3269, %v3621
        %v3723 = vadd.f32 %v3273, %v3626
        %v3724 = vadd.f32 %v3275, %v3626
        %v3725 = vadd.f32 %v3277, %v3631
        %v3726 = vadd.f32 %v3279, %v3631
        %v3727 = vadd.f32 %v3283, %v3636
        %v3728 = vadd.f32 %v3285, %v3636
        %v3729 = vadd.f32 %v3287, %v3641
        %v3730 = vadd.f32 %v3289, %v3641
        %v3731 = vadd.f32 %v3293, %v3646
        %v3732 = vadd.f32 %v3295, %v3646
        %v3733 = vadd.f32 %v3297, %v3651
        %v3734 = vadd.f32 %v3299, %v3651
        %v3735 = vadd.f32 %v3303, %v3656
        %v3736 = vadd.f32 %v3305, %v3656
        %v3737 = vadd.f32 %v3307, %v3661
        %v3738 = vadd.f32 %v3309, %v3661
        %v3739 = vadd.f32 %v3313, %v3666
        %v3740 = vadd.f32 %v3315, %v3666
        %v3741 = vadd.f32 %v3317, %v3671
        %v3742 = vadd.f32 %v3319, %v3671
        %v3743 = vadd.f32 %v3323, %v3676
        %v3744 = vadd.f32 %v3325, %v3676
        %v3745 = vadd.f32 %v3327, %v3681
        %v3746 = vadd.f32 %v3329, %v3681
        %v3747 = vmul.f32 %v3683, 100.0
        %v3748 = vmul.f32 %v3684, 100.0
        %v3749 = vmul.f32 %v3685, 100.0
        %v3750 = vmul.f32 %v3686, 100.0
        %v3751 = vmul.f32 %v3687, 100.0
        %v3752 = vmul.f32 %v3688, 100.0
        %v3753 = vmul.f32 %v3689, 100.0
        %v3754 = vmul.f32 %v3690, 100.0
        %v3755 = vmul.f32 %v3691, 100.0
        %v3756 = vmul.f32 %v3692, 100.0
        %v3757 = vmul.f32 %v3693, 100.0
        %v3758 = vmul.f32 %v3694, 100.0
        %v3759 = vmul.f32 %v3695, 100.0
        %v3760 = vmul.f32 %v3696, 100.0
        %v3761 = vmul.f32 %v3697, 100.0
        %v3762 = vmul.f32 %v3698, 100.0
        %v3763 = vmul.f32 %v3699, 100.0
        %v3764 = vmul.f32 %v3700, 100.0
        %v3765 = vmul.f32 %v3701, 100.0
        %v3766 = vmul.f32 %v3702, 100.0
        %v3767 = vmul.f32 %v3703, 100.0
        %v3768 = vmul.f32 %v3704, 100.0
        %v3769 = vmul.f32 %v3705, 100.0
        %v3770 = vmul.f32 %v3706, 100.0
        %v3771 = vmul.f32 %v3707, 100.0
        %v3772 = vmul.f32 %v3708, 100.0
        %v3773 = vmul.f32 %v3709, 100.0
        %v3774 = vmul.f32 %v3710, 100.0
        %v3775 = vmul.f32 %v3711, 100.0
        %v3776 = vmul.f32 %v3712, 100.0
        %v3777 = vmul.f32 %v3713, 100.0
        %v3778 = vmul.f32 %v3714, 100.0
        %v3779 = vmul.f32 %v3715, 100.0
        %v3780 = vmul.f32 %v3716, 100.0
        %v3781 = vmul.f32 %v3717, 100.0
        %v3782 = vmul.f32 %v3718, 100.0
        %v3783 = vmul.f32 %v3719, 100.0
        %v3784 = vmul.f32 %v3720, 100.0
        %v3785 = vmul.f32 %v3721, 100.0
        %v3786 = vmul.f32 %v3722, 100.0
        %v3787 = vmul.f32 %v3723, 100.0
        %v3788 = vmul.f32 %v3724, 100.0
        %v3789 = vmul.f32 %v3725, 100.0
        %v3790 = vmul.f32 %v3726, 100.0
        %v3791 = vmul.f32 %v3727, 100.0
        %v3792 = vmul.f32 %v3728, 100.0
        %v3793 = vmul.f32 %v3729, 100.0
        %v3794 = vmul.f32 %v3730, 100.0
        %v3795 = vmul.f32 %v3731, 100.0
        %v3796 = vmul.f32 %v3732, 100.0
        %v3797 = vmul.f32 %v3733, 100.0
        %v3798 = vmul.f32 %v3734, 100.0
        %v3799 = vmul.f32 %v3735, 100.0
        %v3800 = vmul.f32 %v3736, 100.0
        %v3801 = vmul.f32 %v3737, 100.0
        %v3802 = vmul.f32 %v3738, 100.0
        %v3803 = vmul.f32 %v3739, 100.0
        %v3804 = vmul.f32 %v3740, 100.0
        %v3805 = vmul.f32 %v3741, 100.0
        %v3806 = vmul.f32 %v3742, 100.0
        %v3807 = vmul.f32 %v3743, 100.0
        %v3808 = vmul.f32 %v3744, 100.0
        %v3809 = vmul.f32 %v3745, 100.0
        %v3810 = vmul.f32 %v3746, 100.0
        %v3811 = vmin.f32 %v3747, 20.0
        %v3812 = vmin.f32 %v3748, 20.0
        %v3813 = vmin.f32 %v3749, 20.0
        %v3814 = vmin.f32 %v3750, 20.0
        %v3815 = vmin.f32 %v3751, 20.0
        %v3816 = vmin.f32 %v3752, 20.0
        %v3817 = vmin.f32 %v3753, 20.0
        %v3818 = vmin.f32 %v3754, 20.0
        %v3819 = vmin.f32 %v3755, 20.0
        %v3820 = vmin.f32 %v3756, 20.0
        %v3821 = vmin.f32 %v3757, 20.0
        %v3822 = vmin.f32 %v3758, 20.0
        %v3823 = vmin.f32 %v3759, 20.0
        %v3824 = vmin.f32 %v3760, 20.0
        %v3825 = vmin.f32 %v3761, 20.0
        %v3826 = vmin.f32 %v3762, 20.0
        %v3827 = vmin.f32 %v3763, 20.0
        %v3828 = vmin.f32 %v3764, 20.0
        %v3829 = vmin.f32 %v3765, 20.0
        %v3830 = vmin.f32 %v3766, 20.0
        %v3831 = vmin.f32 %v3767, 20.0
        %v3832 = vmin.f32 %v3768, 20.0
        %v3833 = vmin.f32 %v3769, 20.0
        %v3834 = vmin.f32 %v3770, 20.0
        %v3835 = vmin.f32 %v3771, 20.0
        %v3836 = vmin.f32 %v3772, 20.0
        %v3837 = vmin.f32 %v3773, 20.0
        %v3838 = vmin.f32 %v3774, 20.0
        %v3839 = vmin.f32 %v3775, 20.0
        %v3840 = vmin.f32 %v3776, 20.0
        %v3841 = vmin.f32 %v3777, 20.0
        %v3842 = vmin.f32 %v3778, 20.0
        %v3843 = vmin.f32 %v3779, 20.0
        %v3844 = vmin.f32 %v3780, 20.0
        %v3845 = vmin.f32 %v3781, 20.0
        %v3846 = vmin.f32 %v3782, 20.0
        %v3847 = vmin.f32 %v3783, 20.0
        %v3848 = vmin.f32 %v3784, 20.0
        %v3849 = vmin.f32 %v3785, 20.0
        %v3850 = vmin.f32 %v3786, 20.0
        %v3851 = vmin.f32 %v3787, 20.0
        %v3852 = vmin.f32 %v3788, 20.0
        %v3853 = vmin.f32 %v3789, 20.0
        %v3854 = vmin.f32 %v3790, 20.0
        %v3855 = vmin.f32 %v3791, 20.0
        %v3856 = vmin.f32 %v3792, 20.0
        %v3857 = vmin.f32 %v3793, 20.0
        %v3858 = vmin.f32 %v3794, 20.0
        %v3859 = vmin.f32 %v3795, 20.0
        %v3860 = vmin.f32 %v3796, 20.0
        %v3861 = vmin.f32 %v3797, 20.0
        %v3862 = vmin.f32 %v3798, 20.0
        %v3863 = vmin.f32 %v3799, 20.0
        %v3864 = vmin.f32 %v3800, 20.0
        %v3865 = vmin.f32 %v3801, 20.0
        %v3866 = vmin.f32 %v3802, 20.0
        %v3867 = vmin.f32 %v3803, 20.0
        %v3868 = vmin.f32 %v3804, 20.0
        %v3869 = vmin.f32 %v3805, 20.0
        %v3870 = vmin.f32 %v3806, 20.0
        %v3871 = vmin.f32 %v3807, 20.0
        %v3872 = vmin.f32 %v3808, 20.0
        %v3873 = vmin.f32 %v3809, 20.0
        %v3874 = vmin.f32 %v3810, 20.0
        %vm3875 = vcmp.gt.f32.partialorder %v3747, 20.0
        %vm3876 = vcmp.gt.f32.partialorder %v3748, 20.0
        %vm3877 = vcmp.gt.f32.partialorder %v3749, 20.0
        %vm3878 = vcmp.gt.f32.partialorder %v3750, 20.0
        %vm3879 = vcmp.gt.f32.partialorder %v3751, 20.0
        %vm3880 = vcmp.gt.f32.partialorder %v3752, 20.0
        %vm3881 = vcmp.gt.f32.partialorder %v3753, 20.0
        %vm3882 = vcmp.gt.f32.partialorder %v3754, 20.0
        %vm3883 = vcmp.gt.f32.partialorder %v3755, 20.0
        %vm3884 = vcmp.gt.f32.partialorder %v3756, 20.0
        %vm3885 = vcmp.gt.f32.partialorder %v3757, 20.0
        %vm3886 = vcmp.gt.f32.partialorder %v3758, 20.0
        %vm3887 = vcmp.gt.f32.partialorder %v3759, 20.0
        %vm3888 = vcmp.gt.f32.partialorder %v3760, 20.0
        %vm3889 = vcmp.gt.f32.partialorder %v3761, 20.0
        %vm3890 = vcmp.gt.f32.partialorder %v3762, 20.0
        %vm3891 = vcmp.gt.f32.partialorder %v3763, 20.0
        %vm3892 = vcmp.gt.f32.partialorder %v3764, 20.0
        %vm3893 = vcmp.gt.f32.partialorder %v3765, 20.0
        %vm3894 = vcmp.gt.f32.partialorder %v3766, 20.0
        %vm3895 = vcmp.gt.f32.partialorder %v3767, 20.0
        %vm3896 = vcmp.gt.f32.partialorder %v3768, 20.0
        %vm3897 = vcmp.gt.f32.partialorder %v3769, 20.0
        %vm3898 = vcmp.gt.f32.partialorder %v3770, 20.0
        %vm3899 = vcmp.gt.f32.partialorder %v3771, 20.0
        %vm3900 = vcmp.gt.f32.partialorder %v3772, 20.0
        %vm3901 = vcmp.gt.f32.partialorder %v3773, 20.0
        %vm3902 = vcmp.gt.f32.partialorder %v3774, 20.0
        %vm3903 = vcmp.gt.f32.partialorder %v3775, 20.0
        %vm3904 = vcmp.gt.f32.partialorder %v3776, 20.0
        %vm3905 = vcmp.gt.f32.partialorder %v3777, 20.0
        %vm3906 = vcmp.gt.f32.partialorder %v3778, 20.0
        %vm3907 = vcmp.gt.f32.partialorder %v3779, 20.0
        %vm3908 = vcmp.gt.f32.partialorder %v3780, 20.0
        %vm3909 = vcmp.gt.f32.partialorder %v3781, 20.0
        %vm3910 = vcmp.gt.f32.partialorder %v3782, 20.0
        %vm3911 = vcmp.gt.f32.partialorder %v3783, 20.0
        %vm3912 = vcmp.gt.f32.partialorder %v3784, 20.0
        %vm3913 = vcmp.gt.f32.partialorder %v3785, 20.0
        %vm3914 = vcmp.gt.f32.partialorder %v3786, 20.0
        %vm3915 = vcmp.gt.f32.partialorder %v3787, 20.0
        %vm3916 = vcmp.gt.f32.partialorder %v3788, 20.0
        %vm3917 = vcmp.gt.f32.partialorder %v3789, 20.0
        %vm3918 = vcmp.gt.f32.partialorder %v3790, 20.0
        %vm3919 = vcmp.gt.f32.partialorder %v3791, 20.0
        %vm3920 = vcmp.gt.f32.partialorder %v3792, 20.0
        %vm3921 = vcmp.gt.f32.partialorder %v3793, 20.0
        %vm3922 = vcmp.gt.f32.partialorder %v3794, 20.0
        %vm3923 = vcmp.gt.f32.partialorder %v3795, 20.0
        %vm3924 = vcmp.gt.f32.partialorder %v3796, 20.0
        %vm3925 = vcmp.gt.f32.partialorder %v3797, 20.0
        %vm3926 = vcmp.gt.f32.partialorder %v3798, 20.0
        %vm3927 = vcmp.gt.f32.partialorder %v3799, 20.0
        %vm3928 = vcmp.gt.f32.partialorder %v3800, 20.0
        %vm3929 = vcmp.gt.f32.partialorder %v3801, 20.0
        %vm3930 = vcmp.gt.f32.partialorder %v3802, 20.0
        %vm3931 = vcmp.gt.f32.partialorder %v3803, 20.0
        %vm3932 = vcmp.gt.f32.partialorder %v3804, 20.0
        %vm3933 = vcmp.gt.f32.partialorder %v3805, 20.0
        %vm3934 = vcmp.gt.f32.partialorder %v3806, 20.0
        %vm3935 = vcmp.gt.f32.partialorder %v3807, 20.0
        %vm3936 = vcmp.gt.f32.partialorder %v3808, 20.0
        %vm3937 = vcmp.gt.f32.partialorder %v3809, 20.0
        %vm3938 = vcmp.gt.f32.partialorder %v3810, 20.0
        %v3939 = vmul.f32 %v3811, 1.442695
        %v3940 = vpow.pop %v3939
        %v3941 = vmul.f32 %v3812, 1.442695
        %v3942 = vpow.pop %v3941
        %v3943 = vmul.f32 %v3813, 1.442695
        %v3944 = vpow.pop %v3943
        %v3945 = vmul.f32 %v3814, 1.442695
        %v3946 = vpow.pop %v3945
        %v3947 = vmul.f32 %v3815, 1.442695
        %v3948 = vpow.pop %v3947
        %v3949 = vmul.f32 %v3816, 1.442695
        %v3950 = vpow.pop %v3949
        %v3951 = vmul.f32 %v3817, 1.442695
        %v3952 = vpow.pop %v3951
        %v3953 = vmul.f32 %v3818, 1.442695
        %v3954 = vpow.pop %v3953
        %v3955 = vmul.f32 %v3819, 1.442695
        %v3956 = vpow.pop %v3955
        %v3957 = vmul.f32 %v3820, 1.442695
        %v3958 = vpow.pop %v3957
        %v3959 = vmul.f32 %v3821, 1.442695
        %v3960 = vpow.pop %v3959
        %v3961 = vmul.f32 %v3822, 1.442695
        %v3962 = vpow.pop %v3961
        %v3963 = vmul.f32 %v3823, 1.442695
        %v3964 = vpow.pop %v3963
        %v3965 = vmul.f32 %v3824, 1.442695
        %v3966 = vpow.pop %v3965
        %v3967 = vmul.f32 %v3825, 1.442695
        %v3968 = vpow.pop %v3967
        %v3969 = vmul.f32 %v3826, 1.442695
        %v3970 = vpow.pop %v3969
        %v3971 = vmul.f32 %v3827, 1.442695
        %v3972 = vpow.pop %v3971
        %v3973 = vmul.f32 %v3828, 1.442695
        %v3974 = vpow.pop %v3973
        %v3975 = vmul.f32 %v3829, 1.442695
        %v3976 = vpow.pop %v3975
        %v3977 = vmul.f32 %v3830, 1.442695
        %v3978 = vpow.pop %v3977
        %v3979 = vmul.f32 %v3831, 1.442695
        %v3980 = vpow.pop %v3979
        %v3981 = vmul.f32 %v3832, 1.442695
        %v3982 = vpow.pop %v3981
        %v3983 = vmul.f32 %v3833, 1.442695
        %v3984 = vpow.pop %v3983
        %v3985 = vmul.f32 %v3834, 1.442695
        %v3986 = vpow.pop %v3985
        %v3987 = vmul.f32 %v3835, 1.442695
        %v3988 = vpow.pop %v3987
        %v3989 = vmul.f32 %v3836, 1.442695
        %v3990 = vpow.pop %v3989
        %v3991 = vmul.f32 %v3837, 1.442695
        %v3992 = vpow.pop %v3991
        %v3993 = vmul.f32 %v3838, 1.442695
        %v3994 = vpow.pop %v3993
        %v3995 = vmul.f32 %v3839, 1.442695
        %v3996 = vpow.pop %v3995
        %v3997 = vmul.f32 %v3840, 1.442695
        %v3998 = vpow.pop %v3997
        %v3999 = vmul.f32 %v3841, 1.442695
        %v4000 = vpow.pop %v3999
        %v4001 = vmul.f32 %v3842, 1.442695
        %v4002 = vpow.pop %v4001
        %v4003 = vmul.f32 %v3843, 1.442695
        %v4004 = vpow.pop %v4003
        %v4005 = vmul.f32 %v3844, 1.442695
        %v4006 = vpow.pop %v4005
        %v4007 = vmul.f32 %v3845, 1.442695
        %v4008 = vpow.pop %v4007
        %v4009 = vmul.f32 %v3846, 1.442695
        %v4010 = vpow.pop %v4009
        %v4011 = vmul.f32 %v3847, 1.442695
        %v4012 = vpow.pop %v4011
        %v4013 = vmul.f32 %v3848, 1.442695
        %v4014 = vpow.pop %v4013
        %v4015 = vmul.f32 %v3849, 1.442695
        %v4016 = vpow.pop %v4015
        %v4017 = vmul.f32 %v3850, 1.442695
        %v4018 = vpow.pop %v4017
        %v4019 = vmul.f32 %v3851, 1.442695
        %v4020 = vpow.pop %v4019
        %v4021 = vmul.f32 %v3852, 1.442695
        %v4022 = vpow.pop %v4021
        %v4023 = vmul.f32 %v3853, 1.442695
        %v4024 = vpow.pop %v4023
        %v4025 = vmul.f32 %v3854, 1.442695
        %v4026 = vpow.pop %v4025
        %v4027 = vmul.f32 %v3855, 1.442695
        %v4028 = vpow.pop %v4027
        %v4029 = vmul.f32 %v3856, 1.442695
        %v4030 = vpow.pop %v4029
        %v4031 = vmul.f32 %v3857, 1.442695
        %v4032 = vpow.pop %v4031
        %v4033 = vmul.f32 %v3858, 1.442695
        %v4034 = vpow.pop %v4033
        %v4035 = vmul.f32 %v3859, 1.442695
        %v4036 = vpow.pop %v4035
        %v4037 = vmul.f32 %v3860, 1.442695
        %v4038 = vpow.pop %v4037
        %v4039 = vmul.f32 %v3861, 1.442695
        %v4040 = vpow.pop %v4039
        %v4041 = vmul.f32 %v3862, 1.442695
        %v4042 = vpow.pop %v4041
        %v4043 = vmul.f32 %v3863, 1.442695
        %v4044 = vpow.pop %v4043
        %v4045 = vmul.f32 %v3864, 1.442695
        %v4046 = vpow.pop %v4045
        %v4047 = vmul.f32 %v3865, 1.442695
        %v4048 = vpow.pop %v4047
        %v4049 = vmul.f32 %v3866, 1.442695
        %v4050 = vpow.pop %v4049
        %v4051 = vmul.f32 %v3867, 1.442695
        %v4052 = vpow.pop %v4051
        %v4053 = vmul.f32 %v3868, 1.442695
        %v4054 = vpow.pop %v4053
        %v4055 = vmul.f32 %v3869, 1.442695
        %v4056 = vpow.pop %v4055
        %v4057 = vmul.f32 %v3870, 1.442695
        %v4058 = vpow.pop %v4057
        %v4059 = vmul.f32 %v3871, 1.442695
        %v4060 = vpow.pop %v4059
        %v4061 = vmul.f32 %v3872, 1.442695
        %v4062 = vpow.pop %v4061
        %v4063 = vmul.f32 %v3873, 1.442695
        %v4064 = vpow.pop %v4063
        %v4065 = vmul.f32 %v3874, 1.442695
        %v4066 = vpow.pop %v4065
        %v4067 = vadd.f32 %v3940, 1.0
        %v4068 = vlog2.pop %v4067
        %v4069 = vmul.f32 %v4068, 0.6931472
        %v4070 = vmul.f32 -0.5, %v3940
        %v4071 = vadd.f32 %v4070, 1.0
        %v4072 = vmul.f32 %v4071, %v3940
        %v4073 = vand.u32 2147483647, %v3940
        %vm4074 = vcmp.lt.f32.partialorder %v4073, 0.0004427343
        %v4075 = vsel %vm4074, %v4072, %v4069
        %v4076 = vadd.f32 %v3942, 1.0
        %v4077 = vlog2.pop %v4076
        %v4078 = vmul.f32 %v4077, 0.6931472
        %v4079 = vmul.f32 -0.5, %v3942
        %v4080 = vadd.f32 %v4079, 1.0
        %v4081 = vmul.f32 %v4080, %v3942
        %v4082 = vand.u32 2147483647, %v3942
        %vm4083 = vcmp.lt.f32.partialorder %v4082, 0.0004427343
        %v4084 = vsel %vm4083, %v4081, %v4078
        %v4085 = vadd.f32 %v3944, 1.0
        %v4086 = vlog2.pop %v4085
        %v4087 = vmul.f32 %v4086, 0.6931472
        %v4088 = vmul.f32 -0.5, %v3944
        %v4089 = vadd.f32 %v4088, 1.0
        %v4090 = vmul.f32 %v4089, %v3944
        %v4091 = vand.u32 2147483647, %v3944
        %vm4092 = vcmp.lt.f32.partialorder %v4091, 0.0004427343
        %v4093 = vsel %vm4092, %v4090, %v4087
        %v4094 = vadd.f32 %v3946, 1.0
        %v4095 = vlog2.pop %v4094
        %v4096 = vmul.f32 %v4095, 0.6931472
        %v4097 = vmul.f32 -0.5, %v3946
        %v4098 = vadd.f32 %v4097, 1.0
        %v4099 = vmul.f32 %v4098, %v3946
        %v4100 = vand.u32 2147483647, %v3946
        %vm4101 = vcmp.lt.f32.partialorder %v4100, 0.0004427343
        %v4102 = vsel %vm4101, %v4099, %v4096
        %v4103 = vadd.f32 %v3948, 1.0
        %v4104 = vlog2.pop %v4103
        %v4105 = vmul.f32 %v4104, 0.6931472
        %v4106 = vmul.f32 -0.5, %v3948
        %v4107 = vadd.f32 %v4106, 1.0
        %v4108 = vmul.f32 %v4107, %v3948
        %v4109 = vand.u32 2147483647, %v3948
        %vm4110 = vcmp.lt.f32.partialorder %v4109, 0.0004427343
        %v4111 = vsel %vm4110, %v4108, %v4105
        %v4112 = vadd.f32 %v3950, 1.0
        %v4113 = vlog2.pop %v4112
        %v4114 = vmul.f32 %v4113, 0.6931472
        %v4115 = vmul.f32 -0.5, %v3950
        %v4116 = vadd.f32 %v4115, 1.0
        %v4117 = vmul.f32 %v4116, %v3950
        %v4118 = vand.u32 2147483647, %v3950
        %vm4119 = vcmp.lt.f32.partialorder %v4118, 0.0004427343
        %v4120 = vsel %vm4119, %v4117, %v4114
        %v4121 = vadd.f32 %v3952, 1.0
        %v4122 = vlog2.pop %v4121
        %v4123 = vmul.f32 %v4122, 0.6931472
        %v4124 = vmul.f32 -0.5, %v3952
        %v4125 = vadd.f32 %v4124, 1.0
        %v4126 = vmul.f32 %v4125, %v3952
        %v4127 = vand.u32 2147483647, %v3952
        %vm4128 = vcmp.lt.f32.partialorder %v4127, 0.0004427343
        %v4129 = vsel %vm4128, %v4126, %v4123
        %v4130 = vadd.f32 %v3954, 1.0
        %v4131 = vlog2.pop %v4130
        %v4132 = vmul.f32 %v4131, 0.6931472
        %v4133 = vmul.f32 -0.5, %v3954
        %v4134 = vadd.f32 %v4133, 1.0
        %v4135 = vmul.f32 %v4134, %v3954
        %v4136 = vand.u32 2147483647, %v3954
        %vm4137 = vcmp.lt.f32.partialorder %v4136, 0.0004427343
        %v4138 = vsel %vm4137, %v4135, %v4132
        %v4139 = vadd.f32 %v3956, 1.0
        %v4140 = vlog2.pop %v4139
        %v4141 = vmul.f32 %v4140, 0.6931472
        %v4142 = vmul.f32 -0.5, %v3956
        %v4143 = vadd.f32 %v4142, 1.0
        %v4144 = vmul.f32 %v4143, %v3956
        %v4145 = vand.u32 2147483647, %v3956
        %vm4146 = vcmp.lt.f32.partialorder %v4145, 0.0004427343
        %v4147 = vsel %vm4146, %v4144, %v4141
        %v4148 = vadd.f32 %v3958, 1.0
        %v4149 = vlog2.pop %v4148
        %v4150 = vmul.f32 %v4149, 0.6931472
        %v4151 = vmul.f32 -0.5, %v3958
        %v4152 = vadd.f32 %v4151, 1.0
        %v4153 = vmul.f32 %v4152, %v3958
        %v4154 = vand.u32 2147483647, %v3958
        %vm4155 = vcmp.lt.f32.partialorder %v4154, 0.0004427343
        %v4156 = vsel %vm4155, %v4153, %v4150
        %v4157 = vadd.f32 %v3960, 1.0
        %v4158 = vlog2.pop %v4157
        %v4159 = vmul.f32 %v4158, 0.6931472
        %v4160 = vmul.f32 -0.5, %v3960
        %v4161 = vadd.f32 %v4160, 1.0
        %v4162 = vmul.f32 %v4161, %v3960
        %v4163 = vand.u32 2147483647, %v3960
        %vm4164 = vcmp.lt.f32.partialorder %v4163, 0.0004427343
        %v4165 = vsel %vm4164, %v4162, %v4159
        %v4166 = vadd.f32 %v3962, 1.0
        %v4167 = vlog2.pop %v4166
        %v4168 = vmul.f32 %v4167, 0.6931472
        %v4169 = vmul.f32 -0.5, %v3962
        %v4170 = vadd.f32 %v4169, 1.0
        %v4171 = vmul.f32 %v4170, %v3962
        %v4172 = vand.u32 2147483647, %v3962
        %vm4173 = vcmp.lt.f32.partialorder %v4172, 0.0004427343
        %v4174 = vsel %vm4173, %v4171, %v4168
        %v4175 = vadd.f32 %v3964, 1.0
        %v4176 = vlog2.pop %v4175
        %v4177 = vmul.f32 %v4176, 0.6931472
        %v4178 = vmul.f32 -0.5, %v3964
        %v4179 = vadd.f32 %v4178, 1.0
        %v4180 = vmul.f32 %v4179, %v3964
        %v4181 = vand.u32 2147483647, %v3964
        %vm4182 = vcmp.lt.f32.partialorder %v4181, 0.0004427343
        %v4183 = vsel %vm4182, %v4180, %v4177
        %v4184 = vadd.f32 %v3966, 1.0
        %v4185 = vlog2.pop %v4184
        %v4186 = vmul.f32 %v4185, 0.6931472
        %v4187 = vmul.f32 -0.5, %v3966
        %v4188 = vadd.f32 %v4187, 1.0
        %v4189 = vmul.f32 %v4188, %v3966
        %v4190 = vand.u32 2147483647, %v3966
        %vm4191 = vcmp.lt.f32.partialorder %v4190, 0.0004427343
        %v4192 = vsel %vm4191, %v4189, %v4186
        %v4193 = vadd.f32 %v3968, 1.0
        %v4194 = vlog2.pop %v4193
        %v4195 = vmul.f32 %v4194, 0.6931472
        %v4196 = vmul.f32 -0.5, %v3968
        %v4197 = vadd.f32 %v4196, 1.0
        %v4198 = vmul.f32 %v4197, %v3968
        %v4199 = vand.u32 2147483647, %v3968
        %vm4200 = vcmp.lt.f32.partialorder %v4199, 0.0004427343
        %v4201 = vsel %vm4200, %v4198, %v4195
        %v4202 = vadd.f32 %v3970, 1.0
        %v4203 = vlog2.pop %v4202
        %v4204 = vmul.f32 %v4203, 0.6931472
        %v4205 = vmul.f32 -0.5, %v3970
        %v4206 = vadd.f32 %v4205, 1.0
        %v4207 = vmul.f32 %v4206, %v3970
        %v4208 = vand.u32 2147483647, %v3970
        %vm4209 = vcmp.lt.f32.partialorder %v4208, 0.0004427343
        %v4210 = vsel %vm4209, %v4207, %v4204
        %v4211 = vadd.f32 %v3972, 1.0
        %v4212 = vlog2.pop %v4211
        %v4213 = vmul.f32 %v4212, 0.6931472
        %v4214 = vmul.f32 -0.5, %v3972
        %v4215 = vadd.f32 %v4214, 1.0
        %v4216 = vmul.f32 %v4215, %v3972
        %v4217 = vand.u32 2147483647, %v3972
        %vm4218 = vcmp.lt.f32.partialorder %v4217, 0.0004427343
        %v4219 = vsel %vm4218, %v4216, %v4213
        %v4220 = vadd.f32 %v3974, 1.0
        %v4221 = vlog2.pop %v4220
        %v4222 = vmul.f32 %v4221, 0.6931472
        %v4223 = vmul.f32 -0.5, %v3974
        %v4224 = vadd.f32 %v4223, 1.0
        %v4225 = vmul.f32 %v4224, %v3974
        %v4226 = vand.u32 2147483647, %v3974
        %vm4227 = vcmp.lt.f32.partialorder %v4226, 0.0004427343
        %v4228 = vsel %vm4227, %v4225, %v4222
        %v4229 = vadd.f32 %v3976, 1.0
        %v4230 = vlog2.pop %v4229
        %v4231 = vmul.f32 %v4230, 0.6931472
        %v4232 = vmul.f32 -0.5, %v3976
        %v4233 = vadd.f32 %v4232, 1.0
        %v4234 = vmul.f32 %v4233, %v3976
        %v4235 = vand.u32 2147483647, %v3976
        %vm4236 = vcmp.lt.f32.partialorder %v4235, 0.0004427343
        %v4237 = vsel %vm4236, %v4234, %v4231
        %v4238 = vadd.f32 %v3978, 1.0
        %v4239 = vlog2.pop %v4238
        %v4240 = vmul.f32 %v4239, 0.6931472
        %v4241 = vmul.f32 -0.5, %v3978
        %v4242 = vadd.f32 %v4241, 1.0
        %v4243 = vmul.f32 %v4242, %v3978
        %v4244 = vand.u32 2147483647, %v3978
        %vm4245 = vcmp.lt.f32.partialorder %v4244, 0.0004427343
        %v4246 = vsel %vm4245, %v4243, %v4240
        %v4247 = vadd.f32 %v3980, 1.0
        %v4248 = vlog2.pop %v4247
        %v4249 = vmul.f32 %v4248, 0.6931472
        %v4250 = vmul.f32 -0.5, %v3980
        %v4251 = vadd.f32 %v4250, 1.0
        %v4252 = vmul.f32 %v4251, %v3980
        %v4253 = vand.u32 2147483647, %v3980
        %vm4254 = vcmp.lt.f32.partialorder %v4253, 0.0004427343
        %v4255 = vsel %vm4254, %v4252, %v4249
        %v4256 = vadd.f32 %v3982, 1.0
        %v4257 = vlog2.pop %v4256
        %v4258 = vmul.f32 %v4257, 0.6931472
        %v4259 = vmul.f32 -0.5, %v3982
        %v4260 = vadd.f32 %v4259, 1.0
        %v4261 = vmul.f32 %v4260, %v3982
        %v4262 = vand.u32 2147483647, %v3982
        %vm4263 = vcmp.lt.f32.partialorder %v4262, 0.0004427343
        %v4264 = vsel %vm4263, %v4261, %v4258
        %v4265 = vadd.f32 %v3984, 1.0
        %v4266 = vlog2.pop %v4265
        %v4267 = vmul.f32 %v4266, 0.6931472
        %v4268 = vmul.f32 -0.5, %v3984
        %v4269 = vadd.f32 %v4268, 1.0
        %v4270 = vmul.f32 %v4269, %v3984
        %v4271 = vand.u32 2147483647, %v3984
        %vm4272 = vcmp.lt.f32.partialorder %v4271, 0.0004427343
        %v4273 = vsel %vm4272, %v4270, %v4267
        %v4274 = vadd.f32 %v3986, 1.0
        %v4275 = vlog2.pop %v4274
        %v4276 = vmul.f32 %v4275, 0.6931472
        %v4277 = vmul.f32 -0.5, %v3986
        %v4278 = vadd.f32 %v4277, 1.0
        %v4279 = vmul.f32 %v4278, %v3986
        %v4280 = vand.u32 2147483647, %v3986
        %vm4281 = vcmp.lt.f32.partialorder %v4280, 0.0004427343
        %v4282 = vsel %vm4281, %v4279, %v4276
        %v4283 = vadd.f32 %v3988, 1.0
        %v4284 = vlog2.pop %v4283
        %v4285 = vmul.f32 %v4284, 0.6931472
        %v4286 = vmul.f32 -0.5, %v3988
        %v4287 = vadd.f32 %v4286, 1.0
        %v4288 = vmul.f32 %v4287, %v3988
        %v4289 = vand.u32 2147483647, %v3988
        %vm4290 = vcmp.lt.f32.partialorder %v4289, 0.0004427343
        %v4291 = vsel %vm4290, %v4288, %v4285
        %v4292 = vadd.f32 %v3990, 1.0
        %v4293 = vlog2.pop %v4292
        %v4294 = vmul.f32 %v4293, 0.6931472
        %v4295 = vmul.f32 -0.5, %v3990
        %v4296 = vadd.f32 %v4295, 1.0
        %v4297 = vmul.f32 %v4296, %v3990
        %v4298 = vand.u32 2147483647, %v3990
        %vm4299 = vcmp.lt.f32.partialorder %v4298, 0.0004427343
        %v4300 = vsel %vm4299, %v4297, %v4294
        %v4301 = vadd.f32 %v3992, 1.0
        %v4302 = vlog2.pop %v4301
        %v4303 = vmul.f32 %v4302, 0.6931472
        %v4304 = vmul.f32 -0.5, %v3992
        %v4305 = vadd.f32 %v4304, 1.0
        %v4306 = vmul.f32 %v4305, %v3992
        %v4307 = vand.u32 2147483647, %v3992
        %vm4308 = vcmp.lt.f32.partialorder %v4307, 0.0004427343
        %v4309 = vsel %vm4308, %v4306, %v4303
        %v4310 = vadd.f32 %v3994, 1.0
        %v4311 = vlog2.pop %v4310
        %v4312 = vmul.f32 %v4311, 0.6931472
        %v4313 = vmul.f32 -0.5, %v3994
        %v4314 = vadd.f32 %v4313, 1.0
        %v4315 = vmul.f32 %v4314, %v3994
        %v4316 = vand.u32 2147483647, %v3994
        %vm4317 = vcmp.lt.f32.partialorder %v4316, 0.0004427343
        %v4318 = vsel %vm4317, %v4315, %v4312
        %v4319 = vadd.f32 %v3996, 1.0
        %v4320 = vlog2.pop %v4319
        %v4321 = vmul.f32 %v4320, 0.6931472
        %v4322 = vmul.f32 -0.5, %v3996
        %v4323 = vadd.f32 %v4322, 1.0
        %v4324 = vmul.f32 %v4323, %v3996
        %v4325 = vand.u32 2147483647, %v3996
        %vm4326 = vcmp.lt.f32.partialorder %v4325, 0.0004427343
        %v4327 = vsel %vm4326, %v4324, %v4321
        %v4328 = vadd.f32 %v3998, 1.0
        %v4329 = vlog2.pop %v4328
        %v4330 = vmul.f32 %v4329, 0.6931472
        %v4331 = vmul.f32 -0.5, %v3998
        %v4332 = vadd.f32 %v4331, 1.0
        %v4333 = vmul.f32 %v4332, %v3998
        %v4334 = vand.u32 2147483647, %v3998
        %vm4335 = vcmp.lt.f32.partialorder %v4334, 0.0004427343
        %v4336 = vsel %vm4335, %v4333, %v4330
        %v4337 = vadd.f32 %v4000, 1.0
        %v4338 = vlog2.pop %v4337
        %v4339 = vmul.f32 %v4338, 0.6931472
        %v4340 = vmul.f32 -0.5, %v4000
        %v4341 = vadd.f32 %v4340, 1.0
        %v4342 = vmul.f32 %v4341, %v4000
        %v4343 = vand.u32 2147483647, %v4000
        %vm4344 = vcmp.lt.f32.partialorder %v4343, 0.0004427343
        %v4345 = vsel %vm4344, %v4342, %v4339
        %v4346 = vadd.f32 %v4002, 1.0
        %v4347 = vlog2.pop %v4346
        %v4348 = vmul.f32 %v4347, 0.6931472
        %v4349 = vmul.f32 -0.5, %v4002
        %v4350 = vadd.f32 %v4349, 1.0
        %v4351 = vmul.f32 %v4350, %v4002
        %v4352 = vand.u32 2147483647, %v4002
        %vm4353 = vcmp.lt.f32.partialorder %v4352, 0.0004427343
        %v4354 = vsel %vm4353, %v4351, %v4348
        %v4355 = vadd.f32 %v4004, 1.0
        %v4356 = vlog2.pop %v4355
        %v4357 = vmul.f32 %v4356, 0.6931472
        %v4358 = vmul.f32 -0.5, %v4004
        %v4359 = vadd.f32 %v4358, 1.0
        %v4360 = vmul.f32 %v4359, %v4004
        %v4361 = vand.u32 2147483647, %v4004
        %vm4362 = vcmp.lt.f32.partialorder %v4361, 0.0004427343
        %v4363 = vsel %vm4362, %v4360, %v4357
        %v4364 = vadd.f32 %v4006, 1.0
        %v4365 = vlog2.pop %v4364
        %v4366 = vmul.f32 %v4365, 0.6931472
        %v4367 = vmul.f32 -0.5, %v4006
        %v4368 = vadd.f32 %v4367, 1.0
        %v4369 = vmul.f32 %v4368, %v4006
        %v4370 = vand.u32 2147483647, %v4006
        %vm4371 = vcmp.lt.f32.partialorder %v4370, 0.0004427343
        %v4372 = vsel %vm4371, %v4369, %v4366
        %v4373 = vadd.f32 %v4008, 1.0
        %v4374 = vlog2.pop %v4373
        %v4375 = vmul.f32 %v4374, 0.6931472
        %v4376 = vmul.f32 -0.5, %v4008
        %v4377 = vadd.f32 %v4376, 1.0
        %v4378 = vmul.f32 %v4377, %v4008
        %v4379 = vand.u32 2147483647, %v4008
        %vm4380 = vcmp.lt.f32.partialorder %v4379, 0.0004427343
        %v4381 = vsel %vm4380, %v4378, %v4375
        %v4382 = vadd.f32 %v4010, 1.0
        %v4383 = vlog2.pop %v4382
        %v4384 = vmul.f32 %v4383, 0.6931472
        %v4385 = vmul.f32 -0.5, %v4010
        %v4386 = vadd.f32 %v4385, 1.0
        %v4387 = vmul.f32 %v4386, %v4010
        %v4388 = vand.u32 2147483647, %v4010
        %vm4389 = vcmp.lt.f32.partialorder %v4388, 0.0004427343
        %v4390 = vsel %vm4389, %v4387, %v4384
        %v4391 = vadd.f32 %v4012, 1.0
        %v4392 = vlog2.pop %v4391
        %v4393 = vmul.f32 %v4392, 0.6931472
        %v4394 = vmul.f32 -0.5, %v4012
        %v4395 = vadd.f32 %v4394, 1.0
        %v4396 = vmul.f32 %v4395, %v4012
        %v4397 = vand.u32 2147483647, %v4012
        %vm4398 = vcmp.lt.f32.partialorder %v4397, 0.0004427343
        %v4399 = vsel %vm4398, %v4396, %v4393
        %v4400 = vadd.f32 %v4014, 1.0
        %v4401 = vlog2.pop %v4400
        %v4402 = vmul.f32 %v4401, 0.6931472
        %v4403 = vmul.f32 -0.5, %v4014
        %v4404 = vadd.f32 %v4403, 1.0
        %v4405 = vmul.f32 %v4404, %v4014
        %v4406 = vand.u32 2147483647, %v4014
        %vm4407 = vcmp.lt.f32.partialorder %v4406, 0.0004427343
        %v4408 = vsel %vm4407, %v4405, %v4402
        %v4409 = vadd.f32 %v4016, 1.0
        %v4410 = vlog2.pop %v4409
        %v4411 = vmul.f32 %v4410, 0.6931472
        %v4412 = vmul.f32 -0.5, %v4016
        %v4413 = vadd.f32 %v4412, 1.0
        %v4414 = vmul.f32 %v4413, %v4016
        %v4415 = vand.u32 2147483647, %v4016
        %vm4416 = vcmp.lt.f32.partialorder %v4415, 0.0004427343
        %v4417 = vsel %vm4416, %v4414, %v4411
        %v4418 = vadd.f32 %v4018, 1.0
        %v4419 = vlog2.pop %v4418
        %v4420 = vmul.f32 %v4419, 0.6931472
        %v4421 = vmul.f32 -0.5, %v4018
        %v4422 = vadd.f32 %v4421, 1.0
        %v4423 = vmul.f32 %v4422, %v4018
        %v4424 = vand.u32 2147483647, %v4018
        %vm4425 = vcmp.lt.f32.partialorder %v4424, 0.0004427343
        %v4426 = vsel %vm4425, %v4423, %v4420
        %v4427 = vadd.f32 %v4020, 1.0
        %v4428 = vlog2.pop %v4427
        %v4429 = vmul.f32 %v4428, 0.6931472
        %v4430 = vmul.f32 -0.5, %v4020
        %v4431 = vadd.f32 %v4430, 1.0
        %v4432 = vmul.f32 %v4431, %v4020
        %v4433 = vand.u32 2147483647, %v4020
        %vm4434 = vcmp.lt.f32.partialorder %v4433, 0.0004427343
        %v4435 = vsel %vm4434, %v4432, %v4429
        %v4436 = vadd.f32 %v4022, 1.0
        %v4437 = vlog2.pop %v4436
        %v4438 = vmul.f32 %v4437, 0.6931472
        %v4439 = vmul.f32 -0.5, %v4022
        %v4440 = vadd.f32 %v4439, 1.0
        %v4441 = vmul.f32 %v4440, %v4022
        %v4442 = vand.u32 2147483647, %v4022
        %vm4443 = vcmp.lt.f32.partialorder %v4442, 0.0004427343
        %v4444 = vsel %vm4443, %v4441, %v4438
        %v4445 = vadd.f32 %v4024, 1.0
        %v4446 = vlog2.pop %v4445
        %v4447 = vmul.f32 %v4446, 0.6931472
        %v4448 = vmul.f32 -0.5, %v4024
        %v4449 = vadd.f32 %v4448, 1.0
        %v4450 = vmul.f32 %v4449, %v4024
        %v4451 = vand.u32 2147483647, %v4024
        %vm4452 = vcmp.lt.f32.partialorder %v4451, 0.0004427343
        %v4453 = vsel %vm4452, %v4450, %v4447
        %v4454 = vadd.f32 %v4026, 1.0
        %v4455 = vlog2.pop %v4454
        %v4456 = vmul.f32 %v4455, 0.6931472
        %v4457 = vmul.f32 -0.5, %v4026
        %v4458 = vadd.f32 %v4457, 1.0
        %v4459 = vmul.f32 %v4458, %v4026
        %v4460 = vand.u32 2147483647, %v4026
        %vm4461 = vcmp.lt.f32.partialorder %v4460, 0.0004427343
        %v4462 = vsel %vm4461, %v4459, %v4456
        %v4463 = vadd.f32 %v4028, 1.0
        %v4464 = vlog2.pop %v4463
        %v4465 = vmul.f32 %v4464, 0.6931472
        %v4466 = vmul.f32 -0.5, %v4028
        %v4467 = vadd.f32 %v4466, 1.0
        %v4468 = vmul.f32 %v4467, %v4028
        %v4469 = vand.u32 2147483647, %v4028
        %vm4470 = vcmp.lt.f32.partialorder %v4469, 0.0004427343
        %v4471 = vsel %vm4470, %v4468, %v4465
        %v4472 = vadd.f32 %v4030, 1.0
        %v4473 = vlog2.pop %v4472
        %v4474 = vmul.f32 %v4473, 0.6931472
        %v4475 = vmul.f32 -0.5, %v4030
        %v4476 = vadd.f32 %v4475, 1.0
        %v4477 = vmul.f32 %v4476, %v4030
        %v4478 = vand.u32 2147483647, %v4030
        %vm4479 = vcmp.lt.f32.partialorder %v4478, 0.0004427343
        %v4480 = vsel %vm4479, %v4477, %v4474
        %v4481 = vadd.f32 %v4032, 1.0
        %v4482 = vlog2.pop %v4481
        %v4483 = vmul.f32 %v4482, 0.6931472
        %v4484 = vmul.f32 -0.5, %v4032
        %v4485 = vadd.f32 %v4484, 1.0
        %v4486 = vmul.f32 %v4485, %v4032
        %v4487 = vand.u32 2147483647, %v4032
        %vm4488 = vcmp.lt.f32.partialorder %v4487, 0.0004427343
        %v4489 = vsel %vm4488, %v4486, %v4483
        %v4490 = vadd.f32 %v4034, 1.0
        %v4491 = vlog2.pop %v4490
        %v4492 = vmul.f32 %v4491, 0.6931472
        %v4493 = vmul.f32 -0.5, %v4034
        %v4494 = vadd.f32 %v4493, 1.0
        %v4495 = vmul.f32 %v4494, %v4034
        %v4496 = vand.u32 2147483647, %v4034
        %vm4497 = vcmp.lt.f32.partialorder %v4496, 0.0004427343
        %v4498 = vsel %vm4497, %v4495, %v4492
        %v4499 = vadd.f32 %v4036, 1.0
        %v4500 = vlog2.pop %v4499
        %v4501 = vmul.f32 %v4500, 0.6931472
        %v4502 = vmul.f32 -0.5, %v4036
        %v4503 = vadd.f32 %v4502, 1.0
        %v4504 = vmul.f32 %v4503, %v4036
        %v4505 = vand.u32 2147483647, %v4036
        %vm4506 = vcmp.lt.f32.partialorder %v4505, 0.0004427343
        %v4507 = vsel %vm4506, %v4504, %v4501
        %v4508 = vadd.f32 %v4038, 1.0
        %v4509 = vlog2.pop %v4508
        %v4510 = vmul.f32 %v4509, 0.6931472
        %v4511 = vmul.f32 -0.5, %v4038
        %v4512 = vadd.f32 %v4511, 1.0
        %v4513 = vmul.f32 %v4512, %v4038
        %v4514 = vand.u32 2147483647, %v4038
        %vm4515 = vcmp.lt.f32.partialorder %v4514, 0.0004427343
        %v4516 = vsel %vm4515, %v4513, %v4510
        %v4517 = vadd.f32 %v4040, 1.0
        %v4518 = vlog2.pop %v4517
        %v4519 = vmul.f32 %v4518, 0.6931472
        %v4520 = vmul.f32 -0.5, %v4040
        %v4521 = vadd.f32 %v4520, 1.0
        %v4522 = vmul.f32 %v4521, %v4040
        %v4523 = vand.u32 2147483647, %v4040
        %vm4524 = vcmp.lt.f32.partialorder %v4523, 0.0004427343
        %v4525 = vsel %vm4524, %v4522, %v4519
        %v4526 = vadd.f32 %v4042, 1.0
        %v4527 = vlog2.pop %v4526
        %v4528 = vmul.f32 %v4527, 0.6931472
        %v4529 = vmul.f32 -0.5, %v4042
        %v4530 = vadd.f32 %v4529, 1.0
        %v4531 = vmul.f32 %v4530, %v4042
        %v4532 = vand.u32 2147483647, %v4042
        %vm4533 = vcmp.lt.f32.partialorder %v4532, 0.0004427343
        %v4534 = vsel %vm4533, %v4531, %v4528
        %v4535 = vadd.f32 %v4044, 1.0
        %v4536 = vlog2.pop %v4535
        %v4537 = vmul.f32 %v4536, 0.6931472
        %v4538 = vmul.f32 -0.5, %v4044
        %v4539 = vadd.f32 %v4538, 1.0
        %v4540 = vmul.f32 %v4539, %v4044
        %v4541 = vand.u32 2147483647, %v4044
        %vm4542 = vcmp.lt.f32.partialorder %v4541, 0.0004427343
        %v4543 = vsel %vm4542, %v4540, %v4537
        %v4544 = vadd.f32 %v4046, 1.0
        %v4545 = vlog2.pop %v4544
        %v4546 = vmul.f32 %v4545, 0.6931472
        %v4547 = vmul.f32 -0.5, %v4046
        %v4548 = vadd.f32 %v4547, 1.0
        %v4549 = vmul.f32 %v4548, %v4046
        %v4550 = vand.u32 2147483647, %v4046
        %vm4551 = vcmp.lt.f32.partialorder %v4550, 0.0004427343
        %v4552 = vsel %vm4551, %v4549, %v4546
        %v4553 = vadd.f32 %v4048, 1.0
        %v4554 = vlog2.pop %v4553
        %v4555 = vmul.f32 %v4554, 0.6931472
        %v4556 = vmul.f32 -0.5, %v4048
        %v4557 = vadd.f32 %v4556, 1.0
        %v4558 = vmul.f32 %v4557, %v4048
        %v4559 = vand.u32 2147483647, %v4048
        %vm4560 = vcmp.lt.f32.partialorder %v4559, 0.0004427343
        %v4561 = vsel %vm4560, %v4558, %v4555
        %v4562 = vadd.f32 %v4050, 1.0
        %v4563 = vlog2.pop %v4562
        %v4564 = vmul.f32 %v4563, 0.6931472
        %v4565 = vmul.f32 -0.5, %v4050
        %v4566 = vadd.f32 %v4565, 1.0
        %v4567 = vmul.f32 %v4566, %v4050
        %v4568 = vand.u32 2147483647, %v4050
        %vm4569 = vcmp.lt.f32.partialorder %v4568, 0.0004427343
        %v4570 = vsel %vm4569, %v4567, %v4564
        %v4571 = vadd.f32 %v4052, 1.0
        %v4572 = vlog2.pop %v4571
        %v4573 = vmul.f32 %v4572, 0.6931472
        %v4574 = vmul.f32 -0.5, %v4052
        %v4575 = vadd.f32 %v4574, 1.0
        %v4576 = vmul.f32 %v4575, %v4052
        %v4577 = vand.u32 2147483647, %v4052
        %vm4578 = vcmp.lt.f32.partialorder %v4577, 0.0004427343
        %v4579 = vsel %vm4578, %v4576, %v4573
        %v4580 = vadd.f32 %v4054, 1.0
        %v4581 = vlog2.pop %v4580
        %v4582 = vmul.f32 %v4581, 0.6931472
        %v4583 = vmul.f32 -0.5, %v4054
        %v4584 = vadd.f32 %v4583, 1.0
        %v4585 = vmul.f32 %v4584, %v4054
        %v4586 = vand.u32 2147483647, %v4054
        %vm4587 = vcmp.lt.f32.partialorder %v4586, 0.0004427343
        %v4588 = vsel %vm4587, %v4585, %v4582
        %v4589 = vadd.f32 %v4056, 1.0
        %v4590 = vlog2.pop %v4589
        %v4591 = vmul.f32 %v4590, 0.6931472
        %v4592 = vmul.f32 -0.5, %v4056
        %v4593 = vadd.f32 %v4592, 1.0
        %v4594 = vmul.f32 %v4593, %v4056
        %v4595 = vand.u32 2147483647, %v4056
        %vm4596 = vcmp.lt.f32.partialorder %v4595, 0.0004427343
        %v4597 = vsel %vm4596, %v4594, %v4591
        %v4598 = vadd.f32 %v4058, 1.0
        %v4599 = vlog2.pop %v4598
        %v4600 = vmul.f32 %v4599, 0.6931472
        %v4601 = vmul.f32 -0.5, %v4058
        %v4602 = vadd.f32 %v4601, 1.0
        %v4603 = vmul.f32 %v4602, %v4058
        %v4604 = vand.u32 2147483647, %v4058
        %vm4605 = vcmp.lt.f32.partialorder %v4604, 0.0004427343
        %v4606 = vsel %vm4605, %v4603, %v4600
        %v4607 = vadd.f32 %v4060, 1.0
        %v4608 = vlog2.pop %v4607
        %v4609 = vmul.f32 %v4608, 0.6931472
        %v4610 = vmul.f32 -0.5, %v4060
        %v4611 = vadd.f32 %v4610, 1.0
        %v4612 = vmul.f32 %v4611, %v4060
        %v4613 = vand.u32 2147483647, %v4060
        %vm4614 = vcmp.lt.f32.partialorder %v4613, 0.0004427343
        %v4615 = vsel %vm4614, %v4612, %v4609
        %v4616 = vadd.f32 %v4062, 1.0
        %v4617 = vlog2.pop %v4616
        %v4618 = vmul.f32 %v4617, 0.6931472
        %v4619 = vmul.f32 -0.5, %v4062
        %v4620 = vadd.f32 %v4619, 1.0
        %v4621 = vmul.f32 %v4620, %v4062
        %v4622 = vand.u32 2147483647, %v4062
        %vm4623 = vcmp.lt.f32.partialorder %v4622, 0.0004427343
        %v4624 = vsel %vm4623, %v4621, %v4618
        %v4625 = vadd.f32 %v4064, 1.0
        %v4626 = vlog2.pop %v4625
        %v4627 = vmul.f32 %v4626, 0.6931472
        %v4628 = vmul.f32 -0.5, %v4064
        %v4629 = vadd.f32 %v4628, 1.0
        %v4630 = vmul.f32 %v4629, %v4064
        %v4631 = vand.u32 2147483647, %v4064
        %vm4632 = vcmp.lt.f32.partialorder %v4631, 0.0004427343
        %v4633 = vsel %vm4632, %v4630, %v4627
        %v4634 = vadd.f32 %v4066, 1.0
        %v4635 = vlog2.pop %v4634
        %v4636 = vmul.f32 %v4635, 0.6931472
        %v4637 = vmul.f32 -0.5, %v4066
        %v4638 = vadd.f32 %v4637, 1.0
        %v4639 = vmul.f32 %v4638, %v4066
        %v4640 = vand.u32 2147483647, %v4066
        %vm4641 = vcmp.lt.f32.partialorder %v4640, 0.0004427343
        %v4642 = vsel %vm4641, %v4639, %v4636
        %v4643 = vmul.f32 %v4075, 0.01
        %v4644 = vmul.f32 %v4084, 0.01
        %v4645 = vmul.f32 %v4093, 0.01
        %v4646 = vmul.f32 %v4102, 0.01
        %v4647 = vmul.f32 %v4111, 0.01
        %v4648 = vmul.f32 %v4120, 0.01
        %v4649 = vmul.f32 %v4129, 0.01
        %v4650 = vmul.f32 %v4138, 0.01
        %v4651 = vmul.f32 %v4147, 0.01
        %v4652 = vmul.f32 %v4156, 0.01
        %v4653 = vmul.f32 %v4165, 0.01
        %v4654 = vmul.f32 %v4174, 0.01
        %v4655 = vmul.f32 %v4183, 0.01
        %v4656 = vmul.f32 %v4192, 0.01
        %v4657 = vmul.f32 %v4201, 0.01
        %v4658 = vmul.f32 %v4210, 0.01
        %v4659 = vmul.f32 %v4219, 0.01
        %v4660 = vmul.f32 %v4228, 0.01
        %v4661 = vmul.f32 %v4237, 0.01
        %v4662 = vmul.f32 %v4246, 0.01
        %v4663 = vmul.f32 %v4255, 0.01
        %v4664 = vmul.f32 %v4264, 0.01
        %v4665 = vmul.f32 %v4273, 0.01
        %v4666 = vmul.f32 %v4282, 0.01
        %v4667 = vmul.f32 %v4291, 0.01
        %v4668 = vmul.f32 %v4300, 0.01
        %v4669 = vmul.f32 %v4309, 0.01
        %v4670 = vmul.f32 %v4318, 0.01
        %v4671 = vmul.f32 %v4327, 0.01
        %v4672 = vmul.f32 %v4336, 0.01
        %v4673 = vmul.f32 %v4345, 0.01
        %v4674 = vmul.f32 %v4354, 0.01
        %v4675 = vmul.f32 %v4363, 0.01
        %v4676 = vmul.f32 %v4372, 0.01
        %v4677 = vmul.f32 %v4381, 0.01
        %v4678 = vmul.f32 %v4390, 0.01
        %v4679 = vmul.f32 %v4399, 0.01
        %v4680 = vmul.f32 %v4408, 0.01
        %v4681 = vmul.f32 %v4417, 0.01
        %v4682 = vmul.f32 %v4426, 0.01
        %v4683 = vmul.f32 %v4435, 0.01
        %v4684 = vmul.f32 %v4444, 0.01
        %v4685 = vmul.f32 %v4453, 0.01
        %v4686 = vmul.f32 %v4462, 0.01
        %v4687 = vmul.f32 %v4471, 0.01
        %v4688 = vmul.f32 %v4480, 0.01
        %v4689 = vmul.f32 %v4489, 0.01
        %v4690 = vmul.f32 %v4498, 0.01
        %v4691 = vmul.f32 %v4507, 0.01
        %v4692 = vmul.f32 %v4516, 0.01
        %v4693 = vmul.f32 %v4525, 0.01
        %v4694 = vmul.f32 %v4534, 0.01
        %v4695 = vmul.f32 %v4543, 0.01
        %v4696 = vmul.f32 %v4552, 0.01
        %v4697 = vmul.f32 %v4561, 0.01
        %v4698 = vmul.f32 %v4570, 0.01
        %v4699 = vmul.f32 %v4579, 0.01
        %v4700 = vmul.f32 %v4588, 0.01
        %v4701 = vmul.f32 %v4597, 0.01
        %v4702 = vmul.f32 %v4606, 0.01
        %v4703 = vmul.f32 %v4615, 0.01
        %v4704 = vmul.f32 %v4624, 0.01
        %v4705 = vmul.f32 %v4633, 0.01
        %v4706 = vmul.f32 %v4642, 0.01
        %v4707 = vsel %vm3875, %v3683, %v4643
        %v4708 = vsel %vm3876, %v3684, %v4644
        %v4709 = vsel %vm3877, %v3685, %v4645
        %v4710 = vsel %vm3878, %v3686, %v4646
        %v4711 = vsel %vm3879, %v3687, %v4647
        %v4712 = vsel %vm3880, %v3688, %v4648
        %v4713 = vsel %vm3881, %v3689, %v4649
        %v4714 = vsel %vm3882, %v3690, %v4650
        %v4715 = vsel %vm3883, %v3691, %v4651
        %v4716 = vsel %vm3884, %v3692, %v4652
        %v4717 = vsel %vm3885, %v3693, %v4653
        %v4718 = vsel %vm3886, %v3694, %v4654
        %v4719 = vsel %vm3887, %v3695, %v4655
        %v4720 = vsel %vm3888, %v3696, %v4656
        %v4721 = vsel %vm3889, %v3697, %v4657
        %v4722 = vsel %vm3890, %v3698, %v4658
        %v4723 = vsel %vm3891, %v3699, %v4659
        %v4724 = vsel %vm3892, %v3700, %v4660
        %v4725 = vsel %vm3893, %v3701, %v4661
        %v4726 = vsel %vm3894, %v3702, %v4662
        %v4727 = vsel %vm3895, %v3703, %v4663
        %v4728 = vsel %vm3896, %v3704, %v4664
        %v4729 = vsel %vm3897, %v3705, %v4665
        %v4730 = vsel %vm3898, %v3706, %v4666
        %v4731 = vsel %vm3899, %v3707, %v4667
        %v4732 = vsel %vm3900, %v3708, %v4668
        %v4733 = vsel %vm3901, %v3709, %v4669
        %v4734 = vsel %vm3902, %v3710, %v4670
        %v4735 = vsel %vm3903, %v3711, %v4671
        %v4736 = vsel %vm3904, %v3712, %v4672
        %v4737 = vsel %vm3905, %v3713, %v4673
        %v4738 = vsel %vm3906, %v3714, %v4674
        %v4739 = vsel %vm3907, %v3715, %v4675
        %v4740 = vsel %vm3908, %v3716, %v4676
        %v4741 = vsel %vm3909, %v3717, %v4677
        %v4742 = vsel %vm3910, %v3718, %v4678
        %v4743 = vsel %vm3911, %v3719, %v4679
        %v4744 = vsel %vm3912, %v3720, %v4680
        %v4745 = vsel %vm3913, %v3721, %v4681
        %v4746 = vsel %vm3914, %v3722, %v4682
        %v4747 = vsel %vm3915, %v3723, %v4683
        %v4748 = vsel %vm3916, %v3724, %v4684
        %v4749 = vsel %vm3917, %v3725, %v4685
        %v4750 = vsel %vm3918, %v3726, %v4686
        %v4751 = vsel %vm3919, %v3727, %v4687
        %v4752 = vsel %vm3920, %v3728, %v4688
        %v4753 = vsel %vm3921, %v3729, %v4689
        %v4754 = vsel %vm3922, %v3730, %v4690
        %v4755 = vsel %vm3923, %v3731, %v4691
        %v4756 = vsel %vm3924, %v3732, %v4692
        %v4757 = vsel %vm3925, %v3733, %v4693
        %v4758 = vsel %vm3926, %v3734, %v4694
        %v4759 = vsel %vm3927, %v3735, %v4695
        %v4760 = vsel %vm3928, %v3736, %v4696
        %v4761 = vsel %vm3929, %v3737, %v4697
        %v4762 = vsel %vm3930, %v3738, %v4698
        %v4763 = vsel %vm3931, %v3739, %v4699
        %v4764 = vsel %vm3932, %v3740, %v4700
        %v4765 = vsel %vm3933, %v3741, %v4701
        %v4766 = vsel %vm3934, %v3742, %v4702
        %v4767 = vsel %vm3935, %v3743, %v4703
        %v4768 = vsel %vm3936, %v3744, %v4704
        %v4769 = vsel %vm3937, %v3745, %v4705
        %v4770 = vsel %vm3938, %v3746, %v4706
        %v4771 = vld [vmem:[%s6] sm:$0xff]
        %v4772 = vld [vmem:[%s6 + $0x8] sm:$0xff]
        %v4773 = vld [vmem:[%s6 + $0x10] sm:$0xff]
        %v4774 = vld [vmem:[%s6 + $0x18] sm:$0xff]
        %v4775 = vld [vmem:[%s6 + $0x20] sm:$0xff]
        %v4776 = vld [vmem:[%s6 + $0x28] sm:$0xff]
        %v4777 = vld [vmem:[%s6 + $0x30] sm:$0xff]
        %v4778 = vld [vmem:[%s6 + $0x38] sm:$0xff]
        %v4779 = vld [vmem:[%s6 + $0x40] sm:$0xff]
        %v4780 = vld [vmem:[%s6 + $0x48] sm:$0xff]
        %v4781 = vld [vmem:[%s6 + $0x50] sm:$0xff]
        %v4782 = vld [vmem:[%s6 + $0x58] sm:$0xff]
        %v4783 = vld [vmem:[%s6 + $0x60] sm:$0xff]
        %v4784 = vld [vmem:[%s6 + $0x68] sm:$0xff]
        %v4785 = vld [vmem:[%s6 + $0x70] sm:$0xff]
        %v4786 = vld [vmem:[%s6 + $0x78] sm:$0xff]
        %v4787 = vld [vmem:[%s6 + $0x80] sm:$0xff]
        %v4788 = vld [vmem:[%s6 + $0x88] sm:$0xff]
        %v4789 = vld [vmem:[%s6 + $0x90] sm:$0xff]
        %v4790 = vld [vmem:[%s6 + $0x98] sm:$0xff]
        %v4791 = vld [vmem:[%s6 + $0xa0] sm:$0xff]
        %v4792 = vld [vmem:[%s6 + $0xa8] sm:$0xff]
        %v4793 = vld [vmem:[%s6 + $0xb0] sm:$0xff]
        %v4794 = vld [vmem:[%s6 + $0xb8] sm:$0xff]
        %v4795 = vld [vmem:[%s6 + $0xc0] sm:$0xff]
        %v4796 = vld [vmem:[%s6 + $0xc8] sm:$0xff]
        %v4797 = vld [vmem:[%s6 + $0xd0] sm:$0xff]
        %v4798 = vld [vmem:[%s6 + $0xd8] sm:$0xff]
        %v4799 = vld [vmem:[%s6 + $0xe0] sm:$0xff]
        %v4800 = vld [vmem:[%s6 + $0xe8] sm:$0xff]
        %v4801 = vld [vmem:[%s6 + $0xf0] sm:$0xff]
        %v4802 = vld [vmem:[%s6 + $0xf8] sm:$0xff]
        %v4803 = vpack.c.bf16 %v4709, %v4707
        %v4804 = vpack.c.bf16 %v4710, %v4708
        %v4805 = vpack.c.bf16 %v4713, %v4711
        %v4806 = vpack.c.bf16 %v4714, %v4712
        %v4807 = vpack.c.bf16 %v4717, %v4715
        %v4808 = vpack.c.bf16 %v4718, %v4716
        %v4809 = vpack.c.bf16 %v4721, %v4719
        %v4810 = vpack.c.bf16 %v4722, %v4720
        %v4811 = vpack.c.bf16 %v4725, %v4723
        %v4812 = vpack.c.bf16 %v4726, %v4724
        %v4813 = vpack.c.bf16 %v4729, %v4727
        %v4814 = vpack.c.bf16 %v4730, %v4728
        %v4815 = vpack.c.bf16 %v4733, %v4731
        %v4816 = vpack.c.bf16 %v4734, %v4732
        %v4817 = vpack.c.bf16 %v4737, %v4735
        %v4818 = vpack.c.bf16 %v4738, %v4736
        %v4819 = vpack.c.bf16 %v4741, %v4739
        %v4820 = vpack.c.bf16 %v4742, %v4740
        %v4821 = vpack.c.bf16 %v4745, %v4743
        %v4822 = vpack.c.bf16 %v4746, %v4744
        %v4823 = vpack.c.bf16 %v4749, %v4747
        %v4824 = vpack.c.bf16 %v4750, %v4748
        %v4825 = vpack.c.bf16 %v4753, %v4751
        %v4826 = vpack.c.bf16 %v4754, %v4752
        %v4827 = vpack.c.bf16 %v4757, %v4755
        %v4828 = vpack.c.bf16 %v4758, %v4756
        %v4829 = vpack.c.bf16 %v4761, %v4759
        %v4830 = vpack.c.bf16 %v4762, %v4760
        %v4831 = vpack.c.bf16 %v4765, %v4763
        %v4832 = vpack.c.bf16 %v4766, %v4764
        %v4833 = vpack.c.bf16 %v4769, %v4767
        %v4834 = vpack.c.bf16 %v4770, %v4768
        %v4835 = vld [vmem:[%s7] sm:$0xff]
        %v4836 = vld [vmem:[%s7 + $0x8] sm:$0xff]
        %v4837 = vld [vmem:[%s7 + $0x10] sm:$0xff]
        %v4838 = vld [vmem:[%s7 + $0x18] sm:$0xff]
        %v4839 = vld [vmem:[%s7 + $0x20] sm:$0xff]
        %v4840 = vld [vmem:[%s7 + $0x28] sm:$0xff]
        %v4841 = vld [vmem:[%s7 + $0x30] sm:$0xff]
        %v4842 = vld [vmem:[%s7 + $0x38] sm:$0xff]
        %v4843 = vld [vmem:[%s7 + $0x40] sm:$0xff]
        %v4844 = vld [vmem:[%s7 + $0x48] sm:$0xff]
        %v4845 = vld [vmem:[%s7 + $0x50] sm:$0xff]
        %v4846 = vld [vmem:[%s7 + $0x58] sm:$0xff]
        %v4847 = vld [vmem:[%s7 + $0x60] sm:$0xff]
        %v4848 = vld [vmem:[%s7 + $0x68] sm:$0xff]
        %v4849 = vld [vmem:[%s7 + $0x70] sm:$0xff]
        %v4850 = vld [vmem:[%s7 + $0x78] sm:$0xff]
        %v4851 = vld [vmem:[%s7 + $0x80] sm:$0xff]
        %v4852 = vld [vmem:[%s7 + $0x88] sm:$0xff]
        %v4853 = vld [vmem:[%s7 + $0x90] sm:$0xff]
        %v4854 = vld [vmem:[%s7 + $0x98] sm:$0xff]
        %v4855 = vld [vmem:[%s7 + $0xa0] sm:$0xff]
        %v4856 = vld [vmem:[%s7 + $0xa8] sm:$0xff]
        %v4857 = vld [vmem:[%s7 + $0xb0] sm:$0xff]
        %v4858 = vld [vmem:[%s7 + $0xb8] sm:$0xff]
        %v4859 = vld [vmem:[%s7 + $0xc0] sm:$0xff]
        %v4860 = vld [vmem:[%s7 + $0xc8] sm:$0xff]
        %v4861 = vld [vmem:[%s7 + $0xd0] sm:$0xff]
        %v4862 = vld [vmem:[%s7 + $0xd8] sm:$0xff]
        %v4863 = vld [vmem:[%s7 + $0xe0] sm:$0xff]
        %v4864 = vld [vmem:[%s7 + $0xe8] sm:$0xff]
        %v4865 = vld [vmem:[%s7 + $0xf0] sm:$0xff]
        %v4866 = vld [vmem:[%s7 + $0xf8] sm:$0xff]
        %4868 = vset.pattern.permute.xlu0 0
        %4869 = vperm.xlu0 %4868, %v4835
        %v4870 = vpop.permute.xlu0 %4869
        %4873 = vset.pattern.permute.xlu0 0
        %4874 = vperm.xlu0 %4873, %v4836
        %v4875 = vpop.permute.xlu0 %4874
        %4878 = vset.pattern.permute.xlu0 0
        %4879 = vperm.xlu0 %4878, %v4837
        %v4880 = vpop.permute.xlu0 %4879
        %4883 = vset.pattern.permute.xlu0 0
        %4884 = vperm.xlu0 %4883, %v4838
        %v4885 = vpop.permute.xlu0 %4884
        %4888 = vset.pattern.permute.xlu0 0
        %4889 = vperm.xlu0 %4888, %v4839
        %v4890 = vpop.permute.xlu0 %4889
        %4893 = vset.pattern.permute.xlu0 0
        %4894 = vperm.xlu0 %4893, %v4840
        %v4895 = vpop.permute.xlu0 %4894
        %4898 = vset.pattern.permute.xlu0 0
        %4899 = vperm.xlu0 %4898, %v4841
        %v4900 = vpop.permute.xlu0 %4899
        %4903 = vset.pattern.permute.xlu0 0
        %4904 = vperm.xlu0 %4903, %v4842
        %v4905 = vpop.permute.xlu0 %4904
        %4908 = vset.pattern.permute.xlu0 0
        %4909 = vperm.xlu0 %4908, %v4843
        %v4910 = vpop.permute.xlu0 %4909
        %4913 = vset.pattern.permute.xlu0 0
        %4914 = vperm.xlu0 %4913, %v4844
        %v4915 = vpop.permute.xlu0 %4914
        %4918 = vset.pattern.permute.xlu0 0
        %4919 = vperm.xlu0 %4918, %v4845
        %v4920 = vpop.permute.xlu0 %4919
        %4923 = vset.pattern.permute.xlu0 0
        %4924 = vperm.xlu0 %4923, %v4846
        %v4925 = vpop.permute.xlu0 %4924
        %4928 = vset.pattern.permute.xlu0 0
        %4929 = vperm.xlu0 %4928, %v4847
        %v4930 = vpop.permute.xlu0 %4929
        %4933 = vset.pattern.permute.xlu0 0
        %4934 = vperm.xlu0 %4933, %v4848
        %v4935 = vpop.permute.xlu0 %4934
        %4938 = vset.pattern.permute.xlu0 0
        %4939 = vperm.xlu0 %4938, %v4849
        %v4940 = vpop.permute.xlu0 %4939
        %4943 = vset.pattern.permute.xlu0 0
        %4944 = vperm.xlu0 %4943, %v4850
        %v4945 = vpop.permute.xlu0 %4944
        %4948 = vset.pattern.permute.xlu0 0
        %4949 = vperm.xlu0 %4948, %v4851
        %v4950 = vpop.permute.xlu0 %4949
        %4953 = vset.pattern.permute.xlu0 0
        %4954 = vperm.xlu0 %4953, %v4852
        %v4955 = vpop.permute.xlu0 %4954
        %4958 = vset.pattern.permute.xlu0 0
        %4959 = vperm.xlu0 %4958, %v4853
        %v4960 = vpop.permute.xlu0 %4959
        %4963 = vset.pattern.permute.xlu0 0
        %4964 = vperm.xlu0 %4963, %v4854
        %v4965 = vpop.permute.xlu0 %4964
        %4968 = vset.pattern.permute.xlu0 0
        %4969 = vperm.xlu0 %4968, %v4855
        %v4970 = vpop.permute.xlu0 %4969
        %4973 = vset.pattern.permute.xlu0 0
        %4974 = vperm.xlu0 %4973, %v4856
        %v4975 = vpop.permute.xlu0 %4974
        %4978 = vset.pattern.permute.xlu0 0
        %4979 = vperm.xlu0 %4978, %v4857
        %v4980 = vpop.permute.xlu0 %4979
        %4983 = vset.pattern.permute.xlu0 0
        %4984 = vperm.xlu0 %4983, %v4858
        %v4985 = vpop.permute.xlu0 %4984
        %4988 = vset.pattern.permute.xlu0 0
        %4989 = vperm.xlu0 %4988, %v4859
        %v4990 = vpop.permute.xlu0 %4989
        %4993 = vset.pattern.permute.xlu0 0
        %4994 = vperm.xlu0 %4993, %v4860
        %v4995 = vpop.permute.xlu0 %4994
        %4998 = vset.pattern.permute.xlu0 0
        %4999 = vperm.xlu0 %4998, %v4861
        %v5000 = vpop.permute.xlu0 %4999
        %5003 = vset.pattern.permute.xlu0 0
        %5004 = vperm.xlu0 %5003, %v4862
        %v5005 = vpop.permute.xlu0 %5004
        %5008 = vset.pattern.permute.xlu0 0
        %5009 = vperm.xlu0 %5008, %v4863
        %v5010 = vpop.permute.xlu0 %5009
        %5013 = vset.pattern.permute.xlu0 0
        %5014 = vperm.xlu0 %5013, %v4864
        %v5015 = vpop.permute.xlu0 %5014
        %5018 = vset.pattern.permute.xlu0 0
        %5019 = vperm.xlu0 %5018, %v4865
        %v5020 = vpop.permute.xlu0 %5019
        %5023 = vset.pattern.permute.xlu0 0
        %5024 = vperm.xlu0 %5023, %v4866
        %v5025 = vpop.permute.xlu0 %5024
        %v5059 = vunpack.c.l.b16 %v4771
        %v5060 = vunpack.c.h.b16 %v4771
        %v5061 = vunpack.c.l.b16 %v4772
        %v5062 = vunpack.c.h.b16 %v4772
        %v5063 = vunpack.c.l.b16 %v4773
        %v5064 = vunpack.c.h.b16 %v4773
        %v5065 = vunpack.c.l.b16 %v4774
        %v5066 = vunpack.c.h.b16 %v4774
        %v5067 = vunpack.c.l.b16 %v4775
        %v5068 = vunpack.c.h.b16 %v4775
        %v5069 = vunpack.c.l.b16 %v4776
        %v5070 = vunpack.c.h.b16 %v4776
        %v5071 = vunpack.c.l.b16 %v4777
        %v5072 = vunpack.c.h.b16 %v4777
        %v5073 = vunpack.c.l.b16 %v4778
        %v5074 = vunpack.c.h.b16 %v4778
        %v5075 = vunpack.c.l.b16 %v4779
        %v5076 = vunpack.c.h.b16 %v4779
        %v5077 = vunpack.c.l.b16 %v4780
        %v5078 = vunpack.c.h.b16 %v4780
        %v5079 = vunpack.c.l.b16 %v4781
        %v5080 = vunpack.c.h.b16 %v4781
        %v5081 = vunpack.c.l.b16 %v4782
        %v5082 = vunpack.c.h.b16 %v4782
        %v5083 = vunpack.c.l.b16 %v4783
        %v5084 = vunpack.c.h.b16 %v4783
        %v5085 = vunpack.c.l.b16 %v4784
        %v5086 = vunpack.c.h.b16 %v4784
        %v5087 = vunpack.c.l.b16 %v4785
        %v5088 = vunpack.c.h.b16 %v4785
        %v5089 = vunpack.c.l.b16 %v4786
        %v5090 = vunpack.c.h.b16 %v4786
        %v5091 = vunpack.c.l.b16 %v4787
        %v5092 = vunpack.c.h.b16 %v4787
        %v5093 = vunpack.c.l.b16 %v4788
        %v5094 = vunpack.c.h.b16 %v4788
        %v5095 = vunpack.c.l.b16 %v4789
        %v5096 = vunpack.c.h.b16 %v4789
        %v5097 = vunpack.c.l.b16 %v4790
        %v5098 = vunpack.c.h.b16 %v4790
        %v5099 = vunpack.c.l.b16 %v4791
        %v5100 = vunpack.c.h.b16 %v4791
        %v5101 = vunpack.c.l.b16 %v4792
        %v5102 = vunpack.c.h.b16 %v4792
        %v5103 = vunpack.c.l.b16 %v4793
        %v5104 = vunpack.c.h.b16 %v4793
        %v5105 = vunpack.c.l.b16 %v4794
        %v5106 = vunpack.c.h.b16 %v4794
        %v5107 = vunpack.c.l.b16 %v4795
        %v5108 = vunpack.c.h.b16 %v4795
        %v5109 = vunpack.c.l.b16 %v4796
        %v5110 = vunpack.c.h.b16 %v4796
        %v5111 = vunpack.c.l.b16 %v4797
        %v5112 = vunpack.c.h.b16 %v4797
        %v5113 = vunpack.c.l.b16 %v4798
        %v5114 = vunpack.c.h.b16 %v4798
        %v5115 = vunpack.c.l.b16 %v4799
        %v5116 = vunpack.c.h.b16 %v4799
        %v5117 = vunpack.c.l.b16 %v4800
        %v5118 = vunpack.c.h.b16 %v4800
        %v5119 = vunpack.c.l.b16 %v4801
        %v5120 = vunpack.c.h.b16 %v4801
        %v5121 = vunpack.c.l.b16 %v4802
        %v5122 = vunpack.c.h.b16 %v4802
        %v5123 = vpack.c.b16 %v5061, %v5059
        %v5124 = vpack.c.b16 %v5062, %v5060
        %v5125 = vpack.c.b16 %v5065, %v5063
        %v5126 = vpack.c.b16 %v5066, %v5064
        %v5127 = vpack.c.b16 %v5069, %v5067
        %v5128 = vpack.c.b16 %v5070, %v5068
        %v5129 = vpack.c.b16 %v5073, %v5071
        %v5130 = vpack.c.b16 %v5074, %v5072
        %v5131 = vpack.c.b16 %v5077, %v5075
        %v5132 = vpack.c.b16 %v5078, %v5076
        %v5133 = vpack.c.b16 %v5081, %v5079
        %v5134 = vpack.c.b16 %v5082, %v5080
        %v5135 = vpack.c.b16 %v5085, %v5083
        %v5136 = vpack.c.b16 %v5086, %v5084
        %v5137 = vpack.c.b16 %v5089, %v5087
        %v5138 = vpack.c.b16 %v5090, %v5088
        %v5139 = vpack.c.b16 %v5093, %v5091
        %v5140 = vpack.c.b16 %v5094, %v5092
        %v5141 = vpack.c.b16 %v5097, %v5095
        %v5142 = vpack.c.b16 %v5098, %v5096
        %v5143 = vpack.c.b16 %v5101, %v5099
        %v5144 = vpack.c.b16 %v5102, %v5100
        %v5145 = vpack.c.b16 %v5105, %v5103
        %v5146 = vpack.c.b16 %v5106, %v5104
        %v5147 = vpack.c.b16 %v5109, %v5107
        %v5148 = vpack.c.b16 %v5110, %v5108
        %v5149 = vpack.c.b16 %v5113, %v5111
        %v5150 = vpack.c.b16 %v5114, %v5112
        %v5151 = vpack.c.b16 %v5117, %v5115
        %v5152 = vpack.c.b16 %v5118, %v5116
        %v5153 = vpack.c.b16 %v5121, %v5119
        %v5154 = vpack.c.b16 %v5122, %v5120
        %5187 = vmatprep.subr.bf16.mxu0 %v4818
        %5188 = vmatpush1.bf16.msra.mxu0 %v4817
        %5189 = vmatprep.subr.bf16.mxu0 %v4816
        %5190 = vmatpush1.bf16.msra.mxu0 %v4815
        %5191 = vmatprep.subr.bf16.mxu0 %v4814
        %5192 = vmatpush1.bf16.msra.mxu0 %v4813
        %5193 = vmatprep.subr.bf16.mxu0 %v4812
        %5194 = vmatpush1.bf16.msra.mxu0 %v4811
        %5195 = vmatprep.subr.bf16.mxu0 %v4810
        %5196 = vmatpush1.bf16.msra.mxu0 %v4809
        %5197 = vmatprep.subr.bf16.mxu0 %v4808
        %5198 = vmatpush1.bf16.msra.mxu0 %v4807
        %5199 = vmatprep.subr.bf16.mxu0 %v4806
        %5200 = vmatpush1.bf16.msra.mxu0 %v4805
        %5201 = vmatprep.subr.bf16.mxu0 %v4804
        %5202 = vmatpush1.bf16.msra.mxu0 %v4803
        %5203 = vmatprep.subr.bf16.mxu0 %v4834
        %5204 = vmatpush2.bf16.msra.mxu0 %v4833
        %5205 = vmatprep.subr.bf16.mxu0 %v4832
        %5206 = vmatpush2.bf16.msra.mxu0 %v4831
        %5207 = vmatprep.subr.bf16.mxu0 %v4830
        %5208 = vmatpush2.bf16.msra.mxu0 %v4829
        %5209 = vmatprep.subr.bf16.mxu0 %v4828
        %5210 = vmatpush2.bf16.msra.mxu0 %v4827
        %5211 = vmatprep.subr.bf16.mxu0 %v4826
        %5212 = vmatpush2.bf16.msra.mxu0 %v4825
        %5213 = vmatprep.subr.bf16.mxu0 %v4824
        %5214 = vmatpush2.bf16.msra.mxu0 %v4823
        %5215 = vmatprep.subr.bf16.mxu0 %v4822
        %5216 = vmatpush2.bf16.msra.mxu0 %v4821
        %5217 = vmatprep.subr.bf16.mxu0 %v4820
        %5218 = vmatpush2.bf16.msra.mxu0 %v4819
        %5219 = vmatprep.mubr.bf16.mxu0 %v5124
        %5220 = vmatmul.mubr.bf16.gmra.mxu0 %v5123
        %v5221 = vpop.f32.mrf.mxu0
        %v5222 = vadd.f32 %v4870, %v5221
        %v5223 = vpop.f32.mrf.mxu0
        %v5224 = vadd.f32 %v4870, %v5223
        %v5225 = vpop.f32.mrf.mxu0
        %v5226 = vadd.f32 %v4875, %v5225
        %v5227 = vpop.f32.mrf.mxu0
        %v5228 = vadd.f32 %v4875, %v5227
        %5229 = vmatprep.mubr.bf16.mxu0 %v5126
        %5230 = vmatmul.mubr.bf16.gmra.mxu0 %v5125
        %v5231 = vpop.f32.mrf.mxu0
        %v5232 = vadd.f32 %v4880, %v5231
        %v5233 = vpop.f32.mrf.mxu0
        %v5234 = vadd.f32 %v4880, %v5233
        %v5235 = vpop.f32.mrf.mxu0
        %v5236 = vadd.f32 %v4885, %v5235
        %v5237 = vpop.f32.mrf.mxu0
        %v5238 = vadd.f32 %v4885, %v5237
        %5239 = vmatprep.mubr.bf16.mxu0 %v5128
        %5240 = vmatmul.mubr.bf16.gmra.mxu0 %v5127
        %v5241 = vpop.f32.mrf.mxu0
        %v5242 = vadd.f32 %v4890, %v5241
        %v5243 = vpop.f32.mrf.mxu0
        %v5244 = vadd.f32 %v4890, %v5243
        %v5245 = vpop.f32.mrf.mxu0
        %v5246 = vadd.f32 %v4895, %v5245
        %v5247 = vpop.f32.mrf.mxu0
        %v5248 = vadd.f32 %v4895, %v5247
        %5249 = vmatprep.mubr.bf16.mxu0 %v5130
        %5250 = vmatmul.mubr.bf16.gmra.mxu0 %v5129
        %v5251 = vpop.f32.mrf.mxu0
        %v5252 = vadd.f32 %v4900, %v5251
        %v5253 = vpop.f32.mrf.mxu0
        %v5254 = vadd.f32 %v4900, %v5253
        %v5255 = vpop.f32.mrf.mxu0
        %v5256 = vadd.f32 %v4905, %v5255
        %v5257 = vpop.f32.mrf.mxu0
        %v5258 = vadd.f32 %v4905, %v5257
        %5259 = vmatprep.mubr.bf16.mxu0 %v5132
        %5260 = vmatmul.mubr.bf16.gmra.mxu0 %v5131
        %v5261 = vpop.f32.mrf.mxu0
        %v5262 = vadd.f32 %v4910, %v5261
        %v5263 = vpop.f32.mrf.mxu0
        %v5264 = vadd.f32 %v4910, %v5263
        %v5265 = vpop.f32.mrf.mxu0
        %v5266 = vadd.f32 %v4915, %v5265
        %v5267 = vpop.f32.mrf.mxu0
        %v5268 = vadd.f32 %v4915, %v5267
        %5269 = vmatprep.mubr.bf16.mxu0 %v5134
        %5270 = vmatmul.mubr.bf16.gmra.mxu0 %v5133
        %v5271 = vpop.f32.mrf.mxu0
        %v5272 = vadd.f32 %v4920, %v5271
        %v5273 = vpop.f32.mrf.mxu0
        %v5274 = vadd.f32 %v4920, %v5273
        %v5275 = vpop.f32.mrf.mxu0
        %v5276 = vadd.f32 %v4925, %v5275
        %v5277 = vpop.f32.mrf.mxu0
        %v5278 = vadd.f32 %v4925, %v5277
        %5279 = vmatprep.mubr.bf16.mxu0 %v5136
        %5280 = vmatmul.mubr.bf16.gmra.mxu0 %v5135
        %v5281 = vpop.f32.mrf.mxu0
        %v5282 = vadd.f32 %v4930, %v5281
        %v5283 = vpop.f32.mrf.mxu0
        %v5284 = vadd.f32 %v4930, %v5283
        %v5285 = vpop.f32.mrf.mxu0
        %v5286 = vadd.f32 %v4935, %v5285
        %v5287 = vpop.f32.mrf.mxu0
        %v5288 = vadd.f32 %v4935, %v5287
        %5289 = vmatprep.mubr.bf16.mxu0 %v5138
        %5290 = vmatmul.mubr.bf16.gmra.mxu0 %v5137
        %v5291 = vpop.f32.mrf.mxu0
        %v5292 = vadd.f32 %v4940, %v5291
        %v5293 = vpop.f32.mrf.mxu0
        %v5294 = vadd.f32 %v4940, %v5293
        %v5295 = vpop.f32.mrf.mxu0
        %v5296 = vadd.f32 %v4945, %v5295
        %v5297 = vpop.f32.mrf.mxu0
        %v5298 = vadd.f32 %v4945, %v5297
        %5299 = vmatprep.mubr.bf16.mxu0 %v5140
        %5300 = vmatmul.mubr.bf16.gmra.mxu0 %v5139
        %v5301 = vpop.f32.mrf.mxu0
        %v5302 = vadd.f32 %v4950, %v5301
        %v5303 = vpop.f32.mrf.mxu0
        %v5304 = vadd.f32 %v4950, %v5303
        %v5305 = vpop.f32.mrf.mxu0
        %v5306 = vadd.f32 %v4955, %v5305
        %v5307 = vpop.f32.mrf.mxu0
        %v5308 = vadd.f32 %v4955, %v5307
        %5309 = vmatprep.mubr.bf16.mxu0 %v5142
        %5310 = vmatmul.mubr.bf16.gmra.mxu0 %v5141
        %v5311 = vpop.f32.mrf.mxu0
        %v5312 = vadd.f32 %v4960, %v5311
        %v5313 = vpop.f32.mrf.mxu0
        %v5314 = vadd.f32 %v4960, %v5313
        %v5315 = vpop.f32.mrf.mxu0
        %v5316 = vadd.f32 %v4965, %v5315
        %v5317 = vpop.f32.mrf.mxu0
        %v5318 = vadd.f32 %v4965, %v5317
        %5319 = vmatprep.mubr.bf16.mxu0 %v5144
        %5320 = vmatmul.mubr.bf16.gmra.mxu0 %v5143
        %v5321 = vpop.f32.mrf.mxu0
        %v5322 = vadd.f32 %v4970, %v5321
        %v5323 = vpop.f32.mrf.mxu0
        %v5324 = vadd.f32 %v4970, %v5323
        %v5325 = vpop.f32.mrf.mxu0
        %v5326 = vadd.f32 %v4975, %v5325
        %v5327 = vpop.f32.mrf.mxu0
        %v5328 = vadd.f32 %v4975, %v5327
        %5329 = vmatprep.mubr.bf16.mxu0 %v5146
        %5330 = vmatmul.mubr.bf16.gmra.mxu0 %v5145
        %v5331 = vpop.f32.mrf.mxu0
        %v5332 = vadd.f32 %v4980, %v5331
        %v5333 = vpop.f32.mrf.mxu0
        %v5334 = vadd.f32 %v4980, %v5333
        %v5335 = vpop.f32.mrf.mxu0
        %v5336 = vadd.f32 %v4985, %v5335
        %v5337 = vpop.f32.mrf.mxu0
        %v5338 = vadd.f32 %v4985, %v5337
        %5339 = vmatprep.mubr.bf16.mxu0 %v5148
        %5340 = vmatmul.mubr.bf16.gmra.mxu0 %v5147
        %v5341 = vpop.f32.mrf.mxu0
        %v5342 = vadd.f32 %v4990, %v5341
        %v5343 = vpop.f32.mrf.mxu0
        %v5344 = vadd.f32 %v4990, %v5343
        %v5345 = vpop.f32.mrf.mxu0
        %v5346 = vadd.f32 %v4995, %v5345
        %v5347 = vpop.f32.mrf.mxu0
        %v5348 = vadd.f32 %v4995, %v5347
        %5349 = vmatprep.mubr.bf16.mxu0 %v5150
        %5350 = vmatmul.mubr.bf16.gmra.mxu0 %v5149
        %v5351 = vpop.f32.mrf.mxu0
        %v5352 = vadd.f32 %v5000, %v5351
        %v5353 = vpop.f32.mrf.mxu0
        %v5354 = vadd.f32 %v5000, %v5353
        %v5355 = vpop.f32.mrf.mxu0
        %v5356 = vadd.f32 %v5005, %v5355
        %v5357 = vpop.f32.mrf.mxu0
        %v5358 = vadd.f32 %v5005, %v5357
        %5359 = vmatprep.mubr.bf16.mxu0 %v5152
        %5360 = vmatmul.mubr.bf16.gmra.mxu0 %v5151
        %v5361 = vpop.f32.mrf.mxu0
        %v5362 = vadd.f32 %v5010, %v5361
        %v5363 = vpop.f32.mrf.mxu0
        %v5364 = vadd.f32 %v5010, %v5363
        %v5365 = vpop.f32.mrf.mxu0
        %v5366 = vadd.f32 %v5015, %v5365
        %v5367 = vpop.f32.mrf.mxu0
        %v5368 = vadd.f32 %v5015, %v5367
        %5369 = vmatprep.mubr.bf16.mxu0 %v5154
        %5370 = vmatmul.mubr.bf16.gmra.mxu0 %v5153
        %v5371 = vpop.f32.mrf.mxu0
        %v5372 = vadd.f32 %v5020, %v5371
        %v5373 = vpop.f32.mrf.mxu0
        %v5374 = vadd.f32 %v5020, %v5373
        %v5375 = vpop.f32.mrf.mxu0
        %v5376 = vadd.f32 %v5025, %v5375
        %v5377 = vpop.f32.mrf.mxu0
        %v5378 = vadd.f32 %v5025, %v5377
        %5379 = vdwg.mxu0
        %v5380 = vmul.f32 %v5222, 100.0
        %v5381 = vmul.f32 %v5224, 100.0
        %v5382 = vmul.f32 %v5226, 100.0
        %v5383 = vmul.f32 %v5228, 100.0
        %v5384 = vmul.f32 %v5232, 100.0
        %v5385 = vmul.f32 %v5234, 100.0
        %v5386 = vmul.f32 %v5236, 100.0
        %v5387 = vmul.f32 %v5238, 100.0
        %v5388 = vmul.f32 %v5242, 100.0
        %v5389 = vmul.f32 %v5244, 100.0
        %v5390 = vmul.f32 %v5246, 100.0
        %v5391 = vmul.f32 %v5248, 100.0
        %v5392 = vmul.f32 %v5252, 100.0
        %v5393 = vmul.f32 %v5254, 100.0
        %v5394 = vmul.f32 %v5256, 100.0
        %v5395 = vmul.f32 %v5258, 100.0
        %v5396 = vmul.f32 %v5262, 100.0
        %v5397 = vmul.f32 %v5264, 100.0
        %v5398 = vmul.f32 %v5266, 100.0
        %v5399 = vmul.f32 %v5268, 100.0
        %v5400 = vmul.f32 %v5272, 100.0
        %v5401 = vmul.f32 %v5274, 100.0
        %v5402 = vmul.f32 %v5276, 100.0
        %v5403 = vmul.f32 %v5278, 100.0
        %v5404 = vmul.f32 %v5282, 100.0
        %v5405 = vmul.f32 %v5284, 100.0
        %v5406 = vmul.f32 %v5286, 100.0
        %v5407 = vmul.f32 %v5288, 100.0
        %v5408 = vmul.f32 %v5292, 100.0
        %v5409 = vmul.f32 %v5294, 100.0
        %v5410 = vmul.f32 %v5296, 100.0
        %v5411 = vmul.f32 %v5298, 100.0
        %v5412 = vmul.f32 %v5302, 100.0
        %v5413 = vmul.f32 %v5304, 100.0
        %v5414 = vmul.f32 %v5306, 100.0
        %v5415 = vmul.f32 %v5308, 100.0
        %v5416 = vmul.f32 %v5312, 100.0
        %v5417 = vmul.f32 %v5314, 100.0
        %v5418 = vmul.f32 %v5316, 100.0
        %v5419 = vmul.f32 %v5318, 100.0
        %v5420 = vmul.f32 %v5322, 100.0
        %v5421 = vmul.f32 %v5324, 100.0
        %v5422 = vmul.f32 %v5326, 100.0
        %v5423 = vmul.f32 %v5328, 100.0
        %v5424 = vmul.f32 %v5332, 100.0
        %v5425 = vmul.f32 %v5334, 100.0
        %v5426 = vmul.f32 %v5336, 100.0
        %v5427 = vmul.f32 %v5338, 100.0
        %v5428 = vmul.f32 %v5342, 100.0
        %v5429 = vmul.f32 %v5344, 100.0
        %v5430 = vmul.f32 %v5346, 100.0
        %v5431 = vmul.f32 %v5348, 100.0
        %v5432 = vmul.f32 %v5352, 100.0
        %v5433 = vmul.f32 %v5354, 100.0
        %v5434 = vmul.f32 %v5356, 100.0
        %v5435 = vmul.f32 %v5358, 100.0
        %v5436 = vmul.f32 %v5362, 100.0
        %v5437 = vmul.f32 %v5364, 100.0
        %v5438 = vmul.f32 %v5366, 100.0
        %v5439 = vmul.f32 %v5368, 100.0
        %v5440 = vmul.f32 %v5372, 100.0
        %v5441 = vmul.f32 %v5374, 100.0
        %v5442 = vmul.f32 %v5376, 100.0
        %v5443 = vmul.f32 %v5378, 100.0
        %v5444 = vmin.f32 %v5380, 20.0
        %v5445 = vmin.f32 %v5381, 20.0
        %v5446 = vmin.f32 %v5382, 20.0
        %v5447 = vmin.f32 %v5383, 20.0
        %v5448 = vmin.f32 %v5384, 20.0
        %v5449 = vmin.f32 %v5385, 20.0
        %v5450 = vmin.f32 %v5386, 20.0
        %v5451 = vmin.f32 %v5387, 20.0
        %v5452 = vmin.f32 %v5388, 20.0
        %v5453 = vmin.f32 %v5389, 20.0
        %v5454 = vmin.f32 %v5390, 20.0
        %v5455 = vmin.f32 %v5391, 20.0
        %v5456 = vmin.f32 %v5392, 20.0
        %v5457 = vmin.f32 %v5393, 20.0
        %v5458 = vmin.f32 %v5394, 20.0
        %v5459 = vmin.f32 %v5395, 20.0
        %v5460 = vmin.f32 %v5396, 20.0
        %v5461 = vmin.f32 %v5397, 20.0
        %v5462 = vmin.f32 %v5398, 20.0
        %v5463 = vmin.f32 %v5399, 20.0
        %v5464 = vmin.f32 %v5400, 20.0
        %v5465 = vmin.f32 %v5401, 20.0
        %v5466 = vmin.f32 %v5402, 20.0
        %v5467 = vmin.f32 %v5403, 20.0
        %v5468 = vmin.f32 %v5404, 20.0
        %v5469 = vmin.f32 %v5405, 20.0
        %v5470 = vmin.f32 %v5406, 20.0
        %v5471 = vmin.f32 %v5407, 20.0
        %v5472 = vmin.f32 %v5408, 20.0
        %v5473 = vmin.f32 %v5409, 20.0
        %v5474 = vmin.f32 %v5410, 20.0
        %v5475 = vmin.f32 %v5411, 20.0
        %v5476 = vmin.f32 %v5412, 20.0
        %v5477 = vmin.f32 %v5413, 20.0
        %v5478 = vmin.f32 %v5414, 20.0
        %v5479 = vmin.f32 %v5415, 20.0
        %v5480 = vmin.f32 %v5416, 20.0
        %v5481 = vmin.f32 %v5417, 20.0
        %v5482 = vmin.f32 %v5418, 20.0
        %v5483 = vmin.f32 %v5419, 20.0
        %v5484 = vmin.f32 %v5420, 20.0
        %v5485 = vmin.f32 %v5421, 20.0
        %v5486 = vmin.f32 %v5422, 20.0
        %v5487 = vmin.f32 %v5423, 20.0
        %v5488 = vmin.f32 %v5424, 20.0
        %v5489 = vmin.f32 %v5425, 20.0
        %v5490 = vmin.f32 %v5426, 20.0
        %v5491 = vmin.f32 %v5427, 20.0
        %v5492 = vmin.f32 %v5428, 20.0
        %v5493 = vmin.f32 %v5429, 20.0
        %v5494 = vmin.f32 %v5430, 20.0
        %v5495 = vmin.f32 %v5431, 20.0
        %v5496 = vmin.f32 %v5432, 20.0
        %v5497 = vmin.f32 %v5433, 20.0
        %v5498 = vmin.f32 %v5434, 20.0
        %v5499 = vmin.f32 %v5435, 20.0
        %v5500 = vmin.f32 %v5436, 20.0
        %v5501 = vmin.f32 %v5437, 20.0
        %v5502 = vmin.f32 %v5438, 20.0
        %v5503 = vmin.f32 %v5439, 20.0
        %v5504 = vmin.f32 %v5440, 20.0
        %v5505 = vmin.f32 %v5441, 20.0
        %v5506 = vmin.f32 %v5442, 20.0
        %v5507 = vmin.f32 %v5443, 20.0
        %vm5508 = vcmp.gt.f32.partialorder %v5380, 20.0
        %vm5509 = vcmp.gt.f32.partialorder %v5381, 20.0
        %vm5510 = vcmp.gt.f32.partialorder %v5382, 20.0
        %vm5511 = vcmp.gt.f32.partialorder %v5383, 20.0
        %vm5512 = vcmp.gt.f32.partialorder %v5384, 20.0
        %vm5513 = vcmp.gt.f32.partialorder %v5385, 20.0
        %vm5514 = vcmp.gt.f32.partialorder %v5386, 20.0
        %vm5515 = vcmp.gt.f32.partialorder %v5387, 20.0
        %vm5516 = vcmp.gt.f32.partialorder %v5388, 20.0
        %vm5517 = vcmp.gt.f32.partialorder %v5389, 20.0
        %vm5518 = vcmp.gt.f32.partialorder %v5390, 20.0
        %vm5519 = vcmp.gt.f32.partialorder %v5391, 20.0
        %vm5520 = vcmp.gt.f32.partialorder %v5392, 20.0
        %vm5521 = vcmp.gt.f32.partialorder %v5393, 20.0
        %vm5522 = vcmp.gt.f32.partialorder %v5394, 20.0
        %vm5523 = vcmp.gt.f32.partialorder %v5395, 20.0
        %vm5524 = vcmp.gt.f32.partialorder %v5396, 20.0
        %vm5525 = vcmp.gt.f32.partialorder %v5397, 20.0
        %vm5526 = vcmp.gt.f32.partialorder %v5398, 20.0
        %vm5527 = vcmp.gt.f32.partialorder %v5399, 20.0
        %vm5528 = vcmp.gt.f32.partialorder %v5400, 20.0
        %vm5529 = vcmp.gt.f32.partialorder %v5401, 20.0
        %vm5530 = vcmp.gt.f32.partialorder %v5402, 20.0
        %vm5531 = vcmp.gt.f32.partialorder %v5403, 20.0
        %vm5532 = vcmp.gt.f32.partialorder %v5404, 20.0
        %vm5533 = vcmp.gt.f32.partialorder %v5405, 20.0
        %vm5534 = vcmp.gt.f32.partialorder %v5406, 20.0
        %vm5535 = vcmp.gt.f32.partialorder %v5407, 20.0
        %vm5536 = vcmp.gt.f32.partialorder %v5408, 20.0
        %vm5537 = vcmp.gt.f32.partialorder %v5409, 20.0
        %vm5538 = vcmp.gt.f32.partialorder %v5410, 20.0
        %vm5539 = vcmp.gt.f32.partialorder %v5411, 20.0
        %vm5540 = vcmp.gt.f32.partialorder %v5412, 20.0
        %vm5541 = vcmp.gt.f32.partialorder %v5413, 20.0
        %vm5542 = vcmp.gt.f32.partialorder %v5414, 20.0
        %vm5543 = vcmp.gt.f32.partialorder %v5415, 20.0
        %vm5544 = vcmp.gt.f32.partialorder %v5416, 20.0
        %vm5545 = vcmp.gt.f32.partialorder %v5417, 20.0
        %vm5546 = vcmp.gt.f32.partialorder %v5418, 20.0
        %vm5547 = vcmp.gt.f32.partialorder %v5419, 20.0
        %vm5548 = vcmp.gt.f32.partialorder %v5420, 20.0
        %vm5549 = vcmp.gt.f32.partialorder %v5421, 20.0
        %vm5550 = vcmp.gt.f32.partialorder %v5422, 20.0
        %vm5551 = vcmp.gt.f32.partialorder %v5423, 20.0
        %vm5552 = vcmp.gt.f32.partialorder %v5424, 20.0
        %vm5553 = vcmp.gt.f32.partialorder %v5425, 20.0
        %vm5554 = vcmp.gt.f32.partialorder %v5426, 20.0
        %vm5555 = vcmp.gt.f32.partialorder %v5427, 20.0
        %vm5556 = vcmp.gt.f32.partialorder %v5428, 20.0
        %vm5557 = vcmp.gt.f32.partialorder %v5429, 20.0
        %vm5558 = vcmp.gt.f32.partialorder %v5430, 20.0
        %vm5559 = vcmp.gt.f32.partialorder %v5431, 20.0
        %vm5560 = vcmp.gt.f32.partialorder %v5432, 20.0
        %vm5561 = vcmp.gt.f32.partialorder %v5433, 20.0
        %vm5562 = vcmp.gt.f32.partialorder %v5434, 20.0
        %vm5563 = vcmp.gt.f32.partialorder %v5435, 20.0
        %vm5564 = vcmp.gt.f32.partialorder %v5436, 20.0
        %vm5565 = vcmp.gt.f32.partialorder %v5437, 20.0
        %vm5566 = vcmp.gt.f32.partialorder %v5438, 20.0
        %vm5567 = vcmp.gt.f32.partialorder %v5439, 20.0
        %vm5568 = vcmp.gt.f32.partialorder %v5440, 20.0
        %vm5569 = vcmp.gt.f32.partialorder %v5441, 20.0
        %vm5570 = vcmp.gt.f32.partialorder %v5442, 20.0
        %vm5571 = vcmp.gt.f32.partialorder %v5443, 20.0
        %v5572 = vmul.f32 %v5444, 1.442695
        %v5573 = vpow.pop %v5572
        %v5574 = vmul.f32 %v5445, 1.442695
        %v5575 = vpow.pop %v5574
        %v5576 = vmul.f32 %v5446, 1.442695
        %v5577 = vpow.pop %v5576
        %v5578 = vmul.f32 %v5447, 1.442695
        %v5579 = vpow.pop %v5578
        %v5580 = vmul.f32 %v5448, 1.442695
        %v5581 = vpow.pop %v5580
        %v5582 = vmul.f32 %v5449, 1.442695
        %v5583 = vpow.pop %v5582
        %v5584 = vmul.f32 %v5450, 1.442695
        %v5585 = vpow.pop %v5584
        %v5586 = vmul.f32 %v5451, 1.442695
        %v5587 = vpow.pop %v5586
        %v5588 = vmul.f32 %v5452, 1.442695
        %v5589 = vpow.pop %v5588
        %v5590 = vmul.f32 %v5453, 1.442695
        %v5591 = vpow.pop %v5590
        %v5592 = vmul.f32 %v5454, 1.442695
        %v5593 = vpow.pop %v5592
        %v5594 = vmul.f32 %v5455, 1.442695
        %v5595 = vpow.pop %v5594
        %v5596 = vmul.f32 %v5456, 1.442695
        %v5597 = vpow.pop %v5596
        %v5598 = vmul.f32 %v5457, 1.442695
        %v5599 = vpow.pop %v5598
        %v5600 = vmul.f32 %v5458, 1.442695
        %v5601 = vpow.pop %v5600
        %v5602 = vmul.f32 %v5459, 1.442695
        %v5603 = vpow.pop %v5602
        %v5604 = vmul.f32 %v5460, 1.442695
        %v5605 = vpow.pop %v5604
        %v5606 = vmul.f32 %v5461, 1.442695
        %v5607 = vpow.pop %v5606
        %v5608 = vmul.f32 %v5462, 1.442695
        %v5609 = vpow.pop %v5608
        %v5610 = vmul.f32 %v5463, 1.442695
        %v5611 = vpow.pop %v5610
        %v5612 = vmul.f32 %v5464, 1.442695
        %v5613 = vpow.pop %v5612
        %v5614 = vmul.f32 %v5465, 1.442695
        %v5615 = vpow.pop %v5614
        %v5616 = vmul.f32 %v5466, 1.442695
        %v5617 = vpow.pop %v5616
        %v5618 = vmul.f32 %v5467, 1.442695
        %v5619 = vpow.pop %v5618
        %v5620 = vmul.f32 %v5468, 1.442695
        %v5621 = vpow.pop %v5620
        %v5622 = vmul.f32 %v5469, 1.442695
        %v5623 = vpow.pop %v5622
        %v5624 = vmul.f32 %v5470, 1.442695
        %v5625 = vpow.pop %v5624
        %v5626 = vmul.f32 %v5471, 1.442695
        %v5627 = vpow.pop %v5626
        %v5628 = vmul.f32 %v5472, 1.442695
        %v5629 = vpow.pop %v5628
        %v5630 = vmul.f32 %v5473, 1.442695
        %v5631 = vpow.pop %v5630
        %v5632 = vmul.f32 %v5474, 1.442695
        %v5633 = vpow.pop %v5632
        %v5634 = vmul.f32 %v5475, 1.442695
        %v5635 = vpow.pop %v5634
        %v5636 = vmul.f32 %v5476, 1.442695
        %v5637 = vpow.pop %v5636
        %v5638 = vmul.f32 %v5477, 1.442695
        %v5639 = vpow.pop %v5638
        %v5640 = vmul.f32 %v5478, 1.442695
        %v5641 = vpow.pop %v5640
        %v5642 = vmul.f32 %v5479, 1.442695
        %v5643 = vpow.pop %v5642
        %v5644 = vmul.f32 %v5480, 1.442695
        %v5645 = vpow.pop %v5644
        %v5646 = vmul.f32 %v5481, 1.442695
        %v5647 = vpow.pop %v5646
        %v5648 = vmul.f32 %v5482, 1.442695
        %v5649 = vpow.pop %v5648
        %v5650 = vmul.f32 %v5483, 1.442695
        %v5651 = vpow.pop %v5650
        %v5652 = vmul.f32 %v5484, 1.442695
        %v5653 = vpow.pop %v5652
        %v5654 = vmul.f32 %v5485, 1.442695
        %v5655 = vpow.pop %v5654
        %v5656 = vmul.f32 %v5486, 1.442695
        %v5657 = vpow.pop %v5656
        %v5658 = vmul.f32 %v5487, 1.442695
        %v5659 = vpow.pop %v5658
        %v5660 = vmul.f32 %v5488, 1.442695
        %v5661 = vpow.pop %v5660
        %v5662 = vmul.f32 %v5489, 1.442695
        %v5663 = vpow.pop %v5662
        %v5664 = vmul.f32 %v5490, 1.442695
        %v5665 = vpow.pop %v5664
        %v5666 = vmul.f32 %v5491, 1.442695
        %v5667 = vpow.pop %v5666
        %v5668 = vmul.f32 %v5492, 1.442695
        %v5669 = vpow.pop %v5668
        %v5670 = vmul.f32 %v5493, 1.442695
        %v5671 = vpow.pop %v5670
        %v5672 = vmul.f32 %v5494, 1.442695
        %v5673 = vpow.pop %v5672
        %v5674 = vmul.f32 %v5495, 1.442695
        %v5675 = vpow.pop %v5674
        %v5676 = vmul.f32 %v5496, 1.442695
        %v5677 = vpow.pop %v5676
        %v5678 = vmul.f32 %v5497, 1.442695
        %v5679 = vpow.pop %v5678
        %v5680 = vmul.f32 %v5498, 1.442695
        %v5681 = vpow.pop %v5680
        %v5682 = vmul.f32 %v5499, 1.442695
        %v5683 = vpow.pop %v5682
        %v5684 = vmul.f32 %v5500, 1.442695
        %v5685 = vpow.pop %v5684
        %v5686 = vmul.f32 %v5501, 1.442695
        %v5687 = vpow.pop %v5686
        %v5688 = vmul.f32 %v5502, 1.442695
        %v5689 = vpow.pop %v5688
        %v5690 = vmul.f32 %v5503, 1.442695
        %v5691 = vpow.pop %v5690
        %v5692 = vmul.f32 %v5504, 1.442695
        %v5693 = vpow.pop %v5692
        %v5694 = vmul.f32 %v5505, 1.442695
        %v5695 = vpow.pop %v5694
        %v5696 = vmul.f32 %v5506, 1.442695
        %v5697 = vpow.pop %v5696
        %v5698 = vmul.f32 %v5507, 1.442695
        %v5699 = vpow.pop %v5698
        %v5700 = vadd.f32 %v5573, 1.0
        %v5701 = vlog2.pop %v5700
        %v5702 = vmul.f32 %v5701, 0.6931472
        %v5703 = vmul.f32 -0.5, %v5573
        %v5704 = vadd.f32 %v5703, 1.0
        %v5705 = vmul.f32 %v5704, %v5573
        %v5706 = vand.u32 2147483647, %v5573
        %vm5707 = vcmp.lt.f32.partialorder %v5706, 0.0004427343
        %v5708 = vsel %vm5707, %v5705, %v5702
        %v5709 = vadd.f32 %v5575, 1.0
        %v5710 = vlog2.pop %v5709
        %v5711 = vmul.f32 %v5710, 0.6931472
        %v5712 = vmul.f32 -0.5, %v5575
        %v5713 = vadd.f32 %v5712, 1.0
        %v5714 = vmul.f32 %v5713, %v5575
        %v5715 = vand.u32 2147483647, %v5575
        %vm5716 = vcmp.lt.f32.partialorder %v5715, 0.0004427343
        %v5717 = vsel %vm5716, %v5714, %v5711
        %v5718 = vadd.f32 %v5577, 1.0
        %v5719 = vlog2.pop %v5718
        %v5720 = vmul.f32 %v5719, 0.6931472
        %v5721 = vmul.f32 -0.5, %v5577
        %v5722 = vadd.f32 %v5721, 1.0
        %v5723 = vmul.f32 %v5722, %v5577
        %v5724 = vand.u32 2147483647, %v5577
        %vm5725 = vcmp.lt.f32.partialorder %v5724, 0.0004427343
        %v5726 = vsel %vm5725, %v5723, %v5720
        %v5727 = vadd.f32 %v5579, 1.0
        %v5728 = vlog2.pop %v5727
        %v5729 = vmul.f32 %v5728, 0.6931472
        %v5730 = vmul.f32 -0.5, %v5579
        %v5731 = vadd.f32 %v5730, 1.0
        %v5732 = vmul.f32 %v5731, %v5579
        %v5733 = vand.u32 2147483647, %v5579
        %vm5734 = vcmp.lt.f32.partialorder %v5733, 0.0004427343
        %v5735 = vsel %vm5734, %v5732, %v5729
        %v5736 = vadd.f32 %v5581, 1.0
        %v5737 = vlog2.pop %v5736
        %v5738 = vmul.f32 %v5737, 0.6931472
        %v5739 = vmul.f32 -0.5, %v5581
        %v5740 = vadd.f32 %v5739, 1.0
        %v5741 = vmul.f32 %v5740, %v5581
        %v5742 = vand.u32 2147483647, %v5581
        %vm5743 = vcmp.lt.f32.partialorder %v5742, 0.0004427343
        %v5744 = vsel %vm5743, %v5741, %v5738
        %v5745 = vadd.f32 %v5583, 1.0
        %v5746 = vlog2.pop %v5745
        %v5747 = vmul.f32 %v5746, 0.6931472
        %v5748 = vmul.f32 -0.5, %v5583
        %v5749 = vadd.f32 %v5748, 1.0
        %v5750 = vmul.f32 %v5749, %v5583
        %v5751 = vand.u32 2147483647, %v5583
        %vm5752 = vcmp.lt.f32.partialorder %v5751, 0.0004427343
        %v5753 = vsel %vm5752, %v5750, %v5747
        %v5754 = vadd.f32 %v5585, 1.0
        %v5755 = vlog2.pop %v5754
        %v5756 = vmul.f32 %v5755, 0.6931472
        %v5757 = vmul.f32 -0.5, %v5585
        %v5758 = vadd.f32 %v5757, 1.0
        %v5759 = vmul.f32 %v5758, %v5585
        %v5760 = vand.u32 2147483647, %v5585
        %vm5761 = vcmp.lt.f32.partialorder %v5760, 0.0004427343
        %v5762 = vsel %vm5761, %v5759, %v5756
        %v5763 = vadd.f32 %v5587, 1.0
        %v5764 = vlog2.pop %v5763
        %v5765 = vmul.f32 %v5764, 0.6931472
        %v5766 = vmul.f32 -0.5, %v5587
        %v5767 = vadd.f32 %v5766, 1.0
        %v5768 = vmul.f32 %v5767, %v5587
        %v5769 = vand.u32 2147483647, %v5587
        %vm5770 = vcmp.lt.f32.partialorder %v5769, 0.0004427343
        %v5771 = vsel %vm5770, %v5768, %v5765
        %v5772 = vadd.f32 %v5589, 1.0
        %v5773 = vlog2.pop %v5772
        %v5774 = vmul.f32 %v5773, 0.6931472
        %v5775 = vmul.f32 -0.5, %v5589
        %v5776 = vadd.f32 %v5775, 1.0
        %v5777 = vmul.f32 %v5776, %v5589
        %v5778 = vand.u32 2147483647, %v5589
        %vm5779 = vcmp.lt.f32.partialorder %v5778, 0.0004427343
        %v5780 = vsel %vm5779, %v5777, %v5774
        %v5781 = vadd.f32 %v5591, 1.0
        %v5782 = vlog2.pop %v5781
        %v5783 = vmul.f32 %v5782, 0.6931472
        %v5784 = vmul.f32 -0.5, %v5591
        %v5785 = vadd.f32 %v5784, 1.0
        %v5786 = vmul.f32 %v5785, %v5591
        %v5787 = vand.u32 2147483647, %v5591
        %vm5788 = vcmp.lt.f32.partialorder %v5787, 0.0004427343
        %v5789 = vsel %vm5788, %v5786, %v5783
        %v5790 = vadd.f32 %v5593, 1.0
        %v5791 = vlog2.pop %v5790
        %v5792 = vmul.f32 %v5791, 0.6931472
        %v5793 = vmul.f32 -0.5, %v5593
        %v5794 = vadd.f32 %v5793, 1.0
        %v5795 = vmul.f32 %v5794, %v5593
        %v5796 = vand.u32 2147483647, %v5593
        %vm5797 = vcmp.lt.f32.partialorder %v5796, 0.0004427343
        %v5798 = vsel %vm5797, %v5795, %v5792
        %v5799 = vadd.f32 %v5595, 1.0
        %v5800 = vlog2.pop %v5799
        %v5801 = vmul.f32 %v5800, 0.6931472
        %v5802 = vmul.f32 -0.5, %v5595
        %v5803 = vadd.f32 %v5802, 1.0
        %v5804 = vmul.f32 %v5803, %v5595
        %v5805 = vand.u32 2147483647, %v5595
        %vm5806 = vcmp.lt.f32.partialorder %v5805, 0.0004427343
        %v5807 = vsel %vm5806, %v5804, %v5801
        %v5808 = vadd.f32 %v5597, 1.0
        %v5809 = vlog2.pop %v5808
        %v5810 = vmul.f32 %v5809, 0.6931472
        %v5811 = vmul.f32 -0.5, %v5597
        %v5812 = vadd.f32 %v5811, 1.0
        %v5813 = vmul.f32 %v5812, %v5597
        %v5814 = vand.u32 2147483647, %v5597
        %vm5815 = vcmp.lt.f32.partialorder %v5814, 0.0004427343
        %v5816 = vsel %vm5815, %v5813, %v5810
        %v5817 = vadd.f32 %v5599, 1.0
        %v5818 = vlog2.pop %v5817
        %v5819 = vmul.f32 %v5818, 0.6931472
        %v5820 = vmul.f32 -0.5, %v5599
        %v5821 = vadd.f32 %v5820, 1.0
        %v5822 = vmul.f32 %v5821, %v5599
        %v5823 = vand.u32 2147483647, %v5599
        %vm5824 = vcmp.lt.f32.partialorder %v5823, 0.0004427343
        %v5825 = vsel %vm5824, %v5822, %v5819
        %v5826 = vadd.f32 %v5601, 1.0
        %v5827 = vlog2.pop %v5826
        %v5828 = vmul.f32 %v5827, 0.6931472
        %v5829 = vmul.f32 -0.5, %v5601
        %v5830 = vadd.f32 %v5829, 1.0
        %v5831 = vmul.f32 %v5830, %v5601
        %v5832 = vand.u32 2147483647, %v5601
        %vm5833 = vcmp.lt.f32.partialorder %v5832, 0.0004427343
        %v5834 = vsel %vm5833, %v5831, %v5828
        %v5835 = vadd.f32 %v5603, 1.0
        %v5836 = vlog2.pop %v5835
        %v5837 = vmul.f32 %v5836, 0.6931472
        %v5838 = vmul.f32 -0.5, %v5603
        %v5839 = vadd.f32 %v5838, 1.0
        %v5840 = vmul.f32 %v5839, %v5603
        %v5841 = vand.u32 2147483647, %v5603
        %vm5842 = vcmp.lt.f32.partialorder %v5841, 0.0004427343
        %v5843 = vsel %vm5842, %v5840, %v5837
        %v5844 = vadd.f32 %v5605, 1.0
        %v5845 = vlog2.pop %v5844
        %v5846 = vmul.f32 %v5845, 0.6931472
        %v5847 = vmul.f32 -0.5, %v5605
        %v5848 = vadd.f32 %v5847, 1.0
        %v5849 = vmul.f32 %v5848, %v5605
        %v5850 = vand.u32 2147483647, %v5605
        %vm5851 = vcmp.lt.f32.partialorder %v5850, 0.0004427343
        %v5852 = vsel %vm5851, %v5849, %v5846
        %v5853 = vadd.f32 %v5607, 1.0
        %v5854 = vlog2.pop %v5853
        %v5855 = vmul.f32 %v5854, 0.6931472
        %v5856 = vmul.f32 -0.5, %v5607
        %v5857 = vadd.f32 %v5856, 1.0
        %v5858 = vmul.f32 %v5857, %v5607
        %v5859 = vand.u32 2147483647, %v5607
        %vm5860 = vcmp.lt.f32.partialorder %v5859, 0.0004427343
        %v5861 = vsel %vm5860, %v5858, %v5855
        %v5862 = vadd.f32 %v5609, 1.0
        %v5863 = vlog2.pop %v5862
        %v5864 = vmul.f32 %v5863, 0.6931472
        %v5865 = vmul.f32 -0.5, %v5609
        %v5866 = vadd.f32 %v5865, 1.0
        %v5867 = vmul.f32 %v5866, %v5609
        %v5868 = vand.u32 2147483647, %v5609
        %vm5869 = vcmp.lt.f32.partialorder %v5868, 0.0004427343
        %v5870 = vsel %vm5869, %v5867, %v5864
        %v5871 = vadd.f32 %v5611, 1.0
        %v5872 = vlog2.pop %v5871
        %v5873 = vmul.f32 %v5872, 0.6931472
        %v5874 = vmul.f32 -0.5, %v5611
        %v5875 = vadd.f32 %v5874, 1.0
        %v5876 = vmul.f32 %v5875, %v5611
        %v5877 = vand.u32 2147483647, %v5611
        %vm5878 = vcmp.lt.f32.partialorder %v5877, 0.0004427343
        %v5879 = vsel %vm5878, %v5876, %v5873
        %v5880 = vadd.f32 %v5613, 1.0
        %v5881 = vlog2.pop %v5880
        %v5882 = vmul.f32 %v5881, 0.6931472
        %v5883 = vmul.f32 -0.5, %v5613
        %v5884 = vadd.f32 %v5883, 1.0
        %v5885 = vmul.f32 %v5884, %v5613
        %v5886 = vand.u32 2147483647, %v5613
        %vm5887 = vcmp.lt.f32.partialorder %v5886, 0.0004427343
        %v5888 = vsel %vm5887, %v5885, %v5882
        %v5889 = vadd.f32 %v5615, 1.0
        %v5890 = vlog2.pop %v5889
        %v5891 = vmul.f32 %v5890, 0.6931472
        %v5892 = vmul.f32 -0.5, %v5615
        %v5893 = vadd.f32 %v5892, 1.0
        %v5894 = vmul.f32 %v5893, %v5615
        %v5895 = vand.u32 2147483647, %v5615
        %vm5896 = vcmp.lt.f32.partialorder %v5895, 0.0004427343
        %v5897 = vsel %vm5896, %v5894, %v5891
        %v5898 = vadd.f32 %v5617, 1.0
        %v5899 = vlog2.pop %v5898
        %v5900 = vmul.f32 %v5899, 0.6931472
        %v5901 = vmul.f32 -0.5, %v5617
        %v5902 = vadd.f32 %v5901, 1.0
        %v5903 = vmul.f32 %v5902, %v5617
        %v5904 = vand.u32 2147483647, %v5617
        %vm5905 = vcmp.lt.f32.partialorder %v5904, 0.0004427343
        %v5906 = vsel %vm5905, %v5903, %v5900
        %v5907 = vadd.f32 %v5619, 1.0
        %v5908 = vlog2.pop %v5907
        %v5909 = vmul.f32 %v5908, 0.6931472
        %v5910 = vmul.f32 -0.5, %v5619
        %v5911 = vadd.f32 %v5910, 1.0
        %v5912 = vmul.f32 %v5911, %v5619
        %v5913 = vand.u32 2147483647, %v5619
        %vm5914 = vcmp.lt.f32.partialorder %v5913, 0.0004427343
        %v5915 = vsel %vm5914, %v5912, %v5909
        %v5916 = vadd.f32 %v5621, 1.0
        %v5917 = vlog2.pop %v5916
        %v5918 = vmul.f32 %v5917, 0.6931472
        %v5919 = vmul.f32 -0.5, %v5621
        %v5920 = vadd.f32 %v5919, 1.0
        %v5921 = vmul.f32 %v5920, %v5621
        %v5922 = vand.u32 2147483647, %v5621
        %vm5923 = vcmp.lt.f32.partialorder %v5922, 0.0004427343
        %v5924 = vsel %vm5923, %v5921, %v5918
        %v5925 = vadd.f32 %v5623, 1.0
        %v5926 = vlog2.pop %v5925
        %v5927 = vmul.f32 %v5926, 0.6931472
        %v5928 = vmul.f32 -0.5, %v5623
        %v5929 = vadd.f32 %v5928, 1.0
        %v5930 = vmul.f32 %v5929, %v5623
        %v5931 = vand.u32 2147483647, %v5623
        %vm5932 = vcmp.lt.f32.partialorder %v5931, 0.0004427343
        %v5933 = vsel %vm5932, %v5930, %v5927
        %v5934 = vadd.f32 %v5625, 1.0
        %v5935 = vlog2.pop %v5934
        %v5936 = vmul.f32 %v5935, 0.6931472
        %v5937 = vmul.f32 -0.5, %v5625
        %v5938 = vadd.f32 %v5937, 1.0
        %v5939 = vmul.f32 %v5938, %v5625
        %v5940 = vand.u32 2147483647, %v5625
        %vm5941 = vcmp.lt.f32.partialorder %v5940, 0.0004427343
        %v5942 = vsel %vm5941, %v5939, %v5936
        %v5943 = vadd.f32 %v5627, 1.0
        %v5944 = vlog2.pop %v5943
        %v5945 = vmul.f32 %v5944, 0.6931472
        %v5946 = vmul.f32 -0.5, %v5627
        %v5947 = vadd.f32 %v5946, 1.0
        %v5948 = vmul.f32 %v5947, %v5627
        %v5949 = vand.u32 2147483647, %v5627
        %vm5950 = vcmp.lt.f32.partialorder %v5949, 0.0004427343
        %v5951 = vsel %vm5950, %v5948, %v5945
        %v5952 = vadd.f32 %v5629, 1.0
        %v5953 = vlog2.pop %v5952
        %v5954 = vmul.f32 %v5953, 0.6931472
        %v5955 = vmul.f32 -0.5, %v5629
        %v5956 = vadd.f32 %v5955, 1.0
        %v5957 = vmul.f32 %v5956, %v5629
        %v5958 = vand.u32 2147483647, %v5629
        %vm5959 = vcmp.lt.f32.partialorder %v5958, 0.0004427343
        %v5960 = vsel %vm5959, %v5957, %v5954
        %v5961 = vadd.f32 %v5631, 1.0
        %v5962 = vlog2.pop %v5961
        %v5963 = vmul.f32 %v5962, 0.6931472
        %v5964 = vmul.f32 -0.5, %v5631
        %v5965 = vadd.f32 %v5964, 1.0
        %v5966 = vmul.f32 %v5965, %v5631
        %v5967 = vand.u32 2147483647, %v5631
        %vm5968 = vcmp.lt.f32.partialorder %v5967, 0.0004427343
        %v5969 = vsel %vm5968, %v5966, %v5963
        %v5970 = vadd.f32 %v5633, 1.0
        %v5971 = vlog2.pop %v5970
        %v5972 = vmul.f32 %v5971, 0.6931472
        %v5973 = vmul.f32 -0.5, %v5633
        %v5974 = vadd.f32 %v5973, 1.0
        %v5975 = vmul.f32 %v5974, %v5633
        %v5976 = vand.u32 2147483647, %v5633
        %vm5977 = vcmp.lt.f32.partialorder %v5976, 0.0004427343
        %v5978 = vsel %vm5977, %v5975, %v5972
        %v5979 = vadd.f32 %v5635, 1.0
        %v5980 = vlog2.pop %v5979
        %v5981 = vmul.f32 %v5980, 0.6931472
        %v5982 = vmul.f32 -0.5, %v5635
        %v5983 = vadd.f32 %v5982, 1.0
        %v5984 = vmul.f32 %v5983, %v5635
        %v5985 = vand.u32 2147483647, %v5635
        %vm5986 = vcmp.lt.f32.partialorder %v5985, 0.0004427343
        %v5987 = vsel %vm5986, %v5984, %v5981
        %v5988 = vadd.f32 %v5637, 1.0
        %v5989 = vlog2.pop %v5988
        %v5990 = vmul.f32 %v5989, 0.6931472
        %v5991 = vmul.f32 -0.5, %v5637
        %v5992 = vadd.f32 %v5991, 1.0
        %v5993 = vmul.f32 %v5992, %v5637
        %v5994 = vand.u32 2147483647, %v5637
        %vm5995 = vcmp.lt.f32.partialorder %v5994, 0.0004427343
        %v5996 = vsel %vm5995, %v5993, %v5990
        %v5997 = vadd.f32 %v5639, 1.0
        %v5998 = vlog2.pop %v5997
        %v5999 = vmul.f32 %v5998, 0.6931472
        %v6000 = vmul.f32 -0.5, %v5639
        %v6001 = vadd.f32 %v6000, 1.0
        %v6002 = vmul.f32 %v6001, %v5639
        %v6003 = vand.u32 2147483647, %v5639
        %vm6004 = vcmp.lt.f32.partialorder %v6003, 0.0004427343
        %v6005 = vsel %vm6004, %v6002, %v5999
        %v6006 = vadd.f32 %v5641, 1.0
        %v6007 = vlog2.pop %v6006
        %v6008 = vmul.f32 %v6007, 0.6931472
        %v6009 = vmul.f32 -0.5, %v5641
        %v6010 = vadd.f32 %v6009, 1.0
        %v6011 = vmul.f32 %v6010, %v5641
        %v6012 = vand.u32 2147483647, %v5641
        %vm6013 = vcmp.lt.f32.partialorder %v6012, 0.0004427343
        %v6014 = vsel %vm6013, %v6011, %v6008
        %v6015 = vadd.f32 %v5643, 1.0
        %v6016 = vlog2.pop %v6015
        %v6017 = vmul.f32 %v6016, 0.6931472
        %v6018 = vmul.f32 -0.5, %v5643
        %v6019 = vadd.f32 %v6018, 1.0
        %v6020 = vmul.f32 %v6019, %v5643
        %v6021 = vand.u32 2147483647, %v5643
        %vm6022 = vcmp.lt.f32.partialorder %v6021, 0.0004427343
        %v6023 = vsel %vm6022, %v6020, %v6017
        %v6024 = vadd.f32 %v5645, 1.0
        %v6025 = vlog2.pop %v6024
        %v6026 = vmul.f32 %v6025, 0.6931472
        %v6027 = vmul.f32 -0.5, %v5645
        %v6028 = vadd.f32 %v6027, 1.0
        %v6029 = vmul.f32 %v6028, %v5645
        %v6030 = vand.u32 2147483647, %v5645
        %vm6031 = vcmp.lt.f32.partialorder %v6030, 0.0004427343
        %v6032 = vsel %vm6031, %v6029, %v6026
        %v6033 = vadd.f32 %v5647, 1.0
        %v6034 = vlog2.pop %v6033
        %v6035 = vmul.f32 %v6034, 0.6931472
        %v6036 = vmul.f32 -0.5, %v5647
        %v6037 = vadd.f32 %v6036, 1.0
        %v6038 = vmul.f32 %v6037, %v5647
        %v6039 = vand.u32 2147483647, %v5647
        %vm6040 = vcmp.lt.f32.partialorder %v6039, 0.0004427343
        %v6041 = vsel %vm6040, %v6038, %v6035
        %v6042 = vadd.f32 %v5649, 1.0
        %v6043 = vlog2.pop %v6042
        %v6044 = vmul.f32 %v6043, 0.6931472
        %v6045 = vmul.f32 -0.5, %v5649
        %v6046 = vadd.f32 %v6045, 1.0
        %v6047 = vmul.f32 %v6046, %v5649
        %v6048 = vand.u32 2147483647, %v5649
        %vm6049 = vcmp.lt.f32.partialorder %v6048, 0.0004427343
        %v6050 = vsel %vm6049, %v6047, %v6044
        %v6051 = vadd.f32 %v5651, 1.0
        %v6052 = vlog2.pop %v6051
        %v6053 = vmul.f32 %v6052, 0.6931472
        %v6054 = vmul.f32 -0.5, %v5651
        %v6055 = vadd.f32 %v6054, 1.0
        %v6056 = vmul.f32 %v6055, %v5651
        %v6057 = vand.u32 2147483647, %v5651
        %vm6058 = vcmp.lt.f32.partialorder %v6057, 0.0004427343
        %v6059 = vsel %vm6058, %v6056, %v6053
        %v6060 = vadd.f32 %v5653, 1.0
        %v6061 = vlog2.pop %v6060
        %v6062 = vmul.f32 %v6061, 0.6931472
        %v6063 = vmul.f32 -0.5, %v5653
        %v6064 = vadd.f32 %v6063, 1.0
        %v6065 = vmul.f32 %v6064, %v5653
        %v6066 = vand.u32 2147483647, %v5653
        %vm6067 = vcmp.lt.f32.partialorder %v6066, 0.0004427343
        %v6068 = vsel %vm6067, %v6065, %v6062
        %v6069 = vadd.f32 %v5655, 1.0
        %v6070 = vlog2.pop %v6069
        %v6071 = vmul.f32 %v6070, 0.6931472
        %v6072 = vmul.f32 -0.5, %v5655
        %v6073 = vadd.f32 %v6072, 1.0
        %v6074 = vmul.f32 %v6073, %v5655
        %v6075 = vand.u32 2147483647, %v5655
        %vm6076 = vcmp.lt.f32.partialorder %v6075, 0.0004427343
        %v6077 = vsel %vm6076, %v6074, %v6071
        %v6078 = vadd.f32 %v5657, 1.0
        %v6079 = vlog2.pop %v6078
        %v6080 = vmul.f32 %v6079, 0.6931472
        %v6081 = vmul.f32 -0.5, %v5657
        %v6082 = vadd.f32 %v6081, 1.0
        %v6083 = vmul.f32 %v6082, %v5657
        %v6084 = vand.u32 2147483647, %v5657
        %vm6085 = vcmp.lt.f32.partialorder %v6084, 0.0004427343
        %v6086 = vsel %vm6085, %v6083, %v6080
        %v6087 = vadd.f32 %v5659, 1.0
        %v6088 = vlog2.pop %v6087
        %v6089 = vmul.f32 %v6088, 0.6931472
        %v6090 = vmul.f32 -0.5, %v5659
        %v6091 = vadd.f32 %v6090, 1.0
        %v6092 = vmul.f32 %v6091, %v5659
        %v6093 = vand.u32 2147483647, %v5659
        %vm6094 = vcmp.lt.f32.partialorder %v6093, 0.0004427343
        %v6095 = vsel %vm6094, %v6092, %v6089
        %v6096 = vadd.f32 %v5661, 1.0
        %v6097 = vlog2.pop %v6096
        %v6098 = vmul.f32 %v6097, 0.6931472
        %v6099 = vmul.f32 -0.5, %v5661
        %v6100 = vadd.f32 %v6099, 1.0
        %v6101 = vmul.f32 %v6100, %v5661
        %v6102 = vand.u32 2147483647, %v5661
        %vm6103 = vcmp.lt.f32.partialorder %v6102, 0.0004427343
        %v6104 = vsel %vm6103, %v6101, %v6098
        %v6105 = vadd.f32 %v5663, 1.0
        %v6106 = vlog2.pop %v6105
        %v6107 = vmul.f32 %v6106, 0.6931472
        %v6108 = vmul.f32 -0.5, %v5663
        %v6109 = vadd.f32 %v6108, 1.0
        %v6110 = vmul.f32 %v6109, %v5663
        %v6111 = vand.u32 2147483647, %v5663
        %vm6112 = vcmp.lt.f32.partialorder %v6111, 0.0004427343
        %v6113 = vsel %vm6112, %v6110, %v6107
        %v6114 = vadd.f32 %v5665, 1.0
        %v6115 = vlog2.pop %v6114
        %v6116 = vmul.f32 %v6115, 0.6931472
        %v6117 = vmul.f32 -0.5, %v5665
        %v6118 = vadd.f32 %v6117, 1.0
        %v6119 = vmul.f32 %v6118, %v5665
        %v6120 = vand.u32 2147483647, %v5665
        %vm6121 = vcmp.lt.f32.partialorder %v6120, 0.0004427343
        %v6122 = vsel %vm6121, %v6119, %v6116
        %v6123 = vadd.f32 %v5667, 1.0
        %v6124 = vlog2.pop %v6123
        %v6125 = vmul.f32 %v6124, 0.6931472
        %v6126 = vmul.f32 -0.5, %v5667
        %v6127 = vadd.f32 %v6126, 1.0
        %v6128 = vmul.f32 %v6127, %v5667
        %v6129 = vand.u32 2147483647, %v5667
        %vm6130 = vcmp.lt.f32.partialorder %v6129, 0.0004427343
        %v6131 = vsel %vm6130, %v6128, %v6125
        %v6132 = vadd.f32 %v5669, 1.0
        %v6133 = vlog2.pop %v6132
        %v6134 = vmul.f32 %v6133, 0.6931472
        %v6135 = vmul.f32 -0.5, %v5669
        %v6136 = vadd.f32 %v6135, 1.0
        %v6137 = vmul.f32 %v6136, %v5669
        %v6138 = vand.u32 2147483647, %v5669
        %vm6139 = vcmp.lt.f32.partialorder %v6138, 0.0004427343
        %v6140 = vsel %vm6139, %v6137, %v6134
        %v6141 = vadd.f32 %v5671, 1.0
        %v6142 = vlog2.pop %v6141
        %v6143 = vmul.f32 %v6142, 0.6931472
        %v6144 = vmul.f32 -0.5, %v5671
        %v6145 = vadd.f32 %v6144, 1.0
        %v6146 = vmul.f32 %v6145, %v5671
        %v6147 = vand.u32 2147483647, %v5671
        %vm6148 = vcmp.lt.f32.partialorder %v6147, 0.0004427343
        %v6149 = vsel %vm6148, %v6146, %v6143
        %v6150 = vadd.f32 %v5673, 1.0
        %v6151 = vlog2.pop %v6150
        %v6152 = vmul.f32 %v6151, 0.6931472
        %v6153 = vmul.f32 -0.5, %v5673
        %v6154 = vadd.f32 %v6153, 1.0
        %v6155 = vmul.f32 %v6154, %v5673
        %v6156 = vand.u32 2147483647, %v5673
        %vm6157 = vcmp.lt.f32.partialorder %v6156, 0.0004427343
        %v6158 = vsel %vm6157, %v6155, %v6152
        %v6159 = vadd.f32 %v5675, 1.0
        %v6160 = vlog2.pop %v6159
        %v6161 = vmul.f32 %v6160, 0.6931472
        %v6162 = vmul.f32 -0.5, %v5675
        %v6163 = vadd.f32 %v6162, 1.0
        %v6164 = vmul.f32 %v6163, %v5675
        %v6165 = vand.u32 2147483647, %v5675
        %vm6166 = vcmp.lt.f32.partialorder %v6165, 0.0004427343
        %v6167 = vsel %vm6166, %v6164, %v6161
        %v6168 = vadd.f32 %v5677, 1.0
        %v6169 = vlog2.pop %v6168
        %v6170 = vmul.f32 %v6169, 0.6931472
        %v6171 = vmul.f32 -0.5, %v5677
        %v6172 = vadd.f32 %v6171, 1.0
        %v6173 = vmul.f32 %v6172, %v5677
        %v6174 = vand.u32 2147483647, %v5677
        %vm6175 = vcmp.lt.f32.partialorder %v6174, 0.0004427343
        %v6176 = vsel %vm6175, %v6173, %v6170
        %v6177 = vadd.f32 %v5679, 1.0
        %v6178 = vlog2.pop %v6177
        %v6179 = vmul.f32 %v6178, 0.6931472
        %v6180 = vmul.f32 -0.5, %v5679
        %v6181 = vadd.f32 %v6180, 1.0
        %v6182 = vmul.f32 %v6181, %v5679
        %v6183 = vand.u32 2147483647, %v5679
        %vm6184 = vcmp.lt.f32.partialorder %v6183, 0.0004427343
        %v6185 = vsel %vm6184, %v6182, %v6179
        %v6186 = vadd.f32 %v5681, 1.0
        %v6187 = vlog2.pop %v6186
        %v6188 = vmul.f32 %v6187, 0.6931472
        %v6189 = vmul.f32 -0.5, %v5681
        %v6190 = vadd.f32 %v6189, 1.0
        %v6191 = vmul.f32 %v6190, %v5681
        %v6192 = vand.u32 2147483647, %v5681
        %vm6193 = vcmp.lt.f32.partialorder %v6192, 0.0004427343
        %v6194 = vsel %vm6193, %v6191, %v6188
        %v6195 = vadd.f32 %v5683, 1.0
        %v6196 = vlog2.pop %v6195
        %v6197 = vmul.f32 %v6196, 0.6931472
        %v6198 = vmul.f32 -0.5, %v5683
        %v6199 = vadd.f32 %v6198, 1.0
        %v6200 = vmul.f32 %v6199, %v5683
        %v6201 = vand.u32 2147483647, %v5683
        %vm6202 = vcmp.lt.f32.partialorder %v6201, 0.0004427343
        %v6203 = vsel %vm6202, %v6200, %v6197
        %v6204 = vadd.f32 %v5685, 1.0
        %v6205 = vlog2.pop %v6204
        %v6206 = vmul.f32 %v6205, 0.6931472
        %v6207 = vmul.f32 -0.5, %v5685
        %v6208 = vadd.f32 %v6207, 1.0
        %v6209 = vmul.f32 %v6208, %v5685
        %v6210 = vand.u32 2147483647, %v5685
        %vm6211 = vcmp.lt.f32.partialorder %v6210, 0.0004427343
        %v6212 = vsel %vm6211, %v6209, %v6206
        %v6213 = vadd.f32 %v5687, 1.0
        %v6214 = vlog2.pop %v6213
        %v6215 = vmul.f32 %v6214, 0.6931472
        %v6216 = vmul.f32 -0.5, %v5687
        %v6217 = vadd.f32 %v6216, 1.0
        %v6218 = vmul.f32 %v6217, %v5687
        %v6219 = vand.u32 2147483647, %v5687
        %vm6220 = vcmp.lt.f32.partialorder %v6219, 0.0004427343
        %v6221 = vsel %vm6220, %v6218, %v6215
        %v6222 = vadd.f32 %v5689, 1.0
        %v6223 = vlog2.pop %v6222
        %v6224 = vmul.f32 %v6223, 0.6931472
        %v6225 = vmul.f32 -0.5, %v5689
        %v6226 = vadd.f32 %v6225, 1.0
        %v6227 = vmul.f32 %v6226, %v5689
        %v6228 = vand.u32 2147483647, %v5689
        %vm6229 = vcmp.lt.f32.partialorder %v6228, 0.0004427343
        %v6230 = vsel %vm6229, %v6227, %v6224
        %v6231 = vadd.f32 %v5691, 1.0
        %v6232 = vlog2.pop %v6231
        %v6233 = vmul.f32 %v6232, 0.6931472
        %v6234 = vmul.f32 -0.5, %v5691
        %v6235 = vadd.f32 %v6234, 1.0
        %v6236 = vmul.f32 %v6235, %v5691
        %v6237 = vand.u32 2147483647, %v5691
        %vm6238 = vcmp.lt.f32.partialorder %v6237, 0.0004427343
        %v6239 = vsel %vm6238, %v6236, %v6233
        %v6240 = vadd.f32 %v5693, 1.0
        %v6241 = vlog2.pop %v6240
        %v6242 = vmul.f32 %v6241, 0.6931472
        %v6243 = vmul.f32 -0.5, %v5693
        %v6244 = vadd.f32 %v6243, 1.0
        %v6245 = vmul.f32 %v6244, %v5693
        %v6246 = vand.u32 2147483647, %v5693
        %vm6247 = vcmp.lt.f32.partialorder %v6246, 0.0004427343
        %v6248 = vsel %vm6247, %v6245, %v6242
        %v6249 = vadd.f32 %v5695, 1.0
        %v6250 = vlog2.pop %v6249
        %v6251 = vmul.f32 %v6250, 0.6931472
        %v6252 = vmul.f32 -0.5, %v5695
        %v6253 = vadd.f32 %v6252, 1.0
        %v6254 = vmul.f32 %v6253, %v5695
        %v6255 = vand.u32 2147483647, %v5695
        %vm6256 = vcmp.lt.f32.partialorder %v6255, 0.0004427343
        %v6257 = vsel %vm6256, %v6254, %v6251
        %v6258 = vadd.f32 %v5697, 1.0
        %v6259 = vlog2.pop %v6258
        %v6260 = vmul.f32 %v6259, 0.6931472
        %v6261 = vmul.f32 -0.5, %v5697
        %v6262 = vadd.f32 %v6261, 1.0
        %v6263 = vmul.f32 %v6262, %v5697
        %v6264 = vand.u32 2147483647, %v5697
        %vm6265 = vcmp.lt.f32.partialorder %v6264, 0.0004427343
        %v6266 = vsel %vm6265, %v6263, %v6260
        %v6267 = vadd.f32 %v5699, 1.0
        %v6268 = vlog2.pop %v6267
        %v6269 = vmul.f32 %v6268, 0.6931472
        %v6270 = vmul.f32 -0.5, %v5699
        %v6271 = vadd.f32 %v6270, 1.0
        %v6272 = vmul.f32 %v6271, %v5699
        %v6273 = vand.u32 2147483647, %v5699
        %vm6274 = vcmp.lt.f32.partialorder %v6273, 0.0004427343
        %v6275 = vsel %vm6274, %v6272, %v6269
        %v6276 = vmul.f32 %v5708, 0.01
        %v6277 = vmul.f32 %v5717, 0.01
        %v6278 = vmul.f32 %v5726, 0.01
        %v6279 = vmul.f32 %v5735, 0.01
        %v6280 = vmul.f32 %v5744, 0.01
        %v6281 = vmul.f32 %v5753, 0.01
        %v6282 = vmul.f32 %v5762, 0.01
        %v6283 = vmul.f32 %v5771, 0.01
        %v6284 = vmul.f32 %v5780, 0.01
        %v6285 = vmul.f32 %v5789, 0.01
        %v6286 = vmul.f32 %v5798, 0.01
        %v6287 = vmul.f32 %v5807, 0.01
        %v6288 = vmul.f32 %v5816, 0.01
        %v6289 = vmul.f32 %v5825, 0.01
        %v6290 = vmul.f32 %v5834, 0.01
        %v6291 = vmul.f32 %v5843, 0.01
        %v6292 = vmul.f32 %v5852, 0.01
        %v6293 = vmul.f32 %v5861, 0.01
        %v6294 = vmul.f32 %v5870, 0.01
        %v6295 = vmul.f32 %v5879, 0.01
        %v6296 = vmul.f32 %v5888, 0.01
        %v6297 = vmul.f32 %v5897, 0.01
        %v6298 = vmul.f32 %v5906, 0.01
        %v6299 = vmul.f32 %v5915, 0.01
        %v6300 = vmul.f32 %v5924, 0.01
        %v6301 = vmul.f32 %v5933, 0.01
        %v6302 = vmul.f32 %v5942, 0.01
        %v6303 = vmul.f32 %v5951, 0.01
        %v6304 = vmul.f32 %v5960, 0.01
        %v6305 = vmul.f32 %v5969, 0.01
        %v6306 = vmul.f32 %v5978, 0.01
        %v6307 = vmul.f32 %v5987, 0.01
        %v6308 = vmul.f32 %v5996, 0.01
        %v6309 = vmul.f32 %v6005, 0.01
        %v6310 = vmul.f32 %v6014, 0.01
        %v6311 = vmul.f32 %v6023, 0.01
        %v6312 = vmul.f32 %v6032, 0.01
        %v6313 = vmul.f32 %v6041, 0.01
        %v6314 = vmul.f32 %v6050, 0.01
        %v6315 = vmul.f32 %v6059, 0.01
        %v6316 = vmul.f32 %v6068, 0.01
        %v6317 = vmul.f32 %v6077, 0.01
        %v6318 = vmul.f32 %v6086, 0.01
        %v6319 = vmul.f32 %v6095, 0.01
        %v6320 = vmul.f32 %v6104, 0.01
        %v6321 = vmul.f32 %v6113, 0.01
        %v6322 = vmul.f32 %v6122, 0.01
        %v6323 = vmul.f32 %v6131, 0.01
        %v6324 = vmul.f32 %v6140, 0.01
        %v6325 = vmul.f32 %v6149, 0.01
        %v6326 = vmul.f32 %v6158, 0.01
        %v6327 = vmul.f32 %v6167, 0.01
        %v6328 = vmul.f32 %v6176, 0.01
        %v6329 = vmul.f32 %v6185, 0.01
        %v6330 = vmul.f32 %v6194, 0.01
        %v6331 = vmul.f32 %v6203, 0.01
        %v6332 = vmul.f32 %v6212, 0.01
        %v6333 = vmul.f32 %v6221, 0.01
        %v6334 = vmul.f32 %v6230, 0.01
        %v6335 = vmul.f32 %v6239, 0.01
        %v6336 = vmul.f32 %v6248, 0.01
        %v6337 = vmul.f32 %v6257, 0.01
        %v6338 = vmul.f32 %v6266, 0.01
        %v6339 = vmul.f32 %v6275, 0.01
        %v6340 = vsel %vm5508, %v5222, %v6276
        %v6341 = vsel %vm5509, %v5224, %v6277
        %v6342 = vsel %vm5510, %v5226, %v6278
        %v6343 = vsel %vm5511, %v5228, %v6279
        %v6344 = vsel %vm5512, %v5232, %v6280
        %v6345 = vsel %vm5513, %v5234, %v6281
        %v6346 = vsel %vm5514, %v5236, %v6282
        %v6347 = vsel %vm5515, %v5238, %v6283
        %v6348 = vsel %vm5516, %v5242, %v6284
        %v6349 = vsel %vm5517, %v5244, %v6285
        %v6350 = vsel %vm5518, %v5246, %v6286
        %v6351 = vsel %vm5519, %v5248, %v6287
        %v6352 = vsel %vm5520, %v5252, %v6288
        %v6353 = vsel %vm5521, %v5254, %v6289
        %v6354 = vsel %vm5522, %v5256, %v6290
        %v6355 = vsel %vm5523, %v5258, %v6291
        %v6356 = vsel %vm5524, %v5262, %v6292
        %v6357 = vsel %vm5525, %v5264, %v6293
        %v6358 = vsel %vm5526, %v5266, %v6294
        %v6359 = vsel %vm5527, %v5268, %v6295
        %v6360 = vsel %vm5528, %v5272, %v6296
        %v6361 = vsel %vm5529, %v5274, %v6297
        %v6362 = vsel %vm5530, %v5276, %v6298
        %v6363 = vsel %vm5531, %v5278, %v6299
        %v6364 = vsel %vm5532, %v5282, %v6300
        %v6365 = vsel %vm5533, %v5284, %v6301
        %v6366 = vsel %vm5534, %v5286, %v6302
        %v6367 = vsel %vm5535, %v5288, %v6303
        %v6368 = vsel %vm5536, %v5292, %v6304
        %v6369 = vsel %vm5537, %v5294, %v6305
        %v6370 = vsel %vm5538, %v5296, %v6306
        %v6371 = vsel %vm5539, %v5298, %v6307
        %v6372 = vsel %vm5540, %v5302, %v6308
        %v6373 = vsel %vm5541, %v5304, %v6309
        %v6374 = vsel %vm5542, %v5306, %v6310
        %v6375 = vsel %vm5543, %v5308, %v6311
        %v6376 = vsel %vm5544, %v5312, %v6312
        %v6377 = vsel %vm5545, %v5314, %v6313
        %v6378 = vsel %vm5546, %v5316, %v6314
        %v6379 = vsel %vm5547, %v5318, %v6315
        %v6380 = vsel %vm5548, %v5322, %v6316
        %v6381 = vsel %vm5549, %v5324, %v6317
        %v6382 = vsel %vm5550, %v5326, %v6318
        %v6383 = vsel %vm5551, %v5328, %v6319
        %v6384 = vsel %vm5552, %v5332, %v6320
        %v6385 = vsel %vm5553, %v5334, %v6321
        %v6386 = vsel %vm5554, %v5336, %v6322
        %v6387 = vsel %vm5555, %v5338, %v6323
        %v6388 = vsel %vm5556, %v5342, %v6324
        %v6389 = vsel %vm5557, %v5344, %v6325
        %v6390 = vsel %vm5558, %v5346, %v6326
        %v6391 = vsel %vm5559, %v5348, %v6327
        %v6392 = vsel %vm5560, %v5352, %v6328
        %v6393 = vsel %vm5561, %v5354, %v6329
        %v6394 = vsel %vm5562, %v5356, %v6330
        %v6395 = vsel %vm5563, %v5358, %v6331
        %v6396 = vsel %vm5564, %v5362, %v6332
        %v6397 = vsel %vm5565, %v5364, %v6333
        %v6398 = vsel %vm5566, %v5366, %v6334
        %v6399 = vsel %vm5567, %v5368, %v6335
        %v6400 = vsel %vm5568, %v5372, %v6336
        %v6401 = vsel %vm5569, %v5374, %v6337
        %v6402 = vsel %vm5570, %v5376, %v6338
        %v6403 = vsel %vm5571, %v5378, %v6339
        %v6404 = vld [vmem:[%s8] sm:$0xff]
        %v6405 = vld [vmem:[%s8 + $0x8] sm:$0xff]
        %v6406 = vld [vmem:[%s8 + $0x10] sm:$0xff]
        %v6407 = vld [vmem:[%s8 + $0x18] sm:$0xff]
        %v6408 = vld [vmem:[%s8 + $0x20] sm:$0xff]
        %v6409 = vld [vmem:[%s8 + $0x28] sm:$0xff]
        %v6410 = vld [vmem:[%s8 + $0x30] sm:$0xff]
        %v6411 = vld [vmem:[%s8 + $0x38] sm:$0xff]
        %v6412 = vld [vmem:[%s8 + $0x40] sm:$0xff]
        %v6413 = vld [vmem:[%s8 + $0x48] sm:$0xff]
        %v6414 = vld [vmem:[%s8 + $0x50] sm:$0xff]
        %v6415 = vld [vmem:[%s8 + $0x58] sm:$0xff]
        %v6416 = vld [vmem:[%s8 + $0x60] sm:$0xff]
        %v6417 = vld [vmem:[%s8 + $0x68] sm:$0xff]
        %v6418 = vld [vmem:[%s8 + $0x70] sm:$0xff]
        %v6419 = vld [vmem:[%s8 + $0x78] sm:$0xff]
        %v6420 = vld [vmem:[%s8 + $0x80] sm:$0xff]
        %v6421 = vld [vmem:[%s8 + $0x88] sm:$0xff]
        %v6422 = vld [vmem:[%s8 + $0x90] sm:$0xff]
        %v6423 = vld [vmem:[%s8 + $0x98] sm:$0xff]
        %v6424 = vld [vmem:[%s8 + $0xa0] sm:$0xff]
        %v6425 = vld [vmem:[%s8 + $0xa8] sm:$0xff]
        %v6426 = vld [vmem:[%s8 + $0xb0] sm:$0xff]
        %v6427 = vld [vmem:[%s8 + $0xb8] sm:$0xff]
        %v6428 = vld [vmem:[%s8 + $0xc0] sm:$0xff]
        %v6429 = vld [vmem:[%s8 + $0xc8] sm:$0xff]
        %v6430 = vld [vmem:[%s8 + $0xd0] sm:$0xff]
        %v6431 = vld [vmem:[%s8 + $0xd8] sm:$0xff]
        %v6432 = vld [vmem:[%s8 + $0xe0] sm:$0xff]
        %v6433 = vld [vmem:[%s8 + $0xe8] sm:$0xff]
        %v6434 = vld [vmem:[%s8 + $0xf0] sm:$0xff]
        %v6435 = vld [vmem:[%s8 + $0xf8] sm:$0xff]
        %v6436 = vpack.c.bf16 %v6342, %v6340
        %v6437 = vpack.c.bf16 %v6343, %v6341
        %v6438 = vpack.c.bf16 %v6346, %v6344
        %v6439 = vpack.c.bf16 %v6347, %v6345
        %v6440 = vpack.c.bf16 %v6350, %v6348
        %v6441 = vpack.c.bf16 %v6351, %v6349
        %v6442 = vpack.c.bf16 %v6354, %v6352
        %v6443 = vpack.c.bf16 %v6355, %v6353
        %v6444 = vpack.c.bf16 %v6358, %v6356
        %v6445 = vpack.c.bf16 %v6359, %v6357
        %v6446 = vpack.c.bf16 %v6362, %v6360
        %v6447 = vpack.c.bf16 %v6363, %v6361
        %v6448 = vpack.c.bf16 %v6366, %v6364
        %v6449 = vpack.c.bf16 %v6367, %v6365
        %v6450 = vpack.c.bf16 %v6370, %v6368
        %v6451 = vpack.c.bf16 %v6371, %v6369
        %v6452 = vpack.c.bf16 %v6374, %v6372
        %v6453 = vpack.c.bf16 %v6375, %v6373
        %v6454 = vpack.c.bf16 %v6378, %v6376
        %v6455 = vpack.c.bf16 %v6379, %v6377
        %v6456 = vpack.c.bf16 %v6382, %v6380
        %v6457 = vpack.c.bf16 %v6383, %v6381
        %v6458 = vpack.c.bf16 %v6386, %v6384
        %v6459 = vpack.c.bf16 %v6387, %v6385
        %v6460 = vpack.c.bf16 %v6390, %v6388
        %v6461 = vpack.c.bf16 %v6391, %v6389
        %v6462 = vpack.c.bf16 %v6394, %v6392
        %v6463 = vpack.c.bf16 %v6395, %v6393
        %v6464 = vpack.c.bf16 %v6398, %v6396
        %v6465 = vpack.c.bf16 %v6399, %v6397
        %v6466 = vpack.c.bf16 %v6402, %v6400
        %v6467 = vpack.c.bf16 %v6403, %v6401
        %v6500 = vunpack.c.l.b16 %v6404
        %v6501 = vunpack.c.h.b16 %v6404
        %v6502 = vunpack.c.l.b16 %v6405
        %v6503 = vunpack.c.h.b16 %v6405
        %v6504 = vunpack.c.l.b16 %v6406
        %v6505 = vunpack.c.h.b16 %v6406
        %v6506 = vunpack.c.l.b16 %v6407
        %v6507 = vunpack.c.h.b16 %v6407
        %v6508 = vunpack.c.l.b16 %v6408
        %v6509 = vunpack.c.h.b16 %v6408
        %v6510 = vunpack.c.l.b16 %v6409
        %v6511 = vunpack.c.h.b16 %v6409
        %v6512 = vunpack.c.l.b16 %v6410
        %v6513 = vunpack.c.h.b16 %v6410
        %v6514 = vunpack.c.l.b16 %v6411
        %v6515 = vunpack.c.h.b16 %v6411
        %v6516 = vunpack.c.l.b16 %v6412
        %v6517 = vunpack.c.h.b16 %v6412
        %v6518 = vunpack.c.l.b16 %v6413
        %v6519 = vunpack.c.h.b16 %v6413
        %v6520 = vunpack.c.l.b16 %v6414
        %v6521 = vunpack.c.h.b16 %v6414
        %v6522 = vunpack.c.l.b16 %v6415
        %v6523 = vunpack.c.h.b16 %v6415
        %v6524 = vunpack.c.l.b16 %v6416
        %v6525 = vunpack.c.h.b16 %v6416
        %v6526 = vunpack.c.l.b16 %v6417
        %v6527 = vunpack.c.h.b16 %v6417
        %v6528 = vunpack.c.l.b16 %v6418
        %v6529 = vunpack.c.h.b16 %v6418
        %v6530 = vunpack.c.l.b16 %v6419
        %v6531 = vunpack.c.h.b16 %v6419
        %v6532 = vunpack.c.l.b16 %v6420
        %v6533 = vunpack.c.h.b16 %v6420
        %v6534 = vunpack.c.l.b16 %v6421
        %v6535 = vunpack.c.h.b16 %v6421
        %v6536 = vunpack.c.l.b16 %v6422
        %v6537 = vunpack.c.h.b16 %v6422
        %v6538 = vunpack.c.l.b16 %v6423
        %v6539 = vunpack.c.h.b16 %v6423
        %v6540 = vunpack.c.l.b16 %v6424
        %v6541 = vunpack.c.h.b16 %v6424
        %v6542 = vunpack.c.l.b16 %v6425
        %v6543 = vunpack.c.h.b16 %v6425
        %v6544 = vunpack.c.l.b16 %v6426
        %v6545 = vunpack.c.h.b16 %v6426
        %v6546 = vunpack.c.l.b16 %v6427
        %v6547 = vunpack.c.h.b16 %v6427
        %v6548 = vunpack.c.l.b16 %v6428
        %v6549 = vunpack.c.h.b16 %v6428
        %v6550 = vunpack.c.l.b16 %v6429
        %v6551 = vunpack.c.h.b16 %v6429
        %v6552 = vunpack.c.l.b16 %v6430
        %v6553 = vunpack.c.h.b16 %v6430
        %v6554 = vunpack.c.l.b16 %v6431
        %v6555 = vunpack.c.h.b16 %v6431
        %v6556 = vunpack.c.l.b16 %v6432
        %v6557 = vunpack.c.h.b16 %v6432
        %v6558 = vunpack.c.l.b16 %v6433
        %v6559 = vunpack.c.h.b16 %v6433
        %v6560 = vunpack.c.l.b16 %v6434
        %v6561 = vunpack.c.h.b16 %v6434
        %v6562 = vunpack.c.l.b16 %v6435
        %v6563 = vunpack.c.h.b16 %v6435
        %v6564 = vpack.c.b16 %v6502, %v6500
        %v6565 = vpack.c.b16 %v6503, %v6501
        %v6566 = vpack.c.b16 %v6506, %v6504
        %v6567 = vpack.c.b16 %v6507, %v6505
        %v6568 = vpack.c.b16 %v6510, %v6508
        %v6569 = vpack.c.b16 %v6511, %v6509
        %v6570 = vpack.c.b16 %v6514, %v6512
        %v6571 = vpack.c.b16 %v6515, %v6513
        %v6572 = vpack.c.b16 %v6518, %v6516
        %v6573 = vpack.c.b16 %v6519, %v6517
        %v6574 = vpack.c.b16 %v6522, %v6520
        %v6575 = vpack.c.b16 %v6523, %v6521
        %v6576 = vpack.c.b16 %v6526, %v6524
        %v6577 = vpack.c.b16 %v6527, %v6525
        %v6578 = vpack.c.b16 %v6530, %v6528
        %v6579 = vpack.c.b16 %v6531, %v6529
        %v6580 = vpack.c.b16 %v6534, %v6532
        %v6581 = vpack.c.b16 %v6535, %v6533
        %v6582 = vpack.c.b16 %v6538, %v6536
        %v6583 = vpack.c.b16 %v6539, %v6537
        %v6584 = vpack.c.b16 %v6542, %v6540
        %v6585 = vpack.c.b16 %v6543, %v6541
        %v6586 = vpack.c.b16 %v6546, %v6544
        %v6587 = vpack.c.b16 %v6547, %v6545
        %v6588 = vpack.c.b16 %v6550, %v6548
        %v6589 = vpack.c.b16 %v6551, %v6549
        %v6590 = vpack.c.b16 %v6554, %v6552
        %v6591 = vpack.c.b16 %v6555, %v6553
        %v6592 = vpack.c.b16 %v6558, %v6556
        %v6593 = vpack.c.b16 %v6559, %v6557
        %v6594 = vpack.c.b16 %v6562, %v6560
        %v6595 = vpack.c.b16 %v6563, %v6561
        %6628 = vmatprep.subr.bf16.mxu0 %v6451
        %6629 = vmatpush1.bf16.msra.mxu0 %v6450
        %6630 = vmatprep.subr.bf16.mxu0 %v6449
        %6631 = vmatpush1.bf16.msra.mxu0 %v6448
        %6632 = vmatprep.subr.bf16.mxu0 %v6447
        %6633 = vmatpush1.bf16.msra.mxu0 %v6446
        %6634 = vmatprep.subr.bf16.mxu0 %v6445
        %6635 = vmatpush1.bf16.msra.mxu0 %v6444
        %6636 = vmatprep.subr.bf16.mxu0 %v6443
        %6637 = vmatpush1.bf16.msra.mxu0 %v6442
        %6638 = vmatprep.subr.bf16.mxu0 %v6441
        %6639 = vmatpush1.bf16.msra.mxu0 %v6440
        %6640 = vmatprep.subr.bf16.mxu0 %v6439
        %6641 = vmatpush1.bf16.msra.mxu0 %v6438
        %6642 = vmatprep.subr.bf16.mxu0 %v6437
        %6643 = vmatpush1.bf16.msra.mxu0 %v6436
        %6644 = vmatprep.subr.bf16.mxu0 %v6467
        %6645 = vmatpush2.bf16.msra.mxu0 %v6466
        %6646 = vmatprep.subr.bf16.mxu0 %v6465
        %6647 = vmatpush2.bf16.msra.mxu0 %v6464
        %6648 = vmatprep.subr.bf16.mxu0 %v6463
        %6649 = vmatpush2.bf16.msra.mxu0 %v6462
        %6650 = vmatprep.subr.bf16.mxu0 %v6461
        %6651 = vmatpush2.bf16.msra.mxu0 %v6460
        %6652 = vmatprep.subr.bf16.mxu0 %v6459
        %6653 = vmatpush2.bf16.msra.mxu0 %v6458
        %6654 = vmatprep.subr.bf16.mxu0 %v6457
        %6655 = vmatpush2.bf16.msra.mxu0 %v6456
        %6656 = vmatprep.subr.bf16.mxu0 %v6455
        %6657 = vmatpush2.bf16.msra.mxu0 %v6454
        %6658 = vmatprep.subr.bf16.mxu0 %v6453
        %6659 = vmatpush2.bf16.msra.mxu0 %v6452
        %6660 = vmatprep.mubr.bf16.mxu0 %v6565
        %6661 = vmatmul.mubr.bf16.gmra.mxu0 %v6564
        %v6662 = vpop.f32.mrf.mxu0
        %v6663 = vadd.f32 %v3333, %v6662
        %v6664 = vpop.f32.mrf.mxu0
        %v6665 = vadd.f32 %v3335, %v6664
        %v6666 = vpop.f32.mrf.mxu0
        %v6667 = vadd.f32 %v3337, %v6666
        %v6668 = vpop.f32.mrf.mxu0
        %v6669 = vadd.f32 %v3339, %v6668
        %6670 = vmatprep.mubr.bf16.mxu0 %v6567
        %6671 = vmatmul.mubr.bf16.gmra.mxu0 %v6566
        %v6672 = vpop.f32.mrf.mxu0
        %v6673 = vadd.f32 %v3343, %v6672
        %v6674 = vpop.f32.mrf.mxu0
        %v6675 = vadd.f32 %v3345, %v6674
        %v6676 = vpop.f32.mrf.mxu0
        %v6677 = vadd.f32 %v3347, %v6676
        %v6678 = vpop.f32.mrf.mxu0
        %v6679 = vadd.f32 %v3349, %v6678
        %6680 = vmatprep.mubr.bf16.mxu0 %v6569
        %6681 = vmatmul.mubr.bf16.gmra.mxu0 %v6568
        %v6682 = vpop.f32.mrf.mxu0
        %v6683 = vadd.f32 %v3353, %v6682
        %v6684 = vpop.f32.mrf.mxu0
        %v6685 = vadd.f32 %v3355, %v6684
        %v6686 = vpop.f32.mrf.mxu0
        %v6687 = vadd.f32 %v3357, %v6686
        %v6688 = vpop.f32.mrf.mxu0
        %v6689 = vadd.f32 %v3359, %v6688
        %6690 = vmatprep.mubr.bf16.mxu0 %v6571
        %6691 = vmatmul.mubr.bf16.gmra.mxu0 %v6570
        %v6692 = vpop.f32.mrf.mxu0
        %v6693 = vadd.f32 %v3363, %v6692
        %v6694 = vpop.f32.mrf.mxu0
        %v6695 = vadd.f32 %v3365, %v6694
        %v6696 = vpop.f32.mrf.mxu0
        %v6697 = vadd.f32 %v3367, %v6696
        %v6698 = vpop.f32.mrf.mxu0
        %v6699 = vadd.f32 %v3369, %v6698
        %6700 = vmatprep.mubr.bf16.mxu0 %v6573
        %6701 = vmatmul.mubr.bf16.gmra.mxu0 %v6572
        %v6702 = vpop.f32.mrf.mxu0
        %v6703 = vadd.f32 %v3373, %v6702
        %v6704 = vpop.f32.mrf.mxu0
        %v6705 = vadd.f32 %v3375, %v6704
        %v6706 = vpop.f32.mrf.mxu0
        %v6707 = vadd.f32 %v3377, %v6706
        %v6708 = vpop.f32.mrf.mxu0
        %v6709 = vadd.f32 %v3379, %v6708
        %6710 = vmatprep.mubr.bf16.mxu0 %v6575
        %6711 = vmatmul.mubr.bf16.gmra.mxu0 %v6574
        %v6712 = vpop.f32.mrf.mxu0
        %v6713 = vadd.f32 %v3383, %v6712
        %v6714 = vpop.f32.mrf.mxu0
        %v6715 = vadd.f32 %v3385, %v6714
        %v6716 = vpop.f32.mrf.mxu0
        %v6717 = vadd.f32 %v3387, %v6716
        %v6718 = vpop.f32.mrf.mxu0
        %v6719 = vadd.f32 %v3389, %v6718
        %6720 = vmatprep.mubr.bf16.mxu0 %v6577
        %6721 = vmatmul.mubr.bf16.gmra.mxu0 %v6576
        %v6722 = vpop.f32.mrf.mxu0
        %v6723 = vadd.f32 %v3393, %v6722
        %v6724 = vpop.f32.mrf.mxu0
        %v6725 = vadd.f32 %v3395, %v6724
        %v6726 = vpop.f32.mrf.mxu0
        %v6727 = vadd.f32 %v3397, %v6726
        %v6728 = vpop.f32.mrf.mxu0
        %v6729 = vadd.f32 %v3399, %v6728
        %6730 = vmatprep.mubr.bf16.mxu0 %v6579
        %6731 = vmatmul.mubr.bf16.gmra.mxu0 %v6578
        %v6732 = vpop.f32.mrf.mxu0
        %v6733 = vadd.f32 %v3403, %v6732
        %v6734 = vpop.f32.mrf.mxu0
        %v6735 = vadd.f32 %v3405, %v6734
        %v6736 = vpop.f32.mrf.mxu0
        %v6737 = vadd.f32 %v3407, %v6736
        %v6738 = vpop.f32.mrf.mxu0
        %v6739 = vadd.f32 %v3409, %v6738
        %6740 = vmatprep.mubr.bf16.mxu0 %v6581
        %6741 = vmatmul.mubr.bf16.gmra.mxu0 %v6580
        %v6742 = vpop.f32.mrf.mxu0
        %v6743 = vadd.f32 %v3413, %v6742
        %v6744 = vpop.f32.mrf.mxu0
        %v6745 = vadd.f32 %v3415, %v6744
        %v6746 = vpop.f32.mrf.mxu0
        %v6747 = vadd.f32 %v3417, %v6746
        %v6748 = vpop.f32.mrf.mxu0
        %v6749 = vadd.f32 %v3419, %v6748
        %6750 = vmatprep.mubr.bf16.mxu0 %v6583
        %6751 = vmatmul.mubr.bf16.gmra.mxu0 %v6582
        %v6752 = vpop.f32.mrf.mxu0
        %v6753 = vadd.f32 %v3423, %v6752
        %v6754 = vpop.f32.mrf.mxu0
        %v6755 = vadd.f32 %v3425, %v6754
        %v6756 = vpop.f32.mrf.mxu0
        %v6757 = vadd.f32 %v3427, %v6756
        %v6758 = vpop.f32.mrf.mxu0
        %v6759 = vadd.f32 %v3429, %v6758
        %6760 = vmatprep.mubr.bf16.mxu0 %v6585
        %6761 = vmatmul.mubr.bf16.gmra.mxu0 %v6584
        %v6762 = vpop.f32.mrf.mxu0
        %v6763 = vadd.f32 %v3433, %v6762
        %v6764 = vpop.f32.mrf.mxu0
        %v6765 = vadd.f32 %v3435, %v6764
        %v6766 = vpop.f32.mrf.mxu0
        %v6767 = vadd.f32 %v3437, %v6766
        %v6768 = vpop.f32.mrf.mxu0
        %v6769 = vadd.f32 %v3439, %v6768
        %6770 = vmatprep.mubr.bf16.mxu0 %v6587
        %6771 = vmatmul.mubr.bf16.gmra.mxu0 %v6586
        %v6772 = vpop.f32.mrf.mxu0
        %v6773 = vadd.f32 %v3443, %v6772
        %v6774 = vpop.f32.mrf.mxu0
        %v6775 = vadd.f32 %v3445, %v6774
        %v6776 = vpop.f32.mrf.mxu0
        %v6777 = vadd.f32 %v3447, %v6776
        %v6778 = vpop.f32.mrf.mxu0
        %v6779 = vadd.f32 %v3449, %v6778
        %6780 = vmatprep.mubr.bf16.mxu0 %v6589
        %6781 = vmatmul.mubr.bf16.gmra.mxu0 %v6588
        %v6782 = vpop.f32.mrf.mxu0
        %v6783 = vadd.f32 %v3453, %v6782
        %v6784 = vpop.f32.mrf.mxu0
        %v6785 = vadd.f32 %v3455, %v6784
        %v6786 = vpop.f32.mrf.mxu0
        %v6787 = vadd.f32 %v3457, %v6786
        %v6788 = vpop.f32.mrf.mxu0
        %v6789 = vadd.f32 %v3459, %v6788
        %6790 = vmatprep.mubr.bf16.mxu0 %v6591
        %6791 = vmatmul.mubr.bf16.gmra.mxu0 %v6590
        %v6792 = vpop.f32.mrf.mxu0
        %v6793 = vadd.f32 %v3463, %v6792
        %v6794 = vpop.f32.mrf.mxu0
        %v6795 = vadd.f32 %v3465, %v6794
        %v6796 = vpop.f32.mrf.mxu0
        %v6797 = vadd.f32 %v3467, %v6796
        %v6798 = vpop.f32.mrf.mxu0
        %v6799 = vadd.f32 %v3469, %v6798
        %6800 = vmatprep.mubr.bf16.mxu0 %v6593
        %6801 = vmatmul.mubr.bf16.gmra.mxu0 %v6592
        %v6802 = vpop.f32.mrf.mxu0
        %v6803 = vadd.f32 %v3473, %v6802
        %v6804 = vpop.f32.mrf.mxu0
        %v6805 = vadd.f32 %v3475, %v6804
        %v6806 = vpop.f32.mrf.mxu0
        %v6807 = vadd.f32 %v3477, %v6806
        %v6808 = vpop.f32.mrf.mxu0
        %v6809 = vadd.f32 %v3479, %v6808
        %6810 = vmatprep.mubr.bf16.mxu0 %v6595
        %6811 = vmatmul.mubr.bf16.gmra.mxu0 %v6594
        %v6812 = vpop.f32.mrf.mxu0
        %v6813 = vadd.f32 %v3483, %v6812
        %v6814 = vpop.f32.mrf.mxu0
        %v6815 = vadd.f32 %v3485, %v6814
        %v6816 = vpop.f32.mrf.mxu0
        %v6817 = vadd.f32 %v3487, %v6816
        %v6818 = vpop.f32.mrf.mxu0
        %v6819 = vadd.f32 %v3489, %v6818
        %6820 = vdwg.mxu0
        %v6821 = vld [vmem:[%s9] sm:$0xff]
        %v6822 = vld [vmem:[%s9 + $0x8] sm:$0xff]
        %v6823 = vld [vmem:[%s9 + $0x10] sm:$0xff]
        %v6824 = vld [vmem:[%s9 + $0x18] sm:$0xff]
        %v6825 = vld [vmem:[%s9 + $0x20] sm:$0xff]
        %v6826 = vld [vmem:[%s9 + $0x28] sm:$0xff]
        %v6827 = vld [vmem:[%s9 + $0x30] sm:$0xff]
        %v6828 = vld [vmem:[%s9 + $0x38] sm:$0xff]
        %v6829 = vld [vmem:[%s9 + $0x40] sm:$0xff]
        %v6830 = vld [vmem:[%s9 + $0x48] sm:$0xff]
        %v6831 = vld [vmem:[%s9 + $0x50] sm:$0xff]
        %v6832 = vld [vmem:[%s9 + $0x58] sm:$0xff]
        %v6833 = vld [vmem:[%s9 + $0x60] sm:$0xff]
        %v6834 = vld [vmem:[%s9 + $0x68] sm:$0xff]
        %v6835 = vld [vmem:[%s9 + $0x70] sm:$0xff]
        %v6836 = vld [vmem:[%s9 + $0x78] sm:$0xff]
        %v6837 = vld [vmem:[%s9 + $0x80] sm:$0xff]
        %v6838 = vld [vmem:[%s9 + $0x88] sm:$0xff]
        %v6839 = vld [vmem:[%s9 + $0x90] sm:$0xff]
        %v6840 = vld [vmem:[%s9 + $0x98] sm:$0xff]
        %v6841 = vld [vmem:[%s9 + $0xa0] sm:$0xff]
        %v6842 = vld [vmem:[%s9 + $0xa8] sm:$0xff]
        %v6843 = vld [vmem:[%s9 + $0xb0] sm:$0xff]
        %v6844 = vld [vmem:[%s9 + $0xb8] sm:$0xff]
        %v6845 = vld [vmem:[%s9 + $0xc0] sm:$0xff]
        %v6846 = vld [vmem:[%s9 + $0xc8] sm:$0xff]
        %v6847 = vld [vmem:[%s9 + $0xd0] sm:$0xff]
        %v6848 = vld [vmem:[%s9 + $0xd8] sm:$0xff]
        %v6849 = vld [vmem:[%s9 + $0xe0] sm:$0xff]
        %v6850 = vld [vmem:[%s9 + $0xe8] sm:$0xff]
        %v6851 = vld [vmem:[%s9 + $0xf0] sm:$0xff]
        %v6852 = vld [vmem:[%s9 + $0xf8] sm:$0xff]
        %6854 = vset.pattern.permute.xlu0 0
        %6855 = vperm.xlu0 %6854, %v6821
        %v6856 = vpop.permute.xlu0 %6855
        %6859 = vset.pattern.permute.xlu0 0
        %6860 = vperm.xlu0 %6859, %v6822
        %v6861 = vpop.permute.xlu0 %6860
        %6864 = vset.pattern.permute.xlu0 0
        %6865 = vperm.xlu0 %6864, %v6823
        %v6866 = vpop.permute.xlu0 %6865
        %6869 = vset.pattern.permute.xlu0 0
        %6870 = vperm.xlu0 %6869, %v6824
        %v6871 = vpop.permute.xlu0 %6870
        %6874 = vset.pattern.permute.xlu0 0
        %6875 = vperm.xlu0 %6874, %v6825
        %v6876 = vpop.permute.xlu0 %6875
        %6879 = vset.pattern.permute.xlu0 0
        %6880 = vperm.xlu0 %6879, %v6826
        %v6881 = vpop.permute.xlu0 %6880
        %6884 = vset.pattern.permute.xlu0 0
        %6885 = vperm.xlu0 %6884, %v6827
        %v6886 = vpop.permute.xlu0 %6885
        %6889 = vset.pattern.permute.xlu0 0
        %6890 = vperm.xlu0 %6889, %v6828
        %v6891 = vpop.permute.xlu0 %6890
        %6894 = vset.pattern.permute.xlu0 0
        %6895 = vperm.xlu0 %6894, %v6829
        %v6896 = vpop.permute.xlu0 %6895
        %6899 = vset.pattern.permute.xlu0 0
        %6900 = vperm.xlu0 %6899, %v6830
        %v6901 = vpop.permute.xlu0 %6900
        %6904 = vset.pattern.permute.xlu0 0
        %6905 = vperm.xlu0 %6904, %v6831
        %v6906 = vpop.permute.xlu0 %6905
        %6909 = vset.pattern.permute.xlu0 0
        %6910 = vperm.xlu0 %6909, %v6832
        %v6911 = vpop.permute.xlu0 %6910
        %6914 = vset.pattern.permute.xlu0 0
        %6915 = vperm.xlu0 %6914, %v6833
        %v6916 = vpop.permute.xlu0 %6915
        %6919 = vset.pattern.permute.xlu0 0
        %6920 = vperm.xlu0 %6919, %v6834
        %v6921 = vpop.permute.xlu0 %6920
        %6924 = vset.pattern.permute.xlu0 0
        %6925 = vperm.xlu0 %6924, %v6835
        %v6926 = vpop.permute.xlu0 %6925
        %6929 = vset.pattern.permute.xlu0 0
        %6930 = vperm.xlu0 %6929, %v6836
        %v6931 = vpop.permute.xlu0 %6930
        %6934 = vset.pattern.permute.xlu0 0
        %6935 = vperm.xlu0 %6934, %v6837
        %v6936 = vpop.permute.xlu0 %6935
        %6939 = vset.pattern.permute.xlu0 0
        %6940 = vperm.xlu0 %6939, %v6838
        %v6941 = vpop.permute.xlu0 %6940
        %6944 = vset.pattern.permute.xlu0 0
        %6945 = vperm.xlu0 %6944, %v6839
        %v6946 = vpop.permute.xlu0 %6945
        %6949 = vset.pattern.permute.xlu0 0
        %6950 = vperm.xlu0 %6949, %v6840
        %v6951 = vpop.permute.xlu0 %6950
        %6954 = vset.pattern.permute.xlu0 0
        %6955 = vperm.xlu0 %6954, %v6841
        %v6956 = vpop.permute.xlu0 %6955
        %6959 = vset.pattern.permute.xlu0 0
        %6960 = vperm.xlu0 %6959, %v6842
        %v6961 = vpop.permute.xlu0 %6960
        %6964 = vset.pattern.permute.xlu0 0
        %6965 = vperm.xlu0 %6964, %v6843
        %v6966 = vpop.permute.xlu0 %6965
        %6969 = vset.pattern.permute.xlu0 0
        %6970 = vperm.xlu0 %6969, %v6844
        %v6971 = vpop.permute.xlu0 %6970
        %6974 = vset.pattern.permute.xlu0 0
        %6975 = vperm.xlu0 %6974, %v6845
        %v6976 = vpop.permute.xlu0 %6975
        %6979 = vset.pattern.permute.xlu0 0
        %6980 = vperm.xlu0 %6979, %v6846
        %v6981 = vpop.permute.xlu0 %6980
        %6984 = vset.pattern.permute.xlu0 0
        %6985 = vperm.xlu0 %6984, %v6847
        %v6986 = vpop.permute.xlu0 %6985
        %6989 = vset.pattern.permute.xlu0 0
        %6990 = vperm.xlu0 %6989, %v6848
        %v6991 = vpop.permute.xlu0 %6990
        %6994 = vset.pattern.permute.xlu0 0
        %6995 = vperm.xlu0 %6994, %v6849
        %v6996 = vpop.permute.xlu0 %6995
        %6999 = vset.pattern.permute.xlu0 0
        %7000 = vperm.xlu0 %6999, %v6850
        %v7001 = vpop.permute.xlu0 %7000
        %7004 = vset.pattern.permute.xlu0 0
        %7005 = vperm.xlu0 %7004, %v6851
        %v7006 = vpop.permute.xlu0 %7005
        %7009 = vset.pattern.permute.xlu0 0
        %7010 = vperm.xlu0 %7009, %v6852
        %v7011 = vpop.permute.xlu0 %7010
        %v7013 = vadd.f32 %v6663, %v6856
        %v7014 = vadd.f32 %v6665, %v6856
        %v7015 = vadd.f32 %v6667, %v6861
        %v7016 = vadd.f32 %v6669, %v6861
        %v7017 = vadd.f32 %v6673, %v6866
        %v7018 = vadd.f32 %v6675, %v6866
        %v7019 = vadd.f32 %v6677, %v6871
        %v7020 = vadd.f32 %v6679, %v6871
        %v7021 = vadd.f32 %v6683, %v6876
        %v7022 = vadd.f32 %v6685, %v6876
        %v7023 = vadd.f32 %v6687, %v6881
        %v7024 = vadd.f32 %v6689, %v6881
        %v7025 = vadd.f32 %v6693, %v6886
        %v7026 = vadd.f32 %v6695, %v6886
        %v7027 = vadd.f32 %v6697, %v6891
        %v7028 = vadd.f32 %v6699, %v6891
        %v7029 = vadd.f32 %v6703, %v6896
        %v7030 = vadd.f32 %v6705, %v6896
        %v7031 = vadd.f32 %v6707, %v6901
        %v7032 = vadd.f32 %v6709, %v6901
        %v7033 = vadd.f32 %v6713, %v6906
        %v7034 = vadd.f32 %v6715, %v6906
        %v7035 = vadd.f32 %v6717, %v6911
        %v7036 = vadd.f32 %v6719, %v6911
        %v7037 = vadd.f32 %v6723, %v6916
        %v7038 = vadd.f32 %v6725, %v6916
        %v7039 = vadd.f32 %v6727, %v6921
        %v7040 = vadd.f32 %v6729, %v6921
        %v7041 = vadd.f32 %v6733, %v6926
        %v7042 = vadd.f32 %v6735, %v6926
        %v7043 = vadd.f32 %v6737, %v6931
        %v7044 = vadd.f32 %v6739, %v6931
        %v7045 = vadd.f32 %v6743, %v6936
        %v7046 = vadd.f32 %v6745, %v6936
        %v7047 = vadd.f32 %v6747, %v6941
        %v7048 = vadd.f32 %v6749, %v6941
        %v7049 = vadd.f32 %v6753, %v6946
        %v7050 = vadd.f32 %v6755, %v6946
        %v7051 = vadd.f32 %v6757, %v6951
        %v7052 = vadd.f32 %v6759, %v6951
        %v7053 = vadd.f32 %v6763, %v6956
        %v7054 = vadd.f32 %v6765, %v6956
        %v7055 = vadd.f32 %v6767, %v6961
        %v7056 = vadd.f32 %v6769, %v6961
        %v7057 = vadd.f32 %v6773, %v6966
        %v7058 = vadd.f32 %v6775, %v6966
        %v7059 = vadd.f32 %v6777, %v6971
        %v7060 = vadd.f32 %v6779, %v6971
        %v7061 = vadd.f32 %v6783, %v6976
        %v7062 = vadd.f32 %v6785, %v6976
        %v7063 = vadd.f32 %v6787, %v6981
        %v7064 = vadd.f32 %v6789, %v6981
        %v7065 = vadd.f32 %v6793, %v6986
        %v7066 = vadd.f32 %v6795, %v6986
        %v7067 = vadd.f32 %v6797, %v6991
        %v7068 = vadd.f32 %v6799, %v6991
        %v7069 = vadd.f32 %v6803, %v6996
        %v7070 = vadd.f32 %v6805, %v6996
        %v7071 = vadd.f32 %v6807, %v7001
        %v7072 = vadd.f32 %v6809, %v7001
        %v7073 = vadd.f32 %v6813, %v7006
        %v7074 = vadd.f32 %v6815, %v7006
        %v7075 = vadd.f32 %v6817, %v7011
        %v7076 = vadd.f32 %v6819, %v7011
        %v7077 = vmul.f32 %v7013, 100.0
        %v7078 = vmul.f32 %v7014, 100.0
        %v7079 = vmul.f32 %v7015, 100.0
        %v7080 = vmul.f32 %v7016, 100.0
        %v7081 = vmul.f32 %v7017, 100.0
        %v7082 = vmul.f32 %v7018, 100.0
        %v7083 = vmul.f32 %v7019, 100.0
        %v7084 = vmul.f32 %v7020, 100.0
        %v7085 = vmul.f32 %v7021, 100.0
        %v7086 = vmul.f32 %v7022, 100.0
        %v7087 = vmul.f32 %v7023, 100.0
        %v7088 = vmul.f32 %v7024, 100.0
        %v7089 = vmul.f32 %v7025, 100.0
        %v7090 = vmul.f32 %v7026, 100.0
        %v7091 = vmul.f32 %v7027, 100.0
        %v7092 = vmul.f32 %v7028, 100.0
        %v7093 = vmul.f32 %v7029, 100.0
        %v7094 = vmul.f32 %v7030, 100.0
        %v7095 = vmul.f32 %v7031, 100.0
        %v7096 = vmul.f32 %v7032, 100.0
        %v7097 = vmul.f32 %v7033, 100.0
        %v7098 = vmul.f32 %v7034, 100.0
        %v7099 = vmul.f32 %v7035, 100.0
        %v7100 = vmul.f32 %v7036, 100.0
        %v7101 = vmul.f32 %v7037, 100.0
        %v7102 = vmul.f32 %v7038, 100.0
        %v7103 = vmul.f32 %v7039, 100.0
        %v7104 = vmul.f32 %v7040, 100.0
        %v7105 = vmul.f32 %v7041, 100.0
        %v7106 = vmul.f32 %v7042, 100.0
        %v7107 = vmul.f32 %v7043, 100.0
        %v7108 = vmul.f32 %v7044, 100.0
        %v7109 = vmul.f32 %v7045, 100.0
        %v7110 = vmul.f32 %v7046, 100.0
        %v7111 = vmul.f32 %v7047, 100.0
        %v7112 = vmul.f32 %v7048, 100.0
        %v7113 = vmul.f32 %v7049, 100.0
        %v7114 = vmul.f32 %v7050, 100.0
        %v7115 = vmul.f32 %v7051, 100.0
        %v7116 = vmul.f32 %v7052, 100.0
        %v7117 = vmul.f32 %v7053, 100.0
        %v7118 = vmul.f32 %v7054, 100.0
        %v7119 = vmul.f32 %v7055, 100.0
        %v7120 = vmul.f32 %v7056, 100.0
        %v7121 = vmul.f32 %v7057, 100.0
        %v7122 = vmul.f32 %v7058, 100.0
        %v7123 = vmul.f32 %v7059, 100.0
        %v7124 = vmul.f32 %v7060, 100.0
        %v7125 = vmul.f32 %v7061, 100.0
        %v7126 = vmul.f32 %v7062, 100.0
        %v7127 = vmul.f32 %v7063, 100.0
        %v7128 = vmul.f32 %v7064, 100.0
        %v7129 = vmul.f32 %v7065, 100.0
        %v7130 = vmul.f32 %v7066, 100.0
        %v7131 = vmul.f32 %v7067, 100.0
        %v7132 = vmul.f32 %v7068, 100.0
        %v7133 = vmul.f32 %v7069, 100.0
        %v7134 = vmul.f32 %v7070, 100.0
        %v7135 = vmul.f32 %v7071, 100.0
        %v7136 = vmul.f32 %v7072, 100.0
        %v7137 = vmul.f32 %v7073, 100.0
        %v7138 = vmul.f32 %v7074, 100.0
        %v7139 = vmul.f32 %v7075, 100.0
        %v7140 = vmul.f32 %v7076, 100.0
        %v7141 = vmin.f32 %v7077, 20.0
        %v7142 = vmin.f32 %v7078, 20.0
        %v7143 = vmin.f32 %v7079, 20.0
        %v7144 = vmin.f32 %v7080, 20.0
        %v7145 = vmin.f32 %v7081, 20.0
        %v7146 = vmin.f32 %v7082, 20.0
        %v7147 = vmin.f32 %v7083, 20.0
        %v7148 = vmin.f32 %v7084, 20.0
        %v7149 = vmin.f32 %v7085, 20.0
        %v7150 = vmin.f32 %v7086, 20.0
        %v7151 = vmin.f32 %v7087, 20.0
        %v7152 = vmin.f32 %v7088, 20.0
        %v7153 = vmin.f32 %v7089, 20.0
        %v7154 = vmin.f32 %v7090, 20.0
        %v7155 = vmin.f32 %v7091, 20.0
        %v7156 = vmin.f32 %v7092, 20.0
        %v7157 = vmin.f32 %v7093, 20.0
        %v7158 = vmin.f32 %v7094, 20.0
        %v7159 = vmin.f32 %v7095, 20.0
        %v7160 = vmin.f32 %v7096, 20.0
        %v7161 = vmin.f32 %v7097, 20.0
        %v7162 = vmin.f32 %v7098, 20.0
        %v7163 = vmin.f32 %v7099, 20.0
        %v7164 = vmin.f32 %v7100, 20.0
        %v7165 = vmin.f32 %v7101, 20.0
        %v7166 = vmin.f32 %v7102, 20.0
        %v7167 = vmin.f32 %v7103, 20.0
        %v7168 = vmin.f32 %v7104, 20.0
        %v7169 = vmin.f32 %v7105, 20.0
        %v7170 = vmin.f32 %v7106, 20.0
        %v7171 = vmin.f32 %v7107, 20.0
        %v7172 = vmin.f32 %v7108, 20.0
        %v7173 = vmin.f32 %v7109, 20.0
        %v7174 = vmin.f32 %v7110, 20.0
        %v7175 = vmin.f32 %v7111, 20.0
        %v7176 = vmin.f32 %v7112, 20.0
        %v7177 = vmin.f32 %v7113, 20.0
        %v7178 = vmin.f32 %v7114, 20.0
        %v7179 = vmin.f32 %v7115, 20.0
        %v7180 = vmin.f32 %v7116, 20.0
        %v7181 = vmin.f32 %v7117, 20.0
        %v7182 = vmin.f32 %v7118, 20.0
        %v7183 = vmin.f32 %v7119, 20.0
        %v7184 = vmin.f32 %v7120, 20.0
        %v7185 = vmin.f32 %v7121, 20.0
        %v7186 = vmin.f32 %v7122, 20.0
        %v7187 = vmin.f32 %v7123, 20.0
        %v7188 = vmin.f32 %v7124, 20.0
        %v7189 = vmin.f32 %v7125, 20.0
        %v7190 = vmin.f32 %v7126, 20.0
        %v7191 = vmin.f32 %v7127, 20.0
        %v7192 = vmin.f32 %v7128, 20.0
        %v7193 = vmin.f32 %v7129, 20.0
        %v7194 = vmin.f32 %v7130, 20.0
        %v7195 = vmin.f32 %v7131, 20.0
        %v7196 = vmin.f32 %v7132, 20.0
        %v7197 = vmin.f32 %v7133, 20.0
        %v7198 = vmin.f32 %v7134, 20.0
        %v7199 = vmin.f32 %v7135, 20.0
        %v7200 = vmin.f32 %v7136, 20.0
        %v7201 = vmin.f32 %v7137, 20.0
        %v7202 = vmin.f32 %v7138, 20.0
        %v7203 = vmin.f32 %v7139, 20.0
        %v7204 = vmin.f32 %v7140, 20.0
        %vm7205 = vcmp.gt.f32.partialorder %v7077, 20.0
        %vm7206 = vcmp.gt.f32.partialorder %v7078, 20.0
        %vm7207 = vcmp.gt.f32.partialorder %v7079, 20.0
        %vm7208 = vcmp.gt.f32.partialorder %v7080, 20.0
        %vm7209 = vcmp.gt.f32.partialorder %v7081, 20.0
        %vm7210 = vcmp.gt.f32.partialorder %v7082, 20.0
        %vm7211 = vcmp.gt.f32.partialorder %v7083, 20.0
        %vm7212 = vcmp.gt.f32.partialorder %v7084, 20.0
        %vm7213 = vcmp.gt.f32.partialorder %v7085, 20.0
        %vm7214 = vcmp.gt.f32.partialorder %v7086, 20.0
        %vm7215 = vcmp.gt.f32.partialorder %v7087, 20.0
        %vm7216 = vcmp.gt.f32.partialorder %v7088, 20.0
        %vm7217 = vcmp.gt.f32.partialorder %v7089, 20.0
        %vm7218 = vcmp.gt.f32.partialorder %v7090, 20.0
        %vm7219 = vcmp.gt.f32.partialorder %v7091, 20.0
        %vm7220 = vcmp.gt.f32.partialorder %v7092, 20.0
        %vm7221 = vcmp.gt.f32.partialorder %v7093, 20.0
        %vm7222 = vcmp.gt.f32.partialorder %v7094, 20.0
        %vm7223 = vcmp.gt.f32.partialorder %v7095, 20.0
        %vm7224 = vcmp.gt.f32.partialorder %v7096, 20.0
        %vm7225 = vcmp.gt.f32.partialorder %v7097, 20.0
        %vm7226 = vcmp.gt.f32.partialorder %v7098, 20.0
        %vm7227 = vcmp.gt.f32.partialorder %v7099, 20.0
        %vm7228 = vcmp.gt.f32.partialorder %v7100, 20.0
        %vm7229 = vcmp.gt.f32.partialorder %v7101, 20.0
        %vm7230 = vcmp.gt.f32.partialorder %v7102, 20.0
        %vm7231 = vcmp.gt.f32.partialorder %v7103, 20.0
        %vm7232 = vcmp.gt.f32.partialorder %v7104, 20.0
        %vm7233 = vcmp.gt.f32.partialorder %v7105, 20.0
        %vm7234 = vcmp.gt.f32.partialorder %v7106, 20.0
        %vm7235 = vcmp.gt.f32.partialorder %v7107, 20.0
        %vm7236 = vcmp.gt.f32.partialorder %v7108, 20.0
        %vm7237 = vcmp.gt.f32.partialorder %v7109, 20.0
        %vm7238 = vcmp.gt.f32.partialorder %v7110, 20.0
        %vm7239 = vcmp.gt.f32.partialorder %v7111, 20.0
        %vm7240 = vcmp.gt.f32.partialorder %v7112, 20.0
        %vm7241 = vcmp.gt.f32.partialorder %v7113, 20.0
        %vm7242 = vcmp.gt.f32.partialorder %v7114, 20.0
        %vm7243 = vcmp.gt.f32.partialorder %v7115, 20.0
        %vm7244 = vcmp.gt.f32.partialorder %v7116, 20.0
        %vm7245 = vcmp.gt.f32.partialorder %v7117, 20.0
        %vm7246 = vcmp.gt.f32.partialorder %v7118, 20.0
        %vm7247 = vcmp.gt.f32.partialorder %v7119, 20.0
        %vm7248 = vcmp.gt.f32.partialorder %v7120, 20.0
        %vm7249 = vcmp.gt.f32.partialorder %v7121, 20.0
        %vm7250 = vcmp.gt.f32.partialorder %v7122, 20.0
        %vm7251 = vcmp.gt.f32.partialorder %v7123, 20.0
        %vm7252 = vcmp.gt.f32.partialorder %v7124, 20.0
        %vm7253 = vcmp.gt.f32.partialorder %v7125, 20.0
        %vm7254 = vcmp.gt.f32.partialorder %v7126, 20.0
        %vm7255 = vcmp.gt.f32.partialorder %v7127, 20.0
        %vm7256 = vcmp.gt.f32.partialorder %v7128, 20.0
        %vm7257 = vcmp.gt.f32.partialorder %v7129, 20.0
        %vm7258 = vcmp.gt.f32.partialorder %v7130, 20.0
        %vm7259 = vcmp.gt.f32.partialorder %v7131, 20.0
        %vm7260 = vcmp.gt.f32.partialorder %v7132, 20.0
        %vm7261 = vcmp.gt.f32.partialorder %v7133, 20.0
        %vm7262 = vcmp.gt.f32.partialorder %v7134, 20.0
        %vm7263 = vcmp.gt.f32.partialorder %v7135, 20.0
        %vm7264 = vcmp.gt.f32.partialorder %v7136, 20.0
        %vm7265 = vcmp.gt.f32.partialorder %v7137, 20.0
        %vm7266 = vcmp.gt.f32.partialorder %v7138, 20.0
        %vm7267 = vcmp.gt.f32.partialorder %v7139, 20.0
        %vm7268 = vcmp.gt.f32.partialorder %v7140, 20.0
        %v7269 = vmul.f32 %v7141, 1.442695
        %v7270 = vpow.pop %v7269
        %v7271 = vmul.f32 %v7142, 1.442695
        %v7272 = vpow.pop %v7271
        %v7273 = vmul.f32 %v7143, 1.442695
        %v7274 = vpow.pop %v7273
        %v7275 = vmul.f32 %v7144, 1.442695
        %v7276 = vpow.pop %v7275
        %v7277 = vmul.f32 %v7145, 1.442695
        %v7278 = vpow.pop %v7277
        %v7279 = vmul.f32 %v7146, 1.442695
        %v7280 = vpow.pop %v7279
        %v7281 = vmul.f32 %v7147, 1.442695
        %v7282 = vpow.pop %v7281
        %v7283 = vmul.f32 %v7148, 1.442695
        %v7284 = vpow.pop %v7283
        %v7285 = vmul.f32 %v7149, 1.442695
        %v7286 = vpow.pop %v7285
        %v7287 = vmul.f32 %v7150, 1.442695
        %v7288 = vpow.pop %v7287
        %v7289 = vmul.f32 %v7151, 1.442695
        %v7290 = vpow.pop %v7289
        %v7291 = vmul.f32 %v7152, 1.442695
        %v7292 = vpow.pop %v7291
        %v7293 = vmul.f32 %v7153, 1.442695
        %v7294 = vpow.pop %v7293
        %v7295 = vmul.f32 %v7154, 1.442695
        %v7296 = vpow.pop %v7295
        %v7297 = vmul.f32 %v7155, 1.442695
        %v7298 = vpow.pop %v7297
        %v7299 = vmul.f32 %v7156, 1.442695
        %v7300 = vpow.pop %v7299
        %v7301 = vmul.f32 %v7157, 1.442695
        %v7302 = vpow.pop %v7301
        %v7303 = vmul.f32 %v7158, 1.442695
        %v7304 = vpow.pop %v7303
        %v7305 = vmul.f32 %v7159, 1.442695
        %v7306 = vpow.pop %v7305
        %v7307 = vmul.f32 %v7160, 1.442695
        %v7308 = vpow.pop %v7307
        %v7309 = vmul.f32 %v7161, 1.442695
        %v7310 = vpow.pop %v7309
        %v7311 = vmul.f32 %v7162, 1.442695
        %v7312 = vpow.pop %v7311
        %v7313 = vmul.f32 %v7163, 1.442695
        %v7314 = vpow.pop %v7313
        %v7315 = vmul.f32 %v7164, 1.442695
        %v7316 = vpow.pop %v7315
        %v7317 = vmul.f32 %v7165, 1.442695
        %v7318 = vpow.pop %v7317
        %v7319 = vmul.f32 %v7166, 1.442695
        %v7320 = vpow.pop %v7319
        %v7321 = vmul.f32 %v7167, 1.442695
        %v7322 = vpow.pop %v7321
        %v7323 = vmul.f32 %v7168, 1.442695
        %v7324 = vpow.pop %v7323
        %v7325 = vmul.f32 %v7169, 1.442695
        %v7326 = vpow.pop %v7325
        %v7327 = vmul.f32 %v7170, 1.442695
        %v7328 = vpow.pop %v7327
        %v7329 = vmul.f32 %v7171, 1.442695
        %v7330 = vpow.pop %v7329
        %v7331 = vmul.f32 %v7172, 1.442695
        %v7332 = vpow.pop %v7331
        %v7333 = vmul.f32 %v7173, 1.442695
        %v7334 = vpow.pop %v7333
        %v7335 = vmul.f32 %v7174, 1.442695
        %v7336 = vpow.pop %v7335
        %v7337 = vmul.f32 %v7175, 1.442695
        %v7338 = vpow.pop %v7337
        %v7339 = vmul.f32 %v7176, 1.442695
        %v7340 = vpow.pop %v7339
        %v7341 = vmul.f32 %v7177, 1.442695
        %v7342 = vpow.pop %v7341
        %v7343 = vmul.f32 %v7178, 1.442695
        %v7344 = vpow.pop %v7343
        %v7345 = vmul.f32 %v7179, 1.442695
        %v7346 = vpow.pop %v7345
        %v7347 = vmul.f32 %v7180, 1.442695
        %v7348 = vpow.pop %v7347
        %v7349 = vmul.f32 %v7181, 1.442695
        %v7350 = vpow.pop %v7349
        %v7351 = vmul.f32 %v7182, 1.442695
        %v7352 = vpow.pop %v7351
        %v7353 = vmul.f32 %v7183, 1.442695
        %v7354 = vpow.pop %v7353
        %v7355 = vmul.f32 %v7184, 1.442695
        %v7356 = vpow.pop %v7355
        %v7357 = vmul.f32 %v7185, 1.442695
        %v7358 = vpow.pop %v7357
        %v7359 = vmul.f32 %v7186, 1.442695
        %v7360 = vpow.pop %v7359
        %v7361 = vmul.f32 %v7187, 1.442695
        %v7362 = vpow.pop %v7361
        %v7363 = vmul.f32 %v7188, 1.442695
        %v7364 = vpow.pop %v7363
        %v7365 = vmul.f32 %v7189, 1.442695
        %v7366 = vpow.pop %v7365
        %v7367 = vmul.f32 %v7190, 1.442695
        %v7368 = vpow.pop %v7367
        %v7369 = vmul.f32 %v7191, 1.442695
        %v7370 = vpow.pop %v7369
        %v7371 = vmul.f32 %v7192, 1.442695
        %v7372 = vpow.pop %v7371
        %v7373 = vmul.f32 %v7193, 1.442695
        %v7374 = vpow.pop %v7373
        %v7375 = vmul.f32 %v7194, 1.442695
        %v7376 = vpow.pop %v7375
        %v7377 = vmul.f32 %v7195, 1.442695
        %v7378 = vpow.pop %v7377
        %v7379 = vmul.f32 %v7196, 1.442695
        %v7380 = vpow.pop %v7379
        %v7381 = vmul.f32 %v7197, 1.442695
        %v7382 = vpow.pop %v7381
        %v7383 = vmul.f32 %v7198, 1.442695
        %v7384 = vpow.pop %v7383
        %v7385 = vmul.f32 %v7199, 1.442695
        %v7386 = vpow.pop %v7385
        %v7387 = vmul.f32 %v7200, 1.442695
        %v7388 = vpow.pop %v7387
        %v7389 = vmul.f32 %v7201, 1.442695
        %v7390 = vpow.pop %v7389
        %v7391 = vmul.f32 %v7202, 1.442695
        %v7392 = vpow.pop %v7391
        %v7393 = vmul.f32 %v7203, 1.442695
        %v7394 = vpow.pop %v7393
        %v7395 = vmul.f32 %v7204, 1.442695
        %v7396 = vpow.pop %v7395
        %v7397 = vadd.f32 %v7270, 1.0
        %v7398 = vlog2.pop %v7397
        %v7399 = vmul.f32 %v7398, 0.6931472
        %v7400 = vmul.f32 -0.5, %v7270
        %v7401 = vadd.f32 %v7400, 1.0
        %v7402 = vmul.f32 %v7401, %v7270
        %v7403 = vand.u32 2147483647, %v7270
        %vm7404 = vcmp.lt.f32.partialorder %v7403, 0.0004427343
        %v7405 = vsel %vm7404, %v7402, %v7399
        %v7406 = vadd.f32 %v7272, 1.0
        %v7407 = vlog2.pop %v7406
        %v7408 = vmul.f32 %v7407, 0.6931472
        %v7409 = vmul.f32 -0.5, %v7272
        %v7410 = vadd.f32 %v7409, 1.0
        %v7411 = vmul.f32 %v7410, %v7272
        %v7412 = vand.u32 2147483647, %v7272
        %vm7413 = vcmp.lt.f32.partialorder %v7412, 0.0004427343
        %v7414 = vsel %vm7413, %v7411, %v7408
        %v7415 = vadd.f32 %v7274, 1.0
        %v7416 = vlog2.pop %v7415
        %v7417 = vmul.f32 %v7416, 0.6931472
        %v7418 = vmul.f32 -0.5, %v7274
        %v7419 = vadd.f32 %v7418, 1.0
        %v7420 = vmul.f32 %v7419, %v7274
        %v7421 = vand.u32 2147483647, %v7274
        %vm7422 = vcmp.lt.f32.partialorder %v7421, 0.0004427343
        %v7423 = vsel %vm7422, %v7420, %v7417
        %v7424 = vadd.f32 %v7276, 1.0
        %v7425 = vlog2.pop %v7424
        %v7426 = vmul.f32 %v7425, 0.6931472
        %v7427 = vmul.f32 -0.5, %v7276
        %v7428 = vadd.f32 %v7427, 1.0
        %v7429 = vmul.f32 %v7428, %v7276
        %v7430 = vand.u32 2147483647, %v7276
        %vm7431 = vcmp.lt.f32.partialorder %v7430, 0.0004427343
        %v7432 = vsel %vm7431, %v7429, %v7426
        %v7433 = vadd.f32 %v7278, 1.0
        %v7434 = vlog2.pop %v7433
        %v7435 = vmul.f32 %v7434, 0.6931472
        %v7436 = vmul.f32 -0.5, %v7278
        %v7437 = vadd.f32 %v7436, 1.0
        %v7438 = vmul.f32 %v7437, %v7278
        %v7439 = vand.u32 2147483647, %v7278
        %vm7440 = vcmp.lt.f32.partialorder %v7439, 0.0004427343
        %v7441 = vsel %vm7440, %v7438, %v7435
        %v7442 = vadd.f32 %v7280, 1.0
        %v7443 = vlog2.pop %v7442
        %v7444 = vmul.f32 %v7443, 0.6931472
        %v7445 = vmul.f32 -0.5, %v7280
        %v7446 = vadd.f32 %v7445, 1.0
        %v7447 = vmul.f32 %v7446, %v7280
        %v7448 = vand.u32 2147483647, %v7280
        %vm7449 = vcmp.lt.f32.partialorder %v7448, 0.0004427343
        %v7450 = vsel %vm7449, %v7447, %v7444
        %v7451 = vadd.f32 %v7282, 1.0
        %v7452 = vlog2.pop %v7451
        %v7453 = vmul.f32 %v7452, 0.6931472
        %v7454 = vmul.f32 -0.5, %v7282
        %v7455 = vadd.f32 %v7454, 1.0
        %v7456 = vmul.f32 %v7455, %v7282
        %v7457 = vand.u32 2147483647, %v7282
        %vm7458 = vcmp.lt.f32.partialorder %v7457, 0.0004427343
        %v7459 = vsel %vm7458, %v7456, %v7453
        %v7460 = vadd.f32 %v7284, 1.0
        %v7461 = vlog2.pop %v7460
        %v7462 = vmul.f32 %v7461, 0.6931472
        %v7463 = vmul.f32 -0.5, %v7284
        %v7464 = vadd.f32 %v7463, 1.0
        %v7465 = vmul.f32 %v7464, %v7284
        %v7466 = vand.u32 2147483647, %v7284
        %vm7467 = vcmp.lt.f32.partialorder %v7466, 0.0004427343
        %v7468 = vsel %vm7467, %v7465, %v7462
        %v7469 = vadd.f32 %v7286, 1.0
        %v7470 = vlog2.pop %v7469
        %v7471 = vmul.f32 %v7470, 0.6931472
        %v7472 = vmul.f32 -0.5, %v7286
        %v7473 = vadd.f32 %v7472, 1.0
        %v7474 = vmul.f32 %v7473, %v7286
        %v7475 = vand.u32 2147483647, %v7286
        %vm7476 = vcmp.lt.f32.partialorder %v7475, 0.0004427343
        %v7477 = vsel %vm7476, %v7474, %v7471
        %v7478 = vadd.f32 %v7288, 1.0
        %v7479 = vlog2.pop %v7478
        %v7480 = vmul.f32 %v7479, 0.6931472
        %v7481 = vmul.f32 -0.5, %v7288
        %v7482 = vadd.f32 %v7481, 1.0
        %v7483 = vmul.f32 %v7482, %v7288
        %v7484 = vand.u32 2147483647, %v7288
        %vm7485 = vcmp.lt.f32.partialorder %v7484, 0.0004427343
        %v7486 = vsel %vm7485, %v7483, %v7480
        %v7487 = vadd.f32 %v7290, 1.0
        %v7488 = vlog2.pop %v7487
        %v7489 = vmul.f32 %v7488, 0.6931472
        %v7490 = vmul.f32 -0.5, %v7290
        %v7491 = vadd.f32 %v7490, 1.0
        %v7492 = vmul.f32 %v7491, %v7290
        %v7493 = vand.u32 2147483647, %v7290
        %vm7494 = vcmp.lt.f32.partialorder %v7493, 0.0004427343
        %v7495 = vsel %vm7494, %v7492, %v7489
        %v7496 = vadd.f32 %v7292, 1.0
        %v7497 = vlog2.pop %v7496
        %v7498 = vmul.f32 %v7497, 0.6931472
        %v7499 = vmul.f32 -0.5, %v7292
        %v7500 = vadd.f32 %v7499, 1.0
        %v7501 = vmul.f32 %v7500, %v7292
        %v7502 = vand.u32 2147483647, %v7292
        %vm7503 = vcmp.lt.f32.partialorder %v7502, 0.0004427343
        %v7504 = vsel %vm7503, %v7501, %v7498
        %v7505 = vadd.f32 %v7294, 1.0
        %v7506 = vlog2.pop %v7505
        %v7507 = vmul.f32 %v7506, 0.6931472
        %v7508 = vmul.f32 -0.5, %v7294
        %v7509 = vadd.f32 %v7508, 1.0
        %v7510 = vmul.f32 %v7509, %v7294
        %v7511 = vand.u32 2147483647, %v7294
        %vm7512 = vcmp.lt.f32.partialorder %v7511, 0.0004427343
        %v7513 = vsel %vm7512, %v7510, %v7507
        %v7514 = vadd.f32 %v7296, 1.0
        %v7515 = vlog2.pop %v7514
        %v7516 = vmul.f32 %v7515, 0.6931472
        %v7517 = vmul.f32 -0.5, %v7296
        %v7518 = vadd.f32 %v7517, 1.0
        %v7519 = vmul.f32 %v7518, %v7296
        %v7520 = vand.u32 2147483647, %v7296
        %vm7521 = vcmp.lt.f32.partialorder %v7520, 0.0004427343
        %v7522 = vsel %vm7521, %v7519, %v7516
        %v7523 = vadd.f32 %v7298, 1.0
        %v7524 = vlog2.pop %v7523
        %v7525 = vmul.f32 %v7524, 0.6931472
        %v7526 = vmul.f32 -0.5, %v7298
        %v7527 = vadd.f32 %v7526, 1.0
        %v7528 = vmul.f32 %v7527, %v7298
        %v7529 = vand.u32 2147483647, %v7298
        %vm7530 = vcmp.lt.f32.partialorder %v7529, 0.0004427343
        %v7531 = vsel %vm7530, %v7528, %v7525
        %v7532 = vadd.f32 %v7300, 1.0
        %v7533 = vlog2.pop %v7532
        %v7534 = vmul.f32 %v7533, 0.6931472
        %v7535 = vmul.f32 -0.5, %v7300
        %v7536 = vadd.f32 %v7535, 1.0
        %v7537 = vmul.f32 %v7536, %v7300
        %v7538 = vand.u32 2147483647, %v7300
        %vm7539 = vcmp.lt.f32.partialorder %v7538, 0.0004427343
        %v7540 = vsel %vm7539, %v7537, %v7534
        %v7541 = vadd.f32 %v7302, 1.0
        %v7542 = vlog2.pop %v7541
        %v7543 = vmul.f32 %v7542, 0.6931472
        %v7544 = vmul.f32 -0.5, %v7302
        %v7545 = vadd.f32 %v7544, 1.0
        %v7546 = vmul.f32 %v7545, %v7302
        %v7547 = vand.u32 2147483647, %v7302
        %vm7548 = vcmp.lt.f32.partialorder %v7547, 0.0004427343
        %v7549 = vsel %vm7548, %v7546, %v7543
        %v7550 = vadd.f32 %v7304, 1.0
        %v7551 = vlog2.pop %v7550
        %v7552 = vmul.f32 %v7551, 0.6931472
        %v7553 = vmul.f32 -0.5, %v7304
        %v7554 = vadd.f32 %v7553, 1.0
        %v7555 = vmul.f32 %v7554, %v7304
        %v7556 = vand.u32 2147483647, %v7304
        %vm7557 = vcmp.lt.f32.partialorder %v7556, 0.0004427343
        %v7558 = vsel %vm7557, %v7555, %v7552
        %v7559 = vadd.f32 %v7306, 1.0
        %v7560 = vlog2.pop %v7559
        %v7561 = vmul.f32 %v7560, 0.6931472
        %v7562 = vmul.f32 -0.5, %v7306
        %v7563 = vadd.f32 %v7562, 1.0
        %v7564 = vmul.f32 %v7563, %v7306
        %v7565 = vand.u32 2147483647, %v7306
        %vm7566 = vcmp.lt.f32.partialorder %v7565, 0.0004427343
        %v7567 = vsel %vm7566, %v7564, %v7561
        %v7568 = vadd.f32 %v7308, 1.0
        %v7569 = vlog2.pop %v7568
        %v7570 = vmul.f32 %v7569, 0.6931472
        %v7571 = vmul.f32 -0.5, %v7308
        %v7572 = vadd.f32 %v7571, 1.0
        %v7573 = vmul.f32 %v7572, %v7308
        %v7574 = vand.u32 2147483647, %v7308
        %vm7575 = vcmp.lt.f32.partialorder %v7574, 0.0004427343
        %v7576 = vsel %vm7575, %v7573, %v7570
        %v7577 = vadd.f32 %v7310, 1.0
        %v7578 = vlog2.pop %v7577
        %v7579 = vmul.f32 %v7578, 0.6931472
        %v7580 = vmul.f32 -0.5, %v7310
        %v7581 = vadd.f32 %v7580, 1.0
        %v7582 = vmul.f32 %v7581, %v7310
        %v7583 = vand.u32 2147483647, %v7310
        %vm7584 = vcmp.lt.f32.partialorder %v7583, 0.0004427343
        %v7585 = vsel %vm7584, %v7582, %v7579
        %v7586 = vadd.f32 %v7312, 1.0
        %v7587 = vlog2.pop %v7586
        %v7588 = vmul.f32 %v7587, 0.6931472
        %v7589 = vmul.f32 -0.5, %v7312
        %v7590 = vadd.f32 %v7589, 1.0
        %v7591 = vmul.f32 %v7590, %v7312
        %v7592 = vand.u32 2147483647, %v7312
        %vm7593 = vcmp.lt.f32.partialorder %v7592, 0.0004427343
        %v7594 = vsel %vm7593, %v7591, %v7588
        %v7595 = vadd.f32 %v7314, 1.0
        %v7596 = vlog2.pop %v7595
        %v7597 = vmul.f32 %v7596, 0.6931472
        %v7598 = vmul.f32 -0.5, %v7314
        %v7599 = vadd.f32 %v7598, 1.0
        %v7600 = vmul.f32 %v7599, %v7314
        %v7601 = vand.u32 2147483647, %v7314
        %vm7602 = vcmp.lt.f32.partialorder %v7601, 0.0004427343
        %v7603 = vsel %vm7602, %v7600, %v7597
        %v7604 = vadd.f32 %v7316, 1.0
        %v7605 = vlog2.pop %v7604
        %v7606 = vmul.f32 %v7605, 0.6931472
        %v7607 = vmul.f32 -0.5, %v7316
        %v7608 = vadd.f32 %v7607, 1.0
        %v7609 = vmul.f32 %v7608, %v7316
        %v7610 = vand.u32 2147483647, %v7316
        %vm7611 = vcmp.lt.f32.partialorder %v7610, 0.0004427343
        %v7612 = vsel %vm7611, %v7609, %v7606
        %v7613 = vadd.f32 %v7318, 1.0
        %v7614 = vlog2.pop %v7613
        %v7615 = vmul.f32 %v7614, 0.6931472
        %v7616 = vmul.f32 -0.5, %v7318
        %v7617 = vadd.f32 %v7616, 1.0
        %v7618 = vmul.f32 %v7617, %v7318
        %v7619 = vand.u32 2147483647, %v7318
        %vm7620 = vcmp.lt.f32.partialorder %v7619, 0.0004427343
        %v7621 = vsel %vm7620, %v7618, %v7615
        %v7622 = vadd.f32 %v7320, 1.0
        %v7623 = vlog2.pop %v7622
        %v7624 = vmul.f32 %v7623, 0.6931472
        %v7625 = vmul.f32 -0.5, %v7320
        %v7626 = vadd.f32 %v7625, 1.0
        %v7627 = vmul.f32 %v7626, %v7320
        %v7628 = vand.u32 2147483647, %v7320
        %vm7629 = vcmp.lt.f32.partialorder %v7628, 0.0004427343
        %v7630 = vsel %vm7629, %v7627, %v7624
        %v7631 = vadd.f32 %v7322, 1.0
        %v7632 = vlog2.pop %v7631
        %v7633 = vmul.f32 %v7632, 0.6931472
        %v7634 = vmul.f32 -0.5, %v7322
        %v7635 = vadd.f32 %v7634, 1.0
        %v7636 = vmul.f32 %v7635, %v7322
        %v7637 = vand.u32 2147483647, %v7322
        %vm7638 = vcmp.lt.f32.partialorder %v7637, 0.0004427343
        %v7639 = vsel %vm7638, %v7636, %v7633
        %v7640 = vadd.f32 %v7324, 1.0
        %v7641 = vlog2.pop %v7640
        %v7642 = vmul.f32 %v7641, 0.6931472
        %v7643 = vmul.f32 -0.5, %v7324
        %v7644 = vadd.f32 %v7643, 1.0
        %v7645 = vmul.f32 %v7644, %v7324
        %v7646 = vand.u32 2147483647, %v7324
        %vm7647 = vcmp.lt.f32.partialorder %v7646, 0.0004427343
        %v7648 = vsel %vm7647, %v7645, %v7642
        %v7649 = vadd.f32 %v7326, 1.0
        %v7650 = vlog2.pop %v7649
        %v7651 = vmul.f32 %v7650, 0.6931472
        %v7652 = vmul.f32 -0.5, %v7326
        %v7653 = vadd.f32 %v7652, 1.0
        %v7654 = vmul.f32 %v7653, %v7326
        %v7655 = vand.u32 2147483647, %v7326
        %vm7656 = vcmp.lt.f32.partialorder %v7655, 0.0004427343
        %v7657 = vsel %vm7656, %v7654, %v7651
        %v7658 = vadd.f32 %v7328, 1.0
        %v7659 = vlog2.pop %v7658
        %v7660 = vmul.f32 %v7659, 0.6931472
        %v7661 = vmul.f32 -0.5, %v7328
        %v7662 = vadd.f32 %v7661, 1.0
        %v7663 = vmul.f32 %v7662, %v7328
        %v7664 = vand.u32 2147483647, %v7328
        %vm7665 = vcmp.lt.f32.partialorder %v7664, 0.0004427343
        %v7666 = vsel %vm7665, %v7663, %v7660
        %v7667 = vadd.f32 %v7330, 1.0
        %v7668 = vlog2.pop %v7667
        %v7669 = vmul.f32 %v7668, 0.6931472
        %v7670 = vmul.f32 -0.5, %v7330
        %v7671 = vadd.f32 %v7670, 1.0
        %v7672 = vmul.f32 %v7671, %v7330
        %v7673 = vand.u32 2147483647, %v7330
        %vm7674 = vcmp.lt.f32.partialorder %v7673, 0.0004427343
        %v7675 = vsel %vm7674, %v7672, %v7669
        %v7676 = vadd.f32 %v7332, 1.0
        %v7677 = vlog2.pop %v7676
        %v7678 = vmul.f32 %v7677, 0.6931472
        %v7679 = vmul.f32 -0.5, %v7332
        %v7680 = vadd.f32 %v7679, 1.0
        %v7681 = vmul.f32 %v7680, %v7332
        %v7682 = vand.u32 2147483647, %v7332
        %vm7683 = vcmp.lt.f32.partialorder %v7682, 0.0004427343
        %v7684 = vsel %vm7683, %v7681, %v7678
        %v7685 = vadd.f32 %v7334, 1.0
        %v7686 = vlog2.pop %v7685
        %v7687 = vmul.f32 %v7686, 0.6931472
        %v7688 = vmul.f32 -0.5, %v7334
        %v7689 = vadd.f32 %v7688, 1.0
        %v7690 = vmul.f32 %v7689, %v7334
        %v7691 = vand.u32 2147483647, %v7334
        %vm7692 = vcmp.lt.f32.partialorder %v7691, 0.0004427343
        %v7693 = vsel %vm7692, %v7690, %v7687
        %v7694 = vadd.f32 %v7336, 1.0
        %v7695 = vlog2.pop %v7694
        %v7696 = vmul.f32 %v7695, 0.6931472
        %v7697 = vmul.f32 -0.5, %v7336
        %v7698 = vadd.f32 %v7697, 1.0
        %v7699 = vmul.f32 %v7698, %v7336
        %v7700 = vand.u32 2147483647, %v7336
        %vm7701 = vcmp.lt.f32.partialorder %v7700, 0.0004427343
        %v7702 = vsel %vm7701, %v7699, %v7696
        %v7703 = vadd.f32 %v7338, 1.0
        %v7704 = vlog2.pop %v7703
        %v7705 = vmul.f32 %v7704, 0.6931472
        %v7706 = vmul.f32 -0.5, %v7338
        %v7707 = vadd.f32 %v7706, 1.0
        %v7708 = vmul.f32 %v7707, %v7338
        %v7709 = vand.u32 2147483647, %v7338
        %vm7710 = vcmp.lt.f32.partialorder %v7709, 0.0004427343
        %v7711 = vsel %vm7710, %v7708, %v7705
        %v7712 = vadd.f32 %v7340, 1.0
        %v7713 = vlog2.pop %v7712
        %v7714 = vmul.f32 %v7713, 0.6931472
        %v7715 = vmul.f32 -0.5, %v7340
        %v7716 = vadd.f32 %v7715, 1.0
        %v7717 = vmul.f32 %v7716, %v7340
        %v7718 = vand.u32 2147483647, %v7340
        %vm7719 = vcmp.lt.f32.partialorder %v7718, 0.0004427343
        %v7720 = vsel %vm7719, %v7717, %v7714
        %v7721 = vadd.f32 %v7342, 1.0
        %v7722 = vlog2.pop %v7721
        %v7723 = vmul.f32 %v7722, 0.6931472
        %v7724 = vmul.f32 -0.5, %v7342
        %v7725 = vadd.f32 %v7724, 1.0
        %v7726 = vmul.f32 %v7725, %v7342
        %v7727 = vand.u32 2147483647, %v7342
        %vm7728 = vcmp.lt.f32.partialorder %v7727, 0.0004427343
        %v7729 = vsel %vm7728, %v7726, %v7723
        %v7730 = vadd.f32 %v7344, 1.0
        %v7731 = vlog2.pop %v7730
        %v7732 = vmul.f32 %v7731, 0.6931472
        %v7733 = vmul.f32 -0.5, %v7344
        %v7734 = vadd.f32 %v7733, 1.0
        %v7735 = vmul.f32 %v7734, %v7344
        %v7736 = vand.u32 2147483647, %v7344
        %vm7737 = vcmp.lt.f32.partialorder %v7736, 0.0004427343
        %v7738 = vsel %vm7737, %v7735, %v7732
        %v7739 = vadd.f32 %v7346, 1.0
        %v7740 = vlog2.pop %v7739
        %v7741 = vmul.f32 %v7740, 0.6931472
        %v7742 = vmul.f32 -0.5, %v7346
        %v7743 = vadd.f32 %v7742, 1.0
        %v7744 = vmul.f32 %v7743, %v7346
        %v7745 = vand.u32 2147483647, %v7346
        %vm7746 = vcmp.lt.f32.partialorder %v7745, 0.0004427343
        %v7747 = vsel %vm7746, %v7744, %v7741
        %v7748 = vadd.f32 %v7348, 1.0
        %v7749 = vlog2.pop %v7748
        %v7750 = vmul.f32 %v7749, 0.6931472
        %v7751 = vmul.f32 -0.5, %v7348
        %v7752 = vadd.f32 %v7751, 1.0
        %v7753 = vmul.f32 %v7752, %v7348
        %v7754 = vand.u32 2147483647, %v7348
        %vm7755 = vcmp.lt.f32.partialorder %v7754, 0.0004427343
        %v7756 = vsel %vm7755, %v7753, %v7750
        %v7757 = vadd.f32 %v7350, 1.0
        %v7758 = vlog2.pop %v7757
        %v7759 = vmul.f32 %v7758, 0.6931472
        %v7760 = vmul.f32 -0.5, %v7350
        %v7761 = vadd.f32 %v7760, 1.0
        %v7762 = vmul.f32 %v7761, %v7350
        %v7763 = vand.u32 2147483647, %v7350
        %vm7764 = vcmp.lt.f32.partialorder %v7763, 0.0004427343
        %v7765 = vsel %vm7764, %v7762, %v7759
        %v7766 = vadd.f32 %v7352, 1.0
        %v7767 = vlog2.pop %v7766
        %v7768 = vmul.f32 %v7767, 0.6931472
        %v7769 = vmul.f32 -0.5, %v7352
        %v7770 = vadd.f32 %v7769, 1.0
        %v7771 = vmul.f32 %v7770, %v7352
        %v7772 = vand.u32 2147483647, %v7352
        %vm7773 = vcmp.lt.f32.partialorder %v7772, 0.0004427343
        %v7774 = vsel %vm7773, %v7771, %v7768
        %v7775 = vadd.f32 %v7354, 1.0
        %v7776 = vlog2.pop %v7775
        %v7777 = vmul.f32 %v7776, 0.6931472
        %v7778 = vmul.f32 -0.5, %v7354
        %v7779 = vadd.f32 %v7778, 1.0
        %v7780 = vmul.f32 %v7779, %v7354
        %v7781 = vand.u32 2147483647, %v7354
        %vm7782 = vcmp.lt.f32.partialorder %v7781, 0.0004427343
        %v7783 = vsel %vm7782, %v7780, %v7777
        %v7784 = vadd.f32 %v7356, 1.0
        %v7785 = vlog2.pop %v7784
        %v7786 = vmul.f32 %v7785, 0.6931472
        %v7787 = vmul.f32 -0.5, %v7356
        %v7788 = vadd.f32 %v7787, 1.0
        %v7789 = vmul.f32 %v7788, %v7356
        %v7790 = vand.u32 2147483647, %v7356
        %vm7791 = vcmp.lt.f32.partialorder %v7790, 0.0004427343
        %v7792 = vsel %vm7791, %v7789, %v7786
        %v7793 = vadd.f32 %v7358, 1.0
        %v7794 = vlog2.pop %v7793
        %v7795 = vmul.f32 %v7794, 0.6931472
        %v7796 = vmul.f32 -0.5, %v7358
        %v7797 = vadd.f32 %v7796, 1.0
        %v7798 = vmul.f32 %v7797, %v7358
        %v7799 = vand.u32 2147483647, %v7358
        %vm7800 = vcmp.lt.f32.partialorder %v7799, 0.0004427343
        %v7801 = vsel %vm7800, %v7798, %v7795
        %v7802 = vadd.f32 %v7360, 1.0
        %v7803 = vlog2.pop %v7802
        %v7804 = vmul.f32 %v7803, 0.6931472
        %v7805 = vmul.f32 -0.5, %v7360
        %v7806 = vadd.f32 %v7805, 1.0
        %v7807 = vmul.f32 %v7806, %v7360
        %v7808 = vand.u32 2147483647, %v7360
        %vm7809 = vcmp.lt.f32.partialorder %v7808, 0.0004427343
        %v7810 = vsel %vm7809, %v7807, %v7804
        %v7811 = vadd.f32 %v7362, 1.0
        %v7812 = vlog2.pop %v7811
        %v7813 = vmul.f32 %v7812, 0.6931472
        %v7814 = vmul.f32 -0.5, %v7362
        %v7815 = vadd.f32 %v7814, 1.0
        %v7816 = vmul.f32 %v7815, %v7362
        %v7817 = vand.u32 2147483647, %v7362
        %vm7818 = vcmp.lt.f32.partialorder %v7817, 0.0004427343
        %v7819 = vsel %vm7818, %v7816, %v7813
        %v7820 = vadd.f32 %v7364, 1.0
        %v7821 = vlog2.pop %v7820
        %v7822 = vmul.f32 %v7821, 0.6931472
        %v7823 = vmul.f32 -0.5, %v7364
        %v7824 = vadd.f32 %v7823, 1.0
        %v7825 = vmul.f32 %v7824, %v7364
        %v7826 = vand.u32 2147483647, %v7364
        %vm7827 = vcmp.lt.f32.partialorder %v7826, 0.0004427343
        %v7828 = vsel %vm7827, %v7825, %v7822
        %v7829 = vadd.f32 %v7366, 1.0
        %v7830 = vlog2.pop %v7829
        %v7831 = vmul.f32 %v7830, 0.6931472
        %v7832 = vmul.f32 -0.5, %v7366
        %v7833 = vadd.f32 %v7832, 1.0
        %v7834 = vmul.f32 %v7833, %v7366
        %v7835 = vand.u32 2147483647, %v7366
        %vm7836 = vcmp.lt.f32.partialorder %v7835, 0.0004427343
        %v7837 = vsel %vm7836, %v7834, %v7831
        %v7838 = vadd.f32 %v7368, 1.0
        %v7839 = vlog2.pop %v7838
        %v7840 = vmul.f32 %v7839, 0.6931472
        %v7841 = vmul.f32 -0.5, %v7368
        %v7842 = vadd.f32 %v7841, 1.0
        %v7843 = vmul.f32 %v7842, %v7368
        %v7844 = vand.u32 2147483647, %v7368
        %vm7845 = vcmp.lt.f32.partialorder %v7844, 0.0004427343
        %v7846 = vsel %vm7845, %v7843, %v7840
        %v7847 = vadd.f32 %v7370, 1.0
        %v7848 = vlog2.pop %v7847
        %v7849 = vmul.f32 %v7848, 0.6931472
        %v7850 = vmul.f32 -0.5, %v7370
        %v7851 = vadd.f32 %v7850, 1.0
        %v7852 = vmul.f32 %v7851, %v7370
        %v7853 = vand.u32 2147483647, %v7370
        %vm7854 = vcmp.lt.f32.partialorder %v7853, 0.0004427343
        %v7855 = vsel %vm7854, %v7852, %v7849
        %v7856 = vadd.f32 %v7372, 1.0
        %v7857 = vlog2.pop %v7856
        %v7858 = vmul.f32 %v7857, 0.6931472
        %v7859 = vmul.f32 -0.5, %v7372
        %v7860 = vadd.f32 %v7859, 1.0
        %v7861 = vmul.f32 %v7860, %v7372
        %v7862 = vand.u32 2147483647, %v7372
        %vm7863 = vcmp.lt.f32.partialorder %v7862, 0.0004427343
        %v7864 = vsel %vm7863, %v7861, %v7858
        %v7865 = vadd.f32 %v7374, 1.0
        %v7866 = vlog2.pop %v7865
        %v7867 = vmul.f32 %v7866, 0.6931472
        %v7868 = vmul.f32 -0.5, %v7374
        %v7869 = vadd.f32 %v7868, 1.0
        %v7870 = vmul.f32 %v7869, %v7374
        %v7871 = vand.u32 2147483647, %v7374
        %vm7872 = vcmp.lt.f32.partialorder %v7871, 0.0004427343
        %v7873 = vsel %vm7872, %v7870, %v7867
        %v7874 = vadd.f32 %v7376, 1.0
        %v7875 = vlog2.pop %v7874
        %v7876 = vmul.f32 %v7875, 0.6931472
        %v7877 = vmul.f32 -0.5, %v7376
        %v7878 = vadd.f32 %v7877, 1.0
        %v7879 = vmul.f32 %v7878, %v7376
        %v7880 = vand.u32 2147483647, %v7376
        %vm7881 = vcmp.lt.f32.partialorder %v7880, 0.0004427343
        %v7882 = vsel %vm7881, %v7879, %v7876
        %v7883 = vadd.f32 %v7378, 1.0
        %v7884 = vlog2.pop %v7883
        %v7885 = vmul.f32 %v7884, 0.6931472
        %v7886 = vmul.f32 -0.5, %v7378
        %v7887 = vadd.f32 %v7886, 1.0
        %v7888 = vmul.f32 %v7887, %v7378
        %v7889 = vand.u32 2147483647, %v7378
        %vm7890 = vcmp.lt.f32.partialorder %v7889, 0.0004427343
        %v7891 = vsel %vm7890, %v7888, %v7885
        %v7892 = vadd.f32 %v7380, 1.0
        %v7893 = vlog2.pop %v7892
        %v7894 = vmul.f32 %v7893, 0.6931472
        %v7895 = vmul.f32 -0.5, %v7380
        %v7896 = vadd.f32 %v7895, 1.0
        %v7897 = vmul.f32 %v7896, %v7380
        %v7898 = vand.u32 2147483647, %v7380
        %vm7899 = vcmp.lt.f32.partialorder %v7898, 0.0004427343
        %v7900 = vsel %vm7899, %v7897, %v7894
        %v7901 = vadd.f32 %v7382, 1.0
        %v7902 = vlog2.pop %v7901
        %v7903 = vmul.f32 %v7902, 0.6931472
        %v7904 = vmul.f32 -0.5, %v7382
        %v7905 = vadd.f32 %v7904, 1.0
        %v7906 = vmul.f32 %v7905, %v7382
        %v7907 = vand.u32 2147483647, %v7382
        %vm7908 = vcmp.lt.f32.partialorder %v7907, 0.0004427343
        %v7909 = vsel %vm7908, %v7906, %v7903
        %v7910 = vadd.f32 %v7384, 1.0
        %v7911 = vlog2.pop %v7910
        %v7912 = vmul.f32 %v7911, 0.6931472
        %v7913 = vmul.f32 -0.5, %v7384
        %v7914 = vadd.f32 %v7913, 1.0
        %v7915 = vmul.f32 %v7914, %v7384
        %v7916 = vand.u32 2147483647, %v7384
        %vm7917 = vcmp.lt.f32.partialorder %v7916, 0.0004427343
        %v7918 = vsel %vm7917, %v7915, %v7912
        %v7919 = vadd.f32 %v7386, 1.0
        %v7920 = vlog2.pop %v7919
        %v7921 = vmul.f32 %v7920, 0.6931472
        %v7922 = vmul.f32 -0.5, %v7386
        %v7923 = vadd.f32 %v7922, 1.0
        %v7924 = vmul.f32 %v7923, %v7386
        %v7925 = vand.u32 2147483647, %v7386
        %vm7926 = vcmp.lt.f32.partialorder %v7925, 0.0004427343
        %v7927 = vsel %vm7926, %v7924, %v7921
        %v7928 = vadd.f32 %v7388, 1.0
        %v7929 = vlog2.pop %v7928
        %v7930 = vmul.f32 %v7929, 0.6931472
        %v7931 = vmul.f32 -0.5, %v7388
        %v7932 = vadd.f32 %v7931, 1.0
        %v7933 = vmul.f32 %v7932, %v7388
        %v7934 = vand.u32 2147483647, %v7388
        %vm7935 = vcmp.lt.f32.partialorder %v7934, 0.0004427343
        %v7936 = vsel %vm7935, %v7933, %v7930
        %v7937 = vadd.f32 %v7390, 1.0
        %v7938 = vlog2.pop %v7937
        %v7939 = vmul.f32 %v7938, 0.6931472
        %v7940 = vmul.f32 -0.5, %v7390
        %v7941 = vadd.f32 %v7940, 1.0
        %v7942 = vmul.f32 %v7941, %v7390
        %v7943 = vand.u32 2147483647, %v7390
        %vm7944 = vcmp.lt.f32.partialorder %v7943, 0.0004427343
        %v7945 = vsel %vm7944, %v7942, %v7939
        %v7946 = vadd.f32 %v7392, 1.0
        %v7947 = vlog2.pop %v7946
        %v7948 = vmul.f32 %v7947, 0.6931472
        %v7949 = vmul.f32 -0.5, %v7392
        %v7950 = vadd.f32 %v7949, 1.0
        %v7951 = vmul.f32 %v7950, %v7392
        %v7952 = vand.u32 2147483647, %v7392
        %vm7953 = vcmp.lt.f32.partialorder %v7952, 0.0004427343
        %v7954 = vsel %vm7953, %v7951, %v7948
        %v7955 = vadd.f32 %v7394, 1.0
        %v7956 = vlog2.pop %v7955
        %v7957 = vmul.f32 %v7956, 0.6931472
        %v7958 = vmul.f32 -0.5, %v7394
        %v7959 = vadd.f32 %v7958, 1.0
        %v7960 = vmul.f32 %v7959, %v7394
        %v7961 = vand.u32 2147483647, %v7394
        %vm7962 = vcmp.lt.f32.partialorder %v7961, 0.0004427343
        %v7963 = vsel %vm7962, %v7960, %v7957
        %v7964 = vadd.f32 %v7396, 1.0
        %v7965 = vlog2.pop %v7964
        %v7966 = vmul.f32 %v7965, 0.6931472
        %v7967 = vmul.f32 -0.5, %v7396
        %v7968 = vadd.f32 %v7967, 1.0
        %v7969 = vmul.f32 %v7968, %v7396
        %v7970 = vand.u32 2147483647, %v7396
        %vm7971 = vcmp.lt.f32.partialorder %v7970, 0.0004427343
        %v7972 = vsel %vm7971, %v7969, %v7966
        %v7973 = vmul.f32 %v7405, 0.01
        %v7974 = vmul.f32 %v7414, 0.01
        %v7975 = vmul.f32 %v7423, 0.01
        %v7976 = vmul.f32 %v7432, 0.01
        %v7977 = vmul.f32 %v7441, 0.01
        %v7978 = vmul.f32 %v7450, 0.01
        %v7979 = vmul.f32 %v7459, 0.01
        %v7980 = vmul.f32 %v7468, 0.01
        %v7981 = vmul.f32 %v7477, 0.01
        %v7982 = vmul.f32 %v7486, 0.01
        %v7983 = vmul.f32 %v7495, 0.01
        %v7984 = vmul.f32 %v7504, 0.01
        %v7985 = vmul.f32 %v7513, 0.01
        %v7986 = vmul.f32 %v7522, 0.01
        %v7987 = vmul.f32 %v7531, 0.01
        %v7988 = vmul.f32 %v7540, 0.01
        %v7989 = vmul.f32 %v7549, 0.01
        %v7990 = vmul.f32 %v7558, 0.01
        %v7991 = vmul.f32 %v7567, 0.01
        %v7992 = vmul.f32 %v7576, 0.01
        %v7993 = vmul.f32 %v7585, 0.01
        %v7994 = vmul.f32 %v7594, 0.01
        %v7995 = vmul.f32 %v7603, 0.01
        %v7996 = vmul.f32 %v7612, 0.01
        %v7997 = vmul.f32 %v7621, 0.01
        %v7998 = vmul.f32 %v7630, 0.01
        %v7999 = vmul.f32 %v7639, 0.01
        %v8000 = vmul.f32 %v7648, 0.01
        %v8001 = vmul.f32 %v7657, 0.01
        %v8002 = vmul.f32 %v7666, 0.01
        %v8003 = vmul.f32 %v7675, 0.01
        %v8004 = vmul.f32 %v7684, 0.01
        %v8005 = vmul.f32 %v7693, 0.01
        %v8006 = vmul.f32 %v7702, 0.01
        %v8007 = vmul.f32 %v7711, 0.01
        %v8008 = vmul.f32 %v7720, 0.01
        %v8009 = vmul.f32 %v7729, 0.01
        %v8010 = vmul.f32 %v7738, 0.01
        %v8011 = vmul.f32 %v7747, 0.01
        %v8012 = vmul.f32 %v7756, 0.01
        %v8013 = vmul.f32 %v7765, 0.01
        %v8014 = vmul.f32 %v7774, 0.01
        %v8015 = vmul.f32 %v7783, 0.01
        %v8016 = vmul.f32 %v7792, 0.01
        %v8017 = vmul.f32 %v7801, 0.01
        %v8018 = vmul.f32 %v7810, 0.01
        %v8019 = vmul.f32 %v7819, 0.01
        %v8020 = vmul.f32 %v7828, 0.01
        %v8021 = vmul.f32 %v7837, 0.01
        %v8022 = vmul.f32 %v7846, 0.01
        %v8023 = vmul.f32 %v7855, 0.01
        %v8024 = vmul.f32 %v7864, 0.01
        %v8025 = vmul.f32 %v7873, 0.01
        %v8026 = vmul.f32 %v7882, 0.01
        %v8027 = vmul.f32 %v7891, 0.01
        %v8028 = vmul.f32 %v7900, 0.01
        %v8029 = vmul.f32 %v7909, 0.01
        %v8030 = vmul.f32 %v7918, 0.01
        %v8031 = vmul.f32 %v7927, 0.01
        %v8032 = vmul.f32 %v7936, 0.01
        %v8033 = vmul.f32 %v7945, 0.01
        %v8034 = vmul.f32 %v7954, 0.01
        %v8035 = vmul.f32 %v7963, 0.01
        %v8036 = vmul.f32 %v7972, 0.01
        %v8037 = vsel %vm7205, %v7013, %v7973
        %v8038 = vsel %vm7206, %v7014, %v7974
        %v8039 = vsel %vm7207, %v7015, %v7975
        %v8040 = vsel %vm7208, %v7016, %v7976
        %v8041 = vsel %vm7209, %v7017, %v7977
        %v8042 = vsel %vm7210, %v7018, %v7978
        %v8043 = vsel %vm7211, %v7019, %v7979
        %v8044 = vsel %vm7212, %v7020, %v7980
        %v8045 = vsel %vm7213, %v7021, %v7981
        %v8046 = vsel %vm7214, %v7022, %v7982
        %v8047 = vsel %vm7215, %v7023, %v7983
        %v8048 = vsel %vm7216, %v7024, %v7984
        %v8049 = vsel %vm7217, %v7025, %v7985
        %v8050 = vsel %vm7218, %v7026, %v7986
        %v8051 = vsel %vm7219, %v7027, %v7987
        %v8052 = vsel %vm7220, %v7028, %v7988
        %v8053 = vsel %vm7221, %v7029, %v7989
        %v8054 = vsel %vm7222, %v7030, %v7990
        %v8055 = vsel %vm7223, %v7031, %v7991
        %v8056 = vsel %vm7224, %v7032, %v7992
        %v8057 = vsel %vm7225, %v7033, %v7993
        %v8058 = vsel %vm7226, %v7034, %v7994
        %v8059 = vsel %vm7227, %v7035, %v7995
        %v8060 = vsel %vm7228, %v7036, %v7996
        %v8061 = vsel %vm7229, %v7037, %v7997
        %v8062 = vsel %vm7230, %v7038, %v7998
        %v8063 = vsel %vm7231, %v7039, %v7999
        %v8064 = vsel %vm7232, %v7040, %v8000
        %v8065 = vsel %vm7233, %v7041, %v8001
        %v8066 = vsel %vm7234, %v7042, %v8002
        %v8067 = vsel %vm7235, %v7043, %v8003
        %v8068 = vsel %vm7236, %v7044, %v8004
        %v8069 = vsel %vm7237, %v7045, %v8005
        %v8070 = vsel %vm7238, %v7046, %v8006
        %v8071 = vsel %vm7239, %v7047, %v8007
        %v8072 = vsel %vm7240, %v7048, %v8008
        %v8073 = vsel %vm7241, %v7049, %v8009
        %v8074 = vsel %vm7242, %v7050, %v8010
        %v8075 = vsel %vm7243, %v7051, %v8011
        %v8076 = vsel %vm7244, %v7052, %v8012
        %v8077 = vsel %vm7245, %v7053, %v8013
        %v8078 = vsel %vm7246, %v7054, %v8014
        %v8079 = vsel %vm7247, %v7055, %v8015
        %v8080 = vsel %vm7248, %v7056, %v8016
        %v8081 = vsel %vm7249, %v7057, %v8017
        %v8082 = vsel %vm7250, %v7058, %v8018
        %v8083 = vsel %vm7251, %v7059, %v8019
        %v8084 = vsel %vm7252, %v7060, %v8020
        %v8085 = vsel %vm7253, %v7061, %v8021
        %v8086 = vsel %vm7254, %v7062, %v8022
        %v8087 = vsel %vm7255, %v7063, %v8023
        %v8088 = vsel %vm7256, %v7064, %v8024
        %v8089 = vsel %vm7257, %v7065, %v8025
        %v8090 = vsel %vm7258, %v7066, %v8026
        %v8091 = vsel %vm7259, %v7067, %v8027
        %v8092 = vsel %vm7260, %v7068, %v8028
        %v8093 = vsel %vm7261, %v7069, %v8029
        %v8094 = vsel %vm7262, %v7070, %v8030
        %v8095 = vsel %vm7263, %v7071, %v8031
        %v8096 = vsel %vm7264, %v7072, %v8032
        %v8097 = vsel %vm7265, %v7073, %v8033
        %v8098 = vsel %vm7266, %v7074, %v8034
        %v8099 = vsel %vm7267, %v7075, %v8035
        %v8100 = vsel %vm7268, %v7076, %v8036
        %v8101 = vld [vmem:[%s10] sm:$0xff]
        %v8102 = vld [vmem:[%s10 + $0x8] sm:$0xff]
        %v8103 = vld [vmem:[%s10 + $0x10] sm:$0xff]
        %v8104 = vld [vmem:[%s10 + $0x18] sm:$0xff]
        %v8105 = vld [vmem:[%s10 + $0x20] sm:$0xff]
        %v8106 = vld [vmem:[%s10 + $0x28] sm:$0xff]
        %v8107 = vld [vmem:[%s10 + $0x30] sm:$0xff]
        %v8108 = vld [vmem:[%s10 + $0x38] sm:$0xff]
        %v8109 = vld [vmem:[%s10 + $0x40] sm:$0xff]
        %v8110 = vld [vmem:[%s10 + $0x48] sm:$0xff]
        %v8111 = vld [vmem:[%s10 + $0x50] sm:$0xff]
        %v8112 = vld [vmem:[%s10 + $0x58] sm:$0xff]
        %v8113 = vld [vmem:[%s10 + $0x60] sm:$0xff]
        %v8114 = vld [vmem:[%s10 + $0x68] sm:$0xff]
        %v8115 = vld [vmem:[%s10 + $0x70] sm:$0xff]
        %v8116 = vld [vmem:[%s10 + $0x78] sm:$0xff]
        %v8117 = vld [vmem:[%s10 + $0x80] sm:$0xff]
        %v8118 = vld [vmem:[%s10 + $0x88] sm:$0xff]
        %v8119 = vld [vmem:[%s10 + $0x90] sm:$0xff]
        %v8120 = vld [vmem:[%s10 + $0x98] sm:$0xff]
        %v8121 = vld [vmem:[%s10 + $0xa0] sm:$0xff]
        %v8122 = vld [vmem:[%s10 + $0xa8] sm:$0xff]
        %v8123 = vld [vmem:[%s10 + $0xb0] sm:$0xff]
        %v8124 = vld [vmem:[%s10 + $0xb8] sm:$0xff]
        %v8125 = vld [vmem:[%s10 + $0xc0] sm:$0xff]
        %v8126 = vld [vmem:[%s10 + $0xc8] sm:$0xff]
        %v8127 = vld [vmem:[%s10 + $0xd0] sm:$0xff]
        %v8128 = vld [vmem:[%s10 + $0xd8] sm:$0xff]
        %v8129 = vld [vmem:[%s10 + $0xe0] sm:$0xff]
        %v8130 = vld [vmem:[%s10 + $0xe8] sm:$0xff]
        %v8131 = vld [vmem:[%s10 + $0xf0] sm:$0xff]
        %v8132 = vld [vmem:[%s10 + $0xf8] sm:$0xff]
        %v8133 = vpack.c.bf16 %v8039, %v8037
        %v8134 = vpack.c.bf16 %v8040, %v8038
        %v8135 = vpack.c.bf16 %v8043, %v8041
        %v8136 = vpack.c.bf16 %v8044, %v8042
        %v8137 = vpack.c.bf16 %v8047, %v8045
        %v8138 = vpack.c.bf16 %v8048, %v8046
        %v8139 = vpack.c.bf16 %v8051, %v8049
        %v8140 = vpack.c.bf16 %v8052, %v8050
        %v8141 = vpack.c.bf16 %v8055, %v8053
        %v8142 = vpack.c.bf16 %v8056, %v8054
        %v8143 = vpack.c.bf16 %v8059, %v8057
        %v8144 = vpack.c.bf16 %v8060, %v8058
        %v8145 = vpack.c.bf16 %v8063, %v8061
        %v8146 = vpack.c.bf16 %v8064, %v8062
        %v8147 = vpack.c.bf16 %v8067, %v8065
        %v8148 = vpack.c.bf16 %v8068, %v8066
        %v8149 = vpack.c.bf16 %v8071, %v8069
        %v8150 = vpack.c.bf16 %v8072, %v8070
        %v8151 = vpack.c.bf16 %v8075, %v8073
        %v8152 = vpack.c.bf16 %v8076, %v8074
        %v8153 = vpack.c.bf16 %v8079, %v8077
        %v8154 = vpack.c.bf16 %v8080, %v8078
        %v8155 = vpack.c.bf16 %v8083, %v8081
        %v8156 = vpack.c.bf16 %v8084, %v8082
        %v8157 = vpack.c.bf16 %v8087, %v8085
        %v8158 = vpack.c.bf16 %v8088, %v8086
        %v8159 = vpack.c.bf16 %v8091, %v8089
        %v8160 = vpack.c.bf16 %v8092, %v8090
        %v8161 = vpack.c.bf16 %v8095, %v8093
        %v8162 = vpack.c.bf16 %v8096, %v8094
        %v8163 = vpack.c.bf16 %v8099, %v8097
        %v8164 = vpack.c.bf16 %v8100, %v8098
        %v8165 = vld [vmem:[%s11] sm:$0xff]
        %v8166 = vld [vmem:[%s11 + $0x8] sm:$0xff]
        %v8167 = vld [vmem:[%s11 + $0x10] sm:$0xff]
        %v8168 = vld [vmem:[%s11 + $0x18] sm:$0xff]
        %v8169 = vld [vmem:[%s11 + $0x20] sm:$0xff]
        %v8170 = vld [vmem:[%s11 + $0x28] sm:$0xff]
        %v8171 = vld [vmem:[%s11 + $0x30] sm:$0xff]
        %v8172 = vld [vmem:[%s11 + $0x38] sm:$0xff]
        %v8173 = vld [vmem:[%s11 + $0x40] sm:$0xff]
        %v8174 = vld [vmem:[%s11 + $0x48] sm:$0xff]
        %v8175 = vld [vmem:[%s11 + $0x50] sm:$0xff]
        %v8176 = vld [vmem:[%s11 + $0x58] sm:$0xff]
        %v8177 = vld [vmem:[%s11 + $0x60] sm:$0xff]
        %v8178 = vld [vmem:[%s11 + $0x68] sm:$0xff]
        %v8179 = vld [vmem:[%s11 + $0x70] sm:$0xff]
        %v8180 = vld [vmem:[%s11 + $0x78] sm:$0xff]
        %v8181 = vld [vmem:[%s11 + $0x80] sm:$0xff]
        %v8182 = vld [vmem:[%s11 + $0x88] sm:$0xff]
        %v8183 = vld [vmem:[%s11 + $0x90] sm:$0xff]
        %v8184 = vld [vmem:[%s11 + $0x98] sm:$0xff]
        %v8185 = vld [vmem:[%s11 + $0xa0] sm:$0xff]
        %v8186 = vld [vmem:[%s11 + $0xa8] sm:$0xff]
        %v8187 = vld [vmem:[%s11 + $0xb0] sm:$0xff]
        %v8188 = vld [vmem:[%s11 + $0xb8] sm:$0xff]
        %v8189 = vld [vmem:[%s11 + $0xc0] sm:$0xff]
        %v8190 = vld [vmem:[%s11 + $0xc8] sm:$0xff]
        %v8191 = vld [vmem:[%s11 + $0xd0] sm:$0xff]
        %v8192 = vld [vmem:[%s11 + $0xd8] sm:$0xff]
        %v8193 = vld [vmem:[%s11 + $0xe0] sm:$0xff]
        %v8194 = vld [vmem:[%s11 + $0xe8] sm:$0xff]
        %v8195 = vld [vmem:[%s11 + $0xf0] sm:$0xff]
        %v8196 = vld [vmem:[%s11 + $0xf8] sm:$0xff]
        %8198 = vset.pattern.permute.xlu0 0
        %8199 = vperm.xlu0 %8198, %v8165
        %v8200 = vpop.permute.xlu0 %8199
        %8203 = vset.pattern.permute.xlu0 0
        %8204 = vperm.xlu0 %8203, %v8166
        %v8205 = vpop.permute.xlu0 %8204
        %8208 = vset.pattern.permute.xlu0 0
        %8209 = vperm.xlu0 %8208, %v8167
        %v8210 = vpop.permute.xlu0 %8209
        %8213 = vset.pattern.permute.xlu0 0
        %8214 = vperm.xlu0 %8213, %v8168
        %v8215 = vpop.permute.xlu0 %8214
        %8218 = vset.pattern.permute.xlu0 0
        %8219 = vperm.xlu0 %8218, %v8169
        %v8220 = vpop.permute.xlu0 %8219
        %8223 = vset.pattern.permute.xlu0 0
        %8224 = vperm.xlu0 %8223, %v8170
        %v8225 = vpop.permute.xlu0 %8224
        %8228 = vset.pattern.permute.xlu0 0
        %8229 = vperm.xlu0 %8228, %v8171
        %v8230 = vpop.permute.xlu0 %8229
        %8233 = vset.pattern.permute.xlu0 0
        %8234 = vperm.xlu0 %8233, %v8172
        %v8235 = vpop.permute.xlu0 %8234
        %8238 = vset.pattern.permute.xlu0 0
        %8239 = vperm.xlu0 %8238, %v8173
        %v8240 = vpop.permute.xlu0 %8239
        %8243 = vset.pattern.permute.xlu0 0
        %8244 = vperm.xlu0 %8243, %v8174
        %v8245 = vpop.permute.xlu0 %8244
        %8248 = vset.pattern.permute.xlu0 0
        %8249 = vperm.xlu0 %8248, %v8175
        %v8250 = vpop.permute.xlu0 %8249
        %8253 = vset.pattern.permute.xlu0 0
        %8254 = vperm.xlu0 %8253, %v8176
        %v8255 = vpop.permute.xlu0 %8254
        %8258 = vset.pattern.permute.xlu0 0
        %8259 = vperm.xlu0 %8258, %v8177
        %v8260 = vpop.permute.xlu0 %8259
        %8263 = vset.pattern.permute.xlu0 0
        %8264 = vperm.xlu0 %8263, %v8178
        %v8265 = vpop.permute.xlu0 %8264
        %8268 = vset.pattern.permute.xlu0 0
        %8269 = vperm.xlu0 %8268, %v8179
        %v8270 = vpop.permute.xlu0 %8269
        %8273 = vset.pattern.permute.xlu0 0
        %8274 = vperm.xlu0 %8273, %v8180
        %v8275 = vpop.permute.xlu0 %8274
        %8278 = vset.pattern.permute.xlu0 0
        %8279 = vperm.xlu0 %8278, %v8181
        %v8280 = vpop.permute.xlu0 %8279
        %8283 = vset.pattern.permute.xlu0 0
        %8284 = vperm.xlu0 %8283, %v8182
        %v8285 = vpop.permute.xlu0 %8284
        %8288 = vset.pattern.permute.xlu0 0
        %8289 = vperm.xlu0 %8288, %v8183
        %v8290 = vpop.permute.xlu0 %8289
        %8293 = vset.pattern.permute.xlu0 0
        %8294 = vperm.xlu0 %8293, %v8184
        %v8295 = vpop.permute.xlu0 %8294
        %8298 = vset.pattern.permute.xlu0 0
        %8299 = vperm.xlu0 %8298, %v8185
        %v8300 = vpop.permute.xlu0 %8299
        %8303 = vset.pattern.permute.xlu0 0
        %8304 = vperm.xlu0 %8303, %v8186
        %v8305 = vpop.permute.xlu0 %8304
        %8308 = vset.pattern.permute.xlu0 0
        %8309 = vperm.xlu0 %8308, %v8187
        %v8310 = vpop.permute.xlu0 %8309
        %8313 = vset.pattern.permute.xlu0 0
        %8314 = vperm.xlu0 %8313, %v8188
        %v8315 = vpop.permute.xlu0 %8314
        %8318 = vset.pattern.permute.xlu0 0
        %8319 = vperm.xlu0 %8318, %v8189
        %v8320 = vpop.permute.xlu0 %8319
        %8323 = vset.pattern.permute.xlu0 0
        %8324 = vperm.xlu0 %8323, %v8190
        %v8325 = vpop.permute.xlu0 %8324
        %8328 = vset.pattern.permute.xlu0 0
        %8329 = vperm.xlu0 %8328, %v8191
        %v8330 = vpop.permute.xlu0 %8329
        %8333 = vset.pattern.permute.xlu0 0
        %8334 = vperm.xlu0 %8333, %v8192
        %v8335 = vpop.permute.xlu0 %8334
        %8338 = vset.pattern.permute.xlu0 0
        %8339 = vperm.xlu0 %8338, %v8193
        %v8340 = vpop.permute.xlu0 %8339
        %8343 = vset.pattern.permute.xlu0 0
        %8344 = vperm.xlu0 %8343, %v8194
        %v8345 = vpop.permute.xlu0 %8344
        %8348 = vset.pattern.permute.xlu0 0
        %8349 = vperm.xlu0 %8348, %v8195
        %v8350 = vpop.permute.xlu0 %8349
        %8353 = vset.pattern.permute.xlu0 0
        %8354 = vperm.xlu0 %8353, %v8196
        %v8355 = vpop.permute.xlu0 %8354
        %v8389 = vunpack.c.l.b16 %v8101
        %v8390 = vunpack.c.h.b16 %v8101
        %v8391 = vunpack.c.l.b16 %v8102
        %v8392 = vunpack.c.h.b16 %v8102
        %v8393 = vunpack.c.l.b16 %v8103
        %v8394 = vunpack.c.h.b16 %v8103
        %v8395 = vunpack.c.l.b16 %v8104
        %v8396 = vunpack.c.h.b16 %v8104
        %v8397 = vunpack.c.l.b16 %v8105
        %v8398 = vunpack.c.h.b16 %v8105
        %v8399 = vunpack.c.l.b16 %v8106
        %v8400 = vunpack.c.h.b16 %v8106
        %v8401 = vunpack.c.l.b16 %v8107
        %v8402 = vunpack.c.h.b16 %v8107
        %v8403 = vunpack.c.l.b16 %v8108
        %v8404 = vunpack.c.h.b16 %v8108
        %v8405 = vunpack.c.l.b16 %v8109
        %v8406 = vunpack.c.h.b16 %v8109
        %v8407 = vunpack.c.l.b16 %v8110
        %v8408 = vunpack.c.h.b16 %v8110
        %v8409 = vunpack.c.l.b16 %v8111
        %v8410 = vunpack.c.h.b16 %v8111
        %v8411 = vunpack.c.l.b16 %v8112
        %v8412 = vunpack.c.h.b16 %v8112
        %v8413 = vunpack.c.l.b16 %v8113
        %v8414 = vunpack.c.h.b16 %v8113
        %v8415 = vunpack.c.l.b16 %v8114
        %v8416 = vunpack.c.h.b16 %v8114
        %v8417 = vunpack.c.l.b16 %v8115
        %v8418 = vunpack.c.h.b16 %v8115
        %v8419 = vunpack.c.l.b16 %v8116
        %v8420 = vunpack.c.h.b16 %v8116
        %v8421 = vunpack.c.l.b16 %v8117
        %v8422 = vunpack.c.h.b16 %v8117
        %v8423 = vunpack.c.l.b16 %v8118
        %v8424 = vunpack.c.h.b16 %v8118
        %v8425 = vunpack.c.l.b16 %v8119
        %v8426 = vunpack.c.h.b16 %v8119
        %v8427 = vunpack.c.l.b16 %v8120
        %v8428 = vunpack.c.h.b16 %v8120
        %v8429 = vunpack.c.l.b16 %v8121
        %v8430 = vunpack.c.h.b16 %v8121
        %v8431 = vunpack.c.l.b16 %v8122
        %v8432 = vunpack.c.h.b16 %v8122
        %v8433 = vunpack.c.l.b16 %v8123
        %v8434 = vunpack.c.h.b16 %v8123
        %v8435 = vunpack.c.l.b16 %v8124
        %v8436 = vunpack.c.h.b16 %v8124
        %v8437 = vunpack.c.l.b16 %v8125
        %v8438 = vunpack.c.h.b16 %v8125
        %v8439 = vunpack.c.l.b16 %v8126
        %v8440 = vunpack.c.h.b16 %v8126
        %v8441 = vunpack.c.l.b16 %v8127
        %v8442 = vunpack.c.h.b16 %v8127
        %v8443 = vunpack.c.l.b16 %v8128
        %v8444 = vunpack.c.h.b16 %v8128
        %v8445 = vunpack.c.l.b16 %v8129
        %v8446 = vunpack.c.h.b16 %v8129
        %v8447 = vunpack.c.l.b16 %v8130
        %v8448 = vunpack.c.h.b16 %v8130
        %v8449 = vunpack.c.l.b16 %v8131
        %v8450 = vunpack.c.h.b16 %v8131
        %v8451 = vunpack.c.l.b16 %v8132
        %v8452 = vunpack.c.h.b16 %v8132
        %v8453 = vpack.c.b16 %v8391, %v8389
        %v8454 = vpack.c.b16 %v8392, %v8390
        %v8455 = vpack.c.b16 %v8395, %v8393
        %v8456 = vpack.c.b16 %v8396, %v8394
        %v8457 = vpack.c.b16 %v8399, %v8397
        %v8458 = vpack.c.b16 %v8400, %v8398
        %v8459 = vpack.c.b16 %v8403, %v8401
        %v8460 = vpack.c.b16 %v8404, %v8402
        %v8461 = vpack.c.b16 %v8407, %v8405
        %v8462 = vpack.c.b16 %v8408, %v8406
        %v8463 = vpack.c.b16 %v8411, %v8409
        %v8464 = vpack.c.b16 %v8412, %v8410
        %v8465 = vpack.c.b16 %v8415, %v8413
        %v8466 = vpack.c.b16 %v8416, %v8414
        %v8467 = vpack.c.b16 %v8419, %v8417
        %v8468 = vpack.c.b16 %v8420, %v8418
        %v8469 = vpack.c.b16 %v8423, %v8421
        %v8470 = vpack.c.b16 %v8424, %v8422
        %v8471 = vpack.c.b16 %v8427, %v8425
        %v8472 = vpack.c.b16 %v8428, %v8426
        %v8473 = vpack.c.b16 %v8431, %v8429
        %v8474 = vpack.c.b16 %v8432, %v8430
        %v8475 = vpack.c.b16 %v8435, %v8433
        %v8476 = vpack.c.b16 %v8436, %v8434
        %v8477 = vpack.c.b16 %v8439, %v8437
        %v8478 = vpack.c.b16 %v8440, %v8438
        %v8479 = vpack.c.b16 %v8443, %v8441
        %v8480 = vpack.c.b16 %v8444, %v8442
        %v8481 = vpack.c.b16 %v8447, %v8445
        %v8482 = vpack.c.b16 %v8448, %v8446
        %v8483 = vpack.c.b16 %v8451, %v8449
        %v8484 = vpack.c.b16 %v8452, %v8450
        %8517 = vmatprep.subr.bf16.mxu0 %v8148
        %8518 = vmatpush1.bf16.msra.mxu0 %v8147
        %8519 = vmatprep.subr.bf16.mxu0 %v8146
        %8520 = vmatpush1.bf16.msra.mxu0 %v8145
        %8521 = vmatprep.subr.bf16.mxu0 %v8144
        %8522 = vmatpush1.bf16.msra.mxu0 %v8143
        %8523 = vmatprep.subr.bf16.mxu0 %v8142
        %8524 = vmatpush1.bf16.msra.mxu0 %v8141
        %8525 = vmatprep.subr.bf16.mxu0 %v8140
        %8526 = vmatpush1.bf16.msra.mxu0 %v8139
        %8527 = vmatprep.subr.bf16.mxu0 %v8138
        %8528 = vmatpush1.bf16.msra.mxu0 %v8137
        %8529 = vmatprep.subr.bf16.mxu0 %v8136
        %8530 = vmatpush1.bf16.msra.mxu0 %v8135
        %8531 = vmatprep.subr.bf16.mxu0 %v8134
        %8532 = vmatpush1.bf16.msra.mxu0 %v8133
        %8533 = vmatprep.subr.bf16.mxu0 %v8164
        %8534 = vmatpush2.bf16.msra.mxu0 %v8163
        %8535 = vmatprep.subr.bf16.mxu0 %v8162
        %8536 = vmatpush2.bf16.msra.mxu0 %v8161
        %8537 = vmatprep.subr.bf16.mxu0 %v8160
        %8538 = vmatpush2.bf16.msra.mxu0 %v8159
        %8539 = vmatprep.subr.bf16.mxu0 %v8158
        %8540 = vmatpush2.bf16.msra.mxu0 %v8157
        %8541 = vmatprep.subr.bf16.mxu0 %v8156
        %8542 = vmatpush2.bf16.msra.mxu0 %v8155
        %8543 = vmatprep.subr.bf16.mxu0 %v8154
        %8544 = vmatpush2.bf16.msra.mxu0 %v8153
        %8545 = vmatprep.subr.bf16.mxu0 %v8152
        %8546 = vmatpush2.bf16.msra.mxu0 %v8151
        %8547 = vmatprep.subr.bf16.mxu0 %v8150
        %8548 = vmatpush2.bf16.msra.mxu0 %v8149
        %8549 = vmatprep.mubr.bf16.mxu0 %v8454
        %8550 = vmatmul.mubr.bf16.gmra.mxu0 %v8453
        %v8551 = vpop.f32.mrf.mxu0
        %v8552 = vadd.f32 %v8200, %v8551
        %v8553 = vpop.f32.mrf.mxu0
        %v8554 = vadd.f32 %v8200, %v8553
        %v8555 = vpop.f32.mrf.mxu0
        %v8556 = vadd.f32 %v8205, %v8555
        %v8557 = vpop.f32.mrf.mxu0
        %v8558 = vadd.f32 %v8205, %v8557
        %8559 = vmatprep.mubr.bf16.mxu0 %v8456
        %8560 = vmatmul.mubr.bf16.gmra.mxu0 %v8455
        %v8561 = vpop.f32.mrf.mxu0
        %v8562 = vadd.f32 %v8210, %v8561
        %v8563 = vpop.f32.mrf.mxu0
        %v8564 = vadd.f32 %v8210, %v8563
        %v8565 = vpop.f32.mrf.mxu0
        %v8566 = vadd.f32 %v8215, %v8565
        %v8567 = vpop.f32.mrf.mxu0
        %v8568 = vadd.f32 %v8215, %v8567
        %8569 = vmatprep.mubr.bf16.mxu0 %v8458
        %8570 = vmatmul.mubr.bf16.gmra.mxu0 %v8457
        %v8571 = vpop.f32.mrf.mxu0
        %v8572 = vadd.f32 %v8220, %v8571
        %v8573 = vpop.f32.mrf.mxu0
        %v8574 = vadd.f32 %v8220, %v8573
        %v8575 = vpop.f32.mrf.mxu0
        %v8576 = vadd.f32 %v8225, %v8575
        %v8577 = vpop.f32.mrf.mxu0
        %v8578 = vadd.f32 %v8225, %v8577
        %8579 = vmatprep.mubr.bf16.mxu0 %v8460
        %8580 = vmatmul.mubr.bf16.gmra.mxu0 %v8459
        %v8581 = vpop.f32.mrf.mxu0
        %v8582 = vadd.f32 %v8230, %v8581
        %v8583 = vpop.f32.mrf.mxu0
        %v8584 = vadd.f32 %v8230, %v8583
        %v8585 = vpop.f32.mrf.mxu0
        %v8586 = vadd.f32 %v8235, %v8585
        %v8587 = vpop.f32.mrf.mxu0
        %v8588 = vadd.f32 %v8235, %v8587
        %8589 = vmatprep.mubr.bf16.mxu0 %v8462
        %8590 = vmatmul.mubr.bf16.gmra.mxu0 %v8461
        %v8591 = vpop.f32.mrf.mxu0
        %v8592 = vadd.f32 %v8240, %v8591
        %v8593 = vpop.f32.mrf.mxu0
        %v8594 = vadd.f32 %v8240, %v8593
        %v8595 = vpop.f32.mrf.mxu0
        %v8596 = vadd.f32 %v8245, %v8595
        %v8597 = vpop.f32.mrf.mxu0
        %v8598 = vadd.f32 %v8245, %v8597
        %8599 = vmatprep.mubr.bf16.mxu0 %v8464
        %8600 = vmatmul.mubr.bf16.gmra.mxu0 %v8463
        %v8601 = vpop.f32.mrf.mxu0
        %v8602 = vadd.f32 %v8250, %v8601
        %v8603 = vpop.f32.mrf.mxu0
        %v8604 = vadd.f32 %v8250, %v8603
        %v8605 = vpop.f32.mrf.mxu0
        %v8606 = vadd.f32 %v8255, %v8605
        %v8607 = vpop.f32.mrf.mxu0
        %v8608 = vadd.f32 %v8255, %v8607
        %8609 = vmatprep.mubr.bf16.mxu0 %v8466
        %8610 = vmatmul.mubr.bf16.gmra.mxu0 %v8465
        %v8611 = vpop.f32.mrf.mxu0
        %v8612 = vadd.f32 %v8260, %v8611
        %v8613 = vpop.f32.mrf.mxu0
        %v8614 = vadd.f32 %v8260, %v8613
        %v8615 = vpop.f32.mrf.mxu0
        %v8616 = vadd.f32 %v8265, %v8615
        %v8617 = vpop.f32.mrf.mxu0
        %v8618 = vadd.f32 %v8265, %v8617
        %8619 = vmatprep.mubr.bf16.mxu0 %v8468
        %8620 = vmatmul.mubr.bf16.gmra.mxu0 %v8467
        %v8621 = vpop.f32.mrf.mxu0
        %v8622 = vadd.f32 %v8270, %v8621
        %v8623 = vpop.f32.mrf.mxu0
        %v8624 = vadd.f32 %v8270, %v8623
        %v8625 = vpop.f32.mrf.mxu0
        %v8626 = vadd.f32 %v8275, %v8625
        %v8627 = vpop.f32.mrf.mxu0
        %v8628 = vadd.f32 %v8275, %v8627
        %8629 = vmatprep.mubr.bf16.mxu0 %v8470
        %8630 = vmatmul.mubr.bf16.gmra.mxu0 %v8469
        %v8631 = vpop.f32.mrf.mxu0
        %v8632 = vadd.f32 %v8280, %v8631
        %v8633 = vpop.f32.mrf.mxu0
        %v8634 = vadd.f32 %v8280, %v8633
        %v8635 = vpop.f32.mrf.mxu0
        %v8636 = vadd.f32 %v8285, %v8635
        %v8637 = vpop.f32.mrf.mxu0
        %v8638 = vadd.f32 %v8285, %v8637
        %8639 = vmatprep.mubr.bf16.mxu0 %v8472
        %8640 = vmatmul.mubr.bf16.gmra.mxu0 %v8471
        %v8641 = vpop.f32.mrf.mxu0
        %v8642 = vadd.f32 %v8290, %v8641
        %v8643 = vpop.f32.mrf.mxu0
        %v8644 = vadd.f32 %v8290, %v8643
        %v8645 = vpop.f32.mrf.mxu0
        %v8646 = vadd.f32 %v8295, %v8645
        %v8647 = vpop.f32.mrf.mxu0
        %v8648 = vadd.f32 %v8295, %v8647
        %8649 = vmatprep.mubr.bf16.mxu0 %v8474
        %8650 = vmatmul.mubr.bf16.gmra.mxu0 %v8473
        %v8651 = vpop.f32.mrf.mxu0
        %v8652 = vadd.f32 %v8300, %v8651
        %v8653 = vpop.f32.mrf.mxu0
        %v8654 = vadd.f32 %v8300, %v8653
        %v8655 = vpop.f32.mrf.mxu0
        %v8656 = vadd.f32 %v8305, %v8655
        %v8657 = vpop.f32.mrf.mxu0
        %v8658 = vadd.f32 %v8305, %v8657
        %8659 = vmatprep.mubr.bf16.mxu0 %v8476
        %8660 = vmatmul.mubr.bf16.gmra.mxu0 %v8475
        %v8661 = vpop.f32.mrf.mxu0
        %v8662 = vadd.f32 %v8310, %v8661
        %v8663 = vpop.f32.mrf.mxu0
        %v8664 = vadd.f32 %v8310, %v8663
        %v8665 = vpop.f32.mrf.mxu0
        %v8666 = vadd.f32 %v8315, %v8665
        %v8667 = vpop.f32.mrf.mxu0
        %v8668 = vadd.f32 %v8315, %v8667
        %8669 = vmatprep.mubr.bf16.mxu0 %v8478
        %8670 = vmatmul.mubr.bf16.gmra.mxu0 %v8477
        %v8671 = vpop.f32.mrf.mxu0
        %v8672 = vadd.f32 %v8320, %v8671
        %v8673 = vpop.f32.mrf.mxu0
        %v8674 = vadd.f32 %v8320, %v8673
        %v8675 = vpop.f32.mrf.mxu0
        %v8676 = vadd.f32 %v8325, %v8675
        %v8677 = vpop.f32.mrf.mxu0
        %v8678 = vadd.f32 %v8325, %v8677
        %8679 = vmatprep.mubr.bf16.mxu0 %v8480
        %8680 = vmatmul.mubr.bf16.gmra.mxu0 %v8479
        %v8681 = vpop.f32.mrf.mxu0
        %v8682 = vadd.f32 %v8330, %v8681
        %v8683 = vpop.f32.mrf.mxu0
        %v8684 = vadd.f32 %v8330, %v8683
        %v8685 = vpop.f32.mrf.mxu0
        %v8686 = vadd.f32 %v8335, %v8685
        %v8687 = vpop.f32.mrf.mxu0
        %v8688 = vadd.f32 %v8335, %v8687
        %8689 = vmatprep.mubr.bf16.mxu0 %v8482
        %8690 = vmatmul.mubr.bf16.gmra.mxu0 %v8481
        %v8691 = vpop.f32.mrf.mxu0
        %v8692 = vadd.f32 %v8340, %v8691
        %v8693 = vpop.f32.mrf.mxu0
        %v8694 = vadd.f32 %v8340, %v8693
        %v8695 = vpop.f32.mrf.mxu0
        %v8696 = vadd.f32 %v8345, %v8695
        %v8697 = vpop.f32.mrf.mxu0
        %v8698 = vadd.f32 %v8345, %v8697
        %8699 = vmatprep.mubr.bf16.mxu0 %v8484
        %8700 = vmatmul.mubr.bf16.gmra.mxu0 %v8483
        %v8701 = vpop.f32.mrf.mxu0
        %v8702 = vadd.f32 %v8350, %v8701
        %v8703 = vpop.f32.mrf.mxu0
        %v8704 = vadd.f32 %v8350, %v8703
        %v8705 = vpop.f32.mrf.mxu0
        %v8706 = vadd.f32 %v8355, %v8705
        %v8707 = vpop.f32.mrf.mxu0
        %v8708 = vadd.f32 %v8355, %v8707
        %8709 = vdwg.mxu0
        %v8710 = vmul.f32 %v8552, 100.0
        %v8711 = vmul.f32 %v8554, 100.0
        %v8712 = vmul.f32 %v8556, 100.0
        %v8713 = vmul.f32 %v8558, 100.0
        %v8714 = vmul.f32 %v8562, 100.0
        %v8715 = vmul.f32 %v8564, 100.0
        %v8716 = vmul.f32 %v8566, 100.0
        %v8717 = vmul.f32 %v8568, 100.0
        %v8718 = vmul.f32 %v8572, 100.0
        %v8719 = vmul.f32 %v8574, 100.0
        %v8720 = vmul.f32 %v8576, 100.0
        %v8721 = vmul.f32 %v8578, 100.0
        %v8722 = vmul.f32 %v8582, 100.0
        %v8723 = vmul.f32 %v8584, 100.0
        %v8724 = vmul.f32 %v8586, 100.0
        %v8725 = vmul.f32 %v8588, 100.0
        %v8726 = vmul.f32 %v8592, 100.0
        %v8727 = vmul.f32 %v8594, 100.0
        %v8728 = vmul.f32 %v8596, 100.0
        %v8729 = vmul.f32 %v8598, 100.0
        %v8730 = vmul.f32 %v8602, 100.0
        %v8731 = vmul.f32 %v8604, 100.0
        %v8732 = vmul.f32 %v8606, 100.0
        %v8733 = vmul.f32 %v8608, 100.0
        %v8734 = vmul.f32 %v8612, 100.0
        %v8735 = vmul.f32 %v8614, 100.0
        %v8736 = vmul.f32 %v8616, 100.0
        %v8737 = vmul.f32 %v8618, 100.0
        %v8738 = vmul.f32 %v8622, 100.0
        %v8739 = vmul.f32 %v8624, 100.0
        %v8740 = vmul.f32 %v8626, 100.0
        %v8741 = vmul.f32 %v8628, 100.0
        %v8742 = vmul.f32 %v8632, 100.0
        %v8743 = vmul.f32 %v8634, 100.0
        %v8744 = vmul.f32 %v8636, 100.0
        %v8745 = vmul.f32 %v8638, 100.0
        %v8746 = vmul.f32 %v8642, 100.0
        %v8747 = vmul.f32 %v8644, 100.0
        %v8748 = vmul.f32 %v8646, 100.0
        %v8749 = vmul.f32 %v8648, 100.0
        %v8750 = vmul.f32 %v8652, 100.0
        %v8751 = vmul.f32 %v8654, 100.0
        %v8752 = vmul.f32 %v8656, 100.0
        %v8753 = vmul.f32 %v8658, 100.0
        %v8754 = vmul.f32 %v8662, 100.0
        %v8755 = vmul.f32 %v8664, 100.0
        %v8756 = vmul.f32 %v8666, 100.0
        %v8757 = vmul.f32 %v8668, 100.0
        %v8758 = vmul.f32 %v8672, 100.0
        %v8759 = vmul.f32 %v8674, 100.0
        %v8760 = vmul.f32 %v8676, 100.0
        %v8761 = vmul.f32 %v8678, 100.0
        %v8762 = vmul.f32 %v8682, 100.0
        %v8763 = vmul.f32 %v8684, 100.0
        %v8764 = vmul.f32 %v8686, 100.0
        %v8765 = vmul.f32 %v8688, 100.0
        %v8766 = vmul.f32 %v8692, 100.0
        %v8767 = vmul.f32 %v8694, 100.0
        %v8768 = vmul.f32 %v8696, 100.0
        %v8769 = vmul.f32 %v8698, 100.0
        %v8770 = vmul.f32 %v8702, 100.0
        %v8771 = vmul.f32 %v8704, 100.0
        %v8772 = vmul.f32 %v8706, 100.0
        %v8773 = vmul.f32 %v8708, 100.0
        %v8774 = vmin.f32 %v8710, 20.0
        %v8775 = vmin.f32 %v8711, 20.0
        %v8776 = vmin.f32 %v8712, 20.0
        %v8777 = vmin.f32 %v8713, 20.0
        %v8778 = vmin.f32 %v8714, 20.0
        %v8779 = vmin.f32 %v8715, 20.0
        %v8780 = vmin.f32 %v8716, 20.0
        %v8781 = vmin.f32 %v8717, 20.0
        %v8782 = vmin.f32 %v8718, 20.0
        %v8783 = vmin.f32 %v8719, 20.0
        %v8784 = vmin.f32 %v8720, 20.0
        %v8785 = vmin.f32 %v8721, 20.0
        %v8786 = vmin.f32 %v8722, 20.0
        %v8787 = vmin.f32 %v8723, 20.0
        %v8788 = vmin.f32 %v8724, 20.0
        %v8789 = vmin.f32 %v8725, 20.0
        %v8790 = vmin.f32 %v8726, 20.0
        %v8791 = vmin.f32 %v8727, 20.0
        %v8792 = vmin.f32 %v8728, 20.0
        %v8793 = vmin.f32 %v8729, 20.0
        %v8794 = vmin.f32 %v8730, 20.0
        %v8795 = vmin.f32 %v8731, 20.0
        %v8796 = vmin.f32 %v8732, 20.0
        %v8797 = vmin.f32 %v8733, 20.0
        %v8798 = vmin.f32 %v8734, 20.0
        %v8799 = vmin.f32 %v8735, 20.0
        %v8800 = vmin.f32 %v8736, 20.0
        %v8801 = vmin.f32 %v8737, 20.0
        %v8802 = vmin.f32 %v8738, 20.0
        %v8803 = vmin.f32 %v8739, 20.0
        %v8804 = vmin.f32 %v8740, 20.0
        %v8805 = vmin.f32 %v8741, 20.0
        %v8806 = vmin.f32 %v8742, 20.0
        %v8807 = vmin.f32 %v8743, 20.0
        %v8808 = vmin.f32 %v8744, 20.0
        %v8809 = vmin.f32 %v8745, 20.0
        %v8810 = vmin.f32 %v8746, 20.0
        %v8811 = vmin.f32 %v8747, 20.0
        %v8812 = vmin.f32 %v8748, 20.0
        %v8813 = vmin.f32 %v8749, 20.0
        %v8814 = vmin.f32 %v8750, 20.0
        %v8815 = vmin.f32 %v8751, 20.0
        %v8816 = vmin.f32 %v8752, 20.0
        %v8817 = vmin.f32 %v8753, 20.0
        %v8818 = vmin.f32 %v8754, 20.0
        %v8819 = vmin.f32 %v8755, 20.0
        %v8820 = vmin.f32 %v8756, 20.0
        %v8821 = vmin.f32 %v8757, 20.0
        %v8822 = vmin.f32 %v8758, 20.0
        %v8823 = vmin.f32 %v8759, 20.0
        %v8824 = vmin.f32 %v8760, 20.0
        %v8825 = vmin.f32 %v8761, 20.0
        %v8826 = vmin.f32 %v8762, 20.0
        %v8827 = vmin.f32 %v8763, 20.0
        %v8828 = vmin.f32 %v8764, 20.0
        %v8829 = vmin.f32 %v8765, 20.0
        %v8830 = vmin.f32 %v8766, 20.0
        %v8831 = vmin.f32 %v8767, 20.0
        %v8832 = vmin.f32 %v8768, 20.0
        %v8833 = vmin.f32 %v8769, 20.0
        %v8834 = vmin.f32 %v8770, 20.0
        %v8835 = vmin.f32 %v8771, 20.0
        %v8836 = vmin.f32 %v8772, 20.0
        %v8837 = vmin.f32 %v8773, 20.0
        %vm8838 = vcmp.gt.f32.partialorder %v8710, 20.0
        %vm8839 = vcmp.gt.f32.partialorder %v8711, 20.0
        %vm8840 = vcmp.gt.f32.partialorder %v8712, 20.0
        %vm8841 = vcmp.gt.f32.partialorder %v8713, 20.0
        %vm8842 = vcmp.gt.f32.partialorder %v8714, 20.0
        %vm8843 = vcmp.gt.f32.partialorder %v8715, 20.0
        %vm8844 = vcmp.gt.f32.partialorder %v8716, 20.0
        %vm8845 = vcmp.gt.f32.partialorder %v8717, 20.0
        %vm8846 = vcmp.gt.f32.partialorder %v8718, 20.0
        %vm8847 = vcmp.gt.f32.partialorder %v8719, 20.0
        %vm8848 = vcmp.gt.f32.partialorder %v8720, 20.0
        %vm8849 = vcmp.gt.f32.partialorder %v8721, 20.0
        %vm8850 = vcmp.gt.f32.partialorder %v8722, 20.0
        %vm8851 = vcmp.gt.f32.partialorder %v8723, 20.0
        %vm8852 = vcmp.gt.f32.partialorder %v8724, 20.0
        %vm8853 = vcmp.gt.f32.partialorder %v8725, 20.0
        %vm8854 = vcmp.gt.f32.partialorder %v8726, 20.0
        %vm8855 = vcmp.gt.f32.partialorder %v8727, 20.0
        %vm8856 = vcmp.gt.f32.partialorder %v8728, 20.0
        %vm8857 = vcmp.gt.f32.partialorder %v8729, 20.0
        %vm8858 = vcmp.gt.f32.partialorder %v8730, 20.0
        %vm8859 = vcmp.gt.f32.partialorder %v8731, 20.0
        %vm8860 = vcmp.gt.f32.partialorder %v8732, 20.0
        %vm8861 = vcmp.gt.f32.partialorder %v8733, 20.0
        %vm8862 = vcmp.gt.f32.partialorder %v8734, 20.0
        %vm8863 = vcmp.gt.f32.partialorder %v8735, 20.0
        %vm8864 = vcmp.gt.f32.partialorder %v8736, 20.0
        %vm8865 = vcmp.gt.f32.partialorder %v8737, 20.0
        %vm8866 = vcmp.gt.f32.partialorder %v8738, 20.0
        %vm8867 = vcmp.gt.f32.partialorder %v8739, 20.0
        %vm8868 = vcmp.gt.f32.partialorder %v8740, 20.0
        %vm8869 = vcmp.gt.f32.partialorder %v8741, 20.0
        %vm8870 = vcmp.gt.f32.partialorder %v8742, 20.0
        %vm8871 = vcmp.gt.f32.partialorder %v8743, 20.0
        %vm8872 = vcmp.gt.f32.partialorder %v8744, 20.0
        %vm8873 = vcmp.gt.f32.partialorder %v8745, 20.0
        %vm8874 = vcmp.gt.f32.partialorder %v8746, 20.0
        %vm8875 = vcmp.gt.f32.partialorder %v8747, 20.0
        %vm8876 = vcmp.gt.f32.partialorder %v8748, 20.0
        %vm8877 = vcmp.gt.f32.partialorder %v8749, 20.0
        %vm8878 = vcmp.gt.f32.partialorder %v8750, 20.0
        %vm8879 = vcmp.gt.f32.partialorder %v8751, 20.0
        %vm8880 = vcmp.gt.f32.partialorder %v8752, 20.0
        %vm8881 = vcmp.gt.f32.partialorder %v8753, 20.0
        %vm8882 = vcmp.gt.f32.partialorder %v8754, 20.0
        %vm8883 = vcmp.gt.f32.partialorder %v8755, 20.0
        %vm8884 = vcmp.gt.f32.partialorder %v8756, 20.0
        %vm8885 = vcmp.gt.f32.partialorder %v8757, 20.0
        %vm8886 = vcmp.gt.f32.partialorder %v8758, 20.0
        %vm8887 = vcmp.gt.f32.partialorder %v8759, 20.0
        %vm8888 = vcmp.gt.f32.partialorder %v8760, 20.0
        %vm8889 = vcmp.gt.f32.partialorder %v8761, 20.0
        %vm8890 = vcmp.gt.f32.partialorder %v8762, 20.0
        %vm8891 = vcmp.gt.f32.partialorder %v8763, 20.0
        %vm8892 = vcmp.gt.f32.partialorder %v8764, 20.0
        %vm8893 = vcmp.gt.f32.partialorder %v8765, 20.0
        %vm8894 = vcmp.gt.f32.partialorder %v8766, 20.0
        %vm8895 = vcmp.gt.f32.partialorder %v8767, 20.0
        %vm8896 = vcmp.gt.f32.partialorder %v8768, 20.0
        %vm8897 = vcmp.gt.f32.partialorder %v8769, 20.0
        %vm8898 = vcmp.gt.f32.partialorder %v8770, 20.0
        %vm8899 = vcmp.gt.f32.partialorder %v8771, 20.0
        %vm8900 = vcmp.gt.f32.partialorder %v8772, 20.0
        %vm8901 = vcmp.gt.f32.partialorder %v8773, 20.0
        %v8902 = vmul.f32 %v8774, 1.442695
        %v8903 = vpow.pop %v8902
        %v8904 = vmul.f32 %v8775, 1.442695
        %v8905 = vpow.pop %v8904
        %v8906 = vmul.f32 %v8776, 1.442695
        %v8907 = vpow.pop %v8906
        %v8908 = vmul.f32 %v8777, 1.442695
        %v8909 = vpow.pop %v8908
        %v8910 = vmul.f32 %v8778, 1.442695
        %v8911 = vpow.pop %v8910
        %v8912 = vmul.f32 %v8779, 1.442695
        %v8913 = vpow.pop %v8912
        %v8914 = vmul.f32 %v8780, 1.442695
        %v8915 = vpow.pop %v8914
        %v8916 = vmul.f32 %v8781, 1.442695
        %v8917 = vpow.pop %v8916
        %v8918 = vmul.f32 %v8782, 1.442695
        %v8919 = vpow.pop %v8918
        %v8920 = vmul.f32 %v8783, 1.442695
        %v8921 = vpow.pop %v8920
        %v8922 = vmul.f32 %v8784, 1.442695
        %v8923 = vpow.pop %v8922
        %v8924 = vmul.f32 %v8785, 1.442695
        %v8925 = vpow.pop %v8924
        %v8926 = vmul.f32 %v8786, 1.442695
        %v8927 = vpow.pop %v8926
        %v8928 = vmul.f32 %v8787, 1.442695
        %v8929 = vpow.pop %v8928
        %v8930 = vmul.f32 %v8788, 1.442695
        %v8931 = vpow.pop %v8930
        %v8932 = vmul.f32 %v8789, 1.442695
        %v8933 = vpow.pop %v8932
        %v8934 = vmul.f32 %v8790, 1.442695
        %v8935 = vpow.pop %v8934
        %v8936 = vmul.f32 %v8791, 1.442695
        %v8937 = vpow.pop %v8936
        %v8938 = vmul.f32 %v8792, 1.442695
        %v8939 = vpow.pop %v8938
        %v8940 = vmul.f32 %v8793, 1.442695
        %v8941 = vpow.pop %v8940
        %v8942 = vmul.f32 %v8794, 1.442695
        %v8943 = vpow.pop %v8942
        %v8944 = vmul.f32 %v8795, 1.442695
        %v8945 = vpow.pop %v8944
        %v8946 = vmul.f32 %v8796, 1.442695
        %v8947 = vpow.pop %v8946
        %v8948 = vmul.f32 %v8797, 1.442695
        %v8949 = vpow.pop %v8948
        %v8950 = vmul.f32 %v8798, 1.442695
        %v8951 = vpow.pop %v8950
        %v8952 = vmul.f32 %v8799, 1.442695
        %v8953 = vpow.pop %v8952
        %v8954 = vmul.f32 %v8800, 1.442695
        %v8955 = vpow.pop %v8954
        %v8956 = vmul.f32 %v8801, 1.442695
        %v8957 = vpow.pop %v8956
        %v8958 = vmul.f32 %v8802, 1.442695
        %v8959 = vpow.pop %v8958
        %v8960 = vmul.f32 %v8803, 1.442695
        %v8961 = vpow.pop %v8960
        %v8962 = vmul.f32 %v8804, 1.442695
        %v8963 = vpow.pop %v8962
        %v8964 = vmul.f32 %v8805, 1.442695
        %v8965 = vpow.pop %v8964
        %v8966 = vmul.f32 %v8806, 1.442695
        %v8967 = vpow.pop %v8966
        %v8968 = vmul.f32 %v8807, 1.442695
        %v8969 = vpow.pop %v8968
        %v8970 = vmul.f32 %v8808, 1.442695
        %v8971 = vpow.pop %v8970
        %v8972 = vmul.f32 %v8809, 1.442695
        %v8973 = vpow.pop %v8972
        %v8974 = vmul.f32 %v8810, 1.442695
        %v8975 = vpow.pop %v8974
        %v8976 = vmul.f32 %v8811, 1.442695
        %v8977 = vpow.pop %v8976
        %v8978 = vmul.f32 %v8812, 1.442695
        %v8979 = vpow.pop %v8978
        %v8980 = vmul.f32 %v8813, 1.442695
        %v8981 = vpow.pop %v8980
        %v8982 = vmul.f32 %v8814, 1.442695
        %v8983 = vpow.pop %v8982
        %v8984 = vmul.f32 %v8815, 1.442695
        %v8985 = vpow.pop %v8984
        %v8986 = vmul.f32 %v8816, 1.442695
        %v8987 = vpow.pop %v8986
        %v8988 = vmul.f32 %v8817, 1.442695
        %v8989 = vpow.pop %v8988
        %v8990 = vmul.f32 %v8818, 1.442695
        %v8991 = vpow.pop %v8990
        %v8992 = vmul.f32 %v8819, 1.442695
        %v8993 = vpow.pop %v8992
        %v8994 = vmul.f32 %v8820, 1.442695
        %v8995 = vpow.pop %v8994
        %v8996 = vmul.f32 %v8821, 1.442695
        %v8997 = vpow.pop %v8996
        %v8998 = vmul.f32 %v8822, 1.442695
        %v8999 = vpow.pop %v8998
        %v9000 = vmul.f32 %v8823, 1.442695
        %v9001 = vpow.pop %v9000
        %v9002 = vmul.f32 %v8824, 1.442695
        %v9003 = vpow.pop %v9002
        %v9004 = vmul.f32 %v8825, 1.442695
        %v9005 = vpow.pop %v9004
        %v9006 = vmul.f32 %v8826, 1.442695
        %v9007 = vpow.pop %v9006
        %v9008 = vmul.f32 %v8827, 1.442695
        %v9009 = vpow.pop %v9008
        %v9010 = vmul.f32 %v8828, 1.442695
        %v9011 = vpow.pop %v9010
        %v9012 = vmul.f32 %v8829, 1.442695
        %v9013 = vpow.pop %v9012
        %v9014 = vmul.f32 %v8830, 1.442695
        %v9015 = vpow.pop %v9014
        %v9016 = vmul.f32 %v8831, 1.442695
        %v9017 = vpow.pop %v9016
        %v9018 = vmul.f32 %v8832, 1.442695
        %v9019 = vpow.pop %v9018
        %v9020 = vmul.f32 %v8833, 1.442695
        %v9021 = vpow.pop %v9020
        %v9022 = vmul.f32 %v8834, 1.442695
        %v9023 = vpow.pop %v9022
        %v9024 = vmul.f32 %v8835, 1.442695
        %v9025 = vpow.pop %v9024
        %v9026 = vmul.f32 %v8836, 1.442695
        %v9027 = vpow.pop %v9026
        %v9028 = vmul.f32 %v8837, 1.442695
        %v9029 = vpow.pop %v9028
        %v9030 = vadd.f32 %v8903, 1.0
        %v9031 = vlog2.pop %v9030
        %v9032 = vmul.f32 %v9031, 0.6931472
        %v9033 = vmul.f32 -0.5, %v8903
        %v9034 = vadd.f32 %v9033, 1.0
        %v9035 = vmul.f32 %v9034, %v8903
        %v9036 = vand.u32 2147483647, %v8903
        %vm9037 = vcmp.lt.f32.partialorder %v9036, 0.0004427343
        %v9038 = vsel %vm9037, %v9035, %v9032
        %v9039 = vadd.f32 %v8905, 1.0
        %v9040 = vlog2.pop %v9039
        %v9041 = vmul.f32 %v9040, 0.6931472
        %v9042 = vmul.f32 -0.5, %v8905
        %v9043 = vadd.f32 %v9042, 1.0
        %v9044 = vmul.f32 %v9043, %v8905
        %v9045 = vand.u32 2147483647, %v8905
        %vm9046 = vcmp.lt.f32.partialorder %v9045, 0.0004427343
        %v9047 = vsel %vm9046, %v9044, %v9041
        %v9048 = vadd.f32 %v8907, 1.0
        %v9049 = vlog2.pop %v9048
        %v9050 = vmul.f32 %v9049, 0.6931472
        %v9051 = vmul.f32 -0.5, %v8907
        %v9052 = vadd.f32 %v9051, 1.0
        %v9053 = vmul.f32 %v9052, %v8907
        %v9054 = vand.u32 2147483647, %v8907
        %vm9055 = vcmp.lt.f32.partialorder %v9054, 0.0004427343
        %v9056 = vsel %vm9055, %v9053, %v9050
        %v9057 = vadd.f32 %v8909, 1.0
        %v9058 = vlog2.pop %v9057
        %v9059 = vmul.f32 %v9058, 0.6931472
        %v9060 = vmul.f32 -0.5, %v8909
        %v9061 = vadd.f32 %v9060, 1.0
        %v9062 = vmul.f32 %v9061, %v8909
        %v9063 = vand.u32 2147483647, %v8909
        %vm9064 = vcmp.lt.f32.partialorder %v9063, 0.0004427343
        %v9065 = vsel %vm9064, %v9062, %v9059
        %v9066 = vadd.f32 %v8911, 1.0
        %v9067 = vlog2.pop %v9066
        %v9068 = vmul.f32 %v9067, 0.6931472
        %v9069 = vmul.f32 -0.5, %v8911
        %v9070 = vadd.f32 %v9069, 1.0
        %v9071 = vmul.f32 %v9070, %v8911
        %v9072 = vand.u32 2147483647, %v8911
        %vm9073 = vcmp.lt.f32.partialorder %v9072, 0.0004427343
        %v9074 = vsel %vm9073, %v9071, %v9068
        %v9075 = vadd.f32 %v8913, 1.0
        %v9076 = vlog2.pop %v9075
        %v9077 = vmul.f32 %v9076, 0.6931472
        %v9078 = vmul.f32 -0.5, %v8913
        %v9079 = vadd.f32 %v9078, 1.0
        %v9080 = vmul.f32 %v9079, %v8913
        %v9081 = vand.u32 2147483647, %v8913
        %vm9082 = vcmp.lt.f32.partialorder %v9081, 0.0004427343
        %v9083 = vsel %vm9082, %v9080, %v9077
        %v9084 = vadd.f32 %v8915, 1.0
        %v9085 = vlog2.pop %v9084
        %v9086 = vmul.f32 %v9085, 0.6931472
        %v9087 = vmul.f32 -0.5, %v8915
        %v9088 = vadd.f32 %v9087, 1.0
        %v9089 = vmul.f32 %v9088, %v8915
        %v9090 = vand.u32 2147483647, %v8915
        %vm9091 = vcmp.lt.f32.partialorder %v9090, 0.0004427343
        %v9092 = vsel %vm9091, %v9089, %v9086
        %v9093 = vadd.f32 %v8917, 1.0
        %v9094 = vlog2.pop %v9093
        %v9095 = vmul.f32 %v9094, 0.6931472
        %v9096 = vmul.f32 -0.5, %v8917
        %v9097 = vadd.f32 %v9096, 1.0
        %v9098 = vmul.f32 %v9097, %v8917
        %v9099 = vand.u32 2147483647, %v8917
        %vm9100 = vcmp.lt.f32.partialorder %v9099, 0.0004427343
        %v9101 = vsel %vm9100, %v9098, %v9095
        %v9102 = vadd.f32 %v8919, 1.0
        %v9103 = vlog2.pop %v9102
        %v9104 = vmul.f32 %v9103, 0.6931472
        %v9105 = vmul.f32 -0.5, %v8919
        %v9106 = vadd.f32 %v9105, 1.0
        %v9107 = vmul.f32 %v9106, %v8919
        %v9108 = vand.u32 2147483647, %v8919
        %vm9109 = vcmp.lt.f32.partialorder %v9108, 0.0004427343
        %v9110 = vsel %vm9109, %v9107, %v9104
        %v9111 = vadd.f32 %v8921, 1.0
        %v9112 = vlog2.pop %v9111
        %v9113 = vmul.f32 %v9112, 0.6931472
        %v9114 = vmul.f32 -0.5, %v8921
        %v9115 = vadd.f32 %v9114, 1.0
        %v9116 = vmul.f32 %v9115, %v8921
        %v9117 = vand.u32 2147483647, %v8921
        %vm9118 = vcmp.lt.f32.partialorder %v9117, 0.0004427343
        %v9119 = vsel %vm9118, %v9116, %v9113
        %v9120 = vadd.f32 %v8923, 1.0
        %v9121 = vlog2.pop %v9120
        %v9122 = vmul.f32 %v9121, 0.6931472
        %v9123 = vmul.f32 -0.5, %v8923
        %v9124 = vadd.f32 %v9123, 1.0
        %v9125 = vmul.f32 %v9124, %v8923
        %v9126 = vand.u32 2147483647, %v8923
        %vm9127 = vcmp.lt.f32.partialorder %v9126, 0.0004427343
        %v9128 = vsel %vm9127, %v9125, %v9122
        %v9129 = vadd.f32 %v8925, 1.0
        %v9130 = vlog2.pop %v9129
        %v9131 = vmul.f32 %v9130, 0.6931472
        %v9132 = vmul.f32 -0.5, %v8925
        %v9133 = vadd.f32 %v9132, 1.0
        %v9134 = vmul.f32 %v9133, %v8925
        %v9135 = vand.u32 2147483647, %v8925
        %vm9136 = vcmp.lt.f32.partialorder %v9135, 0.0004427343
        %v9137 = vsel %vm9136, %v9134, %v9131
        %v9138 = vadd.f32 %v8927, 1.0
        %v9139 = vlog2.pop %v9138
        %v9140 = vmul.f32 %v9139, 0.6931472
        %v9141 = vmul.f32 -0.5, %v8927
        %v9142 = vadd.f32 %v9141, 1.0
        %v9143 = vmul.f32 %v9142, %v8927
        %v9144 = vand.u32 2147483647, %v8927
        %vm9145 = vcmp.lt.f32.partialorder %v9144, 0.0004427343
        %v9146 = vsel %vm9145, %v9143, %v9140
        %v9147 = vadd.f32 %v8929, 1.0
        %v9148 = vlog2.pop %v9147
        %v9149 = vmul.f32 %v9148, 0.6931472
        %v9150 = vmul.f32 -0.5, %v8929
        %v9151 = vadd.f32 %v9150, 1.0
        %v9152 = vmul.f32 %v9151, %v8929
        %v9153 = vand.u32 2147483647, %v8929
        %vm9154 = vcmp.lt.f32.partialorder %v9153, 0.0004427343
        %v9155 = vsel %vm9154, %v9152, %v9149
        %v9156 = vadd.f32 %v8931, 1.0
        %v9157 = vlog2.pop %v9156
        %v9158 = vmul.f32 %v9157, 0.6931472
        %v9159 = vmul.f32 -0.5, %v8931
        %v9160 = vadd.f32 %v9159, 1.0
        %v9161 = vmul.f32 %v9160, %v8931
        %v9162 = vand.u32 2147483647, %v8931
        %vm9163 = vcmp.lt.f32.partialorder %v9162, 0.0004427343
        %v9164 = vsel %vm9163, %v9161, %v9158
        %v9165 = vadd.f32 %v8933, 1.0
        %v9166 = vlog2.pop %v9165
        %v9167 = vmul.f32 %v9166, 0.6931472
        %v9168 = vmul.f32 -0.5, %v8933
        %v9169 = vadd.f32 %v9168, 1.0
        %v9170 = vmul.f32 %v9169, %v8933
        %v9171 = vand.u32 2147483647, %v8933
        %vm9172 = vcmp.lt.f32.partialorder %v9171, 0.0004427343
        %v9173 = vsel %vm9172, %v9170, %v9167
        %v9174 = vadd.f32 %v8935, 1.0
        %v9175 = vlog2.pop %v9174
        %v9176 = vmul.f32 %v9175, 0.6931472
        %v9177 = vmul.f32 -0.5, %v8935
        %v9178 = vadd.f32 %v9177, 1.0
        %v9179 = vmul.f32 %v9178, %v8935
        %v9180 = vand.u32 2147483647, %v8935
        %vm9181 = vcmp.lt.f32.partialorder %v9180, 0.0004427343
        %v9182 = vsel %vm9181, %v9179, %v9176
        %v9183 = vadd.f32 %v8937, 1.0
        %v9184 = vlog2.pop %v9183
        %v9185 = vmul.f32 %v9184, 0.6931472
        %v9186 = vmul.f32 -0.5, %v8937
        %v9187 = vadd.f32 %v9186, 1.0
        %v9188 = vmul.f32 %v9187, %v8937
        %v9189 = vand.u32 2147483647, %v8937
        %vm9190 = vcmp.lt.f32.partialorder %v9189, 0.0004427343
        %v9191 = vsel %vm9190, %v9188, %v9185
        %v9192 = vadd.f32 %v8939, 1.0
        %v9193 = vlog2.pop %v9192
        %v9194 = vmul.f32 %v9193, 0.6931472
        %v9195 = vmul.f32 -0.5, %v8939
        %v9196 = vadd.f32 %v9195, 1.0
        %v9197 = vmul.f32 %v9196, %v8939
        %v9198 = vand.u32 2147483647, %v8939
        %vm9199 = vcmp.lt.f32.partialorder %v9198, 0.0004427343
        %v9200 = vsel %vm9199, %v9197, %v9194
        %v9201 = vadd.f32 %v8941, 1.0
        %v9202 = vlog2.pop %v9201
        %v9203 = vmul.f32 %v9202, 0.6931472
        %v9204 = vmul.f32 -0.5, %v8941
        %v9205 = vadd.f32 %v9204, 1.0
        %v9206 = vmul.f32 %v9205, %v8941
        %v9207 = vand.u32 2147483647, %v8941
        %vm9208 = vcmp.lt.f32.partialorder %v9207, 0.0004427343
        %v9209 = vsel %vm9208, %v9206, %v9203
        %v9210 = vadd.f32 %v8943, 1.0
        %v9211 = vlog2.pop %v9210
        %v9212 = vmul.f32 %v9211, 0.6931472
        %v9213 = vmul.f32 -0.5, %v8943
        %v9214 = vadd.f32 %v9213, 1.0
        %v9215 = vmul.f32 %v9214, %v8943
        %v9216 = vand.u32 2147483647, %v8943
        %vm9217 = vcmp.lt.f32.partialorder %v9216, 0.0004427343
        %v9218 = vsel %vm9217, %v9215, %v9212
        %v9219 = vadd.f32 %v8945, 1.0
        %v9220 = vlog2.pop %v9219
        %v9221 = vmul.f32 %v9220, 0.6931472
        %v9222 = vmul.f32 -0.5, %v8945
        %v9223 = vadd.f32 %v9222, 1.0
        %v9224 = vmul.f32 %v9223, %v8945
        %v9225 = vand.u32 2147483647, %v8945
        %vm9226 = vcmp.lt.f32.partialorder %v9225, 0.0004427343
        %v9227 = vsel %vm9226, %v9224, %v9221
        %v9228 = vadd.f32 %v8947, 1.0
        %v9229 = vlog2.pop %v9228
        %v9230 = vmul.f32 %v9229, 0.6931472
        %v9231 = vmul.f32 -0.5, %v8947
        %v9232 = vadd.f32 %v9231, 1.0
        %v9233 = vmul.f32 %v9232, %v8947
        %v9234 = vand.u32 2147483647, %v8947
        %vm9235 = vcmp.lt.f32.partialorder %v9234, 0.0004427343
        %v9236 = vsel %vm9235, %v9233, %v9230
        %v9237 = vadd.f32 %v8949, 1.0
        %v9238 = vlog2.pop %v9237
        %v9239 = vmul.f32 %v9238, 0.6931472
        %v9240 = vmul.f32 -0.5, %v8949
        %v9241 = vadd.f32 %v9240, 1.0
        %v9242 = vmul.f32 %v9241, %v8949
        %v9243 = vand.u32 2147483647, %v8949
        %vm9244 = vcmp.lt.f32.partialorder %v9243, 0.0004427343
        %v9245 = vsel %vm9244, %v9242, %v9239
        %v9246 = vadd.f32 %v8951, 1.0
        %v9247 = vlog2.pop %v9246
        %v9248 = vmul.f32 %v9247, 0.6931472
        %v9249 = vmul.f32 -0.5, %v8951
        %v9250 = vadd.f32 %v9249, 1.0
        %v9251 = vmul.f32 %v9250, %v8951
        %v9252 = vand.u32 2147483647, %v8951
        %vm9253 = vcmp.lt.f32.partialorder %v9252, 0.0004427343
        %v9254 = vsel %vm9253, %v9251, %v9248
        %v9255 = vadd.f32 %v8953, 1.0
        %v9256 = vlog2.pop %v9255
        %v9257 = vmul.f32 %v9256, 0.6931472
        %v9258 = vmul.f32 -0.5, %v8953
        %v9259 = vadd.f32 %v9258, 1.0
        %v9260 = vmul.f32 %v9259, %v8953
        %v9261 = vand.u32 2147483647, %v8953
        %vm9262 = vcmp.lt.f32.partialorder %v9261, 0.0004427343
        %v9263 = vsel %vm9262, %v9260, %v9257
        %v9264 = vadd.f32 %v8955, 1.0
        %v9265 = vlog2.pop %v9264
        %v9266 = vmul.f32 %v9265, 0.6931472
        %v9267 = vmul.f32 -0.5, %v8955
        %v9268 = vadd.f32 %v9267, 1.0
        %v9269 = vmul.f32 %v9268, %v8955
        %v9270 = vand.u32 2147483647, %v8955
        %vm9271 = vcmp.lt.f32.partialorder %v9270, 0.0004427343
        %v9272 = vsel %vm9271, %v9269, %v9266
        %v9273 = vadd.f32 %v8957, 1.0
        %v9274 = vlog2.pop %v9273
        %v9275 = vmul.f32 %v9274, 0.6931472
        %v9276 = vmul.f32 -0.5, %v8957
        %v9277 = vadd.f32 %v9276, 1.0
        %v9278 = vmul.f32 %v9277, %v8957
        %v9279 = vand.u32 2147483647, %v8957
        %vm9280 = vcmp.lt.f32.partialorder %v9279, 0.0004427343
        %v9281 = vsel %vm9280, %v9278, %v9275
        %v9282 = vadd.f32 %v8959, 1.0
        %v9283 = vlog2.pop %v9282
        %v9284 = vmul.f32 %v9283, 0.6931472
        %v9285 = vmul.f32 -0.5, %v8959
        %v9286 = vadd.f32 %v9285, 1.0
        %v9287 = vmul.f32 %v9286, %v8959
        %v9288 = vand.u32 2147483647, %v8959
        %vm9289 = vcmp.lt.f32.partialorder %v9288, 0.0004427343
        %v9290 = vsel %vm9289, %v9287, %v9284
        %v9291 = vadd.f32 %v8961, 1.0
        %v9292 = vlog2.pop %v9291
        %v9293 = vmul.f32 %v9292, 0.6931472
        %v9294 = vmul.f32 -0.5, %v8961
        %v9295 = vadd.f32 %v9294, 1.0
        %v9296 = vmul.f32 %v9295, %v8961
        %v9297 = vand.u32 2147483647, %v8961
        %vm9298 = vcmp.lt.f32.partialorder %v9297, 0.0004427343
        %v9299 = vsel %vm9298, %v9296, %v9293
        %v9300 = vadd.f32 %v8963, 1.0
        %v9301 = vlog2.pop %v9300
        %v9302 = vmul.f32 %v9301, 0.6931472
        %v9303 = vmul.f32 -0.5, %v8963
        %v9304 = vadd.f32 %v9303, 1.0
        %v9305 = vmul.f32 %v9304, %v8963
        %v9306 = vand.u32 2147483647, %v8963
        %vm9307 = vcmp.lt.f32.partialorder %v9306, 0.0004427343
        %v9308 = vsel %vm9307, %v9305, %v9302
        %v9309 = vadd.f32 %v8965, 1.0
        %v9310 = vlog2.pop %v9309
        %v9311 = vmul.f32 %v9310, 0.6931472
        %v9312 = vmul.f32 -0.5, %v8965
        %v9313 = vadd.f32 %v9312, 1.0
        %v9314 = vmul.f32 %v9313, %v8965
        %v9315 = vand.u32 2147483647, %v8965
        %vm9316 = vcmp.lt.f32.partialorder %v9315, 0.0004427343
        %v9317 = vsel %vm9316, %v9314, %v9311
        %v9318 = vadd.f32 %v8967, 1.0
        %v9319 = vlog2.pop %v9318
        %v9320 = vmul.f32 %v9319, 0.6931472
        %v9321 = vmul.f32 -0.5, %v8967
        %v9322 = vadd.f32 %v9321, 1.0
        %v9323 = vmul.f32 %v9322, %v8967
        %v9324 = vand.u32 2147483647, %v8967
        %vm9325 = vcmp.lt.f32.partialorder %v9324, 0.0004427343
        %v9326 = vsel %vm9325, %v9323, %v9320
        %v9327 = vadd.f32 %v8969, 1.0
        %v9328 = vlog2.pop %v9327
        %v9329 = vmul.f32 %v9328, 0.6931472
        %v9330 = vmul.f32 -0.5, %v8969
        %v9331 = vadd.f32 %v9330, 1.0
        %v9332 = vmul.f32 %v9331, %v8969
        %v9333 = vand.u32 2147483647, %v8969
        %vm9334 = vcmp.lt.f32.partialorder %v9333, 0.0004427343
        %v9335 = vsel %vm9334, %v9332, %v9329
        %v9336 = vadd.f32 %v8971, 1.0
        %v9337 = vlog2.pop %v9336
        %v9338 = vmul.f32 %v9337, 0.6931472
        %v9339 = vmul.f32 -0.5, %v8971
        %v9340 = vadd.f32 %v9339, 1.0
        %v9341 = vmul.f32 %v9340, %v8971
        %v9342 = vand.u32 2147483647, %v8971
        %vm9343 = vcmp.lt.f32.partialorder %v9342, 0.0004427343
        %v9344 = vsel %vm9343, %v9341, %v9338
        %v9345 = vadd.f32 %v8973, 1.0
        %v9346 = vlog2.pop %v9345
        %v9347 = vmul.f32 %v9346, 0.6931472
        %v9348 = vmul.f32 -0.5, %v8973
        %v9349 = vadd.f32 %v9348, 1.0
        %v9350 = vmul.f32 %v9349, %v8973
        %v9351 = vand.u32 2147483647, %v8973
        %vm9352 = vcmp.lt.f32.partialorder %v9351, 0.0004427343
        %v9353 = vsel %vm9352, %v9350, %v9347
        %v9354 = vadd.f32 %v8975, 1.0
        %v9355 = vlog2.pop %v9354
        %v9356 = vmul.f32 %v9355, 0.6931472
        %v9357 = vmul.f32 -0.5, %v8975
        %v9358 = vadd.f32 %v9357, 1.0
        %v9359 = vmul.f32 %v9358, %v8975
        %v9360 = vand.u32 2147483647, %v8975
        %vm9361 = vcmp.lt.f32.partialorder %v9360, 0.0004427343
        %v9362 = vsel %vm9361, %v9359, %v9356
        %v9363 = vadd.f32 %v8977, 1.0
        %v9364 = vlog2.pop %v9363
        %v9365 = vmul.f32 %v9364, 0.6931472
        %v9366 = vmul.f32 -0.5, %v8977
        %v9367 = vadd.f32 %v9366, 1.0
        %v9368 = vmul.f32 %v9367, %v8977
        %v9369 = vand.u32 2147483647, %v8977
        %vm9370 = vcmp.lt.f32.partialorder %v9369, 0.0004427343
        %v9371 = vsel %vm9370, %v9368, %v9365
        %v9372 = vadd.f32 %v8979, 1.0
        %v9373 = vlog2.pop %v9372
        %v9374 = vmul.f32 %v9373, 0.6931472
        %v9375 = vmul.f32 -0.5, %v8979
        %v9376 = vadd.f32 %v9375, 1.0
        %v9377 = vmul.f32 %v9376, %v8979
        %v9378 = vand.u32 2147483647, %v8979
        %vm9379 = vcmp.lt.f32.partialorder %v9378, 0.0004427343
        %v9380 = vsel %vm9379, %v9377, %v9374
        %v9381 = vadd.f32 %v8981, 1.0
        %v9382 = vlog2.pop %v9381
        %v9383 = vmul.f32 %v9382, 0.6931472
        %v9384 = vmul.f32 -0.5, %v8981
        %v9385 = vadd.f32 %v9384, 1.0
        %v9386 = vmul.f32 %v9385, %v8981
        %v9387 = vand.u32 2147483647, %v8981
        %vm9388 = vcmp.lt.f32.partialorder %v9387, 0.0004427343
        %v9389 = vsel %vm9388, %v9386, %v9383
        %v9390 = vadd.f32 %v8983, 1.0
        %v9391 = vlog2.pop %v9390
        %v9392 = vmul.f32 %v9391, 0.6931472
        %v9393 = vmul.f32 -0.5, %v8983
        %v9394 = vadd.f32 %v9393, 1.0
        %v9395 = vmul.f32 %v9394, %v8983
        %v9396 = vand.u32 2147483647, %v8983
        %vm9397 = vcmp.lt.f32.partialorder %v9396, 0.0004427343
        %v9398 = vsel %vm9397, %v9395, %v9392
        %v9399 = vadd.f32 %v8985, 1.0
        %v9400 = vlog2.pop %v9399
        %v9401 = vmul.f32 %v9400, 0.6931472
        %v9402 = vmul.f32 -0.5, %v8985
        %v9403 = vadd.f32 %v9402, 1.0
        %v9404 = vmul.f32 %v9403, %v8985
        %v9405 = vand.u32 2147483647, %v8985
        %vm9406 = vcmp.lt.f32.partialorder %v9405, 0.0004427343
        %v9407 = vsel %vm9406, %v9404, %v9401
        %v9408 = vadd.f32 %v8987, 1.0
        %v9409 = vlog2.pop %v9408
        %v9410 = vmul.f32 %v9409, 0.6931472
        %v9411 = vmul.f32 -0.5, %v8987
        %v9412 = vadd.f32 %v9411, 1.0
        %v9413 = vmul.f32 %v9412, %v8987
        %v9414 = vand.u32 2147483647, %v8987
        %vm9415 = vcmp.lt.f32.partialorder %v9414, 0.0004427343
        %v9416 = vsel %vm9415, %v9413, %v9410
        %v9417 = vadd.f32 %v8989, 1.0
        %v9418 = vlog2.pop %v9417
        %v9419 = vmul.f32 %v9418, 0.6931472
        %v9420 = vmul.f32 -0.5, %v8989
        %v9421 = vadd.f32 %v9420, 1.0
        %v9422 = vmul.f32 %v9421, %v8989
        %v9423 = vand.u32 2147483647, %v8989
        %vm9424 = vcmp.lt.f32.partialorder %v9423, 0.0004427343
        %v9425 = vsel %vm9424, %v9422, %v9419
        %v9426 = vadd.f32 %v8991, 1.0
        %v9427 = vlog2.pop %v9426
        %v9428 = vmul.f32 %v9427, 0.6931472
        %v9429 = vmul.f32 -0.5, %v8991
        %v9430 = vadd.f32 %v9429, 1.0
        %v9431 = vmul.f32 %v9430, %v8991
        %v9432 = vand.u32 2147483647, %v8991
        %vm9433 = vcmp.lt.f32.partialorder %v9432, 0.0004427343
        %v9434 = vsel %vm9433, %v9431, %v9428
        %v9435 = vadd.f32 %v8993, 1.0
        %v9436 = vlog2.pop %v9435
        %v9437 = vmul.f32 %v9436, 0.6931472
        %v9438 = vmul.f32 -0.5, %v8993
        %v9439 = vadd.f32 %v9438, 1.0
        %v9440 = vmul.f32 %v9439, %v8993
        %v9441 = vand.u32 2147483647, %v8993
        %vm9442 = vcmp.lt.f32.partialorder %v9441, 0.0004427343
        %v9443 = vsel %vm9442, %v9440, %v9437
        %v9444 = vadd.f32 %v8995, 1.0
        %v9445 = vlog2.pop %v9444
        %v9446 = vmul.f32 %v9445, 0.6931472
        %v9447 = vmul.f32 -0.5, %v8995
        %v9448 = vadd.f32 %v9447, 1.0
        %v9449 = vmul.f32 %v9448, %v8995
        %v9450 = vand.u32 2147483647, %v8995
        %vm9451 = vcmp.lt.f32.partialorder %v9450, 0.0004427343
        %v9452 = vsel %vm9451, %v9449, %v9446
        %v9453 = vadd.f32 %v8997, 1.0
        %v9454 = vlog2.pop %v9453
        %v9455 = vmul.f32 %v9454, 0.6931472
        %v9456 = vmul.f32 -0.5, %v8997
        %v9457 = vadd.f32 %v9456, 1.0
        %v9458 = vmul.f32 %v9457, %v8997
        %v9459 = vand.u32 2147483647, %v8997
        %vm9460 = vcmp.lt.f32.partialorder %v9459, 0.0004427343
        %v9461 = vsel %vm9460, %v9458, %v9455
        %v9462 = vadd.f32 %v8999, 1.0
        %v9463 = vlog2.pop %v9462
        %v9464 = vmul.f32 %v9463, 0.6931472
        %v9465 = vmul.f32 -0.5, %v8999
        %v9466 = vadd.f32 %v9465, 1.0
        %v9467 = vmul.f32 %v9466, %v8999
        %v9468 = vand.u32 2147483647, %v8999
        %vm9469 = vcmp.lt.f32.partialorder %v9468, 0.0004427343
        %v9470 = vsel %vm9469, %v9467, %v9464
        %v9471 = vadd.f32 %v9001, 1.0
        %v9472 = vlog2.pop %v9471
        %v9473 = vmul.f32 %v9472, 0.6931472
        %v9474 = vmul.f32 -0.5, %v9001
        %v9475 = vadd.f32 %v9474, 1.0
        %v9476 = vmul.f32 %v9475, %v9001
        %v9477 = vand.u32 2147483647, %v9001
        %vm9478 = vcmp.lt.f32.partialorder %v9477, 0.0004427343
        %v9479 = vsel %vm9478, %v9476, %v9473
        %v9480 = vadd.f32 %v9003, 1.0
        %v9481 = vlog2.pop %v9480
        %v9482 = vmul.f32 %v9481, 0.6931472
        %v9483 = vmul.f32 -0.5, %v9003
        %v9484 = vadd.f32 %v9483, 1.0
        %v9485 = vmul.f32 %v9484, %v9003
        %v9486 = vand.u32 2147483647, %v9003
        %vm9487 = vcmp.lt.f32.partialorder %v9486, 0.0004427343
        %v9488 = vsel %vm9487, %v9485, %v9482
        %v9489 = vadd.f32 %v9005, 1.0
        %v9490 = vlog2.pop %v9489
        %v9491 = vmul.f32 %v9490, 0.6931472
        %v9492 = vmul.f32 -0.5, %v9005
        %v9493 = vadd.f32 %v9492, 1.0
        %v9494 = vmul.f32 %v9493, %v9005
        %v9495 = vand.u32 2147483647, %v9005
        %vm9496 = vcmp.lt.f32.partialorder %v9495, 0.0004427343
        %v9497 = vsel %vm9496, %v9494, %v9491
        %v9498 = vadd.f32 %v9007, 1.0
        %v9499 = vlog2.pop %v9498
        %v9500 = vmul.f32 %v9499, 0.6931472
        %v9501 = vmul.f32 -0.5, %v9007
        %v9502 = vadd.f32 %v9501, 1.0
        %v9503 = vmul.f32 %v9502, %v9007
        %v9504 = vand.u32 2147483647, %v9007
        %vm9505 = vcmp.lt.f32.partialorder %v9504, 0.0004427343
        %v9506 = vsel %vm9505, %v9503, %v9500
        %v9507 = vadd.f32 %v9009, 1.0
        %v9508 = vlog2.pop %v9507
        %v9509 = vmul.f32 %v9508, 0.6931472
        %v9510 = vmul.f32 -0.5, %v9009
        %v9511 = vadd.f32 %v9510, 1.0
        %v9512 = vmul.f32 %v9511, %v9009
        %v9513 = vand.u32 2147483647, %v9009
        %vm9514 = vcmp.lt.f32.partialorder %v9513, 0.0004427343
        %v9515 = vsel %vm9514, %v9512, %v9509
        %v9516 = vadd.f32 %v9011, 1.0
        %v9517 = vlog2.pop %v9516
        %v9518 = vmul.f32 %v9517, 0.6931472
        %v9519 = vmul.f32 -0.5, %v9011
        %v9520 = vadd.f32 %v9519, 1.0
        %v9521 = vmul.f32 %v9520, %v9011
        %v9522 = vand.u32 2147483647, %v9011
        %vm9523 = vcmp.lt.f32.partialorder %v9522, 0.0004427343
        %v9524 = vsel %vm9523, %v9521, %v9518
        %v9525 = vadd.f32 %v9013, 1.0
        %v9526 = vlog2.pop %v9525
        %v9527 = vmul.f32 %v9526, 0.6931472
        %v9528 = vmul.f32 -0.5, %v9013
        %v9529 = vadd.f32 %v9528, 1.0
        %v9530 = vmul.f32 %v9529, %v9013
        %v9531 = vand.u32 2147483647, %v9013
        %vm9532 = vcmp.lt.f32.partialorder %v9531, 0.0004427343
        %v9533 = vsel %vm9532, %v9530, %v9527
        %v9534 = vadd.f32 %v9015, 1.0
        %v9535 = vlog2.pop %v9534
        %v9536 = vmul.f32 %v9535, 0.6931472
        %v9537 = vmul.f32 -0.5, %v9015
        %v9538 = vadd.f32 %v9537, 1.0
        %v9539 = vmul.f32 %v9538, %v9015
        %v9540 = vand.u32 2147483647, %v9015
        %vm9541 = vcmp.lt.f32.partialorder %v9540, 0.0004427343
        %v9542 = vsel %vm9541, %v9539, %v9536
        %v9543 = vadd.f32 %v9017, 1.0
        %v9544 = vlog2.pop %v9543
        %v9545 = vmul.f32 %v9544, 0.6931472
        %v9546 = vmul.f32 -0.5, %v9017
        %v9547 = vadd.f32 %v9546, 1.0
        %v9548 = vmul.f32 %v9547, %v9017
        %v9549 = vand.u32 2147483647, %v9017
        %vm9550 = vcmp.lt.f32.partialorder %v9549, 0.0004427343
        %v9551 = vsel %vm9550, %v9548, %v9545
        %v9552 = vadd.f32 %v9019, 1.0
        %v9553 = vlog2.pop %v9552
        %v9554 = vmul.f32 %v9553, 0.6931472
        %v9555 = vmul.f32 -0.5, %v9019
        %v9556 = vadd.f32 %v9555, 1.0
        %v9557 = vmul.f32 %v9556, %v9019
        %v9558 = vand.u32 2147483647, %v9019
        %vm9559 = vcmp.lt.f32.partialorder %v9558, 0.0004427343
        %v9560 = vsel %vm9559, %v9557, %v9554
        %v9561 = vadd.f32 %v9021, 1.0
        %v9562 = vlog2.pop %v9561
        %v9563 = vmul.f32 %v9562, 0.6931472
        %v9564 = vmul.f32 -0.5, %v9021
        %v9565 = vadd.f32 %v9564, 1.0
        %v9566 = vmul.f32 %v9565, %v9021
        %v9567 = vand.u32 2147483647, %v9021
        %vm9568 = vcmp.lt.f32.partialorder %v9567, 0.0004427343
        %v9569 = vsel %vm9568, %v9566, %v9563
        %v9570 = vadd.f32 %v9023, 1.0
        %v9571 = vlog2.pop %v9570
        %v9572 = vmul.f32 %v9571, 0.6931472
        %v9573 = vmul.f32 -0.5, %v9023
        %v9574 = vadd.f32 %v9573, 1.0
        %v9575 = vmul.f32 %v9574, %v9023
        %v9576 = vand.u32 2147483647, %v9023
        %vm9577 = vcmp.lt.f32.partialorder %v9576, 0.0004427343
        %v9578 = vsel %vm9577, %v9575, %v9572
        %v9579 = vadd.f32 %v9025, 1.0
        %v9580 = vlog2.pop %v9579
        %v9581 = vmul.f32 %v9580, 0.6931472
        %v9582 = vmul.f32 -0.5, %v9025
        %v9583 = vadd.f32 %v9582, 1.0
        %v9584 = vmul.f32 %v9583, %v9025
        %v9585 = vand.u32 2147483647, %v9025
        %vm9586 = vcmp.lt.f32.partialorder %v9585, 0.0004427343
        %v9587 = vsel %vm9586, %v9584, %v9581
        %v9588 = vadd.f32 %v9027, 1.0
        %v9589 = vlog2.pop %v9588
        %v9590 = vmul.f32 %v9589, 0.6931472
        %v9591 = vmul.f32 -0.5, %v9027
        %v9592 = vadd.f32 %v9591, 1.0
        %v9593 = vmul.f32 %v9592, %v9027
        %v9594 = vand.u32 2147483647, %v9027
        %vm9595 = vcmp.lt.f32.partialorder %v9594, 0.0004427343
        %v9596 = vsel %vm9595, %v9593, %v9590
        %v9597 = vadd.f32 %v9029, 1.0
        %v9598 = vlog2.pop %v9597
        %v9599 = vmul.f32 %v9598, 0.6931472
        %v9600 = vmul.f32 -0.5, %v9029
        %v9601 = vadd.f32 %v9600, 1.0
        %v9602 = vmul.f32 %v9601, %v9029
        %v9603 = vand.u32 2147483647, %v9029
        %vm9604 = vcmp.lt.f32.partialorder %v9603, 0.0004427343
        %v9605 = vsel %vm9604, %v9602, %v9599
        %v9606 = vmul.f32 %v9038, 0.01
        %v9607 = vmul.f32 %v9047, 0.01
        %v9608 = vmul.f32 %v9056, 0.01
        %v9609 = vmul.f32 %v9065, 0.01
        %v9610 = vmul.f32 %v9074, 0.01
        %v9611 = vmul.f32 %v9083, 0.01
        %v9612 = vmul.f32 %v9092, 0.01
        %v9613 = vmul.f32 %v9101, 0.01
        %v9614 = vmul.f32 %v9110, 0.01
        %v9615 = vmul.f32 %v9119, 0.01
        %v9616 = vmul.f32 %v9128, 0.01
        %v9617 = vmul.f32 %v9137, 0.01
        %v9618 = vmul.f32 %v9146, 0.01
        %v9619 = vmul.f32 %v9155, 0.01
        %v9620 = vmul.f32 %v9164, 0.01
        %v9621 = vmul.f32 %v9173, 0.01
        %v9622 = vmul.f32 %v9182, 0.01
        %v9623 = vmul.f32 %v9191, 0.01
        %v9624 = vmul.f32 %v9200, 0.01
        %v9625 = vmul.f32 %v9209, 0.01
        %v9626 = vmul.f32 %v9218, 0.01
        %v9627 = vmul.f32 %v9227, 0.01
        %v9628 = vmul.f32 %v9236, 0.01
        %v9629 = vmul.f32 %v9245, 0.01
        %v9630 = vmul.f32 %v9254, 0.01
        %v9631 = vmul.f32 %v9263, 0.01
        %v9632 = vmul.f32 %v9272, 0.01
        %v9633 = vmul.f32 %v9281, 0.01
        %v9634 = vmul.f32 %v9290, 0.01
        %v9635 = vmul.f32 %v9299, 0.01
        %v9636 = vmul.f32 %v9308, 0.01
        %v9637 = vmul.f32 %v9317, 0.01
        %v9638 = vmul.f32 %v9326, 0.01
        %v9639 = vmul.f32 %v9335, 0.01
        %v9640 = vmul.f32 %v9344, 0.01
        %v9641 = vmul.f32 %v9353, 0.01
        %v9642 = vmul.f32 %v9362, 0.01
        %v9643 = vmul.f32 %v9371, 0.01
        %v9644 = vmul.f32 %v9380, 0.01
        %v9645 = vmul.f32 %v9389, 0.01
        %v9646 = vmul.f32 %v9398, 0.01
        %v9647 = vmul.f32 %v9407, 0.01
        %v9648 = vmul.f32 %v9416, 0.01
        %v9649 = vmul.f32 %v9425, 0.01
        %v9650 = vmul.f32 %v9434, 0.01
        %v9651 = vmul.f32 %v9443, 0.01
        %v9652 = vmul.f32 %v9452, 0.01
        %v9653 = vmul.f32 %v9461, 0.01
        %v9654 = vmul.f32 %v9470, 0.01
        %v9655 = vmul.f32 %v9479, 0.01
        %v9656 = vmul.f32 %v9488, 0.01
        %v9657 = vmul.f32 %v9497, 0.01
        %v9658 = vmul.f32 %v9506, 0.01
        %v9659 = vmul.f32 %v9515, 0.01
        %v9660 = vmul.f32 %v9524, 0.01
        %v9661 = vmul.f32 %v9533, 0.01
        %v9662 = vmul.f32 %v9542, 0.01
        %v9663 = vmul.f32 %v9551, 0.01
        %v9664 = vmul.f32 %v9560, 0.01
        %v9665 = vmul.f32 %v9569, 0.01
        %v9666 = vmul.f32 %v9578, 0.01
        %v9667 = vmul.f32 %v9587, 0.01
        %v9668 = vmul.f32 %v9596, 0.01
        %v9669 = vmul.f32 %v9605, 0.01
        %v9670 = vsel %vm8838, %v8552, %v9606
        %v9671 = vsel %vm8839, %v8554, %v9607
        %v9672 = vsel %vm8840, %v8556, %v9608
        %v9673 = vsel %vm8841, %v8558, %v9609
        %v9674 = vsel %vm8842, %v8562, %v9610
        %v9675 = vsel %vm8843, %v8564, %v9611
        %v9676 = vsel %vm8844, %v8566, %v9612
        %v9677 = vsel %vm8845, %v8568, %v9613
        %v9678 = vsel %vm8846, %v8572, %v9614
        %v9679 = vsel %vm8847, %v8574, %v9615
        %v9680 = vsel %vm8848, %v8576, %v9616
        %v9681 = vsel %vm8849, %v8578, %v9617
        %v9682 = vsel %vm8850, %v8582, %v9618
        %v9683 = vsel %vm8851, %v8584, %v9619
        %v9684 = vsel %vm8852, %v8586, %v9620
        %v9685 = vsel %vm8853, %v8588, %v9621
        %v9686 = vsel %vm8854, %v8592, %v9622
        %v9687 = vsel %vm8855, %v8594, %v9623
        %v9688 = vsel %vm8856, %v8596, %v9624
        %v9689 = vsel %vm8857, %v8598, %v9625
        %v9690 = vsel %vm8858, %v8602, %v9626
        %v9691 = vsel %vm8859, %v8604, %v9627
        %v9692 = vsel %vm8860, %v8606, %v9628
        %v9693 = vsel %vm8861, %v8608, %v9629
        %v9694 = vsel %vm8862, %v8612, %v9630
        %v9695 = vsel %vm8863, %v8614, %v9631
        %v9696 = vsel %vm8864, %v8616, %v9632
        %v9697 = vsel %vm8865, %v8618, %v9633
        %v9698 = vsel %vm8866, %v8622, %v9634
        %v9699 = vsel %vm8867, %v8624, %v9635
        %v9700 = vsel %vm8868, %v8626, %v9636
        %v9701 = vsel %vm8869, %v8628, %v9637
        %v9702 = vsel %vm8870, %v8632, %v9638
        %v9703 = vsel %vm8871, %v8634, %v9639
        %v9704 = vsel %vm8872, %v8636, %v9640
        %v9705 = vsel %vm8873, %v8638, %v9641
        %v9706 = vsel %vm8874, %v8642, %v9642
        %v9707 = vsel %vm8875, %v8644, %v9643
        %v9708 = vsel %vm8876, %v8646, %v9644
        %v9709 = vsel %vm8877, %v8648, %v9645
        %v9710 = vsel %vm8878, %v8652, %v9646
        %v9711 = vsel %vm8879, %v8654, %v9647
        %v9712 = vsel %vm8880, %v8656, %v9648
        %v9713 = vsel %vm8881, %v8658, %v9649
        %v9714 = vsel %vm8882, %v8662, %v9650
        %v9715 = vsel %vm8883, %v8664, %v9651
        %v9716 = vsel %vm8884, %v8666, %v9652
        %v9717 = vsel %vm8885, %v8668, %v9653
        %v9718 = vsel %vm8886, %v8672, %v9654
        %v9719 = vsel %vm8887, %v8674, %v9655
        %v9720 = vsel %vm8888, %v8676, %v9656
        %v9721 = vsel %vm8889, %v8678, %v9657
        %v9722 = vsel %vm8890, %v8682, %v9658
        %v9723 = vsel %vm8891, %v8684, %v9659
        %v9724 = vsel %vm8892, %v8686, %v9660
        %v9725 = vsel %vm8893, %v8688, %v9661
        %v9726 = vsel %vm8894, %v8692, %v9662
        %v9727 = vsel %vm8895, %v8694, %v9663
        %v9728 = vsel %vm8896, %v8696, %v9664
        %v9729 = vsel %vm8897, %v8698, %v9665
        %v9730 = vsel %vm8898, %v8702, %v9666
        %v9731 = vsel %vm8899, %v8704, %v9667
        %v9732 = vsel %vm8900, %v8706, %v9668
        %v9733 = vsel %vm8901, %v8708, %v9669
        %v9734 = vld [vmem:[%s12] sm:$0xf]
        %v9735 = vpack.c.bf16 %v9672, %v9670
        %v9736 = vpack.c.bf16 %v9673, %v9671
        %v9737 = vpack.c.bf16 %v9676, %v9674
        %v9738 = vpack.c.bf16 %v9677, %v9675
        %v9739 = vpack.c.bf16 %v9680, %v9678
        %v9740 = vpack.c.bf16 %v9681, %v9679
        %v9741 = vpack.c.bf16 %v9684, %v9682
        %v9742 = vpack.c.bf16 %v9685, %v9683
        %v9743 = vpack.c.bf16 %v9688, %v9686
        %v9744 = vpack.c.bf16 %v9689, %v9687
        %v9745 = vpack.c.bf16 %v9692, %v9690
        %v9746 = vpack.c.bf16 %v9693, %v9691
        %v9747 = vpack.c.bf16 %v9696, %v9694
        %v9748 = vpack.c.bf16 %v9697, %v9695
        %v9749 = vpack.c.bf16 %v9700, %v9698
        %v9750 = vpack.c.bf16 %v9701, %v9699
        %v9751 = vpack.c.bf16 %v9704, %v9702
        %v9752 = vpack.c.bf16 %v9705, %v9703
        %v9753 = vpack.c.bf16 %v9708, %v9706
        %v9754 = vpack.c.bf16 %v9709, %v9707
        %v9755 = vpack.c.bf16 %v9712, %v9710
        %v9756 = vpack.c.bf16 %v9713, %v9711
        %v9757 = vpack.c.bf16 %v9716, %v9714
        %v9758 = vpack.c.bf16 %v9717, %v9715
        %v9759 = vpack.c.bf16 %v9720, %v9718
        %v9760 = vpack.c.bf16 %v9721, %v9719
        %v9761 = vpack.c.bf16 %v9724, %v9722
        %v9762 = vpack.c.bf16 %v9725, %v9723
        %v9763 = vpack.c.bf16 %v9728, %v9726
        %v9764 = vpack.c.bf16 %v9729, %v9727
        %v9765 = vpack.c.bf16 %v9732, %v9730
        %v9766 = vpack.c.bf16 %v9733, %v9731
        %v9767 = vld [vmem:[%s13] sm:$0x7]
        %9769 = vset.pattern.permute.xlu0 0
        %9770 = vperm.xlu0 %9769, %v9767
        %v9771 = vpop.permute.xlu0 %9770
        %v9775 = vunpack.c.l.s4 1983009808
        %v9776 = vunpack.c.0.s8 %v9775
        %v9777 = vlaneseq
        %v9778 = vshrl.u32 %v9777, 7
        %v9779 = vsub.s32 %v9776, %v9778
        %v9780 = vrot.slane %v9734, %v9779
        %v9781 = vcombine.high %v9780, %v9780
        %9784 = vmatprep.subr.bf16.mxu0 %v9750
        %9785 = vmatpush1.bf16.msra.mxu0 %v9749
        %9786 = vmatprep.subr.bf16.mxu0 %v9748
        %9787 = vmatpush1.bf16.msra.mxu0 %v9747
        %9788 = vmatprep.subr.bf16.mxu0 %v9746
        %9789 = vmatpush1.bf16.msra.mxu0 %v9745
        %9790 = vmatprep.subr.bf16.mxu0 %v9744
        %9791 = vmatpush1.bf16.msra.mxu0 %v9743
        %9792 = vmatprep.subr.bf16.mxu0 %v9742
        %9793 = vmatpush1.bf16.msra.mxu0 %v9741
        %9794 = vmatprep.subr.bf16.mxu0 %v9740
        %9795 = vmatpush1.bf16.msra.mxu0 %v9739
        %9796 = vmatprep.subr.bf16.mxu0 %v9738
        %9797 = vmatpush1.bf16.msra.mxu0 %v9737
        %9798 = vmatprep.subr.bf16.mxu0 %v9736
        %9799 = vmatpush1.bf16.msra.mxu0 %v9735
        %9800 = vmatprep.subr.bf16.mxu0 %v9766
        %9801 = vmatpush2.bf16.msra.mxu0 %v9765
        %9802 = vmatprep.subr.bf16.mxu0 %v9764
        %9803 = vmatpush2.bf16.msra.mxu0 %v9763
        %9804 = vmatprep.subr.bf16.mxu0 %v9762
        %9805 = vmatpush2.bf16.msra.mxu0 %v9761
        %9806 = vmatprep.subr.bf16.mxu0 %v9760
        %9807 = vmatpush2.bf16.msra.mxu0 %v9759
        %9808 = vmatprep.subr.bf16.mxu0 %v9758
        %9809 = vmatpush2.bf16.msra.mxu0 %v9757
        %9810 = vmatprep.subr.bf16.mxu0 %v9756
        %9811 = vmatpush2.bf16.msra.mxu0 %v9755
        %9812 = vmatprep.subr.bf16.mxu0 %v9754
        %9813 = vmatpush2.bf16.msra.mxu0 %v9753
        %9814 = vmatprep.subr.bf16.mxu0 %v9752
        %9815 = vmatpush2.bf16.msra.mxu0 %v9751
        %9816 = vmatprep.mubr.bf16.mxu0 %v9781
        %9817 = vmatmul.mubr.bf16.gmra.mxu0 %v9780
        %v9818 = vpop.f32.mrf.mxu0
        %v9819 = vadd.f32 %v9771, %v9818
        %v9820 = vpop.f32.mrf.mxu0
        %v9821 = vadd.f32 %v9771, %v9820
        %v9822 = vpop.f32.mrf.mxu0
        %v9823 = vpop.f32.mrf.mxu0
        %9824 = vdwg.mxu0
        %v9825 = vld [vmem:[%s931] sm:$0x77]
        %v9827 = vcombine.high %v9825, %v9825
        %v9829 = vsub.f32 %v9819, %v9825
        %v9830 = vsub.f32 %v9821, %v9827
        %v9831 = vand.u32 2147483647, %v9829
        %v9832 = vand.u32 2147483647, %v9830
        %vm9833 = vcmask 1042432
        %v9834 = vsel %vm9833, %v9831, 0.0
        %v9835 = vsel %vm9833, %v9832, 0.0
        %v9836 = vadd.f32 %v9834, %v9835
        %9837 = vadd.xlane.f32.xlu0 %v9836
        %v9838 = vpop.xlane.xlu0 %9837
        %v9839 = vrot.slane %v9838, 4
        %v9840 = vadd.f32 %v9838, %v9839
        %v9841 = vrot.slane %v9840, 2
        %v9842 = vadd.f32 %v9840, %v9841
        %v9843 = vrot.slane %v9842, 1
        %v9844 = vadd.f32 %v9842, %v9843
        %s9845 = vtos %v9844
        %v9846 = vstv %s9845
        %vm9847 = vcmask 0
        %9848 = vst.msk [vmem:[%s939] sm:$0x1] %vm9847, %v9846
        %p9849 = scmp.lt.s32.totalorder %s29, 1
        %s9850 = scalar_select %p9849, %s29, 1
        %p9851 = scmp.lt.s32.totalorder %s30, 1
        %s9852 = scalar_select %p9851, %s30, 1
        %s9853 = smul.addr %s9850, 2
        %s9854 = sadd.s32 %s9852, %s9853
        %s9855 = scalar_lea.vmem %s14, %s9854
        // Predicated region
        $region123: #{tnet_forward.1} parent=113 // pred_check
          %p9856 = pneg %p372
        $region124: #{tnet_forward.1} parent=113 // pred_check_branch
          %9858 = sbr.rel (%p9856) target = $region126
        $region125: #{tnet_forward.1} parent=113 // pred_region
          _
        $region126: #{tnet_forward.1} parent=113 // pred_fallthru
          _
      $region114: #{tnet_forward.1} parent=5 // pred_fallthru
        _
      %p9859 = scmp.le.s32.totalorder 2, %s20
      // Predicated region
      $region127: #{tnet_forward.1} parent=5 // pred_check
        %p9860 = pneg %p9859
      $region128: #{tnet_forward.1} parent=5 // pred_check_branch
        %9862 = sbr.rel (%p9860) target = $region130
      $region129: #{tnet_forward.1} parent=5 // pred_region
        %s9863 = ssub.s32 %s20, 2
        // Predicated region
        $region131: #{tnet_forward.1} parent=129 // pred_check
          %p9864 = pneg %p378
        $region132: #{tnet_forward.1} parent=129 // pred_check_branch
          %9866 = sbr.rel (%p9864) target = $region134
        $region133: #{tnet_forward.1} parent=129 // pred_region
          %p9867 = scmp.lt.s32.totalorder %s31, 1
          %s9868 = scalar_select %p9867, %s31, 1
          %p9869 = scmp.lt.s32.totalorder %s32, 1
          %s9870 = scalar_select %p9869, %s32, 1
          %s9871 = smul.addr %s9868, 2
          %s9872 = sadd.s32 %s9870, %s9871
          %s9873 = scalar_lea.vmem %s14, %s9872
        $region134: #{tnet_forward.1} parent=129 // pred_fallthru
          _
      $region130: #{tnet_forward.1} parent=5 // pred_fallthru
        _
    $region6: #{tnet_forward.1} parent=1 // loop_footer
      %s24 = sadd.s32 1, %s20
    $region7: #{tnet_forward.1} parent=1 // loop_footer_branch
      %19 = sbr.rel target = $region3
    $region8: #{tnet_forward.1} parent=1 // loop_exit
      _

</llo_original>
